<compile_context>
chip_gen: v7x
topology: tpu7x:2x2x1
jax: 0.10.0
libtpu: 0.0.40
codegen_flags: <defaults>
</compile_context>

<pallas_src>
import jax
import jax.numpy as jnp
from jax.experimental import pallas as pl
from jax.experimental.pallas import tpu as pltpu

_CANON = ("seqs", "description", "network", "expression")


def _round_up(x, m):
    return -(-x // m) * m


def _leaky_relu(y):
    return jnp.where(y > 0, y, 0.01 * y)


# ----------------------------------------------------------------------------
# Fused Pallas kernel
# ----------------------------------------------------------------------------
def _make_fused_kernel(meta):
    """Fused forward kernel.

    Ref order (inputs, then the single output):
      x_seq    (TN, Lpad, C_in)                    if 'seqs' in feature
      x_other  (TN, D_desc + D_net + D_expr)       if any non-seq feature
      slab_conv (max_k*C_in + 1, n_conv*C_out)     if 'seqs'  [fused conv W ; bias row]
      slab_hid  (sum d_in + n_feat, hidden)                   [per-feature W ; bias rows]
      slab_cat  (n_feat*hidden + 1, text_dim)                 [cat2emb W ; bias row]
      out       (TN, text_dim)
    """
    feature = tuple(meta["feature"])
    hidden = meta["hidden"]
    text_dim = meta["text_dim"]
    dot_dtype = meta["dot_dtype"]
    has_seqs = "seqs" in feature
    other = [f for f in ("description", "network", "expression") if f in feature]
    order = [f for f in _CANON if f in feature]
    n_feat = len(feature)

    if has_seqs:
        kernels = list(meta["kernels"])
        c_in, c_out = meta["c_in"], meta["c_out"]
        L, lp = meta["seq_length"], meta["lp"]
        max_k = max(kernels)
        kc = max_k * c_in
        n_conv = len(kernels)

    d_in = {}
    if has_seqs:
        d_in["seqs"] = n_conv * c_out
    for f in other:
        d_in[f] = meta[f + "_dim"]

    # slab_hid row offsets (weights first, then one bias row per feature).
    row_of, r = {}, 0
    for f in order:
        row_of[f] = r
        r += d_in[f]
    bias_row0 = r

    # x_other column offsets.
    col_of, c = {}, 0
    for f in other:
        col_of[f] = c
        c += d_in[f]

    def kernel(*refs):
        it = iter(refs)
        x_seq_ref = next(it) if has_seqs else None
        x_oth_ref = next(it) if other else None
        slab_conv = next(it) if has_seqs else None
        slab_hid = next(it)
        slab_cat = next(it)
        out_ref = next(it)
        tn = out_ref.shape[0]

        def first_layer(x_mat, f):
            r0 = row_of[f]
            h = jnp.dot(x_mat, slab_hid[r0:r0 + d_in[f], :],
                        preferred_element_type=jnp.float32)
            bi = bias_row0 + order.index(f)
            h = h + slab_hid[bi:bi + 1, :].astype(jnp.float32)
            # expression: Linear -> ReLU -> Dropout (eval == identity); others LeakyReLU.
            return jnp.maximum(h, 0.0) if f == "expression" else _leaky_relu(h)

        feats = {}

        if has_seqs:
            # In-kernel im2col: patch column j*C_in + c  <->  x[:, t + j, c].
            # x is zero-padded along time in the wrapper; padded positions are
            # excluded below by pooling only over each conv's valid range.
            patches = jnp.concatenate(
                [x_seq_ref[:, j:j + lp, :] for j in range(max_k)], axis=2)
            patches = patches.reshape(tn * lp, kc).astype(dot_dtype)
            # ONE fused MXU dot for all n_conv convolutions (128-deep contraction
            # instead of 4 lane-sparse depth<=128 dots with C_out=8 live lanes).
            y = jnp.dot(patches, slab_conv[0:kc, :],
                        preferred_element_type=jnp.float32)
            y = y.reshape(tn, lp, n_conv * c_out)
            # Per-conv global max-pool over that conv's valid time range.
            # (Per-group reductions keep the kernel free of iota/constant masks.)
            pooled = jnp.concatenate(
                [jnp.max(y[:, :L - k + 1, i * c_out:(i + 1) * c_out], axis=1)
                 for i, k in enumerate(kernels)], axis=1)          # (tn, n_conv*c_out)
            # Conv bias after the pool: max(y + b) == max(y) + b.
            pooled = pooled + slab_conv[kc:kc + 1, :].astype(jnp.float32)
            feats["seqs"] = first_layer(pooled.astype(dot_dtype), "seqs")

        for f in other:
            c0 = col_of[f]
            # TODO(synk): Dropout on the expression branch is eval-mode identity only.
            feats[f] = first_layer(x_oth_ref[:, c0:c0 + d_in[f]], f)

        # cat2emb: per-feature partial dots accumulated into the f32 output
        # (skips the (TN, n_feat*hidden) concat relayout entirely).
        acc = jnp.broadcast_to(
            slab_cat[n_feat * hidden:n_feat * hidden + 1, :].astype(jnp.float32),
            (tn, text_dim))
        for i, f in enumerate(feature):
            acc = acc + jnp.dot(feats[f].astype(dot_dtype),
                                slab_cat[i * hidden:(i + 1) * hidden, :],
                                preferred_element_type=jnp.float32)
        out_ref[...] = acc.astype(out_ref.dtype)

    return kernel


# ----------------------------------------------------------------------------
# Wrapper: operand packing + single pallas_call (batch-tiled, parallel grid)
# ----------------------------------------------------------------------------
def bio_data_encoder_forward(params, feature, x=None, x_description=None,
                             x_vector=None, x_expr=None, *,
                             compute_dtype=jnp.float32, batch_tile=8):
    """Fused forward.  compute_dtype=jnp.bfloat16 enables the bf16 MXU fast
    path for v6e/v7x (f32 accumulation and f32 element-wise math are kept)."""
    feature = tuple(feature)
    has_seqs = "seqs" in feature
    other = [f for f in ("description", "network", "expression") if f in feature]
    order = [f for f in _CANON if f in feature]

    n_batch = None
    for cand in (x, x_description, x_vector, x_expr):
        if cand is not None:
            n_batch = cand.shape[0]
            break

    # Batch tile: multiple of 8 (sublane rule for the 2-D operands) or full N.
    if n_batch % batch_tile == 0 and (batch_tile % 8 == 0 or batch_tile == n_batch):
        tn = batch_tile
    else:
        tn = n_batch
    grid = (n_batch // tn,)

    hidden = params["cat2emb"][0].shape[0] // len(feature)
    text_dim = params["cat2emb"][0].shape[1]

    inputs, in_specs = [], []
    itemsize = jnp.dtype(compute_dtype).itemsize
    tiled_bytes = 0       # per-grid-step (double-buffered) operand bytes
    resident_bytes = 0    # constant-index_map weight slabs (fetched once)

    meta = {"feature": feature, "hidden": hidden, "text_dim": text_dim,
            "dot_dtype": compute_dtype}

    if has_seqs:
        _, c_in, L = x.shape
        kernels = [w.shape[0] for (w, _) in params["conv"]]
        c_out = params["conv"][0][0].shape[2]
        max_k = max(kernels)
        lp = _round_up(max(L - k + 1 for k in kernels), 8)
        lpad = _round_up(lp + max_k - 1, 8)
        # Raw x goes in channels-last and zero-padded along time; the 80x
        # im2col expansion now happens inside the kernel (VMEM only).
        # Kept f32 at the DMA level on all chip generations; the assembled
        # patch matrix is cast to the MXU dtype right before the dot.
        x_nlc = jnp.transpose(x, (0, 2, 1)).astype(jnp.float32)
        x_nlc = jnp.pad(x_nlc, ((0, 0), (0, lpad - L), (0, 0)))
        inputs.append(x_nlc)
        in_specs.append(pl.BlockSpec((tn, lpad, c_in), lambda i: (i, 0, 0)))
        tiled_bytes += tn * lpad * c_in * 4
        meta.update(kernels=kernels, c_in=c_in, c_out=c_out, seq_length=L, lp=lp)

    if other:
        raw = {"description": x_description, "network": x_vector,
               "expression": x_expr}
        x_other = jnp.concatenate([raw[f] for f in other], axis=1)
        x_other = x_other.astype(compute_dtype)
        inputs.append(x_other)
        in_specs.append(pl.BlockSpec((tn, x_other.shape[1]), lambda i: (i, 0)))
        tiled_bytes += tn * x_other.shape[1] * itemsize
        for f in other:
            meta[f + "_dim"] = raw[f].shape[1]

    # ---- weight slabs: one DMA each, resident across the batch grid ----
    if has_seqs:
        w_blocks, b_blocks = [], []
        for (w, b) in params["conv"]:   # w: (k, c_in, c_out) == torch (o, c, k).transpose(2,1,0)
            k = w.shape[0]
            w2 = jnp.pad(w.reshape(k * c_in, c_out),
                         ((0, (max_k - k) * c_in), (0, 0)))
            w_blocks.append(w2)
            b_blocks.append(b.reshape(1, c_out))
        slab_conv = jnp.concatenate(
            [jnp.concatenate(w_blocks, axis=1),
             jnp.concatenate(b_blocks, axis=1)], axis=0).astype(compute_dtype)
        inputs.append(slab_conv)
        in_specs.append(pl.BlockSpec(slab_conv.shape, lambda i: (0, 0)))
        resident_bytes += slab_conv.size * itemsize

    name_of = {"seqs": "fc_seq", "description": "fc_description",
               "network": "fc_network", "expression": "fc_expr"}
    w_rows, b_rows = [], []
    for f in order:
        w, b = params[name_of[f]]
        w_rows.append(w)
        b_rows.append(b.reshape(1, -1))
    slab_hid = jnp.concatenate(w_rows + b_rows, axis=0).astype(compute_dtype)
    inputs.append(slab_hid)
    in_specs.append(pl.BlockSpec(slab_hid.shape, lambda i: (0, 0)))
    resident_bytes += slab_hid.size * itemsize

    w_cat, b_cat = params["cat2emb"]
    slab_cat = jnp.concatenate([w_cat, b_cat.reshape(1, -1)],
                               axis=0).astype(compute_dtype)
    inputs.append(slab_cat)
    in_specs.append(pl.BlockSpec(slab_cat.shape, lambda i: (0, 0)))
    resident_bytes += slab_cat.size * itemsize

    # VMEM budget: double-buffered batch tiles + resident weights, generous
    # headroom for internal scratch, capped below v7x's 64 MiB physical VMEM.
    vmem_need = 2 * (tiled_bytes + tn * text_dim * 4) + 2 * resident_bytes
    vmem_limit = int(min(48 * 2 ** 20, max(8 * 2 ** 20, 8 * vmem_need)))

    kern = _make_fused_kernel(meta)
    return pl.pallas_call(
        kern,
        out_shape=jax.ShapeDtypeStruct((n_batch, text_dim), jnp.float32),
        grid=grid,
        in_specs=in_specs,
        out_specs=pl.BlockSpec((tn, text_dim), lambda i: (i, 0)),
        compiler_params=pltpu.CompilerParams(
            dimension_semantics=("parallel",),   # v7x: 2 TCs split the batch
            vmem_limit_bytes=vmem_limit),
    )(*inputs)


# ----------------------------------------------------------------------------
# Parameter construction (deterministic, PyTorch-default-style uniform init).
# Layouts: Linear weights stored (in, out) == torch.weight.T; Conv1d weights
# stored (k, c_in, c_out) == torch.weight.transpose(2, 1, 0).
# ----------------------------------------------------------------------------
def _uniform(key, shape, bound):
    return jax.random.uniform(key, shape, jnp.float32, -bound, bound)


def init_params(key, *, feature, hidden_dim, seq_input_nc, seq_in_nc,
                seq_max_kernels, network_dim, description_dim,
                expression_dim, text_dim):
    kernels = list(range(8, seq_max_kernels, 8))
    params = {"kernels": kernels}
    keys = iter(jax.random.split(key, 64))

    def lin(d_in, d_out):
        bnd = 1.0 / (d_in ** 0.5)
        return (_uniform(next(keys), (d_in, d_out), bnd),
                _uniform(next(keys), (d_out,), bnd))

    if "seqs" in feature:
        params["conv"] = []
        for k in kernels:
            bnd = 1.0 / ((seq_input_nc * k) ** 0.5)
            w = _uniform(next(keys), (k, seq_input_nc, seq_in_nc), bnd)
            b = _uniform(next(keys), (seq_in_nc,), bnd)
            params["conv"].append((w, b))
        params["fc_seq"] = lin(len(kernels) * seq_in_nc, hidden_dim)
    if "description" in feature:
        params["fc_description"] = lin(description_dim, hidden_dim)
    if "network" in feature:
        params["fc_network"] = lin(network_dim, hidden_dim)
    if "expression" in feature:
        params["fc_expr"] = lin(expression_dim, hidden_dim)
    params["cat2emb"] = lin(len(feature) * hidden_dim, text_dim)
    return params


# ----------------------------------------------------------------------------
# Pure-JAX reference (all four features; used for the correctness check)
# ----------------------------------------------------------------------------
def reference_forward(params, feature, x, x_description, x_vector, x_expr):
    hp = jax.lax.Precision.HIGHEST
    x_nlc = jnp.transpose(x, (0, 2, 1)).astype(jnp.float32)
    outs = []
    for (w, b) in params["conv"]:
        k = w.shape[0]
        L = x_nlc.shape[1]
        lout = L - k + 1
        acc = jnp.zeros((x_nlc.shape[0], lout, w.shape[2]), jnp.float32)
        for j in range(k):
            acc = acc + jnp.einsum("nlc,co->nlo", x_nlc[:, j:j + lout, :],
                                   w[j], precision=hp)
        acc = acc + b[None, None, :]
        outs.append(jnp.max(acc, axis=1))
    seq_cat = jnp.concatenate(outs, axis=1)

    def lin(xv, wb, act):
        w, b = wb
        y = jnp.dot(xv, w, precision=hp) + b
        if act == "leaky_relu":
            return jnp.where(y > 0, y, 0.01 * y)
        if act == "relu":
            return jnp.maximum(y, 0.0)
        return y

    feats = {
        "seqs": lin(seq_cat, params["fc_seq"], "leaky_relu"),
        "description": lin(x_description, params["fc_description"], "leaky_relu"),
        "network": lin(x_vector, params["fc_network"], "leaky_relu"),
        "expression": lin(x_expr, params["fc_expr"], "relu"),
    }
    x_enc = jnp.concatenate([feats[f] for f in feature], axis=1)
    return lin(x_enc, params["cat2emb"], "none")


# ----------------------------------------------------------------------------
if __name__ == "__main__":
    feature = ["seqs", "network", "description", "expression"]
    cfg = dict(
        hidden_dim=32,
        seq_input_nc=4,
        seq_in_nc=8,
        seq_max_kernels=33,   # kernels = [8, 16, 24, 32]
        seq_length=64,
        network_dim=16,
        description_dim=24,
        expression_dim=20,
        text_dim=16,
    )
    batch = 16   # two grid steps of 8 -> exercises the parallel batch axis

    key = jax.random.PRNGKey(0)
    kp, kx, kd, kv, ke = jax.random.split(key, 5)

    params = init_params(
        kp, feature=feature, hidden_dim=cfg["hidden_dim"],
        seq_input_nc=cfg["seq_input_nc"], seq_in_nc=cfg["seq_in_nc"],
        seq_max_kernels=cfg["seq_max_kernels"],
        network_dim=cfg["network_dim"],
        description_dim=cfg["description_dim"],
        expression_dim=cfg["expression_dim"], text_dim=cfg["text_dim"])

    x = jax.random.normal(kx, (batch, cfg["seq_input_nc"], cfg["seq_length"]),
                          jnp.float32)                      # NCW like PyTorch
    x_description = jax.random.normal(kd, (batch, cfg["description_dim"]),
                                      jnp.float32)
    x_vector = jax.random.normal(kv, (batch, cfg["network_dim"]), jnp.float32)
    x_expr = jax.random.normal(ke, (batch, cfg["expression_dim"]), jnp.float32)

    ref = jax.block_until_ready(
        reference_forward(params, feature, x, x_description, x_vector, x_expr))

    # f32 path (default): must match the f32 reference to 1e-3.
    out = jax.block_until_ready(
        bio_data_encoder_forward(params, feature, x, x_description,
                                 x_vector, x_expr))
    assert out.shape == (batch, cfg["text_dim"]), out.shape
    err = float(jnp.max(jnp.abs(out - ref)))
    assert jnp.allclose(out, ref, rtol=1e-3, atol=1e-3), err

    # bf16 MXU fast path (the one to ship on v6e/v7x); f32 accumulation, so
    # only operand-rounding error vs. the f32 reference.
    out_bf16 = jax.block_until_ready(
        bio_data_encoder_forward(params, feature, x, x_description,
                                 x_vector, x_expr,
                                 compute_dtype=jnp.bfloat16))
    err_bf16 = float(jnp.max(jnp.abs(out_bf16 - ref)))
    assert err_bf16 < 5e-2, err_bf16

    print("KERNEL_OK")
</pallas_src>

<mosaic_0001>
module attributes {stable_mosaic.version = 11 : i64} {
  func.func @kernel(%arg0: i32, %arg1: memref<8x96x4xf32, #tpu.memory_space<vmem>>, %arg2: memref<8x60xf32, #tpu.memory_space<vmem>>, %arg3: memref<129x32xf32, #tpu.memory_space<vmem>>, %arg4: memref<96x32xf32, #tpu.memory_space<vmem>>, %arg5: memref<129x16xf32, #tpu.memory_space<vmem>>, %arg6: memref<8x16xf32, #tpu.memory_space<vmem>>) attributes {dimension_semantics = [#tpu.dimension_semantics<parallel>], iteration_bounds = array<i64: 2>, scalar_prefetch = 0 : i64, scratch_operands = 0 : i64, tpu.core_type = #tpu.core_type<tc>, window_params = [{transform_indices = @transform_0, window_bounds = array<i64: 8, 96, 4>}, {transform_indices = @transform_1, window_bounds = array<i64: 8, 60>}, {pipeline_mode = #tpu.pipeline_mode<synchronous>, transform_indices = @transform_2, window_bounds = array<i64: 129, 32>}, {pipeline_mode = #tpu.pipeline_mode<synchronous>, transform_indices = @transform_3, window_bounds = array<i64: 96, 32>}, {pipeline_mode = #tpu.pipeline_mode<synchronous>, transform_indices = @transform_4, window_bounds = array<i64: 129, 16>}, {transform_indices = @transform_5, window_bounds = array<i64: 8, 16>}]} {
    %c0 = arith.constant 0 : index
    %c0_0 = arith.constant 0 : index
    %c0_1 = arith.constant 0 : index
    %0 = vector.load %arg1[%c0, %c0_0, %c0_1] : memref<8x96x4xf32, #tpu.memory_space<vmem>>, vector<8x64x4xf32>
    %c0_2 = arith.constant 0 : index
    %c1 = arith.constant 1 : index
    %c0_3 = arith.constant 0 : index
    %1 = vector.load %arg1[%c0_2, %c1, %c0_3] : memref<8x96x4xf32, #tpu.memory_space<vmem>>, vector<8x64x4xf32>
    %c0_4 = arith.constant 0 : index
    %c2 = arith.constant 2 : index
    %c0_5 = arith.constant 0 : index
    %2 = vector.load %arg1[%c0_4, %c2, %c0_5] : memref<8x96x4xf32, #tpu.memory_space<vmem>>, vector<8x64x4xf32>
    %c0_6 = arith.constant 0 : index
    %c3 = arith.constant 3 : index
    %c0_7 = arith.constant 0 : index
    %3 = vector.load %arg1[%c0_6, %c3, %c0_7] : memref<8x96x4xf32, #tpu.memory_space<vmem>>, vector<8x64x4xf32>
    %c0_8 = arith.constant 0 : index
    %c4 = arith.constant 4 : index
    %c0_9 = arith.constant 0 : index
    %4 = vector.load %arg1[%c0_8, %c4, %c0_9] : memref<8x96x4xf32, #tpu.memory_space<vmem>>, vector<8x64x4xf32>
    %c0_10 = arith.constant 0 : index
    %c5 = arith.constant 5 : index
    %c0_11 = arith.constant 0 : index
    %5 = vector.load %arg1[%c0_10, %c5, %c0_11] : memref<8x96x4xf32, #tpu.memory_space<vmem>>, vector<8x64x4xf32>
    %c0_12 = arith.constant 0 : index
    %c6 = arith.constant 6 : index
    %c0_13 = arith.constant 0 : index
    %6 = vector.load %arg1[%c0_12, %c6, %c0_13] : memref<8x96x4xf32, #tpu.memory_space<vmem>>, vector<8x64x4xf32>
    %c0_14 = arith.constant 0 : index
    %c7 = arith.constant 7 : index
    %c0_15 = arith.constant 0 : index
    %7 = vector.load %arg1[%c0_14, %c7, %c0_15] : memref<8x96x4xf32, #tpu.memory_space<vmem>>, vector<8x64x4xf32>
    %c0_16 = arith.constant 0 : index
    %c8 = arith.constant 8 : index
    %c0_17 = arith.constant 0 : index
    %8 = vector.load %arg1[%c0_16, %c8, %c0_17] : memref<8x96x4xf32, #tpu.memory_space<vmem>>, vector<8x64x4xf32>
    %c0_18 = arith.constant 0 : index
    %c9 = arith.constant 9 : index
    %c0_19 = arith.constant 0 : index
    %9 = vector.load %arg1[%c0_18, %c9, %c0_19] : memref<8x96x4xf32, #tpu.memory_space<vmem>>, vector<8x64x4xf32>
    %c0_20 = arith.constant 0 : index
    %c10 = arith.constant 10 : index
    %c0_21 = arith.constant 0 : index
    %10 = vector.load %arg1[%c0_20, %c10, %c0_21] : memref<8x96x4xf32, #tpu.memory_space<vmem>>, vector<8x64x4xf32>
    %c0_22 = arith.constant 0 : index
    %c11 = arith.constant 11 : index
    %c0_23 = arith.constant 0 : index
    %11 = vector.load %arg1[%c0_22, %c11, %c0_23] : memref<8x96x4xf32, #tpu.memory_space<vmem>>, vector<8x64x4xf32>
    %c0_24 = arith.constant 0 : index
    %c12 = arith.constant 12 : index
    %c0_25 = arith.constant 0 : index
    %12 = vector.load %arg1[%c0_24, %c12, %c0_25] : memref<8x96x4xf32, #tpu.memory_space<vmem>>, vector<8x64x4xf32>
    %c0_26 = arith.constant 0 : index
    %c13 = arith.constant 13 : index
    %c0_27 = arith.constant 0 : index
    %13 = vector.load %arg1[%c0_26, %c13, %c0_27] : memref<8x96x4xf32, #tpu.memory_space<vmem>>, vector<8x64x4xf32>
    %c0_28 = arith.constant 0 : index
    %c14 = arith.constant 14 : index
    %c0_29 = arith.constant 0 : index
    %14 = vector.load %arg1[%c0_28, %c14, %c0_29] : memref<8x96x4xf32, #tpu.memory_space<vmem>>, vector<8x64x4xf32>
    %c0_30 = arith.constant 0 : index
    %c15 = arith.constant 15 : index
    %c0_31 = arith.constant 0 : index
    %15 = vector.load %arg1[%c0_30, %c15, %c0_31] : memref<8x96x4xf32, #tpu.memory_space<vmem>>, vector<8x64x4xf32>
    %c0_32 = arith.constant 0 : index
    %c16 = arith.constant 16 : index
    %c0_33 = arith.constant 0 : index
    %16 = vector.load %arg1[%c0_32, %c16, %c0_33] : memref<8x96x4xf32, #tpu.memory_space<vmem>>, vector<8x64x4xf32>
    %c0_34 = arith.constant 0 : index
    %c17 = arith.constant 17 : index
    %c0_35 = arith.constant 0 : index
    %17 = vector.load %arg1[%c0_34, %c17, %c0_35] : memref<8x96x4xf32, #tpu.memory_space<vmem>>, vector<8x64x4xf32>
    %c0_36 = arith.constant 0 : index
    %c18 = arith.constant 18 : index
    %c0_37 = arith.constant 0 : index
    %18 = vector.load %arg1[%c0_36, %c18, %c0_37] : memref<8x96x4xf32, #tpu.memory_space<vmem>>, vector<8x64x4xf32>
    %c0_38 = arith.constant 0 : index
    %c19 = arith.constant 19 : index
    %c0_39 = arith.constant 0 : index
    %19 = vector.load %arg1[%c0_38, %c19, %c0_39] : memref<8x96x4xf32, #tpu.memory_space<vmem>>, vector<8x64x4xf32>
    %c0_40 = arith.constant 0 : index
    %c20 = arith.constant 20 : index
    %c0_41 = arith.constant 0 : index
    %20 = vector.load %arg1[%c0_40, %c20, %c0_41] : memref<8x96x4xf32, #tpu.memory_space<vmem>>, vector<8x64x4xf32>
    %c0_42 = arith.constant 0 : index
    %c21 = arith.constant 21 : index
    %c0_43 = arith.constant 0 : index
    %21 = vector.load %arg1[%c0_42, %c21, %c0_43] : memref<8x96x4xf32, #tpu.memory_space<vmem>>, vector<8x64x4xf32>
    %c0_44 = arith.constant 0 : index
    %c22 = arith.constant 22 : index
    %c0_45 = arith.constant 0 : index
    %22 = vector.load %arg1[%c0_44, %c22, %c0_45] : memref<8x96x4xf32, #tpu.memory_space<vmem>>, vector<8x64x4xf32>
    %c0_46 = arith.constant 0 : index
    %c23 = arith.constant 23 : index
    %c0_47 = arith.constant 0 : index
    %23 = vector.load %arg1[%c0_46, %c23, %c0_47] : memref<8x96x4xf32, #tpu.memory_space<vmem>>, vector<8x64x4xf32>
    %c0_48 = arith.constant 0 : index
    %c24 = arith.constant 24 : index
    %c0_49 = arith.constant 0 : index
    %24 = vector.load %arg1[%c0_48, %c24, %c0_49] : memref<8x96x4xf32, #tpu.memory_space<vmem>>, vector<8x64x4xf32>
    %c0_50 = arith.constant 0 : index
    %c25 = arith.constant 25 : index
    %c0_51 = arith.constant 0 : index
    %25 = vector.load %arg1[%c0_50, %c25, %c0_51] : memref<8x96x4xf32, #tpu.memory_space<vmem>>, vector<8x64x4xf32>
    %c0_52 = arith.constant 0 : index
    %c26 = arith.constant 26 : index
    %c0_53 = arith.constant 0 : index
    %26 = vector.load %arg1[%c0_52, %c26, %c0_53] : memref<8x96x4xf32, #tpu.memory_space<vmem>>, vector<8x64x4xf32>
    %c0_54 = arith.constant 0 : index
    %c27 = arith.constant 27 : index
    %c0_55 = arith.constant 0 : index
    %27 = vector.load %arg1[%c0_54, %c27, %c0_55] : memref<8x96x4xf32, #tpu.memory_space<vmem>>, vector<8x64x4xf32>
    %c0_56 = arith.constant 0 : index
    %c28 = arith.constant 28 : index
    %c0_57 = arith.constant 0 : index
    %28 = vector.load %arg1[%c0_56, %c28, %c0_57] : memref<8x96x4xf32, #tpu.memory_space<vmem>>, vector<8x64x4xf32>
    %c0_58 = arith.constant 0 : index
    %c29 = arith.constant 29 : index
    %c0_59 = arith.constant 0 : index
    %29 = vector.load %arg1[%c0_58, %c29, %c0_59] : memref<8x96x4xf32, #tpu.memory_space<vmem>>, vector<8x64x4xf32>
    %c0_60 = arith.constant 0 : index
    %c30 = arith.constant 30 : index
    %c0_61 = arith.constant 0 : index
    %30 = vector.load %arg1[%c0_60, %c30, %c0_61] : memref<8x96x4xf32, #tpu.memory_space<vmem>>, vector<8x64x4xf32>
    %c0_62 = arith.constant 0 : index
    %c31 = arith.constant 31 : index
    %c0_63 = arith.constant 0 : index
    %31 = vector.load %arg1[%c0_62, %c31, %c0_63] : memref<8x96x4xf32, #tpu.memory_space<vmem>>, vector<8x64x4xf32>
    %32 = tpu.concatenate %0, %1, %2, %3, %4, %5, %6, %7, %8, %9, %10, %11, %12, %13, %14, %15 in 2 : vector<8x64x4xf32>, vector<8x64x4xf32>, vector<8x64x4xf32>, vector<8x64x4xf32>, vector<8x64x4xf32>, vector<8x64x4xf32>, vector<8x64x4xf32>, vector<8x64x4xf32>, vector<8x64x4xf32>, vector<8x64x4xf32>, vector<8x64x4xf32>, vector<8x64x4xf32>, vector<8x64x4xf32>, vector<8x64x4xf32>, vector<8x64x4xf32>, vector<8x64x4xf32> -> vector<8x64x64xf32>
    %33 = tpu.concatenate %16, %17, %18, %19, %20, %21, %22, %23, %24, %25, %26, %27, %28, %29, %30, %31 in 2 : vector<8x64x4xf32>, vector<8x64x4xf32>, vector<8x64x4xf32>, vector<8x64x4xf32>, vector<8x64x4xf32>, vector<8x64x4xf32>, vector<8x64x4xf32>, vector<8x64x4xf32>, vector<8x64x4xf32>, vector<8x64x4xf32>, vector<8x64x4xf32>, vector<8x64x4xf32>, vector<8x64x4xf32>, vector<8x64x4xf32>, vector<8x64x4xf32>, vector<8x64x4xf32> -> vector<8x64x64xf32>
    %34 = tpu.concatenate %32, %33 in 2 : vector<8x64x64xf32>, vector<8x64x64xf32> -> vector<8x64x128xf32>
    %35 = vector.shape_cast %34 : vector<8x64x128xf32> to vector<512x128xf32>
    %c0_64 = arith.constant 0 : index
    %c0_65 = arith.constant 0 : index
    %36 = vector.load %arg3[%c0_64, %c0_65] : memref<129x32xf32, #tpu.memory_space<vmem>>, vector<128x32xf32>
    %cst = arith.constant dense<0.000000e+00> : vector<512x32xf32>
    %37 = tpu.matmul %35, %36, %cst {dimension_numbers = #tpu.dot_dimension_numbers<[1], [0], [0], [1], [0, 0, 1, 1], [], []>} : vector<512x128xf32>, vector<128x32xf32>, vector<512x32xf32> -> vector<512x32xf32>
    %38 = vector.shape_cast %37 : vector<512x32xf32> to vector<8x64x32xf32>
    %39 = vector.extract_strided_slice %38 {offsets = [0, 0, 0], sizes = [8, 57, 8], strides = [1, 1, 1]} : vector<8x64x32xf32> to vector<8x57x8xf32>
    %cst_66 = arith.constant dense<0xFF800000> : vector<8x8xf32>
    %40 = vector.multi_reduction <maximumf>, %39, %cst_66 [1] : vector<8x57x8xf32> to vector<8x8xf32>
    %41 = vector.extract_strided_slice %38 {offsets = [0, 0, 8], sizes = [8, 49, 8], strides = [1, 1, 1]} : vector<8x64x32xf32> to vector<8x49x8xf32>
    %cst_67 = arith.constant dense<0xFF800000> : vector<8x8xf32>
    %42 = vector.multi_reduction <maximumf>, %41, %cst_67 [1] : vector<8x49x8xf32> to vector<8x8xf32>
    %43 = vector.extract_strided_slice %38 {offsets = [0, 0, 16], sizes = [8, 41, 8], strides = [1, 1, 1]} : vector<8x64x32xf32> to vector<8x41x8xf32>
    %cst_68 = arith.constant dense<0xFF800000> : vector<8x8xf32>
    %44 = vector.multi_reduction <maximumf>, %43, %cst_68 [1] : vector<8x41x8xf32> to vector<8x8xf32>
    %45 = vector.extract_strided_slice %38 {offsets = [0, 0, 24], sizes = [8, 33, 8], strides = [1, 1, 1]} : vector<8x64x32xf32> to vector<8x33x8xf32>
    %cst_69 = arith.constant dense<0xFF800000> : vector<8x8xf32>
    %46 = vector.multi_reduction <maximumf>, %45, %cst_69 [1] : vector<8x33x8xf32> to vector<8x8xf32>
    %47 = tpu.concatenate %40, %42, %44, %46 in 1 : vector<8x8xf32>, vector<8x8xf32>, vector<8x8xf32>, vector<8x8xf32> -> vector<8x32xf32>
    %c128 = arith.constant 128 : index
    %c0_70 = arith.constant 0 : index
    %48 = vector.load %arg3[%c128, %c0_70] : memref<129x32xf32, #tpu.memory_space<vmem>>, vector<1x32xf32>
    %49 = vector.broadcast %48 : vector<1x32xf32> to vector<8x32xf32>
    %50 = arith.addf %47, %49 : vector<8x32xf32>
    %c0_71 = arith.constant 0 : index
    %c0_72 = arith.constant 0 : index
    %51 = vector.load %arg4[%c0_71, %c0_72] : memref<96x32xf32, #tpu.memory_space<vmem>>, vector<32x32xf32>
    %cst_73 = arith.constant dense<0.000000e+00> : vector<8x32xf32>
    %52 = tpu.matmul %50, %51, %cst_73 {dimension_numbers = #tpu.dot_dimension_numbers<[1], [0], [0], [1], [0, 0, 1, 1], [], []>} : vector<8x32xf32>, vector<32x32xf32>, vector<8x32xf32> -> vector<8x32xf32>
    %c92 = arith.constant 92 : index
    %c0_74 = arith.constant 0 : index
    %53 = vector.load %arg4[%c92, %c0_74] : memref<96x32xf32, #tpu.memory_space<vmem>>, vector<1x32xf32>
    %54 = vector.broadcast %53 : vector<1x32xf32> to vector<8x32xf32>
    %55 = arith.addf %52, %54 : vector<8x32xf32>
    %cst_75 = arith.constant 0.000000e+00 : f32
    %56 = vector.broadcast %cst_75 : f32 to vector<8x32xf32>
    %57 = arith.cmpf ogt, %55, %56 : vector<8x32xf32>
    %cst_76 = arith.constant 0.00999999977 : f32
    %58 = vector.broadcast %cst_76 : f32 to vector<8x32xf32>
    %59 = arith.mulf %58, %55 : vector<8x32xf32>
    %60 = arith.select %57, %55, %59 : vector<8x32xi1>, vector<8x32xf32>
    %c0_77 = arith.constant 0 : index
    %c0_78 = arith.constant 0 : index
    %61 = vector.load %arg2[%c0_77, %c0_78] : memref<8x60xf32, #tpu.memory_space<vmem>>, vector<8x24xf32>
    %c32 = arith.constant 32 : index
    %c0_79 = arith.constant 0 : index
    %62 = vector.load %arg4[%c32, %c0_79] : memref<96x32xf32, #tpu.memory_space<vmem>>, vector<24x32xf32>
    %cst_80 = arith.constant dense<0.000000e+00> : vector<8x32xf32>
    %63 = tpu.matmul %61, %62, %cst_80 {dimension_numbers = #tpu.dot_dimension_numbers<[1], [0], [0], [1], [0, 0, 1, 1], [], []>} : vector<8x24xf32>, vector<24x32xf32>, vector<8x32xf32> -> vector<8x32xf32>
    %c93 = arith.constant 93 : index
    %c0_81 = arith.constant 0 : index
    %64 = vector.load %arg4[%c93, %c0_81] : memref<96x32xf32, #tpu.memory_space<vmem>>, vector<1x32xf32>
    %65 = vector.broadcast %64 : vector<1x32xf32> to vector<8x32xf32>
    %66 = arith.addf %63, %65 : vector<8x32xf32>
    %cst_82 = arith.constant 0.000000e+00 : f32
    %67 = vector.broadcast %cst_82 : f32 to vector<8x32xf32>
    %68 = arith.cmpf ogt, %66, %67 : vector<8x32xf32>
    %cst_83 = arith.constant 0.00999999977 : f32
    %69 = vector.broadcast %cst_83 : f32 to vector<8x32xf32>
    %70 = arith.mulf %69, %66 : vector<8x32xf32>
    %71 = arith.select %68, %66, %70 : vector<8x32xi1>, vector<8x32xf32>
    %c0_84 = arith.constant 0 : index
    %c24_85 = arith.constant 24 : index
    %72 = vector.load %arg2[%c0_84, %c24_85] : memref<8x60xf32, #tpu.memory_space<vmem>>, vector<8x16xf32>
    %c56 = arith.constant 56 : index
    %c0_86 = arith.constant 0 : index
    %73 = vector.load %arg4[%c56, %c0_86] : memref<96x32xf32, #tpu.memory_space<vmem>>, vector<16x32xf32>
    %cst_87 = arith.constant dense<0.000000e+00> : vector<8x32xf32>
    %74 = tpu.matmul %72, %73, %cst_87 {dimension_numbers = #tpu.dot_dimension_numbers<[1], [0], [0], [1], [0, 0, 1, 1], [], []>} : vector<8x16xf32>, vector<16x32xf32>, vector<8x32xf32> -> vector<8x32xf32>
    %c94 = arith.constant 94 : index
    %c0_88 = arith.constant 0 : index
    %75 = vector.load %arg4[%c94, %c0_88] : memref<96x32xf32, #tpu.memory_space<vmem>>, vector<1x32xf32>
    %76 = vector.broadcast %75 : vector<1x32xf32> to vector<8x32xf32>
    %77 = arith.addf %74, %76 : vector<8x32xf32>
    %cst_89 = arith.constant 0.000000e+00 : f32
    %78 = vector.broadcast %cst_89 : f32 to vector<8x32xf32>
    %79 = arith.cmpf ogt, %77, %78 : vector<8x32xf32>
    %cst_90 = arith.constant 0.00999999977 : f32
    %80 = vector.broadcast %cst_90 : f32 to vector<8x32xf32>
    %81 = arith.mulf %80, %77 : vector<8x32xf32>
    %82 = arith.select %79, %77, %81 : vector<8x32xi1>, vector<8x32xf32>
    %c0_91 = arith.constant 0 : index
    %c40 = arith.constant 40 : index
    %83 = vector.load %arg2[%c0_91, %c40] : memref<8x60xf32, #tpu.memory_space<vmem>>, vector<8x20xf32>
    %c72 = arith.constant 72 : index
    %c0_92 = arith.constant 0 : index
    %84 = vector.load %arg4[%c72, %c0_92] : memref<96x32xf32, #tpu.memory_space<vmem>>, vector<20x32xf32>
    %cst_93 = arith.constant dense<0.000000e+00> : vector<8x32xf32>
    %85 = tpu.matmul %83, %84, %cst_93 {dimension_numbers = #tpu.dot_dimension_numbers<[1], [0], [0], [1], [0, 0, 1, 1], [], []>} : vector<8x20xf32>, vector<20x32xf32>, vector<8x32xf32> -> vector<8x32xf32>
    %c95 = arith.constant 95 : index
    %c0_94 = arith.constant 0 : index
    %86 = vector.load %arg4[%c95, %c0_94] : memref<96x32xf32, #tpu.memory_space<vmem>>, vector<1x32xf32>
    %87 = vector.broadcast %86 : vector<1x32xf32> to vector<8x32xf32>
    %88 = arith.addf %85, %87 : vector<8x32xf32>
    %cst_95 = arith.constant 0.000000e+00 : f32
    %89 = vector.broadcast %cst_95 : f32 to vector<8x32xf32>
    %90 = arith.maximumf %88, %89 : vector<8x32xf32>
    %c128_96 = arith.constant 128 : index
    %c0_97 = arith.constant 0 : index
    %91 = vector.load %arg5[%c128_96, %c0_97] : memref<129x16xf32, #tpu.memory_space<vmem>>, vector<1x16xf32>
    %92 = vector.shape_cast %91 : vector<1x16xf32> to vector<1x16xf32>
    %93 = vector.broadcast %92 : vector<1x16xf32> to vector<8x16xf32>
    %c0_98 = arith.constant 0 : index
    %c0_99 = arith.constant 0 : index
    %94 = vector.load %arg5[%c0_98, %c0_99] : memref<129x16xf32, #tpu.memory_space<vmem>>, vector<32x16xf32>
    %cst_100 = arith.constant dense<0.000000e+00> : vector<8x16xf32>
    %95 = tpu.matmul %60, %94, %cst_100 {dimension_numbers = #tpu.dot_dimension_numbers<[1], [0], [0], [1], [0, 0, 1, 1], [], []>} : vector<8x32xf32>, vector<32x16xf32>, vector<8x16xf32> -> vector<8x16xf32>
    %96 = arith.addf %93, %95 : vector<8x16xf32>
    %c32_101 = arith.constant 32 : index
    %c0_102 = arith.constant 0 : index
    %97 = vector.load %arg5[%c32_101, %c0_102] : memref<129x16xf32, #tpu.memory_space<vmem>>, vector<32x16xf32>
    %cst_103 = arith.constant dense<0.000000e+00> : vector<8x16xf32>
    %98 = tpu.matmul %82, %97, %cst_103 {dimension_numbers = #tpu.dot_dimension_numbers<[1], [0], [0], [1], [0, 0, 1, 1], [], []>} : vector<8x32xf32>, vector<32x16xf32>, vector<8x16xf32> -> vector<8x16xf32>
    %99 = arith.addf %96, %98 : vector<8x16xf32>
    %c64 = arith.constant 64 : index
    %c0_104 = arith.constant 0 : index
    %100 = vector.load %arg5[%c64, %c0_104] : memref<129x16xf32, #tpu.memory_space<vmem>>, vector<32x16xf32>
    %cst_105 = arith.constant dense<0.000000e+00> : vector<8x16xf32>
    %101 = tpu.matmul %71, %100, %cst_105 {dimension_numbers = #tpu.dot_dimension_numbers<[1], [0], [0], [1], [0, 0, 1, 1], [], []>} : vector<8x32xf32>, vector<32x16xf32>, vector<8x16xf32> -> vector<8x16xf32>
    %102 = arith.addf %99, %101 : vector<8x16xf32>
    %c96 = arith.constant 96 : index
    %c0_106 = arith.constant 0 : index
    %103 = vector.load %arg5[%c96, %c0_106] : memref<129x16xf32, #tpu.memory_space<vmem>>, vector<32x16xf32>
    %cst_107 = arith.constant dense<0.000000e+00> : vector<8x16xf32>
    %104 = tpu.matmul %90, %103, %cst_107 {dimension_numbers = #tpu.dot_dimension_numbers<[1], [0], [0], [1], [0, 0, 1, 1], [], []>} : vector<8x32xf32>, vector<32x16xf32>, vector<8x16xf32> -> vector<8x16xf32>
    %105 = arith.addf %102, %104 : vector<8x16xf32>
    %c0_108 = arith.constant 0 : index
    %c0_109 = arith.constant 0 : index
    %106 = vector.load %arg6[%c0_108, %c0_109] : memref<8x16xf32, #tpu.memory_space<vmem>>, vector<8x16xf32>
    tpu.vector_store %arg6[%c0_108, %c0_109], %105 {strides = array<i32>} : memref<8x16xf32, #tpu.memory_space<vmem>>, vector<8x16xf32>,
    return
  }
  func.func @transform_0(%arg0: i32) -> (i32, i32, i32) {
    %c0_i32 = arith.constant 0 : i32
    %c0_i32_0 = arith.constant 0 : i32
    %c0_i32_1 = arith.constant 0 : i32
    return %arg0, %c0_i32, %c0_i32_0 : i32, i32, i32
  }
  func.func @transform_1(%arg0: i32) -> (i32, i32) {
    %c0_i32 = arith.constant 0 : i32
    %c0_i32_0 = arith.constant 0 : i32
    return %arg0, %c0_i32 : i32, i32
  }
  func.func @transform_2(%arg0: i32) -> (i32, i32) {
    %c0_i32 = arith.constant 0 : i32
    %c0_i32_0 = arith.constant 0 : i32
    %c0_i32_1 = arith.constant 0 : i32
    return %c0_i32, %c0_i32_0 : i32, i32
  }
  func.func @transform_3(%arg0: i32) -> (i32, i32) {
    %c0_i32 = arith.constant 0 : i32
    %c0_i32_0 = arith.constant 0 : i32
    %c0_i32_1 = arith.constant 0 : i32
    return %c0_i32, %c0_i32_0 : i32, i32
  }
  func.func @transform_4(%arg0: i32) -> (i32, i32) {
    %c0_i32 = arith.constant 0 : i32
    %c0_i32_0 = arith.constant 0 : i32
    %c0_i32_1 = arith.constant 0 : i32
    return %c0_i32, %c0_i32_0 : i32, i32
  }
  func.func @transform_5(%arg0: i32) -> (i32, i32) {
    %c0_i32 = arith.constant 0 : i32
    %c0_i32_0 = arith.constant 0 : i32
    return %arg0, %c0_i32 : i32, i32
  }
}

</mosaic_0001>

<llo_original>
// kernel: tpu_custom_call.1
$region0: #{tpu_custom_call.1}
  #allocation0 [shape = 'u32[]', space=smem, size = 0x4, offset = 0x4, fixed_abs, tag = 'smem constant byte address 0x4 - core index']
  #allocation1 [shape = 'u32[144,128]{1,0:T(1,128)}', space=vmem, size = 0x12000, scoped, tag = 'internal scratch']
  %s0 = inlined_call_operand.vmem [shape: f32[16,96,4], index: 0, kind: input, shape index: {}]
  %s1 = inlined_call_operand.vmem [shape: f32[16,60], index: 1, kind: input, shape index: {}]
  %s2 = inlined_call_operand.vmem [shape: f32[129,32], index: 2, kind: input, shape index: {}]
  %s3 = inlined_call_operand.vmem [shape: f32[96,32], index: 3, kind: input, shape index: {}]
  %s4 = inlined_call_operand.vmem [shape: f32[129,16], index: 4, kind: input, shape index: {}]
  %s5 = inlined_call_operand.hbm [shape: f32[16,16], index: 5, kind: output, shape index: {}]
  %s6 = sld [smem:[#allocation0]]
  $region53: #{tpu_custom_call.1} parent=0
    _
  %s8 = ssub.s32 1, %s6
  %s9 = scalar_select 0, %s8, %s6
  $region1: #{tpu_custom_call.1} parent=0
    #allocation2 [shape = 'u8[8192]{0}', space=vmem, size = 0x2000, scoped, tag = 'output window, operand 0']
    #allocation3 [shape = 's32[2]{0}', space=sflag, size = 0x8, scoped, tag = 'scoped memory for tpu_custom_call.1']
    %10 = vsyncpa [#allocation3], 0
    %s11 = scalar_lea.sflag [#allocation3], 1
    %12 = vsyncpa %s11, 0
    loop: start=0, step=1, limit=4
    $region2: #{tpu_custom_call.1} parent=1 // loop_pre_header
      _
    $region3: #{tpu_custom_call.1} parent=1 // loop_header
      %s14 = sphi 0, %s18
      %p15 = scmp.ge.s32.totalorder %s14, 4
      %s24 = sphi 0, %s26
      %s27 = sphi 0, %s24
      %s28 = sphi 0, %s27
      %s44 = sphi 0, %s28
      %s50 = sphi 0, %s52
      %s53 = sphi 0, %s50
      %s54 = sphi 0, %s53
      %s70 = sphi 0, %s54
      %s74 = sphi 0, %s74
      %s76 = sphi 0, %s74
      %s77 = sphi 0, %s76
      %s91 = sphi 0, %s77
      %s95 = sphi 0, %s95
      %s97 = sphi 0, %s95
      %s98 = sphi 0, %s97
      %s112 = sphi 0, %s98
      %s116 = sphi 0, %s116
      %s118 = sphi 0, %s116
      %s119 = sphi 0, %s118
      %s133 = sphi 0, %s119
      %s139 = sphi 0, %s141
      %s142 = sphi 0, %s139
      %s143 = sphi 0, %s142
      %s159 = sphi 0, %s143
    $region4: #{tpu_custom_call.1} parent=1 // loop_header_branch
      %17 = sbr.rel (%p15) target = $region8
    $region5: #{tpu_custom_call.1} parent=1 // loop_body
      %s19 = ssub.s32 %s14, 1
      %s20 = ssub.s32 %s14, 2
      %s21 = sadd.s32 %s14, 1
      %s22 = ssub.s32 %s14, %s21
      %p23 = scmp.eq.s32.totalorder %s22, 0
      %s25 = sadd.s32 %s24, 1
      %s26 = scalar_select %p23, %s24, %s25
      %p29 = pneg %p23
      %p30 = scmp.eq.s32.totalorder %s14, 1
      %p31 = por %p29, %p30
      %p32 = scmp.ne.s32.totalorder %s24, %s27
      %p33 = scmp.eq.s32.totalorder %s14, 0
      %p34 = por %p32, %p33
      %p35 = scmp.ne.s32.totalorder %s24, %s27
      %p36 = scmp.eq.s32.totalorder %s19, 1
      %p37 = por %p35, %p36
      %p38 = scmp.ne.s32.totalorder %s27, %s28
      %p39 = scmp.eq.s32.totalorder %s19, 0
      %p40 = por %p38, %p39
      %p41 = scmp.ne.s32.totalorder %s27, %s28
      %p42 = scmp.eq.s32.totalorder %s20, 1
      %p43 = por %p41, %p42
      %p45 = scmp.ne.s32.totalorder %s28, %s44
      %p46 = scmp.eq.s32.totalorder %s20, 0
      %p47 = por %p45, %p46
      %s48 = ssub.s32 %s14, %s21
      %p49 = scmp.eq.s32.totalorder %s48, 0
      %s51 = sadd.s32 %s50, 1
      %s52 = scalar_select %p49, %s50, %s51
      %p55 = pneg %p49
      %p56 = scmp.eq.s32.totalorder %s14, 1
      %p57 = por %p55, %p56
      %p58 = scmp.ne.s32.totalorder %s50, %s53
      %p59 = scmp.eq.s32.totalorder %s14, 0
      %p60 = por %p58, %p59
      %p61 = scmp.ne.s32.totalorder %s50, %s53
      %p62 = scmp.eq.s32.totalorder %s19, 1
      %p63 = por %p61, %p62
      %p64 = scmp.ne.s32.totalorder %s53, %s54
      %p65 = scmp.eq.s32.totalorder %s19, 0
      %p66 = por %p64, %p65
      %p67 = scmp.ne.s32.totalorder %s53, %s54
      %p68 = scmp.eq.s32.totalorder %s20, 1
      %p69 = por %p67, %p68
      %p71 = scmp.ne.s32.totalorder %s54, %s70
      %p72 = scmp.eq.s32.totalorder %s20, 0
      %p73 = por %p71, %p72
      %s75 = sadd.s32 %s74, 1
      %p78 = scmp.eq.s32.totalorder %s14, 1
      %p79 = scmp.ne.s32.totalorder %s74, %s76
      %p80 = scmp.eq.s32.totalorder %s14, 0
      %p81 = por %p79, %p80
      %p82 = scmp.ne.s32.totalorder %s74, %s76
      %p83 = scmp.eq.s32.totalorder %s19, 1
      %p84 = por %p82, %p83
      %p85 = scmp.ne.s32.totalorder %s76, %s77
      %p86 = scmp.eq.s32.totalorder %s19, 0
      %p87 = por %p85, %p86
      %p88 = scmp.ne.s32.totalorder %s76, %s77
      %p89 = scmp.eq.s32.totalorder %s20, 1
      %p90 = por %p88, %p89
      %p92 = scmp.ne.s32.totalorder %s77, %s91
      %p93 = scmp.eq.s32.totalorder %s20, 0
      %p94 = por %p92, %p93
      %s96 = sadd.s32 %s95, 1
      %p99 = scmp.eq.s32.totalorder %s14, 1
      %p100 = scmp.ne.s32.totalorder %s95, %s97
      %p101 = scmp.eq.s32.totalorder %s14, 0
      %p102 = por %p100, %p101
      %p103 = scmp.ne.s32.totalorder %s95, %s97
      %p104 = scmp.eq.s32.totalorder %s19, 1
      %p105 = por %p103, %p104
      %p106 = scmp.ne.s32.totalorder %s97, %s98
      %p107 = scmp.eq.s32.totalorder %s19, 0
      %p108 = por %p106, %p107
      %p109 = scmp.ne.s32.totalorder %s97, %s98
      %p110 = scmp.eq.s32.totalorder %s20, 1
      %p111 = por %p109, %p110
      %p113 = scmp.ne.s32.totalorder %s98, %s112
      %p114 = scmp.eq.s32.totalorder %s20, 0
      %p115 = por %p113, %p114
      %s117 = sadd.s32 %s116, 1
      %p120 = scmp.eq.s32.totalorder %s14, 1
      %p121 = scmp.ne.s32.totalorder %s116, %s118
      %p122 = scmp.eq.s32.totalorder %s14, 0
      %p123 = por %p121, %p122
      %p124 = scmp.ne.s32.totalorder %s116, %s118
      %p125 = scmp.eq.s32.totalorder %s19, 1
      %p126 = por %p124, %p125
      %p127 = scmp.ne.s32.totalorder %s118, %s119
      %p128 = scmp.eq.s32.totalorder %s19, 0
      %p129 = por %p127, %p128
      %p130 = scmp.ne.s32.totalorder %s118, %s119
      %p131 = scmp.eq.s32.totalorder %s20, 1
      %p132 = por %p130, %p131
      %p134 = scmp.ne.s32.totalorder %s119, %s133
      %p135 = scmp.eq.s32.totalorder %s20, 0
      %p136 = por %p134, %p135
      %s137 = ssub.s32 %s14, %s21
      %p138 = scmp.eq.s32.totalorder %s137, 0
      %s140 = sadd.s32 %s139, 1
      %s141 = scalar_select %p138, %s139, %s140
      %p144 = pneg %p138
      %p145 = scmp.eq.s32.totalorder %s14, 1
      %p146 = por %p144, %p145
      %p147 = scmp.ne.s32.totalorder %s139, %s142
      %p148 = scmp.eq.s32.totalorder %s14, 0
      %p149 = por %p147, %p148
      %p150 = scmp.ne.s32.totalorder %s139, %s142
      %p151 = scmp.eq.s32.totalorder %s19, 1
      %p152 = por %p150, %p151
      %p153 = scmp.ne.s32.totalorder %s142, %s143
      %p154 = scmp.eq.s32.totalorder %s19, 0
      %p155 = por %p153, %p154
      %p156 = scmp.ne.s32.totalorder %s142, %s143
      %p157 = scmp.eq.s32.totalorder %s20, 1
      %p158 = por %p156, %p157
      %p160 = scmp.ne.s32.totalorder %s143, %s159
      %p161 = scmp.eq.s32.totalorder %s20, 0
      %p162 = por %p160, %p161
      %p163 = scmp.le.s32.totalorder 1, %s14
      %p164 = scmp.lt.s32.totalorder %s14, 3
      %p165 = pnand %p163, %p164
      %p166 = pneg %p165
      // Predicated region
      $region9: #{tpu_custom_call.1} parent=5 // pred_check
        _
      $region10: #{tpu_custom_call.1} parent=5 // pred_check_branch
        %168 = sbr.rel (%p165) target = $region12
      $region11: #{tpu_custom_call.1} parent=5 // pred_region
        %s169 = ssub.s32 %s14, 1
        // Predicated region
        $region13: #{tpu_custom_call.1} parent=11 // pred_check
          %p170 = pneg %p87
        $region14: #{tpu_custom_call.1} parent=11 // pred_check_branch
          %172 = sbr.rel (%p170) target = $region16
        $region15: #{tpu_custom_call.1} parent=11 // pred_region
          _
        $region16: #{tpu_custom_call.1} parent=11 // pred_fallthru
          _
        // Predicated region
        $region17: #{tpu_custom_call.1} parent=11 // pred_check
          %p173 = pneg %p108
        $region18: #{tpu_custom_call.1} parent=11 // pred_check_branch
          %175 = sbr.rel (%p173) target = $region20
        $region19: #{tpu_custom_call.1} parent=11 // pred_region
          _
        $region20: #{tpu_custom_call.1} parent=11 // pred_fallthru
          _
        // Predicated region
        $region21: #{tpu_custom_call.1} parent=11 // pred_check
          %p176 = pneg %p129
        $region22: #{tpu_custom_call.1} parent=11 // pred_check_branch
          %178 = sbr.rel (%p176) target = $region24
        $region23: #{tpu_custom_call.1} parent=11 // pred_region
          _
        $region24: #{tpu_custom_call.1} parent=11 // pred_fallthru
          _
      $region12: #{tpu_custom_call.1} parent=5 // pred_fallthru
        _
      %p179 = scmp.lt.s32.totalorder %s14, 2
      // Predicated region
      $region25: #{tpu_custom_call.1} parent=5 // pred_check
        %p180 = pneg %p179
      $region26: #{tpu_custom_call.1} parent=5 // pred_check_branch
        %182 = sbr.rel (%p180) target = $region28
      $region27: #{tpu_custom_call.1} parent=5 // pred_region
        // Predicated region
        $region29: #{tpu_custom_call.1} parent=27 // pred_check
          %p183 = pneg %p34
        $region30: #{tpu_custom_call.1} parent=27 // pred_check_branch
          %185 = sbr.rel (%p183) target = $region32
        $region31: #{tpu_custom_call.1} parent=27 // pred_region
          %s186 = smul.u32 8, %s14
          %p187 = scmp.lt.s32.totalorder %s186, 15
          %s188 = scalar_select %p187, %s186, 15
          %s189 = smul.addr %s188, 12
          %s190 = smul.addr %s189, 8
          %s191 = scalar_lea.vmem %s0, %s190
          %s192 = smul.u32 8, %s14
        $region32: #{tpu_custom_call.1} parent=27 // pred_fallthru
          _
        // Predicated region
        $region33: #{tpu_custom_call.1} parent=27 // pred_check
          %p193 = pneg %p60
        $region34: #{tpu_custom_call.1} parent=27 // pred_check_branch
          %195 = sbr.rel (%p193) target = $region36
        $region35: #{tpu_custom_call.1} parent=27 // pred_region
          %p196 = scmp.lt.s32.totalorder %s14, 1
          %s197 = scalar_select %p196, %s14, 1
          %s198 = smul.addr %s197, 8
          %s199 = scalar_lea.vmem %s1, %s198
        $region36: #{tpu_custom_call.1} parent=27 // pred_fallthru
          _
      $region28: #{tpu_custom_call.1} parent=5 // pred_fallthru
        _
      %p200 = scmp.le.s32.totalorder 1, %s14
      %p201 = scmp.lt.s32.totalorder %s14, 3
      %p202 = pnand %p200, %p201
      %p203 = pneg %p202
      // Predicated region
      $region37: #{tpu_custom_call.1} parent=5 // pred_check
        _
      $region38: #{tpu_custom_call.1} parent=5 // pred_check_branch
        %205 = sbr.rel (%p202) target = $region40
      $region39: #{tpu_custom_call.1} parent=5 // pred_region
        %s206 = ssub.s32 %s14, 1
        %s207 = smul.u32 8, %s19
        %p208 = scmp.lt.s32.totalorder %s207, 15
        %s209 = scalar_select %p208, %s207, 15
        %s210 = smul.addr %s209, 12
        %s211 = smul.addr %s210, 8
        %s212 = scalar_lea.vmem %s0, %s211
        %p213 = pneg %p40
        %p214 = pneg %p37
        %p215 = scmp.lt.s32.totalorder %s19, 1
        %s216 = scalar_select %p215, %s19, 1
        %s217 = smul.addr %s216, 8
        %s218 = scalar_lea.vmem %s1, %s217
        %p219 = pneg %p66
        %p220 = pneg %p63
        %p221 = pneg %p87
        %p222 = pneg %p84
        %p223 = pneg %p108
        %p224 = pneg %p105
        %p225 = pneg %p129
        %p226 = pneg %p126
        %p227 = pneg %p155
        %p228 = pneg %p152
        %s229 = sand.u32 %s142, 1
        %s230 = scalar_lea.sflag [#allocation3], %s229
        %s231 = sand.u32 %s142, 1
        %s232 = smul.addr %s231, 8
        %s233 = scalar_lea.vmem [#allocation2], %s232
        %s234 = smul.u32 8, %s19
        %p235 = scmp.lt.s32.totalorder %s234, 15
        %s236 = scalar_select %p235, %s234, 15
        %s237 = smul.addr %s236, 12
        %s238 = smul.addr %s237, 8
        %s239 = scalar_lea.vmem %s0, %s238
        %s240 = smul.u32 8, %s19
        %p241 = scmp.lt.s32.totalorder %s19, 1
        %s242 = scalar_select %p241, %s19, 1
        %s243 = smul.addr %s242, 8
        %s244 = scalar_lea.vmem %s1, %s243
        %v245 = vld [vmem:[%s239] sm:$0xff]
        %v246 = vld [vmem:[%s239 + $0x8] sm:$0xff]
        %v247 = vld [vmem:[%s239 + $0x10] sm:$0xff]
        %v248 = vld [vmem:[%s239 + $0x18] sm:$0xff]
        %v249 = vld [vmem:[%s239 + $0x20] sm:$0xff]
        %v250 = vld [vmem:[%s239 + $0x28] sm:$0xff]
        %v251 = vld [vmem:[%s239 + $0x30] sm:$0xff]
        %v252 = vld [vmem:[%s239 + $0x38] sm:$0xff]
        %v253 = vld [vmem:[%s239 + $0x60] sm:$0xff]
        %v254 = vld [vmem:[%s239 + $0x68] sm:$0xff]
        %v255 = vld [vmem:[%s239 + $0x70] sm:$0xff]
        %v256 = vld [vmem:[%s239 + $0x78] sm:$0xff]
        %v257 = vld [vmem:[%s239 + $0x80] sm:$0xff]
        %v258 = vld [vmem:[%s239 + $0x88] sm:$0xff]
        %v259 = vld [vmem:[%s239 + $0x90] sm:$0xff]
        %v260 = vld [vmem:[%s239 + $0x98] sm:$0xff]
        %v261 = vld [vmem:[%s239 + $0xc0] sm:$0xff]
        %v262 = vld [vmem:[%s239 + $0xc8] sm:$0xff]
        %v263 = vld [vmem:[%s239 + $0xd0] sm:$0xff]
        %v264 = vld [vmem:[%s239 + $0xd8] sm:$0xff]
        %v265 = vld [vmem:[%s239 + $0xe0] sm:$0xff]
        %v266 = vld [vmem:[%s239 + $0xe8] sm:$0xff]
        %v267 = vld [vmem:[%s239 + $0xf0] sm:$0xff]
        %v268 = vld [vmem:[%s239 + $0xf8] sm:$0xff]
        %v269 = vld [vmem:[%s239 + $0x120] sm:$0xff]
        %v270 = vld [vmem:[%s239 + $0x128] sm:$0xff]
        %v271 = vld [vmem:[%s239 + $0x130] sm:$0xff]
        %v272 = vld [vmem:[%s239 + $0x138] sm:$0xff]
        %v273 = vld [vmem:[%s239 + $0x140] sm:$0xff]
        %v274 = vld [vmem:[%s239 + $0x148] sm:$0xff]
        %v275 = vld [vmem:[%s239 + $0x150] sm:$0xff]
        %v276 = vld [vmem:[%s239 + $0x158] sm:$0xff]
        %v277 = vld [vmem:[%s239 + $0x180] sm:$0xff]
        %v278 = vld [vmem:[%s239 + $0x188] sm:$0xff]
        %v279 = vld [vmem:[%s239 + $0x190] sm:$0xff]
        %v280 = vld [vmem:[%s239 + $0x198] sm:$0xff]
        %v281 = vld [vmem:[%s239 + $0x1a0] sm:$0xff]
        %v282 = vld [vmem:[%s239 + $0x1a8] sm:$0xff]
        %v283 = vld [vmem:[%s239 + $0x1b0] sm:$0xff]
        %v284 = vld [vmem:[%s239 + $0x1b8] sm:$0xff]
        %v285 = vld [vmem:[%s239 + $0x1e0] sm:$0xff]
        %v286 = vld [vmem:[%s239 + $0x1e8] sm:$0xff]
        %v287 = vld [vmem:[%s239 + $0x1f0] sm:$0xff]
        %v288 = vld [vmem:[%s239 + $0x1f8] sm:$0xff]
        %v289 = vld [vmem:[%s239 + $0x200] sm:$0xff]
        %v290 = vld [vmem:[%s239 + $0x208] sm:$0xff]
        %v291 = vld [vmem:[%s239 + $0x210] sm:$0xff]
        %v292 = vld [vmem:[%s239 + $0x218] sm:$0xff]
        %v293 = vld [vmem:[%s239 + $0x240] sm:$0xff]
        %v294 = vld [vmem:[%s239 + $0x248] sm:$0xff]
        %v295 = vld [vmem:[%s239 + $0x250] sm:$0xff]
        %v296 = vld [vmem:[%s239 + $0x258] sm:$0xff]
        %v297 = vld [vmem:[%s239 + $0x260] sm:$0xff]
        %v298 = vld [vmem:[%s239 + $0x268] sm:$0xff]
        %v299 = vld [vmem:[%s239 + $0x270] sm:$0xff]
        %v300 = vld [vmem:[%s239 + $0x278] sm:$0xff]
        %v301 = vld [vmem:[%s239 + $0x2a0] sm:$0xff]
        %v302 = vld [vmem:[%s239 + $0x2a8] sm:$0xff]
        %v303 = vld [vmem:[%s239 + $0x2b0] sm:$0xff]
        %v304 = vld [vmem:[%s239 + $0x2b8] sm:$0xff]
        %v305 = vld [vmem:[%s239 + $0x2c0] sm:$0xff]
        %v306 = vld [vmem:[%s239 + $0x2c8] sm:$0xff]
        %v307 = vld [vmem:[%s239 + $0x2d0] sm:$0xff]
        %v308 = vld [vmem:[%s239 + $0x2d8] sm:$0xff]
        %v309 = vld [vmem:[%s239 + $0x1] sm:$0xff]
        %v310 = vld [vmem:[%s239 + $0x9] sm:$0xff]
        %v311 = vld [vmem:[%s239 + $0x11] sm:$0xff]
        %v312 = vld [vmem:[%s239 + $0x19] sm:$0xff]
        %v313 = vld [vmem:[%s239 + $0x21] sm:$0xff]
        %v314 = vld [vmem:[%s239 + $0x29] sm:$0xff]
        %v315 = vld [vmem:[%s239 + $0x31] sm:$0xff]
        %v316 = vld [vmem:[%s239 + $0x39] sm:$0xff]
        %v317 = vld [vmem:[%s239 + $0x61] sm:$0xff]
        %v318 = vld [vmem:[%s239 + $0x69] sm:$0xff]
        %v319 = vld [vmem:[%s239 + $0x71] sm:$0xff]
        %v320 = vld [vmem:[%s239 + $0x79] sm:$0xff]
        %v321 = vld [vmem:[%s239 + $0x81] sm:$0xff]
        %v322 = vld [vmem:[%s239 + $0x89] sm:$0xff]
        %v323 = vld [vmem:[%s239 + $0x91] sm:$0xff]
        %v324 = vld [vmem:[%s239 + $0x99] sm:$0xff]
        %v325 = vld [vmem:[%s239 + $0xc1] sm:$0xff]
        %v326 = vld [vmem:[%s239 + $0xc9] sm:$0xff]
        %v327 = vld [vmem:[%s239 + $0xd1] sm:$0xff]
        %v328 = vld [vmem:[%s239 + $0xd9] sm:$0xff]
        %v329 = vld [vmem:[%s239 + $0xe1] sm:$0xff]
        %v330 = vld [vmem:[%s239 + $0xe9] sm:$0xff]
        %v331 = vld [vmem:[%s239 + $0xf1] sm:$0xff]
        %v332 = vld [vmem:[%s239 + $0xf9] sm:$0xff]
        %v333 = vld [vmem:[%s239 + $0x121] sm:$0xff]
        %v334 = vld [vmem:[%s239 + $0x129] sm:$0xff]
        %v335 = vld [vmem:[%s239 + $0x131] sm:$0xff]
        %v336 = vld [vmem:[%s239 + $0x139] sm:$0xff]
        %v337 = vld [vmem:[%s239 + $0x141] sm:$0xff]
        %v338 = vld [vmem:[%s239 + $0x149] sm:$0xff]
        %v339 = vld [vmem:[%s239 + $0x151] sm:$0xff]
        %v340 = vld [vmem:[%s239 + $0x159] sm:$0xff]
        %v341 = vld [vmem:[%s239 + $0x181] sm:$0xff]
        %v342 = vld [vmem:[%s239 + $0x189] sm:$0xff]
        %v343 = vld [vmem:[%s239 + $0x191] sm:$0xff]
        %v344 = vld [vmem:[%s239 + $0x199] sm:$0xff]
        %v345 = vld [vmem:[%s239 + $0x1a1] sm:$0xff]
        %v346 = vld [vmem:[%s239 + $0x1a9] sm:$0xff]
        %v347 = vld [vmem:[%s239 + $0x1b1] sm:$0xff]
        %v348 = vld [vmem:[%s239 + $0x1b9] sm:$0xff]
        %v349 = vld [vmem:[%s239 + $0x1e1] sm:$0xff]
        %v350 = vld [vmem:[%s239 + $0x1e9] sm:$0xff]
        %v351 = vld [vmem:[%s239 + $0x1f1] sm:$0xff]
        %v352 = vld [vmem:[%s239 + $0x1f9] sm:$0xff]
        %v353 = vld [vmem:[%s239 + $0x201] sm:$0xff]
        %v354 = vld [vmem:[%s239 + $0x209] sm:$0xff]
        %v355 = vld [vmem:[%s239 + $0x211] sm:$0xff]
        %v356 = vld [vmem:[%s239 + $0x219] sm:$0xff]
        %v357 = vld [vmem:[%s239 + $0x241] sm:$0xff]
        %v358 = vld [vmem:[%s239 + $0x249] sm:$0xff]
        %v359 = vld [vmem:[%s239 + $0x251] sm:$0xff]
        %v360 = vld [vmem:[%s239 + $0x259] sm:$0xff]
        %v361 = vld [vmem:[%s239 + $0x261] sm:$0xff]
        %v362 = vld [vmem:[%s239 + $0x269] sm:$0xff]
        %v363 = vld [vmem:[%s239 + $0x271] sm:$0xff]
        %v364 = vld [vmem:[%s239 + $0x279] sm:$0xff]
        %v365 = vld [vmem:[%s239 + $0x2a1] sm:$0xff]
        %v366 = vld [vmem:[%s239 + $0x2a9] sm:$0xff]
        %v367 = vld [vmem:[%s239 + $0x2b1] sm:$0xff]
        %v368 = vld [vmem:[%s239 + $0x2b9] sm:$0xff]
        %v369 = vld [vmem:[%s239 + $0x2c1] sm:$0xff]
        %v370 = vld [vmem:[%s239 + $0x2c9] sm:$0xff]
        %v371 = vld [vmem:[%s239 + $0x2d1] sm:$0xff]
        %v372 = vld [vmem:[%s239 + $0x2d9] sm:$0xff]
        %v373 = vld [vmem:[%s239 + $0x2] sm:$0xff]
        %v374 = vld [vmem:[%s239 + $0xa] sm:$0xff]
        %v375 = vld [vmem:[%s239 + $0x12] sm:$0xff]
        %v376 = vld [vmem:[%s239 + $0x1a] sm:$0xff]
        %v377 = vld [vmem:[%s239 + $0x22] sm:$0xff]
        %v378 = vld [vmem:[%s239 + $0x2a] sm:$0xff]
        %v379 = vld [vmem:[%s239 + $0x32] sm:$0xff]
        %v380 = vld [vmem:[%s239 + $0x3a] sm:$0xff]
        %v381 = vld [vmem:[%s239 + $0x62] sm:$0xff]
        %v382 = vld [vmem:[%s239 + $0x6a] sm:$0xff]
        %v383 = vld [vmem:[%s239 + $0x72] sm:$0xff]
        %v384 = vld [vmem:[%s239 + $0x7a] sm:$0xff]
        %v385 = vld [vmem:[%s239 + $0x82] sm:$0xff]
        %v386 = vld [vmem:[%s239 + $0x8a] sm:$0xff]
        %v387 = vld [vmem:[%s239 + $0x92] sm:$0xff]
        %v388 = vld [vmem:[%s239 + $0x9a] sm:$0xff]
        %v389 = vld [vmem:[%s239 + $0xc2] sm:$0xff]
        %v390 = vld [vmem:[%s239 + $0xca] sm:$0xff]
        %v391 = vld [vmem:[%s239 + $0xd2] sm:$0xff]
        %v392 = vld [vmem:[%s239 + $0xda] sm:$0xff]
        %v393 = vld [vmem:[%s239 + $0xe2] sm:$0xff]
        %v394 = vld [vmem:[%s239 + $0xea] sm:$0xff]
        %v395 = vld [vmem:[%s239 + $0xf2] sm:$0xff]
        %v396 = vld [vmem:[%s239 + $0xfa] sm:$0xff]
        %v397 = vld [vmem:[%s239 + $0x122] sm:$0xff]
        %v398 = vld [vmem:[%s239 + $0x12a] sm:$0xff]
        %v399 = vld [vmem:[%s239 + $0x132] sm:$0xff]
        %v400 = vld [vmem:[%s239 + $0x13a] sm:$0xff]
        %v401 = vld [vmem:[%s239 + $0x142] sm:$0xff]
        %v402 = vld [vmem:[%s239 + $0x14a] sm:$0xff]
        %v403 = vld [vmem:[%s239 + $0x152] sm:$0xff]
        %v404 = vld [vmem:[%s239 + $0x15a] sm:$0xff]
        %v405 = vld [vmem:[%s239 + $0x182] sm:$0xff]
        %v406 = vld [vmem:[%s239 + $0x18a] sm:$0xff]
        %v407 = vld [vmem:[%s239 + $0x192] sm:$0xff]
        %v408 = vld [vmem:[%s239 + $0x19a] sm:$0xff]
        %v409 = vld [vmem:[%s239 + $0x1a2] sm:$0xff]
        %v410 = vld [vmem:[%s239 + $0x1aa] sm:$0xff]
        %v411 = vld [vmem:[%s239 + $0x1b2] sm:$0xff]
        %v412 = vld [vmem:[%s239 + $0x1ba] sm:$0xff]
        %v413 = vld [vmem:[%s239 + $0x1e2] sm:$0xff]
        %v414 = vld [vmem:[%s239 + $0x1ea] sm:$0xff]
        %v415 = vld [vmem:[%s239 + $0x1f2] sm:$0xff]
        %v416 = vld [vmem:[%s239 + $0x1fa] sm:$0xff]
        %v417 = vld [vmem:[%s239 + $0x202] sm:$0xff]
        %v418 = vld [vmem:[%s239 + $0x20a] sm:$0xff]
        %v419 = vld [vmem:[%s239 + $0x212] sm:$0xff]
        %v420 = vld [vmem:[%s239 + $0x21a] sm:$0xff]
        %v421 = vld [vmem:[%s239 + $0x242] sm:$0xff]
        %v422 = vld [vmem:[%s239 + $0x24a] sm:$0xff]
        %v423 = vld [vmem:[%s239 + $0x252] sm:$0xff]
        %v424 = vld [vmem:[%s239 + $0x25a] sm:$0xff]
        %v425 = vld [vmem:[%s239 + $0x262] sm:$0xff]
        %v426 = vld [vmem:[%s239 + $0x26a] sm:$0xff]
        %v427 = vld [vmem:[%s239 + $0x272] sm:$0xff]
        %v428 = vld [vmem:[%s239 + $0x27a] sm:$0xff]
        %v429 = vld [vmem:[%s239 + $0x2a2] sm:$0xff]
        %v430 = vld [vmem:[%s239 + $0x2aa] sm:$0xff]
        %v431 = vld [vmem:[%s239 + $0x2b2] sm:$0xff]
        %v432 = vld [vmem:[%s239 + $0x2ba] sm:$0xff]
        %v433 = vld [vmem:[%s239 + $0x2c2] sm:$0xff]
        %v434 = vld [vmem:[%s239 + $0x2ca] sm:$0xff]
        %v435 = vld [vmem:[%s239 + $0x2d2] sm:$0xff]
        %v436 = vld [vmem:[%s239 + $0x2da] sm:$0xff]
        %v437 = vld [vmem:[%s239 + $0x3] sm:$0xff]
        %v438 = vld [vmem:[%s239 + $0xb] sm:$0xff]
        %v439 = vld [vmem:[%s239 + $0x13] sm:$0xff]
        %v440 = vld [vmem:[%s239 + $0x1b] sm:$0xff]
        %v441 = vld [vmem:[%s239 + $0x23] sm:$0xff]
        %v442 = vld [vmem:[%s239 + $0x2b] sm:$0xff]
        %v443 = vld [vmem:[%s239 + $0x33] sm:$0xff]
        %v444 = vld [vmem:[%s239 + $0x3b] sm:$0xff]
        %v445 = vld [vmem:[%s239 + $0x63] sm:$0xff]
        %v446 = vld [vmem:[%s239 + $0x6b] sm:$0xff]
        %v447 = vld [vmem:[%s239 + $0x73] sm:$0xff]
        %v448 = vld [vmem:[%s239 + $0x7b] sm:$0xff]
        %v449 = vld [vmem:[%s239 + $0x83] sm:$0xff]
        %v450 = vld [vmem:[%s239 + $0x8b] sm:$0xff]
        %v451 = vld [vmem:[%s239 + $0x93] sm:$0xff]
        %v452 = vld [vmem:[%s239 + $0x9b] sm:$0xff]
        %v453 = vld [vmem:[%s239 + $0xc3] sm:$0xff]
        %v454 = vld [vmem:[%s239 + $0xcb] sm:$0xff]
        %v455 = vld [vmem:[%s239 + $0xd3] sm:$0xff]
        %v456 = vld [vmem:[%s239 + $0xdb] sm:$0xff]
        %v457 = vld [vmem:[%s239 + $0xe3] sm:$0xff]
        %v458 = vld [vmem:[%s239 + $0xeb] sm:$0xff]
        %v459 = vld [vmem:[%s239 + $0xf3] sm:$0xff]
        %v460 = vld [vmem:[%s239 + $0xfb] sm:$0xff]
        %v461 = vld [vmem:[%s239 + $0x123] sm:$0xff]
        %v462 = vld [vmem:[%s239 + $0x12b] sm:$0xff]
        %v463 = vld [vmem:[%s239 + $0x133] sm:$0xff]
        %v464 = vld [vmem:[%s239 + $0x13b] sm:$0xff]
        %v465 = vld [vmem:[%s239 + $0x143] sm:$0xff]
        %v466 = vld [vmem:[%s239 + $0x14b] sm:$0xff]
        %v467 = vld [vmem:[%s239 + $0x153] sm:$0xff]
        %v468 = vld [vmem:[%s239 + $0x15b] sm:$0xff]
        %v469 = vld [vmem:[%s239 + $0x183] sm:$0xff]
        %v470 = vld [vmem:[%s239 + $0x18b] sm:$0xff]
        %v471 = vld [vmem:[%s239 + $0x193] sm:$0xff]
        %v472 = vld [vmem:[%s239 + $0x19b] sm:$0xff]
        %v473 = vld [vmem:[%s239 + $0x1a3] sm:$0xff]
        %v474 = vld [vmem:[%s239 + $0x1ab] sm:$0xff]
        %v475 = vld [vmem:[%s239 + $0x1b3] sm:$0xff]
        %v476 = vld [vmem:[%s239 + $0x1bb] sm:$0xff]
        %v477 = vld [vmem:[%s239 + $0x1e3] sm:$0xff]
        %v478 = vld [vmem:[%s239 + $0x1eb] sm:$0xff]
        %v479 = vld [vmem:[%s239 + $0x1f3] sm:$0xff]
        %v480 = vld [vmem:[%s239 + $0x1fb] sm:$0xff]
        %v481 = vld [vmem:[%s239 + $0x203] sm:$0xff]
        %v482 = vld [vmem:[%s239 + $0x20b] sm:$0xff]
        %v483 = vld [vmem:[%s239 + $0x213] sm:$0xff]
        %v484 = vld [vmem:[%s239 + $0x21b] sm:$0xff]
        %v485 = vld [vmem:[%s239 + $0x243] sm:$0xff]
        %v486 = vld [vmem:[%s239 + $0x24b] sm:$0xff]
        %v487 = vld [vmem:[%s239 + $0x253] sm:$0xff]
        %v488 = vld [vmem:[%s239 + $0x25b] sm:$0xff]
        %v489 = vld [vmem:[%s239 + $0x263] sm:$0xff]
        %v490 = vld [vmem:[%s239 + $0x26b] sm:$0xff]
        %v491 = vld [vmem:[%s239 + $0x273] sm:$0xff]
        %v492 = vld [vmem:[%s239 + $0x27b] sm:$0xff]
        %v493 = vld [vmem:[%s239 + $0x2a3] sm:$0xff]
        %v494 = vld [vmem:[%s239 + $0x2ab] sm:$0xff]
        %v495 = vld [vmem:[%s239 + $0x2b3] sm:$0xff]
        %v496 = vld [vmem:[%s239 + $0x2bb] sm:$0xff]
        %v497 = vld [vmem:[%s239 + $0x2c3] sm:$0xff]
        %v498 = vld [vmem:[%s239 + $0x2cb] sm:$0xff]
        %v499 = vld [vmem:[%s239 + $0x2d3] sm:$0xff]
        %v500 = vld [vmem:[%s239 + $0x2db] sm:$0xff]
        %v501 = vld [vmem:[%s239 + $0x4] sm:$0xff]
        %v502 = vld [vmem:[%s239 + $0xc] sm:$0xff]
        %v503 = vld [vmem:[%s239 + $0x14] sm:$0xff]
        %v504 = vld [vmem:[%s239 + $0x1c] sm:$0xff]
        %v505 = vld [vmem:[%s239 + $0x24] sm:$0xff]
        %v506 = vld [vmem:[%s239 + $0x2c] sm:$0xff]
        %v507 = vld [vmem:[%s239 + $0x34] sm:$0xff]
        %v508 = vld [vmem:[%s239 + $0x3c] sm:$0xff]
        %v509 = vld [vmem:[%s239 + $0x64] sm:$0xff]
        %v510 = vld [vmem:[%s239 + $0x6c] sm:$0xff]
        %v511 = vld [vmem:[%s239 + $0x74] sm:$0xff]
        %v512 = vld [vmem:[%s239 + $0x7c] sm:$0xff]
        %v513 = vld [vmem:[%s239 + $0x84] sm:$0xff]
        %v514 = vld [vmem:[%s239 + $0x8c] sm:$0xff]
        %v515 = vld [vmem:[%s239 + $0x94] sm:$0xff]
        %v516 = vld [vmem:[%s239 + $0x9c] sm:$0xff]
        %v517 = vld [vmem:[%s239 + $0xc4] sm:$0xff]
        %v518 = vld [vmem:[%s239 + $0xcc] sm:$0xff]
        %v519 = vld [vmem:[%s239 + $0xd4] sm:$0xff]
        %v520 = vld [vmem:[%s239 + $0xdc] sm:$0xff]
        %v521 = vld [vmem:[%s239 + $0xe4] sm:$0xff]
        %v522 = vld [vmem:[%s239 + $0xec] sm:$0xff]
        %v523 = vld [vmem:[%s239 + $0xf4] sm:$0xff]
        %v524 = vld [vmem:[%s239 + $0xfc] sm:$0xff]
        %v525 = vld [vmem:[%s239 + $0x124] sm:$0xff]
        %v526 = vld [vmem:[%s239 + $0x12c] sm:$0xff]
        %v527 = vld [vmem:[%s239 + $0x134] sm:$0xff]
        %v528 = vld [vmem:[%s239 + $0x13c] sm:$0xff]
        %v529 = vld [vmem:[%s239 + $0x144] sm:$0xff]
        %v530 = vld [vmem:[%s239 + $0x14c] sm:$0xff]
        %v531 = vld [vmem:[%s239 + $0x154] sm:$0xff]
        %v532 = vld [vmem:[%s239 + $0x15c] sm:$0xff]
        %v533 = vld [vmem:[%s239 + $0x184] sm:$0xff]
        %v534 = vld [vmem:[%s239 + $0x18c] sm:$0xff]
        %v535 = vld [vmem:[%s239 + $0x194] sm:$0xff]
        %v536 = vld [vmem:[%s239 + $0x19c] sm:$0xff]
        %v537 = vld [vmem:[%s239 + $0x1a4] sm:$0xff]
        %v538 = vld [vmem:[%s239 + $0x1ac] sm:$0xff]
        %v539 = vld [vmem:[%s239 + $0x1b4] sm:$0xff]
        %v540 = vld [vmem:[%s239 + $0x1bc] sm:$0xff]
        %v541 = vld [vmem:[%s239 + $0x1e4] sm:$0xff]
        %v542 = vld [vmem:[%s239 + $0x1ec] sm:$0xff]
        %v543 = vld [vmem:[%s239 + $0x1f4] sm:$0xff]
        %v544 = vld [vmem:[%s239 + $0x1fc] sm:$0xff]
        %v545 = vld [vmem:[%s239 + $0x204] sm:$0xff]
        %v546 = vld [vmem:[%s239 + $0x20c] sm:$0xff]
        %v547 = vld [vmem:[%s239 + $0x214] sm:$0xff]
        %v548 = vld [vmem:[%s239 + $0x21c] sm:$0xff]
        %v549 = vld [vmem:[%s239 + $0x244] sm:$0xff]
        %v550 = vld [vmem:[%s239 + $0x24c] sm:$0xff]
        %v551 = vld [vmem:[%s239 + $0x254] sm:$0xff]
        %v552 = vld [vmem:[%s239 + $0x25c] sm:$0xff]
        %v553 = vld [vmem:[%s239 + $0x264] sm:$0xff]
        %v554 = vld [vmem:[%s239 + $0x26c] sm:$0xff]
        %v555 = vld [vmem:[%s239 + $0x274] sm:$0xff]
        %v556 = vld [vmem:[%s239 + $0x27c] sm:$0xff]
        %v557 = vld [vmem:[%s239 + $0x2a4] sm:$0xff]
        %v558 = vld [vmem:[%s239 + $0x2ac] sm:$0xff]
        %v559 = vld [vmem:[%s239 + $0x2b4] sm:$0xff]
        %v560 = vld [vmem:[%s239 + $0x2bc] sm:$0xff]
        %v561 = vld [vmem:[%s239 + $0x2c4] sm:$0xff]
        %v562 = vld [vmem:[%s239 + $0x2cc] sm:$0xff]
        %v563 = vld [vmem:[%s239 + $0x2d4] sm:$0xff]
        %v564 = vld [vmem:[%s239 + $0x2dc] sm:$0xff]
        %v565 = vld [vmem:[%s239 + $0x5] sm:$0xff]
        %v566 = vld [vmem:[%s239 + $0xd] sm:$0xff]
        %v567 = vld [vmem:[%s239 + $0x15] sm:$0xff]
        %v568 = vld [vmem:[%s239 + $0x1d] sm:$0xff]
        %v569 = vld [vmem:[%s239 + $0x25] sm:$0xff]
        %v570 = vld [vmem:[%s239 + $0x2d] sm:$0xff]
        %v571 = vld [vmem:[%s239 + $0x35] sm:$0xff]
        %v572 = vld [vmem:[%s239 + $0x3d] sm:$0xff]
        %v573 = vld [vmem:[%s239 + $0x65] sm:$0xff]
        %v574 = vld [vmem:[%s239 + $0x6d] sm:$0xff]
        %v575 = vld [vmem:[%s239 + $0x75] sm:$0xff]
        %v576 = vld [vmem:[%s239 + $0x7d] sm:$0xff]
        %v577 = vld [vmem:[%s239 + $0x85] sm:$0xff]
        %v578 = vld [vmem:[%s239 + $0x8d] sm:$0xff]
        %v579 = vld [vmem:[%s239 + $0x95] sm:$0xff]
        %v580 = vld [vmem:[%s239 + $0x9d] sm:$0xff]
        %v581 = vld [vmem:[%s239 + $0xc5] sm:$0xff]
        %v582 = vld [vmem:[%s239 + $0xcd] sm:$0xff]
        %v583 = vld [vmem:[%s239 + $0xd5] sm:$0xff]
        %v584 = vld [vmem:[%s239 + $0xdd] sm:$0xff]
        %v585 = vld [vmem:[%s239 + $0xe5] sm:$0xff]
        %v586 = vld [vmem:[%s239 + $0xed] sm:$0xff]
        %v587 = vld [vmem:[%s239 + $0xf5] sm:$0xff]
        %v588 = vld [vmem:[%s239 + $0xfd] sm:$0xff]
        %v589 = vld [vmem:[%s239 + $0x125] sm:$0xff]
        %v590 = vld [vmem:[%s239 + $0x12d] sm:$0xff]
        %v591 = vld [vmem:[%s239 + $0x135] sm:$0xff]
        %v592 = vld [vmem:[%s239 + $0x13d] sm:$0xff]
        %v593 = vld [vmem:[%s239 + $0x145] sm:$0xff]
        %v594 = vld [vmem:[%s239 + $0x14d] sm:$0xff]
        %v595 = vld [vmem:[%s239 + $0x155] sm:$0xff]
        %v596 = vld [vmem:[%s239 + $0x15d] sm:$0xff]
        %v597 = vld [vmem:[%s239 + $0x185] sm:$0xff]
        %v598 = vld [vmem:[%s239 + $0x18d] sm:$0xff]
        %v599 = vld [vmem:[%s239 + $0x195] sm:$0xff]
        %v600 = vld [vmem:[%s239 + $0x19d] sm:$0xff]
        %v601 = vld [vmem:[%s239 + $0x1a5] sm:$0xff]
        %v602 = vld [vmem:[%s239 + $0x1ad] sm:$0xff]
        %v603 = vld [vmem:[%s239 + $0x1b5] sm:$0xff]
        %v604 = vld [vmem:[%s239 + $0x1bd] sm:$0xff]
        %v605 = vld [vmem:[%s239 + $0x1e5] sm:$0xff]
        %v606 = vld [vmem:[%s239 + $0x1ed] sm:$0xff]
        %v607 = vld [vmem:[%s239 + $0x1f5] sm:$0xff]
        %v608 = vld [vmem:[%s239 + $0x1fd] sm:$0xff]
        %v609 = vld [vmem:[%s239 + $0x205] sm:$0xff]
        %v610 = vld [vmem:[%s239 + $0x20d] sm:$0xff]
        %v611 = vld [vmem:[%s239 + $0x215] sm:$0xff]
        %v612 = vld [vmem:[%s239 + $0x21d] sm:$0xff]
        %v613 = vld [vmem:[%s239 + $0x245] sm:$0xff]
        %v614 = vld [vmem:[%s239 + $0x24d] sm:$0xff]
        %v615 = vld [vmem:[%s239 + $0x255] sm:$0xff]
        %v616 = vld [vmem:[%s239 + $0x25d] sm:$0xff]
        %v617 = vld [vmem:[%s239 + $0x265] sm:$0xff]
        %v618 = vld [vmem:[%s239 + $0x26d] sm:$0xff]
        %v619 = vld [vmem:[%s239 + $0x275] sm:$0xff]
        %v620 = vld [vmem:[%s239 + $0x27d] sm:$0xff]
        %v621 = vld [vmem:[%s239 + $0x2a5] sm:$0xff]
        %v622 = vld [vmem:[%s239 + $0x2ad] sm:$0xff]
        %v623 = vld [vmem:[%s239 + $0x2b5] sm:$0xff]
        %v624 = vld [vmem:[%s239 + $0x2bd] sm:$0xff]
        %v625 = vld [vmem:[%s239 + $0x2c5] sm:$0xff]
        %v626 = vld [vmem:[%s239 + $0x2cd] sm:$0xff]
        %v627 = vld [vmem:[%s239 + $0x2d5] sm:$0xff]
        %v628 = vld [vmem:[%s239 + $0x2dd] sm:$0xff]
        %v629 = vld [vmem:[%s239 + $0x6] sm:$0xff]
        %v630 = vld [vmem:[%s239 + $0xe] sm:$0xff]
        %v631 = vld [vmem:[%s239 + $0x16] sm:$0xff]
        %v632 = vld [vmem:[%s239 + $0x1e] sm:$0xff]
        %v633 = vld [vmem:[%s239 + $0x26] sm:$0xff]
        %v634 = vld [vmem:[%s239 + $0x2e] sm:$0xff]
        %v635 = vld [vmem:[%s239 + $0x36] sm:$0xff]
        %v636 = vld [vmem:[%s239 + $0x3e] sm:$0xff]
        %v637 = vld [vmem:[%s239 + $0x66] sm:$0xff]
        %v638 = vld [vmem:[%s239 + $0x6e] sm:$0xff]
        %v639 = vld [vmem:[%s239 + $0x76] sm:$0xff]
        %v640 = vld [vmem:[%s239 + $0x7e] sm:$0xff]
        %v641 = vld [vmem:[%s239 + $0x86] sm:$0xff]
        %v642 = vld [vmem:[%s239 + $0x8e] sm:$0xff]
        %v643 = vld [vmem:[%s239 + $0x96] sm:$0xff]
        %v644 = vld [vmem:[%s239 + $0x9e] sm:$0xff]
        %v645 = vld [vmem:[%s239 + $0xc6] sm:$0xff]
        %v646 = vld [vmem:[%s239 + $0xce] sm:$0xff]
        %v647 = vld [vmem:[%s239 + $0xd6] sm:$0xff]
        %v648 = vld [vmem:[%s239 + $0xde] sm:$0xff]
        %v649 = vld [vmem:[%s239 + $0xe6] sm:$0xff]
        %v650 = vld [vmem:[%s239 + $0xee] sm:$0xff]
        %v651 = vld [vmem:[%s239 + $0xf6] sm:$0xff]
        %v652 = vld [vmem:[%s239 + $0xfe] sm:$0xff]
        %v653 = vld [vmem:[%s239 + $0x126] sm:$0xff]
        %v654 = vld [vmem:[%s239 + $0x12e] sm:$0xff]
        %v655 = vld [vmem:[%s239 + $0x136] sm:$0xff]
        %v656 = vld [vmem:[%s239 + $0x13e] sm:$0xff]
        %v657 = vld [vmem:[%s239 + $0x146] sm:$0xff]
        %v658 = vld [vmem:[%s239 + $0x14e] sm:$0xff]
        %v659 = vld [vmem:[%s239 + $0x156] sm:$0xff]
        %v660 = vld [vmem:[%s239 + $0x15e] sm:$0xff]
        %v661 = vld [vmem:[%s239 + $0x186] sm:$0xff]
        %v662 = vld [vmem:[%s239 + $0x18e] sm:$0xff]
        %v663 = vld [vmem:[%s239 + $0x196] sm:$0xff]
        %v664 = vld [vmem:[%s239 + $0x19e] sm:$0xff]
        %v665 = vld [vmem:[%s239 + $0x1a6] sm:$0xff]
        %v666 = vld [vmem:[%s239 + $0x1ae] sm:$0xff]
        %v667 = vld [vmem:[%s239 + $0x1b6] sm:$0xff]
        %v668 = vld [vmem:[%s239 + $0x1be] sm:$0xff]
        %v669 = vld [vmem:[%s239 + $0x1e6] sm:$0xff]
        %v670 = vld [vmem:[%s239 + $0x1ee] sm:$0xff]
        %v671 = vld [vmem:[%s239 + $0x1f6] sm:$0xff]
        %v672 = vld [vmem:[%s239 + $0x1fe] sm:$0xff]
        %v673 = vld [vmem:[%s239 + $0x206] sm:$0xff]
        %v674 = vld [vmem:[%s239 + $0x20e] sm:$0xff]
        %v675 = vld [vmem:[%s239 + $0x216] sm:$0xff]
        %v676 = vld [vmem:[%s239 + $0x21e] sm:$0xff]
        %v677 = vld [vmem:[%s239 + $0x246] sm:$0xff]
        %v678 = vld [vmem:[%s239 + $0x24e] sm:$0xff]
        %v679 = vld [vmem:[%s239 + $0x256] sm:$0xff]
        %v680 = vld [vmem:[%s239 + $0x25e] sm:$0xff]
        %v681 = vld [vmem:[%s239 + $0x266] sm:$0xff]
        %v682 = vld [vmem:[%s239 + $0x26e] sm:$0xff]
        %v683 = vld [vmem:[%s239 + $0x276] sm:$0xff]
        %v684 = vld [vmem:[%s239 + $0x27e] sm:$0xff]
        %v685 = vld [vmem:[%s239 + $0x2a6] sm:$0xff]
        %v686 = vld [vmem:[%s239 + $0x2ae] sm:$0xff]
        %v687 = vld [vmem:[%s239 + $0x2b6] sm:$0xff]
        %v688 = vld [vmem:[%s239 + $0x2be] sm:$0xff]
        %v689 = vld [vmem:[%s239 + $0x2c6] sm:$0xff]
        %v690 = vld [vmem:[%s239 + $0x2ce] sm:$0xff]
        %v691 = vld [vmem:[%s239 + $0x2d6] sm:$0xff]
        %v692 = vld [vmem:[%s239 + $0x2de] sm:$0xff]
        %v693 = vld [vmem:[%s239 + $0x7] sm:$0xff]
        %v694 = vld [vmem:[%s239 + $0xf] sm:$0xff]
        %v695 = vld [vmem:[%s239 + $0x17] sm:$0xff]
        %v696 = vld [vmem:[%s239 + $0x1f] sm:$0xff]
        %v697 = vld [vmem:[%s239 + $0x27] sm:$0xff]
        %v698 = vld [vmem:[%s239 + $0x2f] sm:$0xff]
        %v699 = vld [vmem:[%s239 + $0x37] sm:$0xff]
        %v700 = vld [vmem:[%s239 + $0x3f] sm:$0xff]
        %v701 = vld [vmem:[%s239 + $0x67] sm:$0xff]
        %v702 = vld [vmem:[%s239 + $0x6f] sm:$0xff]
        %v703 = vld [vmem:[%s239 + $0x77] sm:$0xff]
        %v704 = vld [vmem:[%s239 + $0x7f] sm:$0xff]
        %v705 = vld [vmem:[%s239 + $0x87] sm:$0xff]
        %v706 = vld [vmem:[%s239 + $0x8f] sm:$0xff]
        %v707 = vld [vmem:[%s239 + $0x97] sm:$0xff]
        %v708 = vld [vmem:[%s239 + $0x9f] sm:$0xff]
        %v709 = vld [vmem:[%s239 + $0xc7] sm:$0xff]
        %v710 = vld [vmem:[%s239 + $0xcf] sm:$0xff]
        %v711 = vld [vmem:[%s239 + $0xd7] sm:$0xff]
        %v712 = vld [vmem:[%s239 + $0xdf] sm:$0xff]
        %v713 = vld [vmem:[%s239 + $0xe7] sm:$0xff]
        %v714 = vld [vmem:[%s239 + $0xef] sm:$0xff]
        %v715 = vld [vmem:[%s239 + $0xf7] sm:$0xff]
        %v716 = vld [vmem:[%s239 + $0xff] sm:$0xff]
        %v717 = vld [vmem:[%s239 + $0x127] sm:$0xff]
        %v718 = vld [vmem:[%s239 + $0x12f] sm:$0xff]
        %v719 = vld [vmem:[%s239 + $0x137] sm:$0xff]
        %v720 = vld [vmem:[%s239 + $0x13f] sm:$0xff]
        %v721 = vld [vmem:[%s239 + $0x147] sm:$0xff]
        %v722 = vld [vmem:[%s239 + $0x14f] sm:$0xff]
        %v723 = vld [vmem:[%s239 + $0x157] sm:$0xff]
        %v724 = vld [vmem:[%s239 + $0x15f] sm:$0xff]
        %v725 = vld [vmem:[%s239 + $0x187] sm:$0xff]
        %v726 = vld [vmem:[%s239 + $0x18f] sm:$0xff]
        %v727 = vld [vmem:[%s239 + $0x197] sm:$0xff]
        %v728 = vld [vmem:[%s239 + $0x19f] sm:$0xff]
        %v729 = vld [vmem:[%s239 + $0x1a7] sm:$0xff]
        %v730 = vld [vmem:[%s239 + $0x1af] sm:$0xff]
        %v731 = vld [vmem:[%s239 + $0x1b7] sm:$0xff]
        %v732 = vld [vmem:[%s239 + $0x1bf] sm:$0xff]
        %v733 = vld [vmem:[%s239 + $0x1e7] sm:$0xff]
        %v734 = vld [vmem:[%s239 + $0x1ef] sm:$0xff]
        %v735 = vld [vmem:[%s239 + $0x1f7] sm:$0xff]
        %v736 = vld [vmem:[%s239 + $0x1ff] sm:$0xff]
        %v737 = vld [vmem:[%s239 + $0x207] sm:$0xff]
        %v738 = vld [vmem:[%s239 + $0x20f] sm:$0xff]
        %v739 = vld [vmem:[%s239 + $0x217] sm:$0xff]
        %v740 = vld [vmem:[%s239 + $0x21f] sm:$0xff]
        %v741 = vld [vmem:[%s239 + $0x247] sm:$0xff]
        %v742 = vld [vmem:[%s239 + $0x24f] sm:$0xff]
        %v743 = vld [vmem:[%s239 + $0x257] sm:$0xff]
        %v744 = vld [vmem:[%s239 + $0x25f] sm:$0xff]
        %v745 = vld [vmem:[%s239 + $0x267] sm:$0xff]
        %v746 = vld [vmem:[%s239 + $0x26f] sm:$0xff]
        %v747 = vld [vmem:[%s239 + $0x277] sm:$0xff]
        %v748 = vld [vmem:[%s239 + $0x27f] sm:$0xff]
        %v749 = vld [vmem:[%s239 + $0x2a7] sm:$0xff]
        %v750 = vld [vmem:[%s239 + $0x2af] sm:$0xff]
        %v751 = vld [vmem:[%s239 + $0x2b7] sm:$0xff]
        %v752 = vld [vmem:[%s239 + $0x2bf] sm:$0xff]
        %v753 = vld [vmem:[%s239 + $0x2c7] sm:$0xff]
        %v754 = vld [vmem:[%s239 + $0x2cf] sm:$0xff]
        %v755 = vld [vmem:[%s239 + $0x2d7] sm:$0xff]
        %v756 = vld [vmem:[%s239 + $0x2df] sm:$0xff]
        %v757 = vld [vmem:[%s239 + $0x40] sm:$0xff]
        %v758 = vld [vmem:[%s239 + $0xa0] sm:$0xff]
        %v759 = vld [vmem:[%s239 + $0x100] sm:$0xff]
        %v760 = vld [vmem:[%s239 + $0x160] sm:$0xff]
        %v761 = vld [vmem:[%s239 + $0x1c0] sm:$0xff]
        %v762 = vld [vmem:[%s239 + $0x220] sm:$0xff]
        %v763 = vld [vmem:[%s239 + $0x280] sm:$0xff]
        %v764 = vld [vmem:[%s239 + $0x2e0] sm:$0xff]
        %v765 = vld [vmem:[%s239 + $0x41] sm:$0xff]
        %v766 = vld [vmem:[%s239 + $0xa1] sm:$0xff]
        %v767 = vld [vmem:[%s239 + $0x101] sm:$0xff]
        %v768 = vld [vmem:[%s239 + $0x161] sm:$0xff]
        %v769 = vld [vmem:[%s239 + $0x1c1] sm:$0xff]
        %v770 = vld [vmem:[%s239 + $0x221] sm:$0xff]
        %v771 = vld [vmem:[%s239 + $0x281] sm:$0xff]
        %v772 = vld [vmem:[%s239 + $0x2e1] sm:$0xff]
        %v773 = vld [vmem:[%s239 + $0x42] sm:$0xff]
        %v774 = vld [vmem:[%s239 + $0xa2] sm:$0xff]
        %v775 = vld [vmem:[%s239 + $0x102] sm:$0xff]
        %v776 = vld [vmem:[%s239 + $0x162] sm:$0xff]
        %v777 = vld [vmem:[%s239 + $0x1c2] sm:$0xff]
        %v778 = vld [vmem:[%s239 + $0x222] sm:$0xff]
        %v779 = vld [vmem:[%s239 + $0x282] sm:$0xff]
        %v780 = vld [vmem:[%s239 + $0x2e2] sm:$0xff]
        %v781 = vld [vmem:[%s239 + $0x43] sm:$0xff]
        %v782 = vld [vmem:[%s239 + $0xa3] sm:$0xff]
        %v783 = vld [vmem:[%s239 + $0x103] sm:$0xff]
        %v784 = vld [vmem:[%s239 + $0x163] sm:$0xff]
        %v785 = vld [vmem:[%s239 + $0x1c3] sm:$0xff]
        %v786 = vld [vmem:[%s239 + $0x223] sm:$0xff]
        %v787 = vld [vmem:[%s239 + $0x283] sm:$0xff]
        %v788 = vld [vmem:[%s239 + $0x2e3] sm:$0xff]
        %v789 = vld [vmem:[%s239 + $0x44] sm:$0xff]
        %v790 = vld [vmem:[%s239 + $0xa4] sm:$0xff]
        %v791 = vld [vmem:[%s239 + $0x104] sm:$0xff]
        %v792 = vld [vmem:[%s239 + $0x164] sm:$0xff]
        %v793 = vld [vmem:[%s239 + $0x1c4] sm:$0xff]
        %v794 = vld [vmem:[%s239 + $0x224] sm:$0xff]
        %v795 = vld [vmem:[%s239 + $0x284] sm:$0xff]
        %v796 = vld [vmem:[%s239 + $0x2e4] sm:$0xff]
        %v797 = vld [vmem:[%s239 + $0x45] sm:$0xff]
        %v798 = vld [vmem:[%s239 + $0xa5] sm:$0xff]
        %v799 = vld [vmem:[%s239 + $0x105] sm:$0xff]
        %v800 = vld [vmem:[%s239 + $0x165] sm:$0xff]
        %v801 = vld [vmem:[%s239 + $0x1c5] sm:$0xff]
        %v802 = vld [vmem:[%s239 + $0x225] sm:$0xff]
        %v803 = vld [vmem:[%s239 + $0x285] sm:$0xff]
        %v804 = vld [vmem:[%s239 + $0x2e5] sm:$0xff]
        %v805 = vld [vmem:[%s239 + $0x46] sm:$0xff]
        %v806 = vld [vmem:[%s239 + $0xa6] sm:$0xff]
        %v807 = vld [vmem:[%s239 + $0x106] sm:$0xff]
        %v808 = vld [vmem:[%s239 + $0x166] sm:$0xff]
        %v809 = vld [vmem:[%s239 + $0x1c6] sm:$0xff]
        %v810 = vld [vmem:[%s239 + $0x226] sm:$0xff]
        %v811 = vld [vmem:[%s239 + $0x286] sm:$0xff]
        %v812 = vld [vmem:[%s239 + $0x2e6] sm:$0xff]
        %v813 = vld [vmem:[%s239 + $0x47] sm:$0xff]
        %v814 = vld [vmem:[%s239 + $0xa7] sm:$0xff]
        %v815 = vld [vmem:[%s239 + $0x107] sm:$0xff]
        %v816 = vld [vmem:[%s239 + $0x167] sm:$0xff]
        %v817 = vld [vmem:[%s239 + $0x1c7] sm:$0xff]
        %v818 = vld [vmem:[%s239 + $0x227] sm:$0xff]
        %v819 = vld [vmem:[%s239 + $0x287] sm:$0xff]
        %v820 = vld [vmem:[%s239 + $0x2e7] sm:$0xff]
        %v821 = vld [vmem:[%s239 + $0x48] sm:$0xff]
        %v822 = vld [vmem:[%s239 + $0xa8] sm:$0xff]
        %v823 = vld [vmem:[%s239 + $0x108] sm:$0xff]
        %v824 = vld [vmem:[%s239 + $0x168] sm:$0xff]
        %v825 = vld [vmem:[%s239 + $0x1c8] sm:$0xff]
        %v826 = vld [vmem:[%s239 + $0x228] sm:$0xff]
        %v827 = vld [vmem:[%s239 + $0x288] sm:$0xff]
        %v828 = vld [vmem:[%s239 + $0x2e8] sm:$0xff]
        %v829 = vld [vmem:[%s239 + $0x49] sm:$0xff]
        %v830 = vld [vmem:[%s239 + $0xa9] sm:$0xff]
        %v831 = vld [vmem:[%s239 + $0x109] sm:$0xff]
        %v832 = vld [vmem:[%s239 + $0x169] sm:$0xff]
        %v833 = vld [vmem:[%s239 + $0x1c9] sm:$0xff]
        %v834 = vld [vmem:[%s239 + $0x229] sm:$0xff]
        %v835 = vld [vmem:[%s239 + $0x289] sm:$0xff]
        %v836 = vld [vmem:[%s239 + $0x2e9] sm:$0xff]
        %v837 = vld [vmem:[%s239 + $0x4a] sm:$0xff]
        %v838 = vld [vmem:[%s239 + $0xaa] sm:$0xff]
        %v839 = vld [vmem:[%s239 + $0x10a] sm:$0xff]
        %v840 = vld [vmem:[%s239 + $0x16a] sm:$0xff]
        %v841 = vld [vmem:[%s239 + $0x1ca] sm:$0xff]
        %v842 = vld [vmem:[%s239 + $0x22a] sm:$0xff]
        %v843 = vld [vmem:[%s239 + $0x28a] sm:$0xff]
        %v844 = vld [vmem:[%s239 + $0x2ea] sm:$0xff]
        %v845 = vld [vmem:[%s239 + $0x4b] sm:$0xff]
        %v846 = vld [vmem:[%s239 + $0xab] sm:$0xff]
        %v847 = vld [vmem:[%s239 + $0x10b] sm:$0xff]
        %v848 = vld [vmem:[%s239 + $0x16b] sm:$0xff]
        %v849 = vld [vmem:[%s239 + $0x1cb] sm:$0xff]
        %v850 = vld [vmem:[%s239 + $0x22b] sm:$0xff]
        %v851 = vld [vmem:[%s239 + $0x28b] sm:$0xff]
        %v852 = vld [vmem:[%s239 + $0x2eb] sm:$0xff]
        %v853 = vld [vmem:[%s239 + $0x4c] sm:$0xff]
        %v854 = vld [vmem:[%s239 + $0xac] sm:$0xff]
        %v855 = vld [vmem:[%s239 + $0x10c] sm:$0xff]
        %v856 = vld [vmem:[%s239 + $0x16c] sm:$0xff]
        %v857 = vld [vmem:[%s239 + $0x1cc] sm:$0xff]
        %v858 = vld [vmem:[%s239 + $0x22c] sm:$0xff]
        %v859 = vld [vmem:[%s239 + $0x28c] sm:$0xff]
        %v860 = vld [vmem:[%s239 + $0x2ec] sm:$0xff]
        %v861 = vld [vmem:[%s239 + $0x4d] sm:$0xff]
        %v862 = vld [vmem:[%s239 + $0xad] sm:$0xff]
        %v863 = vld [vmem:[%s239 + $0x10d] sm:$0xff]
        %v864 = vld [vmem:[%s239 + $0x16d] sm:$0xff]
        %v865 = vld [vmem:[%s239 + $0x1cd] sm:$0xff]
        %v866 = vld [vmem:[%s239 + $0x22d] sm:$0xff]
        %v867 = vld [vmem:[%s239 + $0x28d] sm:$0xff]
        %v868 = vld [vmem:[%s239 + $0x2ed] sm:$0xff]
        %v869 = vld [vmem:[%s239 + $0x4e] sm:$0xff]
        %v870 = vld [vmem:[%s239 + $0xae] sm:$0xff]
        %v871 = vld [vmem:[%s239 + $0x10e] sm:$0xff]
        %v872 = vld [vmem:[%s239 + $0x16e] sm:$0xff]
        %v873 = vld [vmem:[%s239 + $0x1ce] sm:$0xff]
        %v874 = vld [vmem:[%s239 + $0x22e] sm:$0xff]
        %v875 = vld [vmem:[%s239 + $0x28e] sm:$0xff]
        %v876 = vld [vmem:[%s239 + $0x2ee] sm:$0xff]
        %v877 = vld [vmem:[%s239 + $0x4f] sm:$0xff]
        %v878 = vld [vmem:[%s239 + $0xaf] sm:$0xff]
        %v879 = vld [vmem:[%s239 + $0x10f] sm:$0xff]
        %v880 = vld [vmem:[%s239 + $0x16f] sm:$0xff]
        %v881 = vld [vmem:[%s239 + $0x1cf] sm:$0xff]
        %v882 = vld [vmem:[%s239 + $0x22f] sm:$0xff]
        %v883 = vld [vmem:[%s239 + $0x28f] sm:$0xff]
        %v884 = vld [vmem:[%s239 + $0x2ef] sm:$0xff]
        %v885 = vld [vmem:[%s239 + $0x50] sm:$0xff]
        %v886 = vld [vmem:[%s239 + $0xb0] sm:$0xff]
        %v887 = vld [vmem:[%s239 + $0x110] sm:$0xff]
        %v888 = vld [vmem:[%s239 + $0x170] sm:$0xff]
        %v889 = vld [vmem:[%s239 + $0x1d0] sm:$0xff]
        %v890 = vld [vmem:[%s239 + $0x230] sm:$0xff]
        %v891 = vld [vmem:[%s239 + $0x290] sm:$0xff]
        %v892 = vld [vmem:[%s239 + $0x2f0] sm:$0xff]
        %v893 = vld [vmem:[%s239 + $0x51] sm:$0xff]
        %v894 = vld [vmem:[%s239 + $0xb1] sm:$0xff]
        %v895 = vld [vmem:[%s239 + $0x111] sm:$0xff]
        %v896 = vld [vmem:[%s239 + $0x171] sm:$0xff]
        %v897 = vld [vmem:[%s239 + $0x1d1] sm:$0xff]
        %v898 = vld [vmem:[%s239 + $0x231] sm:$0xff]
        %v899 = vld [vmem:[%s239 + $0x291] sm:$0xff]
        %v900 = vld [vmem:[%s239 + $0x2f1] sm:$0xff]
        %v901 = vld [vmem:[%s239 + $0x52] sm:$0xff]
        %v902 = vld [vmem:[%s239 + $0xb2] sm:$0xff]
        %v903 = vld [vmem:[%s239 + $0x112] sm:$0xff]
        %v904 = vld [vmem:[%s239 + $0x172] sm:$0xff]
        %v905 = vld [vmem:[%s239 + $0x1d2] sm:$0xff]
        %v906 = vld [vmem:[%s239 + $0x232] sm:$0xff]
        %v907 = vld [vmem:[%s239 + $0x292] sm:$0xff]
        %v908 = vld [vmem:[%s239 + $0x2f2] sm:$0xff]
        %v909 = vld [vmem:[%s239 + $0x53] sm:$0xff]
        %v910 = vld [vmem:[%s239 + $0xb3] sm:$0xff]
        %v911 = vld [vmem:[%s239 + $0x113] sm:$0xff]
        %v912 = vld [vmem:[%s239 + $0x173] sm:$0xff]
        %v913 = vld [vmem:[%s239 + $0x1d3] sm:$0xff]
        %v914 = vld [vmem:[%s239 + $0x233] sm:$0xff]
        %v915 = vld [vmem:[%s239 + $0x293] sm:$0xff]
        %v916 = vld [vmem:[%s239 + $0x2f3] sm:$0xff]
        %v917 = vld [vmem:[%s239 + $0x54] sm:$0xff]
        %v918 = vld [vmem:[%s239 + $0xb4] sm:$0xff]
        %v919 = vld [vmem:[%s239 + $0x114] sm:$0xff]
        %v920 = vld [vmem:[%s239 + $0x174] sm:$0xff]
        %v921 = vld [vmem:[%s239 + $0x1d4] sm:$0xff]
        %v922 = vld [vmem:[%s239 + $0x234] sm:$0xff]
        %v923 = vld [vmem:[%s239 + $0x294] sm:$0xff]
        %v924 = vld [vmem:[%s239 + $0x2f4] sm:$0xff]
        %v925 = vld [vmem:[%s239 + $0x55] sm:$0xff]
        %v926 = vld [vmem:[%s239 + $0xb5] sm:$0xff]
        %v927 = vld [vmem:[%s239 + $0x115] sm:$0xff]
        %v928 = vld [vmem:[%s239 + $0x175] sm:$0xff]
        %v929 = vld [vmem:[%s239 + $0x1d5] sm:$0xff]
        %v930 = vld [vmem:[%s239 + $0x235] sm:$0xff]
        %v931 = vld [vmem:[%s239 + $0x295] sm:$0xff]
        %v932 = vld [vmem:[%s239 + $0x2f5] sm:$0xff]
        %v933 = vld [vmem:[%s239 + $0x56] sm:$0xff]
        %v934 = vld [vmem:[%s239 + $0xb6] sm:$0xff]
        %v935 = vld [vmem:[%s239 + $0x116] sm:$0xff]
        %v936 = vld [vmem:[%s239 + $0x176] sm:$0xff]
        %v937 = vld [vmem:[%s239 + $0x1d6] sm:$0xff]
        %v938 = vld [vmem:[%s239 + $0x236] sm:$0xff]
        %v939 = vld [vmem:[%s239 + $0x296] sm:$0xff]
        %v940 = vld [vmem:[%s239 + $0x2f6] sm:$0xff]
        %v941 = vld [vmem:[%s239 + $0x57] sm:$0xff]
        %v942 = vld [vmem:[%s239 + $0xb7] sm:$0xff]
        %v943 = vld [vmem:[%s239 + $0x117] sm:$0xff]
        %v944 = vld [vmem:[%s239 + $0x177] sm:$0xff]
        %v945 = vld [vmem:[%s239 + $0x1d7] sm:$0xff]
        %v946 = vld [vmem:[%s239 + $0x237] sm:$0xff]
        %v947 = vld [vmem:[%s239 + $0x297] sm:$0xff]
        %v948 = vld [vmem:[%s239 + $0x2f7] sm:$0xff]
        %1013 = vrot.lane.b32.xlu0 %v309, 4
        %v1014 = vpop.permute.xlu0 %1013
        %1015 = vrot.lane.b32.xlu0 %v310, 4
        %v1016 = vpop.permute.xlu0 %1015
        %1017 = vrot.lane.b32.xlu0 %v311, 4
        %v1018 = vpop.permute.xlu0 %1017
        %1019 = vrot.lane.b32.xlu0 %v312, 4
        %v1020 = vpop.permute.xlu0 %1019
        %1021 = vrot.lane.b32.xlu0 %v313, 4
        %v1022 = vpop.permute.xlu0 %1021
        %1023 = vrot.lane.b32.xlu0 %v314, 4
        %v1024 = vpop.permute.xlu0 %1023
        %1025 = vrot.lane.b32.xlu0 %v315, 4
        %v1026 = vpop.permute.xlu0 %1025
        %1027 = vrot.lane.b32.xlu0 %v316, 4
        %v1028 = vpop.permute.xlu0 %1027
        %1029 = vrot.lane.b32.xlu0 %v317, 4
        %v1030 = vpop.permute.xlu0 %1029
        %1031 = vrot.lane.b32.xlu0 %v318, 4
        %v1032 = vpop.permute.xlu0 %1031
        %1033 = vrot.lane.b32.xlu0 %v319, 4
        %v1034 = vpop.permute.xlu0 %1033
        %1035 = vrot.lane.b32.xlu0 %v320, 4
        %v1036 = vpop.permute.xlu0 %1035
        %1037 = vrot.lane.b32.xlu0 %v321, 4
        %v1038 = vpop.permute.xlu0 %1037
        %1039 = vrot.lane.b32.xlu0 %v322, 4
        %v1040 = vpop.permute.xlu0 %1039
        %1041 = vrot.lane.b32.xlu0 %v323, 4
        %v1042 = vpop.permute.xlu0 %1041
        %1043 = vrot.lane.b32.xlu0 %v324, 4
        %v1044 = vpop.permute.xlu0 %1043
        %1045 = vrot.lane.b32.xlu0 %v325, 4
        %v1046 = vpop.permute.xlu0 %1045
        %1047 = vrot.lane.b32.xlu0 %v326, 4
        %v1048 = vpop.permute.xlu0 %1047
        %1049 = vrot.lane.b32.xlu0 %v327, 4
        %v1050 = vpop.permute.xlu0 %1049
        %1051 = vrot.lane.b32.xlu0 %v328, 4
        %v1052 = vpop.permute.xlu0 %1051
        %1053 = vrot.lane.b32.xlu0 %v329, 4
        %v1054 = vpop.permute.xlu0 %1053
        %1055 = vrot.lane.b32.xlu0 %v330, 4
        %v1056 = vpop.permute.xlu0 %1055
        %1057 = vrot.lane.b32.xlu0 %v331, 4
        %v1058 = vpop.permute.xlu0 %1057
        %1059 = vrot.lane.b32.xlu0 %v332, 4
        %v1060 = vpop.permute.xlu0 %1059
        %1061 = vrot.lane.b32.xlu0 %v333, 4
        %v1062 = vpop.permute.xlu0 %1061
        %1063 = vrot.lane.b32.xlu0 %v334, 4
        %v1064 = vpop.permute.xlu0 %1063
        %1065 = vrot.lane.b32.xlu0 %v335, 4
        %v1066 = vpop.permute.xlu0 %1065
        %1067 = vrot.lane.b32.xlu0 %v336, 4
        %v1068 = vpop.permute.xlu0 %1067
        %1069 = vrot.lane.b32.xlu0 %v337, 4
        %v1070 = vpop.permute.xlu0 %1069
        %1071 = vrot.lane.b32.xlu0 %v338, 4
        %v1072 = vpop.permute.xlu0 %1071
        %1073 = vrot.lane.b32.xlu0 %v339, 4
        %v1074 = vpop.permute.xlu0 %1073
        %1075 = vrot.lane.b32.xlu0 %v340, 4
        %v1076 = vpop.permute.xlu0 %1075
        %1077 = vrot.lane.b32.xlu0 %v341, 4
        %v1078 = vpop.permute.xlu0 %1077
        %1079 = vrot.lane.b32.xlu0 %v342, 4
        %v1080 = vpop.permute.xlu0 %1079
        %1081 = vrot.lane.b32.xlu0 %v343, 4
        %v1082 = vpop.permute.xlu0 %1081
        %1083 = vrot.lane.b32.xlu0 %v344, 4
        %v1084 = vpop.permute.xlu0 %1083
        %1085 = vrot.lane.b32.xlu0 %v345, 4
        %v1086 = vpop.permute.xlu0 %1085
        %1087 = vrot.lane.b32.xlu0 %v346, 4
        %v1088 = vpop.permute.xlu0 %1087
        %1089 = vrot.lane.b32.xlu0 %v347, 4
        %v1090 = vpop.permute.xlu0 %1089
        %1091 = vrot.lane.b32.xlu0 %v348, 4
        %v1092 = vpop.permute.xlu0 %1091
        %1093 = vrot.lane.b32.xlu0 %v349, 4
        %v1094 = vpop.permute.xlu0 %1093
        %1095 = vrot.lane.b32.xlu0 %v350, 4
        %v1096 = vpop.permute.xlu0 %1095
        %1097 = vrot.lane.b32.xlu0 %v351, 4
        %v1098 = vpop.permute.xlu0 %1097
        %1099 = vrot.lane.b32.xlu0 %v352, 4
        %v1100 = vpop.permute.xlu0 %1099
        %1101 = vrot.lane.b32.xlu0 %v353, 4
        %v1102 = vpop.permute.xlu0 %1101
        %1103 = vrot.lane.b32.xlu0 %v354, 4
        %v1104 = vpop.permute.xlu0 %1103
        %1105 = vrot.lane.b32.xlu0 %v355, 4
        %v1106 = vpop.permute.xlu0 %1105
        %1107 = vrot.lane.b32.xlu0 %v356, 4
        %v1108 = vpop.permute.xlu0 %1107
        %1109 = vrot.lane.b32.xlu0 %v357, 4
        %v1110 = vpop.permute.xlu0 %1109
        %1111 = vrot.lane.b32.xlu0 %v358, 4
        %v1112 = vpop.permute.xlu0 %1111
        %1113 = vrot.lane.b32.xlu0 %v359, 4
        %v1114 = vpop.permute.xlu0 %1113
        %1115 = vrot.lane.b32.xlu0 %v360, 4
        %v1116 = vpop.permute.xlu0 %1115
        %1117 = vrot.lane.b32.xlu0 %v361, 4
        %v1118 = vpop.permute.xlu0 %1117
        %1119 = vrot.lane.b32.xlu0 %v362, 4
        %v1120 = vpop.permute.xlu0 %1119
        %1121 = vrot.lane.b32.xlu0 %v363, 4
        %v1122 = vpop.permute.xlu0 %1121
        %1123 = vrot.lane.b32.xlu0 %v364, 4
        %v1124 = vpop.permute.xlu0 %1123
        %1125 = vrot.lane.b32.xlu0 %v365, 4
        %v1126 = vpop.permute.xlu0 %1125
        %1127 = vrot.lane.b32.xlu0 %v366, 4
        %v1128 = vpop.permute.xlu0 %1127
        %1129 = vrot.lane.b32.xlu0 %v367, 4
        %v1130 = vpop.permute.xlu0 %1129
        %1131 = vrot.lane.b32.xlu0 %v368, 4
        %v1132 = vpop.permute.xlu0 %1131
        %1133 = vrot.lane.b32.xlu0 %v369, 4
        %v1134 = vpop.permute.xlu0 %1133
        %1135 = vrot.lane.b32.xlu0 %v370, 4
        %v1136 = vpop.permute.xlu0 %1135
        %1137 = vrot.lane.b32.xlu0 %v371, 4
        %v1138 = vpop.permute.xlu0 %1137
        %1139 = vrot.lane.b32.xlu0 %v372, 4
        %v1140 = vpop.permute.xlu0 %1139
        %1269 = vrot.lane.b32.xlu0 %v373, 8
        %v1270 = vpop.permute.xlu0 %1269
        %1271 = vrot.lane.b32.xlu0 %v374, 8
        %v1272 = vpop.permute.xlu0 %1271
        %1273 = vrot.lane.b32.xlu0 %v375, 8
        %v1274 = vpop.permute.xlu0 %1273
        %1275 = vrot.lane.b32.xlu0 %v376, 8
        %v1276 = vpop.permute.xlu0 %1275
        %1277 = vrot.lane.b32.xlu0 %v377, 8
        %v1278 = vpop.permute.xlu0 %1277
        %1279 = vrot.lane.b32.xlu0 %v378, 8
        %v1280 = vpop.permute.xlu0 %1279
        %1281 = vrot.lane.b32.xlu0 %v379, 8
        %v1282 = vpop.permute.xlu0 %1281
        %1283 = vrot.lane.b32.xlu0 %v380, 8
        %v1284 = vpop.permute.xlu0 %1283
        %1285 = vrot.lane.b32.xlu0 %v381, 8
        %v1286 = vpop.permute.xlu0 %1285
        %1287 = vrot.lane.b32.xlu0 %v382, 8
        %v1288 = vpop.permute.xlu0 %1287
        %1289 = vrot.lane.b32.xlu0 %v383, 8
        %v1290 = vpop.permute.xlu0 %1289
        %1291 = vrot.lane.b32.xlu0 %v384, 8
        %v1292 = vpop.permute.xlu0 %1291
        %1293 = vrot.lane.b32.xlu0 %v385, 8
        %v1294 = vpop.permute.xlu0 %1293
        %1295 = vrot.lane.b32.xlu0 %v386, 8
        %v1296 = vpop.permute.xlu0 %1295
        %1297 = vrot.lane.b32.xlu0 %v387, 8
        %v1298 = vpop.permute.xlu0 %1297
        %1299 = vrot.lane.b32.xlu0 %v388, 8
        %v1300 = vpop.permute.xlu0 %1299
        %1301 = vrot.lane.b32.xlu0 %v389, 8
        %v1302 = vpop.permute.xlu0 %1301
        %1303 = vrot.lane.b32.xlu0 %v390, 8
        %v1304 = vpop.permute.xlu0 %1303
        %1305 = vrot.lane.b32.xlu0 %v391, 8
        %v1306 = vpop.permute.xlu0 %1305
        %1307 = vrot.lane.b32.xlu0 %v392, 8
        %v1308 = vpop.permute.xlu0 %1307
        %1309 = vrot.lane.b32.xlu0 %v393, 8
        %v1310 = vpop.permute.xlu0 %1309
        %1311 = vrot.lane.b32.xlu0 %v394, 8
        %v1312 = vpop.permute.xlu0 %1311
        %1313 = vrot.lane.b32.xlu0 %v395, 8
        %v1314 = vpop.permute.xlu0 %1313
        %1315 = vrot.lane.b32.xlu0 %v396, 8
        %v1316 = vpop.permute.xlu0 %1315
        %1317 = vrot.lane.b32.xlu0 %v397, 8
        %v1318 = vpop.permute.xlu0 %1317
        %1319 = vrot.lane.b32.xlu0 %v398, 8
        %v1320 = vpop.permute.xlu0 %1319
        %1321 = vrot.lane.b32.xlu0 %v399, 8
        %v1322 = vpop.permute.xlu0 %1321
        %1323 = vrot.lane.b32.xlu0 %v400, 8
        %v1324 = vpop.permute.xlu0 %1323
        %1325 = vrot.lane.b32.xlu0 %v401, 8
        %v1326 = vpop.permute.xlu0 %1325
        %1327 = vrot.lane.b32.xlu0 %v402, 8
        %v1328 = vpop.permute.xlu0 %1327
        %1329 = vrot.lane.b32.xlu0 %v403, 8
        %v1330 = vpop.permute.xlu0 %1329
        %1331 = vrot.lane.b32.xlu0 %v404, 8
        %v1332 = vpop.permute.xlu0 %1331
        %1333 = vrot.lane.b32.xlu0 %v405, 8
        %v1334 = vpop.permute.xlu0 %1333
        %1335 = vrot.lane.b32.xlu0 %v406, 8
        %v1336 = vpop.permute.xlu0 %1335
        %1337 = vrot.lane.b32.xlu0 %v407, 8
        %v1338 = vpop.permute.xlu0 %1337
        %1339 = vrot.lane.b32.xlu0 %v408, 8
        %v1340 = vpop.permute.xlu0 %1339
        %1341 = vrot.lane.b32.xlu0 %v409, 8
        %v1342 = vpop.permute.xlu0 %1341
        %1343 = vrot.lane.b32.xlu0 %v410, 8
        %v1344 = vpop.permute.xlu0 %1343
        %1345 = vrot.lane.b32.xlu0 %v411, 8
        %v1346 = vpop.permute.xlu0 %1345
        %1347 = vrot.lane.b32.xlu0 %v412, 8
        %v1348 = vpop.permute.xlu0 %1347
        %1349 = vrot.lane.b32.xlu0 %v413, 8
        %v1350 = vpop.permute.xlu0 %1349
        %1351 = vrot.lane.b32.xlu0 %v414, 8
        %v1352 = vpop.permute.xlu0 %1351
        %1353 = vrot.lane.b32.xlu0 %v415, 8
        %v1354 = vpop.permute.xlu0 %1353
        %1355 = vrot.lane.b32.xlu0 %v416, 8
        %v1356 = vpop.permute.xlu0 %1355
        %1357 = vrot.lane.b32.xlu0 %v417, 8
        %v1358 = vpop.permute.xlu0 %1357
        %1359 = vrot.lane.b32.xlu0 %v418, 8
        %v1360 = vpop.permute.xlu0 %1359
        %1361 = vrot.lane.b32.xlu0 %v419, 8
        %v1362 = vpop.permute.xlu0 %1361
        %1363 = vrot.lane.b32.xlu0 %v420, 8
        %v1364 = vpop.permute.xlu0 %1363
        %1365 = vrot.lane.b32.xlu0 %v421, 8
        %v1366 = vpop.permute.xlu0 %1365
        %1367 = vrot.lane.b32.xlu0 %v422, 8
        %v1368 = vpop.permute.xlu0 %1367
        %1369 = vrot.lane.b32.xlu0 %v423, 8
        %v1370 = vpop.permute.xlu0 %1369
        %1371 = vrot.lane.b32.xlu0 %v424, 8
        %v1372 = vpop.permute.xlu0 %1371
        %1373 = vrot.lane.b32.xlu0 %v425, 8
        %v1374 = vpop.permute.xlu0 %1373
        %1375 = vrot.lane.b32.xlu0 %v426, 8
        %v1376 = vpop.permute.xlu0 %1375
        %1377 = vrot.lane.b32.xlu0 %v427, 8
        %v1378 = vpop.permute.xlu0 %1377
        %1379 = vrot.lane.b32.xlu0 %v428, 8
        %v1380 = vpop.permute.xlu0 %1379
        %1381 = vrot.lane.b32.xlu0 %v429, 8
        %v1382 = vpop.permute.xlu0 %1381
        %1383 = vrot.lane.b32.xlu0 %v430, 8
        %v1384 = vpop.permute.xlu0 %1383
        %1385 = vrot.lane.b32.xlu0 %v431, 8
        %v1386 = vpop.permute.xlu0 %1385
        %1387 = vrot.lane.b32.xlu0 %v432, 8
        %v1388 = vpop.permute.xlu0 %1387
        %1389 = vrot.lane.b32.xlu0 %v433, 8
        %v1390 = vpop.permute.xlu0 %1389
        %1391 = vrot.lane.b32.xlu0 %v434, 8
        %v1392 = vpop.permute.xlu0 %1391
        %1393 = vrot.lane.b32.xlu0 %v435, 8
        %v1394 = vpop.permute.xlu0 %1393
        %1395 = vrot.lane.b32.xlu0 %v436, 8
        %v1396 = vpop.permute.xlu0 %1395
        %1525 = vrot.lane.b32.xlu0 %v437, 12
        %v1526 = vpop.permute.xlu0 %1525
        %1527 = vrot.lane.b32.xlu0 %v438, 12
        %v1528 = vpop.permute.xlu0 %1527
        %1529 = vrot.lane.b32.xlu0 %v439, 12
        %v1530 = vpop.permute.xlu0 %1529
        %1531 = vrot.lane.b32.xlu0 %v440, 12
        %v1532 = vpop.permute.xlu0 %1531
        %1533 = vrot.lane.b32.xlu0 %v441, 12
        %v1534 = vpop.permute.xlu0 %1533
        %1535 = vrot.lane.b32.xlu0 %v442, 12
        %v1536 = vpop.permute.xlu0 %1535
        %1537 = vrot.lane.b32.xlu0 %v443, 12
        %v1538 = vpop.permute.xlu0 %1537
        %1539 = vrot.lane.b32.xlu0 %v444, 12
        %v1540 = vpop.permute.xlu0 %1539
        %1541 = vrot.lane.b32.xlu0 %v445, 12
        %v1542 = vpop.permute.xlu0 %1541
        %1543 = vrot.lane.b32.xlu0 %v446, 12
        %v1544 = vpop.permute.xlu0 %1543
        %1545 = vrot.lane.b32.xlu0 %v447, 12
        %v1546 = vpop.permute.xlu0 %1545
        %1547 = vrot.lane.b32.xlu0 %v448, 12
        %v1548 = vpop.permute.xlu0 %1547
        %1549 = vrot.lane.b32.xlu0 %v449, 12
        %v1550 = vpop.permute.xlu0 %1549
        %1551 = vrot.lane.b32.xlu0 %v450, 12
        %v1552 = vpop.permute.xlu0 %1551
        %1553 = vrot.lane.b32.xlu0 %v451, 12
        %v1554 = vpop.permute.xlu0 %1553
        %1555 = vrot.lane.b32.xlu0 %v452, 12
        %v1556 = vpop.permute.xlu0 %1555
        %1557 = vrot.lane.b32.xlu0 %v453, 12
        %v1558 = vpop.permute.xlu0 %1557
        %1559 = vrot.lane.b32.xlu0 %v454, 12
        %v1560 = vpop.permute.xlu0 %1559
        %1561 = vrot.lane.b32.xlu0 %v455, 12
        %v1562 = vpop.permute.xlu0 %1561
        %1563 = vrot.lane.b32.xlu0 %v456, 12
        %v1564 = vpop.permute.xlu0 %1563
        %1565 = vrot.lane.b32.xlu0 %v457, 12
        %v1566 = vpop.permute.xlu0 %1565
        %1567 = vrot.lane.b32.xlu0 %v458, 12
        %v1568 = vpop.permute.xlu0 %1567
        %1569 = vrot.lane.b32.xlu0 %v459, 12
        %v1570 = vpop.permute.xlu0 %1569
        %1571 = vrot.lane.b32.xlu0 %v460, 12
        %v1572 = vpop.permute.xlu0 %1571
        %1573 = vrot.lane.b32.xlu0 %v461, 12
        %v1574 = vpop.permute.xlu0 %1573
        %1575 = vrot.lane.b32.xlu0 %v462, 12
        %v1576 = vpop.permute.xlu0 %1575
        %1577 = vrot.lane.b32.xlu0 %v463, 12
        %v1578 = vpop.permute.xlu0 %1577
        %1579 = vrot.lane.b32.xlu0 %v464, 12
        %v1580 = vpop.permute.xlu0 %1579
        %1581 = vrot.lane.b32.xlu0 %v465, 12
        %v1582 = vpop.permute.xlu0 %1581
        %1583 = vrot.lane.b32.xlu0 %v466, 12
        %v1584 = vpop.permute.xlu0 %1583
        %1585 = vrot.lane.b32.xlu0 %v467, 12
        %v1586 = vpop.permute.xlu0 %1585
        %1587 = vrot.lane.b32.xlu0 %v468, 12
        %v1588 = vpop.permute.xlu0 %1587
        %1589 = vrot.lane.b32.xlu0 %v469, 12
        %v1590 = vpop.permute.xlu0 %1589
        %1591 = vrot.lane.b32.xlu0 %v470, 12
        %v1592 = vpop.permute.xlu0 %1591
        %1593 = vrot.lane.b32.xlu0 %v471, 12
        %v1594 = vpop.permute.xlu0 %1593
        %1595 = vrot.lane.b32.xlu0 %v472, 12
        %v1596 = vpop.permute.xlu0 %1595
        %1597 = vrot.lane.b32.xlu0 %v473, 12
        %v1598 = vpop.permute.xlu0 %1597
        %1599 = vrot.lane.b32.xlu0 %v474, 12
        %v1600 = vpop.permute.xlu0 %1599
        %1601 = vrot.lane.b32.xlu0 %v475, 12
        %v1602 = vpop.permute.xlu0 %1601
        %1603 = vrot.lane.b32.xlu0 %v476, 12
        %v1604 = vpop.permute.xlu0 %1603
        %1605 = vrot.lane.b32.xlu0 %v477, 12
        %v1606 = vpop.permute.xlu0 %1605
        %1607 = vrot.lane.b32.xlu0 %v478, 12
        %v1608 = vpop.permute.xlu0 %1607
        %1609 = vrot.lane.b32.xlu0 %v479, 12
        %v1610 = vpop.permute.xlu0 %1609
        %1611 = vrot.lane.b32.xlu0 %v480, 12
        %v1612 = vpop.permute.xlu0 %1611
        %1613 = vrot.lane.b32.xlu0 %v481, 12
        %v1614 = vpop.permute.xlu0 %1613
        %1615 = vrot.lane.b32.xlu0 %v482, 12
        %v1616 = vpop.permute.xlu0 %1615
        %1617 = vrot.lane.b32.xlu0 %v483, 12
        %v1618 = vpop.permute.xlu0 %1617
        %1619 = vrot.lane.b32.xlu0 %v484, 12
        %v1620 = vpop.permute.xlu0 %1619
        %1621 = vrot.lane.b32.xlu0 %v485, 12
        %v1622 = vpop.permute.xlu0 %1621
        %1623 = vrot.lane.b32.xlu0 %v486, 12
        %v1624 = vpop.permute.xlu0 %1623
        %1625 = vrot.lane.b32.xlu0 %v487, 12
        %v1626 = vpop.permute.xlu0 %1625
        %1627 = vrot.lane.b32.xlu0 %v488, 12
        %v1628 = vpop.permute.xlu0 %1627
        %1629 = vrot.lane.b32.xlu0 %v489, 12
        %v1630 = vpop.permute.xlu0 %1629
        %1631 = vrot.lane.b32.xlu0 %v490, 12
        %v1632 = vpop.permute.xlu0 %1631
        %1633 = vrot.lane.b32.xlu0 %v491, 12
        %v1634 = vpop.permute.xlu0 %1633
        %1635 = vrot.lane.b32.xlu0 %v492, 12
        %v1636 = vpop.permute.xlu0 %1635
        %1637 = vrot.lane.b32.xlu0 %v493, 12
        %v1638 = vpop.permute.xlu0 %1637
        %1639 = vrot.lane.b32.xlu0 %v494, 12
        %v1640 = vpop.permute.xlu0 %1639
        %1641 = vrot.lane.b32.xlu0 %v495, 12
        %v1642 = vpop.permute.xlu0 %1641
        %1643 = vrot.lane.b32.xlu0 %v496, 12
        %v1644 = vpop.permute.xlu0 %1643
        %1645 = vrot.lane.b32.xlu0 %v497, 12
        %v1646 = vpop.permute.xlu0 %1645
        %1647 = vrot.lane.b32.xlu0 %v498, 12
        %v1648 = vpop.permute.xlu0 %1647
        %1649 = vrot.lane.b32.xlu0 %v499, 12
        %v1650 = vpop.permute.xlu0 %1649
        %1651 = vrot.lane.b32.xlu0 %v500, 12
        %v1652 = vpop.permute.xlu0 %1651
        %1781 = vrot.lane.b32.xlu0 %v501, 16
        %v1782 = vpop.permute.xlu0 %1781
        %1783 = vrot.lane.b32.xlu0 %v502, 16
        %v1784 = vpop.permute.xlu0 %1783
        %1785 = vrot.lane.b32.xlu0 %v503, 16
        %v1786 = vpop.permute.xlu0 %1785
        %1787 = vrot.lane.b32.xlu0 %v504, 16
        %v1788 = vpop.permute.xlu0 %1787
        %1789 = vrot.lane.b32.xlu0 %v505, 16
        %v1790 = vpop.permute.xlu0 %1789
        %1791 = vrot.lane.b32.xlu0 %v506, 16
        %v1792 = vpop.permute.xlu0 %1791
        %1793 = vrot.lane.b32.xlu0 %v507, 16
        %v1794 = vpop.permute.xlu0 %1793
        %1795 = vrot.lane.b32.xlu0 %v508, 16
        %v1796 = vpop.permute.xlu0 %1795
        %1797 = vrot.lane.b32.xlu0 %v509, 16
        %v1798 = vpop.permute.xlu0 %1797
        %1799 = vrot.lane.b32.xlu0 %v510, 16
        %v1800 = vpop.permute.xlu0 %1799
        %1801 = vrot.lane.b32.xlu0 %v511, 16
        %v1802 = vpop.permute.xlu0 %1801
        %1803 = vrot.lane.b32.xlu0 %v512, 16
        %v1804 = vpop.permute.xlu0 %1803
        %1805 = vrot.lane.b32.xlu0 %v513, 16
        %v1806 = vpop.permute.xlu0 %1805
        %1807 = vrot.lane.b32.xlu0 %v514, 16
        %v1808 = vpop.permute.xlu0 %1807
        %1809 = vrot.lane.b32.xlu0 %v515, 16
        %v1810 = vpop.permute.xlu0 %1809
        %1811 = vrot.lane.b32.xlu0 %v516, 16
        %v1812 = vpop.permute.xlu0 %1811
        %1813 = vrot.lane.b32.xlu0 %v517, 16
        %v1814 = vpop.permute.xlu0 %1813
        %1815 = vrot.lane.b32.xlu0 %v518, 16
        %v1816 = vpop.permute.xlu0 %1815
        %1817 = vrot.lane.b32.xlu0 %v519, 16
        %v1818 = vpop.permute.xlu0 %1817
        %1819 = vrot.lane.b32.xlu0 %v520, 16
        %v1820 = vpop.permute.xlu0 %1819
        %1821 = vrot.lane.b32.xlu0 %v521, 16
        %v1822 = vpop.permute.xlu0 %1821
        %1823 = vrot.lane.b32.xlu0 %v522, 16
        %v1824 = vpop.permute.xlu0 %1823
        %1825 = vrot.lane.b32.xlu0 %v523, 16
        %v1826 = vpop.permute.xlu0 %1825
        %1827 = vrot.lane.b32.xlu0 %v524, 16
        %v1828 = vpop.permute.xlu0 %1827
        %1829 = vrot.lane.b32.xlu0 %v525, 16
        %v1830 = vpop.permute.xlu0 %1829
        %1831 = vrot.lane.b32.xlu0 %v526, 16
        %v1832 = vpop.permute.xlu0 %1831
        %1833 = vrot.lane.b32.xlu0 %v527, 16
        %v1834 = vpop.permute.xlu0 %1833
        %1835 = vrot.lane.b32.xlu0 %v528, 16
        %v1836 = vpop.permute.xlu0 %1835
        %1837 = vrot.lane.b32.xlu0 %v529, 16
        %v1838 = vpop.permute.xlu0 %1837
        %1839 = vrot.lane.b32.xlu0 %v530, 16
        %v1840 = vpop.permute.xlu0 %1839
        %1841 = vrot.lane.b32.xlu0 %v531, 16
        %v1842 = vpop.permute.xlu0 %1841
        %1843 = vrot.lane.b32.xlu0 %v532, 16
        %v1844 = vpop.permute.xlu0 %1843
        %1845 = vrot.lane.b32.xlu0 %v533, 16
        %v1846 = vpop.permute.xlu0 %1845
        %1847 = vrot.lane.b32.xlu0 %v534, 16
        %v1848 = vpop.permute.xlu0 %1847
        %1849 = vrot.lane.b32.xlu0 %v535, 16
        %v1850 = vpop.permute.xlu0 %1849
        %1851 = vrot.lane.b32.xlu0 %v536, 16
        %v1852 = vpop.permute.xlu0 %1851
        %1853 = vrot.lane.b32.xlu0 %v537, 16
        %v1854 = vpop.permute.xlu0 %1853
        %1855 = vrot.lane.b32.xlu0 %v538, 16
        %v1856 = vpop.permute.xlu0 %1855
        %1857 = vrot.lane.b32.xlu0 %v539, 16
        %v1858 = vpop.permute.xlu0 %1857
        %1859 = vrot.lane.b32.xlu0 %v540, 16
        %v1860 = vpop.permute.xlu0 %1859
        %1861 = vrot.lane.b32.xlu0 %v541, 16
        %v1862 = vpop.permute.xlu0 %1861
        %1863 = vrot.lane.b32.xlu0 %v542, 16
        %v1864 = vpop.permute.xlu0 %1863
        %1865 = vrot.lane.b32.xlu0 %v543, 16
        %v1866 = vpop.permute.xlu0 %1865
        %1867 = vrot.lane.b32.xlu0 %v544, 16
        %v1868 = vpop.permute.xlu0 %1867
        %1869 = vrot.lane.b32.xlu0 %v545, 16
        %v1870 = vpop.permute.xlu0 %1869
        %1871 = vrot.lane.b32.xlu0 %v546, 16
        %v1872 = vpop.permute.xlu0 %1871
        %1873 = vrot.lane.b32.xlu0 %v547, 16
        %v1874 = vpop.permute.xlu0 %1873
        %1875 = vrot.lane.b32.xlu0 %v548, 16
        %v1876 = vpop.permute.xlu0 %1875
        %1877 = vrot.lane.b32.xlu0 %v549, 16
        %v1878 = vpop.permute.xlu0 %1877
        %1879 = vrot.lane.b32.xlu0 %v550, 16
        %v1880 = vpop.permute.xlu0 %1879
        %1881 = vrot.lane.b32.xlu0 %v551, 16
        %v1882 = vpop.permute.xlu0 %1881
        %1883 = vrot.lane.b32.xlu0 %v552, 16
        %v1884 = vpop.permute.xlu0 %1883
        %1885 = vrot.lane.b32.xlu0 %v553, 16
        %v1886 = vpop.permute.xlu0 %1885
        %1887 = vrot.lane.b32.xlu0 %v554, 16
        %v1888 = vpop.permute.xlu0 %1887
        %1889 = vrot.lane.b32.xlu0 %v555, 16
        %v1890 = vpop.permute.xlu0 %1889
        %1891 = vrot.lane.b32.xlu0 %v556, 16
        %v1892 = vpop.permute.xlu0 %1891
        %1893 = vrot.lane.b32.xlu0 %v557, 16
        %v1894 = vpop.permute.xlu0 %1893
        %1895 = vrot.lane.b32.xlu0 %v558, 16
        %v1896 = vpop.permute.xlu0 %1895
        %1897 = vrot.lane.b32.xlu0 %v559, 16
        %v1898 = vpop.permute.xlu0 %1897
        %1899 = vrot.lane.b32.xlu0 %v560, 16
        %v1900 = vpop.permute.xlu0 %1899
        %1901 = vrot.lane.b32.xlu0 %v561, 16
        %v1902 = vpop.permute.xlu0 %1901
        %1903 = vrot.lane.b32.xlu0 %v562, 16
        %v1904 = vpop.permute.xlu0 %1903
        %1905 = vrot.lane.b32.xlu0 %v563, 16
        %v1906 = vpop.permute.xlu0 %1905
        %1907 = vrot.lane.b32.xlu0 %v564, 16
        %v1908 = vpop.permute.xlu0 %1907
        %2037 = vrot.lane.b32.xlu0 %v565, 20
        %v2038 = vpop.permute.xlu0 %2037
        %2039 = vrot.lane.b32.xlu0 %v566, 20
        %v2040 = vpop.permute.xlu0 %2039
        %2041 = vrot.lane.b32.xlu0 %v567, 20
        %v2042 = vpop.permute.xlu0 %2041
        %2043 = vrot.lane.b32.xlu0 %v568, 20
        %v2044 = vpop.permute.xlu0 %2043
        %2045 = vrot.lane.b32.xlu0 %v569, 20
        %v2046 = vpop.permute.xlu0 %2045
        %2047 = vrot.lane.b32.xlu0 %v570, 20
        %v2048 = vpop.permute.xlu0 %2047
        %2049 = vrot.lane.b32.xlu0 %v571, 20
        %v2050 = vpop.permute.xlu0 %2049
        %2051 = vrot.lane.b32.xlu0 %v572, 20
        %v2052 = vpop.permute.xlu0 %2051
        %2053 = vrot.lane.b32.xlu0 %v573, 20
        %v2054 = vpop.permute.xlu0 %2053
        %2055 = vrot.lane.b32.xlu0 %v574, 20
        %v2056 = vpop.permute.xlu0 %2055
        %2057 = vrot.lane.b32.xlu0 %v575, 20
        %v2058 = vpop.permute.xlu0 %2057
        %2059 = vrot.lane.b32.xlu0 %v576, 20
        %v2060 = vpop.permute.xlu0 %2059
        %2061 = vrot.lane.b32.xlu0 %v577, 20
        %v2062 = vpop.permute.xlu0 %2061
        %2063 = vrot.lane.b32.xlu0 %v578, 20
        %v2064 = vpop.permute.xlu0 %2063
        %2065 = vrot.lane.b32.xlu0 %v579, 20
        %v2066 = vpop.permute.xlu0 %2065
        %2067 = vrot.lane.b32.xlu0 %v580, 20
        %v2068 = vpop.permute.xlu0 %2067
        %2069 = vrot.lane.b32.xlu0 %v581, 20
        %v2070 = vpop.permute.xlu0 %2069
        %2071 = vrot.lane.b32.xlu0 %v582, 20
        %v2072 = vpop.permute.xlu0 %2071
        %2073 = vrot.lane.b32.xlu0 %v583, 20
        %v2074 = vpop.permute.xlu0 %2073
        %2075 = vrot.lane.b32.xlu0 %v584, 20
        %v2076 = vpop.permute.xlu0 %2075
        %2077 = vrot.lane.b32.xlu0 %v585, 20
        %v2078 = vpop.permute.xlu0 %2077
        %2079 = vrot.lane.b32.xlu0 %v586, 20
        %v2080 = vpop.permute.xlu0 %2079
        %2081 = vrot.lane.b32.xlu0 %v587, 20
        %v2082 = vpop.permute.xlu0 %2081
        %2083 = vrot.lane.b32.xlu0 %v588, 20
        %v2084 = vpop.permute.xlu0 %2083
        %2085 = vrot.lane.b32.xlu0 %v589, 20
        %v2086 = vpop.permute.xlu0 %2085
        %2087 = vrot.lane.b32.xlu0 %v590, 20
        %v2088 = vpop.permute.xlu0 %2087
        %2089 = vrot.lane.b32.xlu0 %v591, 20
        %v2090 = vpop.permute.xlu0 %2089
        %2091 = vrot.lane.b32.xlu0 %v592, 20
        %v2092 = vpop.permute.xlu0 %2091
        %2093 = vrot.lane.b32.xlu0 %v593, 20
        %v2094 = vpop.permute.xlu0 %2093
        %2095 = vrot.lane.b32.xlu0 %v594, 20
        %v2096 = vpop.permute.xlu0 %2095
        %2097 = vrot.lane.b32.xlu0 %v595, 20
        %v2098 = vpop.permute.xlu0 %2097
        %2099 = vrot.lane.b32.xlu0 %v596, 20
        %v2100 = vpop.permute.xlu0 %2099
        %2101 = vrot.lane.b32.xlu0 %v597, 20
        %v2102 = vpop.permute.xlu0 %2101
        %2103 = vrot.lane.b32.xlu0 %v598, 20
        %v2104 = vpop.permute.xlu0 %2103
        %2105 = vrot.lane.b32.xlu0 %v599, 20
        %v2106 = vpop.permute.xlu0 %2105
        %2107 = vrot.lane.b32.xlu0 %v600, 20
        %v2108 = vpop.permute.xlu0 %2107
        %2109 = vrot.lane.b32.xlu0 %v601, 20
        %v2110 = vpop.permute.xlu0 %2109
        %2111 = vrot.lane.b32.xlu0 %v602, 20
        %v2112 = vpop.permute.xlu0 %2111
        %2113 = vrot.lane.b32.xlu0 %v603, 20
        %v2114 = vpop.permute.xlu0 %2113
        %2115 = vrot.lane.b32.xlu0 %v604, 20
        %v2116 = vpop.permute.xlu0 %2115
        %2117 = vrot.lane.b32.xlu0 %v605, 20
        %v2118 = vpop.permute.xlu0 %2117
        %2119 = vrot.lane.b32.xlu0 %v606, 20
        %v2120 = vpop.permute.xlu0 %2119
        %2121 = vrot.lane.b32.xlu0 %v607, 20
        %v2122 = vpop.permute.xlu0 %2121
        %2123 = vrot.lane.b32.xlu0 %v608, 20
        %v2124 = vpop.permute.xlu0 %2123
        %2125 = vrot.lane.b32.xlu0 %v609, 20
        %v2126 = vpop.permute.xlu0 %2125
        %2127 = vrot.lane.b32.xlu0 %v610, 20
        %v2128 = vpop.permute.xlu0 %2127
        %2129 = vrot.lane.b32.xlu0 %v611, 20
        %v2130 = vpop.permute.xlu0 %2129
        %2131 = vrot.lane.b32.xlu0 %v612, 20
        %v2132 = vpop.permute.xlu0 %2131
        %2133 = vrot.lane.b32.xlu0 %v613, 20
        %v2134 = vpop.permute.xlu0 %2133
        %2135 = vrot.lane.b32.xlu0 %v614, 20
        %v2136 = vpop.permute.xlu0 %2135
        %2137 = vrot.lane.b32.xlu0 %v615, 20
        %v2138 = vpop.permute.xlu0 %2137
        %2139 = vrot.lane.b32.xlu0 %v616, 20
        %v2140 = vpop.permute.xlu0 %2139
        %2141 = vrot.lane.b32.xlu0 %v617, 20
        %v2142 = vpop.permute.xlu0 %2141
        %2143 = vrot.lane.b32.xlu0 %v618, 20
        %v2144 = vpop.permute.xlu0 %2143
        %2145 = vrot.lane.b32.xlu0 %v619, 20
        %v2146 = vpop.permute.xlu0 %2145
        %2147 = vrot.lane.b32.xlu0 %v620, 20
        %v2148 = vpop.permute.xlu0 %2147
        %2149 = vrot.lane.b32.xlu0 %v621, 20
        %v2150 = vpop.permute.xlu0 %2149
        %2151 = vrot.lane.b32.xlu0 %v622, 20
        %v2152 = vpop.permute.xlu0 %2151
        %2153 = vrot.lane.b32.xlu0 %v623, 20
        %v2154 = vpop.permute.xlu0 %2153
        %2155 = vrot.lane.b32.xlu0 %v624, 20
        %v2156 = vpop.permute.xlu0 %2155
        %2157 = vrot.lane.b32.xlu0 %v625, 20
        %v2158 = vpop.permute.xlu0 %2157
        %2159 = vrot.lane.b32.xlu0 %v626, 20
        %v2160 = vpop.permute.xlu0 %2159
        %2161 = vrot.lane.b32.xlu0 %v627, 20
        %v2162 = vpop.permute.xlu0 %2161
        %2163 = vrot.lane.b32.xlu0 %v628, 20
        %v2164 = vpop.permute.xlu0 %2163
        %2293 = vrot.lane.b32.xlu0 %v629, 24
        %v2294 = vpop.permute.xlu0 %2293
        %2295 = vrot.lane.b32.xlu0 %v630, 24
        %v2296 = vpop.permute.xlu0 %2295
        %2297 = vrot.lane.b32.xlu0 %v631, 24
        %v2298 = vpop.permute.xlu0 %2297
        %2299 = vrot.lane.b32.xlu0 %v632, 24
        %v2300 = vpop.permute.xlu0 %2299
        %2301 = vrot.lane.b32.xlu0 %v633, 24
        %v2302 = vpop.permute.xlu0 %2301
        %2303 = vrot.lane.b32.xlu0 %v634, 24
        %v2304 = vpop.permute.xlu0 %2303
        %2305 = vrot.lane.b32.xlu0 %v635, 24
        %v2306 = vpop.permute.xlu0 %2305
        %2307 = vrot.lane.b32.xlu0 %v636, 24
        %v2308 = vpop.permute.xlu0 %2307
        %2309 = vrot.lane.b32.xlu0 %v637, 24
        %v2310 = vpop.permute.xlu0 %2309
        %2311 = vrot.lane.b32.xlu0 %v638, 24
        %v2312 = vpop.permute.xlu0 %2311
        %2313 = vrot.lane.b32.xlu0 %v639, 24
        %v2314 = vpop.permute.xlu0 %2313
        %2315 = vrot.lane.b32.xlu0 %v640, 24
        %v2316 = vpop.permute.xlu0 %2315
        %2317 = vrot.lane.b32.xlu0 %v641, 24
        %v2318 = vpop.permute.xlu0 %2317
        %2319 = vrot.lane.b32.xlu0 %v642, 24
        %v2320 = vpop.permute.xlu0 %2319
        %2321 = vrot.lane.b32.xlu0 %v643, 24
        %v2322 = vpop.permute.xlu0 %2321
        %2323 = vrot.lane.b32.xlu0 %v644, 24
        %v2324 = vpop.permute.xlu0 %2323
        %2325 = vrot.lane.b32.xlu0 %v645, 24
        %v2326 = vpop.permute.xlu0 %2325
        %2327 = vrot.lane.b32.xlu0 %v646, 24
        %v2328 = vpop.permute.xlu0 %2327
        %2329 = vrot.lane.b32.xlu0 %v647, 24
        %v2330 = vpop.permute.xlu0 %2329
        %2331 = vrot.lane.b32.xlu0 %v648, 24
        %v2332 = vpop.permute.xlu0 %2331
        %2333 = vrot.lane.b32.xlu0 %v649, 24
        %v2334 = vpop.permute.xlu0 %2333
        %2335 = vrot.lane.b32.xlu0 %v650, 24
        %v2336 = vpop.permute.xlu0 %2335
        %2337 = vrot.lane.b32.xlu0 %v651, 24
        %v2338 = vpop.permute.xlu0 %2337
        %2339 = vrot.lane.b32.xlu0 %v652, 24
        %v2340 = vpop.permute.xlu0 %2339
        %2341 = vrot.lane.b32.xlu0 %v653, 24
        %v2342 = vpop.permute.xlu0 %2341
        %2343 = vrot.lane.b32.xlu0 %v654, 24
        %v2344 = vpop.permute.xlu0 %2343
        %2345 = vrot.lane.b32.xlu0 %v655, 24
        %v2346 = vpop.permute.xlu0 %2345
        %2347 = vrot.lane.b32.xlu0 %v656, 24
        %v2348 = vpop.permute.xlu0 %2347
        %2349 = vrot.lane.b32.xlu0 %v657, 24
        %v2350 = vpop.permute.xlu0 %2349
        %2351 = vrot.lane.b32.xlu0 %v658, 24
        %v2352 = vpop.permute.xlu0 %2351
        %2353 = vrot.lane.b32.xlu0 %v659, 24
        %v2354 = vpop.permute.xlu0 %2353
        %2355 = vrot.lane.b32.xlu0 %v660, 24
        %v2356 = vpop.permute.xlu0 %2355
        %2357 = vrot.lane.b32.xlu0 %v661, 24
        %v2358 = vpop.permute.xlu0 %2357
        %2359 = vrot.lane.b32.xlu0 %v662, 24
        %v2360 = vpop.permute.xlu0 %2359
        %2361 = vrot.lane.b32.xlu0 %v663, 24
        %v2362 = vpop.permute.xlu0 %2361
        %2363 = vrot.lane.b32.xlu0 %v664, 24
        %v2364 = vpop.permute.xlu0 %2363
        %2365 = vrot.lane.b32.xlu0 %v665, 24
        %v2366 = vpop.permute.xlu0 %2365
        %2367 = vrot.lane.b32.xlu0 %v666, 24
        %v2368 = vpop.permute.xlu0 %2367
        %2369 = vrot.lane.b32.xlu0 %v667, 24
        %v2370 = vpop.permute.xlu0 %2369
        %2371 = vrot.lane.b32.xlu0 %v668, 24
        %v2372 = vpop.permute.xlu0 %2371
        %2373 = vrot.lane.b32.xlu0 %v669, 24
        %v2374 = vpop.permute.xlu0 %2373
        %2375 = vrot.lane.b32.xlu0 %v670, 24
        %v2376 = vpop.permute.xlu0 %2375
        %2377 = vrot.lane.b32.xlu0 %v671, 24
        %v2378 = vpop.permute.xlu0 %2377
        %2379 = vrot.lane.b32.xlu0 %v672, 24
        %v2380 = vpop.permute.xlu0 %2379
        %2381 = vrot.lane.b32.xlu0 %v673, 24
        %v2382 = vpop.permute.xlu0 %2381
        %2383 = vrot.lane.b32.xlu0 %v674, 24
        %v2384 = vpop.permute.xlu0 %2383
        %2385 = vrot.lane.b32.xlu0 %v675, 24
        %v2386 = vpop.permute.xlu0 %2385
        %2387 = vrot.lane.b32.xlu0 %v676, 24
        %v2388 = vpop.permute.xlu0 %2387
        %2389 = vrot.lane.b32.xlu0 %v677, 24
        %v2390 = vpop.permute.xlu0 %2389
        %2391 = vrot.lane.b32.xlu0 %v678, 24
        %v2392 = vpop.permute.xlu0 %2391
        %2393 = vrot.lane.b32.xlu0 %v679, 24
        %v2394 = vpop.permute.xlu0 %2393
        %2395 = vrot.lane.b32.xlu0 %v680, 24
        %v2396 = vpop.permute.xlu0 %2395
        %2397 = vrot.lane.b32.xlu0 %v681, 24
        %v2398 = vpop.permute.xlu0 %2397
        %2399 = vrot.lane.b32.xlu0 %v682, 24
        %v2400 = vpop.permute.xlu0 %2399
        %2401 = vrot.lane.b32.xlu0 %v683, 24
        %v2402 = vpop.permute.xlu0 %2401
        %2403 = vrot.lane.b32.xlu0 %v684, 24
        %v2404 = vpop.permute.xlu0 %2403
        %2405 = vrot.lane.b32.xlu0 %v685, 24
        %v2406 = vpop.permute.xlu0 %2405
        %2407 = vrot.lane.b32.xlu0 %v686, 24
        %v2408 = vpop.permute.xlu0 %2407
        %2409 = vrot.lane.b32.xlu0 %v687, 24
        %v2410 = vpop.permute.xlu0 %2409
        %2411 = vrot.lane.b32.xlu0 %v688, 24
        %v2412 = vpop.permute.xlu0 %2411
        %2413 = vrot.lane.b32.xlu0 %v689, 24
        %v2414 = vpop.permute.xlu0 %2413
        %2415 = vrot.lane.b32.xlu0 %v690, 24
        %v2416 = vpop.permute.xlu0 %2415
        %2417 = vrot.lane.b32.xlu0 %v691, 24
        %v2418 = vpop.permute.xlu0 %2417
        %2419 = vrot.lane.b32.xlu0 %v692, 24
        %v2420 = vpop.permute.xlu0 %2419
        %2549 = vrot.lane.b32.xlu0 %v693, 28
        %v2550 = vpop.permute.xlu0 %2549
        %2551 = vrot.lane.b32.xlu0 %v694, 28
        %v2552 = vpop.permute.xlu0 %2551
        %2553 = vrot.lane.b32.xlu0 %v695, 28
        %v2554 = vpop.permute.xlu0 %2553
        %2555 = vrot.lane.b32.xlu0 %v696, 28
        %v2556 = vpop.permute.xlu0 %2555
        %2557 = vrot.lane.b32.xlu0 %v697, 28
        %v2558 = vpop.permute.xlu0 %2557
        %2559 = vrot.lane.b32.xlu0 %v698, 28
        %v2560 = vpop.permute.xlu0 %2559
        %2561 = vrot.lane.b32.xlu0 %v699, 28
        %v2562 = vpop.permute.xlu0 %2561
        %2563 = vrot.lane.b32.xlu0 %v700, 28
        %v2564 = vpop.permute.xlu0 %2563
        %2565 = vrot.lane.b32.xlu0 %v701, 28
        %v2566 = vpop.permute.xlu0 %2565
        %2567 = vrot.lane.b32.xlu0 %v702, 28
        %v2568 = vpop.permute.xlu0 %2567
        %2569 = vrot.lane.b32.xlu0 %v703, 28
        %v2570 = vpop.permute.xlu0 %2569
        %2571 = vrot.lane.b32.xlu0 %v704, 28
        %v2572 = vpop.permute.xlu0 %2571
        %2573 = vrot.lane.b32.xlu0 %v705, 28
        %v2574 = vpop.permute.xlu0 %2573
        %2575 = vrot.lane.b32.xlu0 %v706, 28
        %v2576 = vpop.permute.xlu0 %2575
        %2577 = vrot.lane.b32.xlu0 %v707, 28
        %v2578 = vpop.permute.xlu0 %2577
        %2579 = vrot.lane.b32.xlu0 %v708, 28
        %v2580 = vpop.permute.xlu0 %2579
        %2581 = vrot.lane.b32.xlu0 %v709, 28
        %v2582 = vpop.permute.xlu0 %2581
        %2583 = vrot.lane.b32.xlu0 %v710, 28
        %v2584 = vpop.permute.xlu0 %2583
        %2585 = vrot.lane.b32.xlu0 %v711, 28
        %v2586 = vpop.permute.xlu0 %2585
        %2587 = vrot.lane.b32.xlu0 %v712, 28
        %v2588 = vpop.permute.xlu0 %2587
        %2589 = vrot.lane.b32.xlu0 %v713, 28
        %v2590 = vpop.permute.xlu0 %2589
        %2591 = vrot.lane.b32.xlu0 %v714, 28
        %v2592 = vpop.permute.xlu0 %2591
        %2593 = vrot.lane.b32.xlu0 %v715, 28
        %v2594 = vpop.permute.xlu0 %2593
        %2595 = vrot.lane.b32.xlu0 %v716, 28
        %v2596 = vpop.permute.xlu0 %2595
        %2597 = vrot.lane.b32.xlu0 %v717, 28
        %v2598 = vpop.permute.xlu0 %2597
        %2599 = vrot.lane.b32.xlu0 %v718, 28
        %v2600 = vpop.permute.xlu0 %2599
        %2601 = vrot.lane.b32.xlu0 %v719, 28
        %v2602 = vpop.permute.xlu0 %2601
        %2603 = vrot.lane.b32.xlu0 %v720, 28
        %v2604 = vpop.permute.xlu0 %2603
        %2605 = vrot.lane.b32.xlu0 %v721, 28
        %v2606 = vpop.permute.xlu0 %2605
        %2607 = vrot.lane.b32.xlu0 %v722, 28
        %v2608 = vpop.permute.xlu0 %2607
        %2609 = vrot.lane.b32.xlu0 %v723, 28
        %v2610 = vpop.permute.xlu0 %2609
        %2611 = vrot.lane.b32.xlu0 %v724, 28
        %v2612 = vpop.permute.xlu0 %2611
        %2613 = vrot.lane.b32.xlu0 %v725, 28
        %v2614 = vpop.permute.xlu0 %2613
        %2615 = vrot.lane.b32.xlu0 %v726, 28
        %v2616 = vpop.permute.xlu0 %2615
        %2617 = vrot.lane.b32.xlu0 %v727, 28
        %v2618 = vpop.permute.xlu0 %2617
        %2619 = vrot.lane.b32.xlu0 %v728, 28
        %v2620 = vpop.permute.xlu0 %2619
        %2621 = vrot.lane.b32.xlu0 %v729, 28
        %v2622 = vpop.permute.xlu0 %2621
        %2623 = vrot.lane.b32.xlu0 %v730, 28
        %v2624 = vpop.permute.xlu0 %2623
        %2625 = vrot.lane.b32.xlu0 %v731, 28
        %v2626 = vpop.permute.xlu0 %2625
        %2627 = vrot.lane.b32.xlu0 %v732, 28
        %v2628 = vpop.permute.xlu0 %2627
        %2629 = vrot.lane.b32.xlu0 %v733, 28
        %v2630 = vpop.permute.xlu0 %2629
        %2631 = vrot.lane.b32.xlu0 %v734, 28
        %v2632 = vpop.permute.xlu0 %2631
        %2633 = vrot.lane.b32.xlu0 %v735, 28
        %v2634 = vpop.permute.xlu0 %2633
        %2635 = vrot.lane.b32.xlu0 %v736, 28
        %v2636 = vpop.permute.xlu0 %2635
        %2637 = vrot.lane.b32.xlu0 %v737, 28
        %v2638 = vpop.permute.xlu0 %2637
        %2639 = vrot.lane.b32.xlu0 %v738, 28
        %v2640 = vpop.permute.xlu0 %2639
        %2641 = vrot.lane.b32.xlu0 %v739, 28
        %v2642 = vpop.permute.xlu0 %2641
        %2643 = vrot.lane.b32.xlu0 %v740, 28
        %v2644 = vpop.permute.xlu0 %2643
        %2645 = vrot.lane.b32.xlu0 %v741, 28
        %v2646 = vpop.permute.xlu0 %2645
        %2647 = vrot.lane.b32.xlu0 %v742, 28
        %v2648 = vpop.permute.xlu0 %2647
        %2649 = vrot.lane.b32.xlu0 %v743, 28
        %v2650 = vpop.permute.xlu0 %2649
        %2651 = vrot.lane.b32.xlu0 %v744, 28
        %v2652 = vpop.permute.xlu0 %2651
        %2653 = vrot.lane.b32.xlu0 %v745, 28
        %v2654 = vpop.permute.xlu0 %2653
        %2655 = vrot.lane.b32.xlu0 %v746, 28
        %v2656 = vpop.permute.xlu0 %2655
        %2657 = vrot.lane.b32.xlu0 %v747, 28
        %v2658 = vpop.permute.xlu0 %2657
        %2659 = vrot.lane.b32.xlu0 %v748, 28
        %v2660 = vpop.permute.xlu0 %2659
        %2661 = vrot.lane.b32.xlu0 %v749, 28
        %v2662 = vpop.permute.xlu0 %2661
        %2663 = vrot.lane.b32.xlu0 %v750, 28
        %v2664 = vpop.permute.xlu0 %2663
        %2665 = vrot.lane.b32.xlu0 %v751, 28
        %v2666 = vpop.permute.xlu0 %2665
        %2667 = vrot.lane.b32.xlu0 %v752, 28
        %v2668 = vpop.permute.xlu0 %2667
        %2669 = vrot.lane.b32.xlu0 %v753, 28
        %v2670 = vpop.permute.xlu0 %2669
        %2671 = vrot.lane.b32.xlu0 %v754, 28
        %v2672 = vpop.permute.xlu0 %2671
        %2673 = vrot.lane.b32.xlu0 %v755, 28
        %v2674 = vpop.permute.xlu0 %2673
        %2675 = vrot.lane.b32.xlu0 %v756, 28
        %v2676 = vpop.permute.xlu0 %2675
        %2805 = vrot.lane.b32.xlu0 %v246, 32
        %v2806 = vpop.permute.xlu0 %2805
        %2807 = vrot.lane.b32.xlu0 %v247, 32
        %v2808 = vpop.permute.xlu0 %2807
        %2809 = vrot.lane.b32.xlu0 %v248, 32
        %v2810 = vpop.permute.xlu0 %2809
        %2811 = vrot.lane.b32.xlu0 %v249, 32
        %v2812 = vpop.permute.xlu0 %2811
        %2813 = vrot.lane.b32.xlu0 %v250, 32
        %v2814 = vpop.permute.xlu0 %2813
        %2815 = vrot.lane.b32.xlu0 %v251, 32
        %v2816 = vpop.permute.xlu0 %2815
        %2817 = vrot.lane.b32.xlu0 %v252, 32
        %v2818 = vpop.permute.xlu0 %2817
        %2819 = vrot.lane.b32.xlu0 %v757, 32
        %v2820 = vpop.permute.xlu0 %2819
        %2821 = vrot.lane.b32.xlu0 %v254, 32
        %v2822 = vpop.permute.xlu0 %2821
        %2823 = vrot.lane.b32.xlu0 %v255, 32
        %v2824 = vpop.permute.xlu0 %2823
        %2825 = vrot.lane.b32.xlu0 %v256, 32
        %v2826 = vpop.permute.xlu0 %2825
        %2827 = vrot.lane.b32.xlu0 %v257, 32
        %v2828 = vpop.permute.xlu0 %2827
        %2829 = vrot.lane.b32.xlu0 %v258, 32
        %v2830 = vpop.permute.xlu0 %2829
        %2831 = vrot.lane.b32.xlu0 %v259, 32
        %v2832 = vpop.permute.xlu0 %2831
        %2833 = vrot.lane.b32.xlu0 %v260, 32
        %v2834 = vpop.permute.xlu0 %2833
        %2835 = vrot.lane.b32.xlu0 %v758, 32
        %v2836 = vpop.permute.xlu0 %2835
        %2837 = vrot.lane.b32.xlu0 %v262, 32
        %v2838 = vpop.permute.xlu0 %2837
        %2839 = vrot.lane.b32.xlu0 %v263, 32
        %v2840 = vpop.permute.xlu0 %2839
        %2841 = vrot.lane.b32.xlu0 %v264, 32
        %v2842 = vpop.permute.xlu0 %2841
        %2843 = vrot.lane.b32.xlu0 %v265, 32
        %v2844 = vpop.permute.xlu0 %2843
        %2845 = vrot.lane.b32.xlu0 %v266, 32
        %v2846 = vpop.permute.xlu0 %2845
        %2847 = vrot.lane.b32.xlu0 %v267, 32
        %v2848 = vpop.permute.xlu0 %2847
        %2849 = vrot.lane.b32.xlu0 %v268, 32
        %v2850 = vpop.permute.xlu0 %2849
        %2851 = vrot.lane.b32.xlu0 %v759, 32
        %v2852 = vpop.permute.xlu0 %2851
        %2853 = vrot.lane.b32.xlu0 %v270, 32
        %v2854 = vpop.permute.xlu0 %2853
        %2855 = vrot.lane.b32.xlu0 %v271, 32
        %v2856 = vpop.permute.xlu0 %2855
        %2857 = vrot.lane.b32.xlu0 %v272, 32
        %v2858 = vpop.permute.xlu0 %2857
        %2859 = vrot.lane.b32.xlu0 %v273, 32
        %v2860 = vpop.permute.xlu0 %2859
        %2861 = vrot.lane.b32.xlu0 %v274, 32
        %v2862 = vpop.permute.xlu0 %2861
        %2863 = vrot.lane.b32.xlu0 %v275, 32
        %v2864 = vpop.permute.xlu0 %2863
        %2865 = vrot.lane.b32.xlu0 %v276, 32
        %v2866 = vpop.permute.xlu0 %2865
        %2867 = vrot.lane.b32.xlu0 %v760, 32
        %v2868 = vpop.permute.xlu0 %2867
        %2869 = vrot.lane.b32.xlu0 %v278, 32
        %v2870 = vpop.permute.xlu0 %2869
        %2871 = vrot.lane.b32.xlu0 %v279, 32
        %v2872 = vpop.permute.xlu0 %2871
        %2873 = vrot.lane.b32.xlu0 %v280, 32
        %v2874 = vpop.permute.xlu0 %2873
        %2875 = vrot.lane.b32.xlu0 %v281, 32
        %v2876 = vpop.permute.xlu0 %2875
        %2877 = vrot.lane.b32.xlu0 %v282, 32
        %v2878 = vpop.permute.xlu0 %2877
        %2879 = vrot.lane.b32.xlu0 %v283, 32
        %v2880 = vpop.permute.xlu0 %2879
        %2881 = vrot.lane.b32.xlu0 %v284, 32
        %v2882 = vpop.permute.xlu0 %2881
        %2883 = vrot.lane.b32.xlu0 %v761, 32
        %v2884 = vpop.permute.xlu0 %2883
        %2885 = vrot.lane.b32.xlu0 %v286, 32
        %v2886 = vpop.permute.xlu0 %2885
        %2887 = vrot.lane.b32.xlu0 %v287, 32
        %v2888 = vpop.permute.xlu0 %2887
        %2889 = vrot.lane.b32.xlu0 %v288, 32
        %v2890 = vpop.permute.xlu0 %2889
        %2891 = vrot.lane.b32.xlu0 %v289, 32
        %v2892 = vpop.permute.xlu0 %2891
        %2893 = vrot.lane.b32.xlu0 %v290, 32
        %v2894 = vpop.permute.xlu0 %2893
        %2895 = vrot.lane.b32.xlu0 %v291, 32
        %v2896 = vpop.permute.xlu0 %2895
        %2897 = vrot.lane.b32.xlu0 %v292, 32
        %v2898 = vpop.permute.xlu0 %2897
        %2899 = vrot.lane.b32.xlu0 %v762, 32
        %v2900 = vpop.permute.xlu0 %2899
        %2901 = vrot.lane.b32.xlu0 %v294, 32
        %v2902 = vpop.permute.xlu0 %2901
        %2903 = vrot.lane.b32.xlu0 %v295, 32
        %v2904 = vpop.permute.xlu0 %2903
        %2905 = vrot.lane.b32.xlu0 %v296, 32
        %v2906 = vpop.permute.xlu0 %2905
        %2907 = vrot.lane.b32.xlu0 %v297, 32
        %v2908 = vpop.permute.xlu0 %2907
        %2909 = vrot.lane.b32.xlu0 %v298, 32
        %v2910 = vpop.permute.xlu0 %2909
        %2911 = vrot.lane.b32.xlu0 %v299, 32
        %v2912 = vpop.permute.xlu0 %2911
        %2913 = vrot.lane.b32.xlu0 %v300, 32
        %v2914 = vpop.permute.xlu0 %2913
        %2915 = vrot.lane.b32.xlu0 %v763, 32
        %v2916 = vpop.permute.xlu0 %2915
        %2917 = vrot.lane.b32.xlu0 %v302, 32
        %v2918 = vpop.permute.xlu0 %2917
        %2919 = vrot.lane.b32.xlu0 %v303, 32
        %v2920 = vpop.permute.xlu0 %2919
        %2921 = vrot.lane.b32.xlu0 %v304, 32
        %v2922 = vpop.permute.xlu0 %2921
        %2923 = vrot.lane.b32.xlu0 %v305, 32
        %v2924 = vpop.permute.xlu0 %2923
        %2925 = vrot.lane.b32.xlu0 %v306, 32
        %v2926 = vpop.permute.xlu0 %2925
        %2927 = vrot.lane.b32.xlu0 %v307, 32
        %v2928 = vpop.permute.xlu0 %2927
        %2929 = vrot.lane.b32.xlu0 %v308, 32
        %v2930 = vpop.permute.xlu0 %2929
        %2931 = vrot.lane.b32.xlu0 %v764, 32
        %v2932 = vpop.permute.xlu0 %2931
        %3005 = vrot.lane.b32.xlu0 %v310, 36
        %v3006 = vpop.permute.xlu0 %3005
        %3007 = vrot.lane.b32.xlu0 %v311, 36
        %v3008 = vpop.permute.xlu0 %3007
        %3009 = vrot.lane.b32.xlu0 %v312, 36
        %v3010 = vpop.permute.xlu0 %3009
        %3011 = vrot.lane.b32.xlu0 %v313, 36
        %v3012 = vpop.permute.xlu0 %3011
        %3013 = vrot.lane.b32.xlu0 %v314, 36
        %v3014 = vpop.permute.xlu0 %3013
        %3015 = vrot.lane.b32.xlu0 %v315, 36
        %v3016 = vpop.permute.xlu0 %3015
        %3017 = vrot.lane.b32.xlu0 %v316, 36
        %v3018 = vpop.permute.xlu0 %3017
        %3019 = vrot.lane.b32.xlu0 %v765, 36
        %v3020 = vpop.permute.xlu0 %3019
        %3021 = vrot.lane.b32.xlu0 %v318, 36
        %v3022 = vpop.permute.xlu0 %3021
        %3023 = vrot.lane.b32.xlu0 %v319, 36
        %v3024 = vpop.permute.xlu0 %3023
        %3025 = vrot.lane.b32.xlu0 %v320, 36
        %v3026 = vpop.permute.xlu0 %3025
        %3027 = vrot.lane.b32.xlu0 %v321, 36
        %v3028 = vpop.permute.xlu0 %3027
        %3029 = vrot.lane.b32.xlu0 %v322, 36
        %v3030 = vpop.permute.xlu0 %3029
        %3031 = vrot.lane.b32.xlu0 %v323, 36
        %v3032 = vpop.permute.xlu0 %3031
        %3033 = vrot.lane.b32.xlu0 %v324, 36
        %v3034 = vpop.permute.xlu0 %3033
        %3035 = vrot.lane.b32.xlu0 %v766, 36
        %v3036 = vpop.permute.xlu0 %3035
        %3037 = vrot.lane.b32.xlu0 %v326, 36
        %v3038 = vpop.permute.xlu0 %3037
        %3039 = vrot.lane.b32.xlu0 %v327, 36
        %v3040 = vpop.permute.xlu0 %3039
        %3041 = vrot.lane.b32.xlu0 %v328, 36
        %v3042 = vpop.permute.xlu0 %3041
        %3043 = vrot.lane.b32.xlu0 %v329, 36
        %v3044 = vpop.permute.xlu0 %3043
        %3045 = vrot.lane.b32.xlu0 %v330, 36
        %v3046 = vpop.permute.xlu0 %3045
        %3047 = vrot.lane.b32.xlu0 %v331, 36
        %v3048 = vpop.permute.xlu0 %3047
        %3049 = vrot.lane.b32.xlu0 %v332, 36
        %v3050 = vpop.permute.xlu0 %3049
        %3051 = vrot.lane.b32.xlu0 %v767, 36
        %v3052 = vpop.permute.xlu0 %3051
        %3053 = vrot.lane.b32.xlu0 %v334, 36
        %v3054 = vpop.permute.xlu0 %3053
        %3055 = vrot.lane.b32.xlu0 %v335, 36
        %v3056 = vpop.permute.xlu0 %3055
        %3057 = vrot.lane.b32.xlu0 %v336, 36
        %v3058 = vpop.permute.xlu0 %3057
        %3059 = vrot.lane.b32.xlu0 %v337, 36
        %v3060 = vpop.permute.xlu0 %3059
        %3061 = vrot.lane.b32.xlu0 %v338, 36
        %v3062 = vpop.permute.xlu0 %3061
        %3063 = vrot.lane.b32.xlu0 %v339, 36
        %v3064 = vpop.permute.xlu0 %3063
        %3065 = vrot.lane.b32.xlu0 %v340, 36
        %v3066 = vpop.permute.xlu0 %3065
        %3067 = vrot.lane.b32.xlu0 %v768, 36
        %v3068 = vpop.permute.xlu0 %3067
        %3069 = vrot.lane.b32.xlu0 %v342, 36
        %v3070 = vpop.permute.xlu0 %3069
        %3071 = vrot.lane.b32.xlu0 %v343, 36
        %v3072 = vpop.permute.xlu0 %3071
        %3073 = vrot.lane.b32.xlu0 %v344, 36
        %v3074 = vpop.permute.xlu0 %3073
        %3075 = vrot.lane.b32.xlu0 %v345, 36
        %v3076 = vpop.permute.xlu0 %3075
        %3077 = vrot.lane.b32.xlu0 %v346, 36
        %v3078 = vpop.permute.xlu0 %3077
        %3079 = vrot.lane.b32.xlu0 %v347, 36
        %v3080 = vpop.permute.xlu0 %3079
        %3081 = vrot.lane.b32.xlu0 %v348, 36
        %v3082 = vpop.permute.xlu0 %3081
        %3083 = vrot.lane.b32.xlu0 %v769, 36
        %v3084 = vpop.permute.xlu0 %3083
        %3085 = vrot.lane.b32.xlu0 %v350, 36
        %v3086 = vpop.permute.xlu0 %3085
        %3087 = vrot.lane.b32.xlu0 %v351, 36
        %v3088 = vpop.permute.xlu0 %3087
        %3089 = vrot.lane.b32.xlu0 %v352, 36
        %v3090 = vpop.permute.xlu0 %3089
        %3091 = vrot.lane.b32.xlu0 %v353, 36
        %v3092 = vpop.permute.xlu0 %3091
        %3093 = vrot.lane.b32.xlu0 %v354, 36
        %v3094 = vpop.permute.xlu0 %3093
        %3095 = vrot.lane.b32.xlu0 %v355, 36
        %v3096 = vpop.permute.xlu0 %3095
        %3097 = vrot.lane.b32.xlu0 %v356, 36
        %v3098 = vpop.permute.xlu0 %3097
        %3099 = vrot.lane.b32.xlu0 %v770, 36
        %v3100 = vpop.permute.xlu0 %3099
        %3101 = vrot.lane.b32.xlu0 %v358, 36
        %v3102 = vpop.permute.xlu0 %3101
        %3103 = vrot.lane.b32.xlu0 %v359, 36
        %v3104 = vpop.permute.xlu0 %3103
        %3105 = vrot.lane.b32.xlu0 %v360, 36
        %v3106 = vpop.permute.xlu0 %3105
        %3107 = vrot.lane.b32.xlu0 %v361, 36
        %v3108 = vpop.permute.xlu0 %3107
        %3109 = vrot.lane.b32.xlu0 %v362, 36
        %v3110 = vpop.permute.xlu0 %3109
        %3111 = vrot.lane.b32.xlu0 %v363, 36
        %v3112 = vpop.permute.xlu0 %3111
        %3113 = vrot.lane.b32.xlu0 %v364, 36
        %v3114 = vpop.permute.xlu0 %3113
        %3115 = vrot.lane.b32.xlu0 %v771, 36
        %v3116 = vpop.permute.xlu0 %3115
        %3117 = vrot.lane.b32.xlu0 %v366, 36
        %v3118 = vpop.permute.xlu0 %3117
        %3119 = vrot.lane.b32.xlu0 %v367, 36
        %v3120 = vpop.permute.xlu0 %3119
        %3121 = vrot.lane.b32.xlu0 %v368, 36
        %v3122 = vpop.permute.xlu0 %3121
        %3123 = vrot.lane.b32.xlu0 %v369, 36
        %v3124 = vpop.permute.xlu0 %3123
        %3125 = vrot.lane.b32.xlu0 %v370, 36
        %v3126 = vpop.permute.xlu0 %3125
        %3127 = vrot.lane.b32.xlu0 %v371, 36
        %v3128 = vpop.permute.xlu0 %3127
        %3129 = vrot.lane.b32.xlu0 %v372, 36
        %v3130 = vpop.permute.xlu0 %3129
        %3131 = vrot.lane.b32.xlu0 %v772, 36
        %v3132 = vpop.permute.xlu0 %3131
        %3205 = vrot.lane.b32.xlu0 %v374, 40
        %v3206 = vpop.permute.xlu0 %3205
        %3207 = vrot.lane.b32.xlu0 %v375, 40
        %v3208 = vpop.permute.xlu0 %3207
        %3209 = vrot.lane.b32.xlu0 %v376, 40
        %v3210 = vpop.permute.xlu0 %3209
        %3211 = vrot.lane.b32.xlu0 %v377, 40
        %v3212 = vpop.permute.xlu0 %3211
        %3213 = vrot.lane.b32.xlu0 %v378, 40
        %v3214 = vpop.permute.xlu0 %3213
        %3215 = vrot.lane.b32.xlu0 %v379, 40
        %v3216 = vpop.permute.xlu0 %3215
        %3217 = vrot.lane.b32.xlu0 %v380, 40
        %v3218 = vpop.permute.xlu0 %3217
        %3219 = vrot.lane.b32.xlu0 %v773, 40
        %v3220 = vpop.permute.xlu0 %3219
        %3221 = vrot.lane.b32.xlu0 %v382, 40
        %v3222 = vpop.permute.xlu0 %3221
        %3223 = vrot.lane.b32.xlu0 %v383, 40
        %v3224 = vpop.permute.xlu0 %3223
        %3225 = vrot.lane.b32.xlu0 %v384, 40
        %v3226 = vpop.permute.xlu0 %3225
        %3227 = vrot.lane.b32.xlu0 %v385, 40
        %v3228 = vpop.permute.xlu0 %3227
        %3229 = vrot.lane.b32.xlu0 %v386, 40
        %v3230 = vpop.permute.xlu0 %3229
        %3231 = vrot.lane.b32.xlu0 %v387, 40
        %v3232 = vpop.permute.xlu0 %3231
        %3233 = vrot.lane.b32.xlu0 %v388, 40
        %v3234 = vpop.permute.xlu0 %3233
        %3235 = vrot.lane.b32.xlu0 %v774, 40
        %v3236 = vpop.permute.xlu0 %3235
        %3237 = vrot.lane.b32.xlu0 %v390, 40
        %v3238 = vpop.permute.xlu0 %3237
        %3239 = vrot.lane.b32.xlu0 %v391, 40
        %v3240 = vpop.permute.xlu0 %3239
        %3241 = vrot.lane.b32.xlu0 %v392, 40
        %v3242 = vpop.permute.xlu0 %3241
        %3243 = vrot.lane.b32.xlu0 %v393, 40
        %v3244 = vpop.permute.xlu0 %3243
        %3245 = vrot.lane.b32.xlu0 %v394, 40
        %v3246 = vpop.permute.xlu0 %3245
        %3247 = vrot.lane.b32.xlu0 %v395, 40
        %v3248 = vpop.permute.xlu0 %3247
        %3249 = vrot.lane.b32.xlu0 %v396, 40
        %v3250 = vpop.permute.xlu0 %3249
        %3251 = vrot.lane.b32.xlu0 %v775, 40
        %v3252 = vpop.permute.xlu0 %3251
        %3253 = vrot.lane.b32.xlu0 %v398, 40
        %v3254 = vpop.permute.xlu0 %3253
        %3255 = vrot.lane.b32.xlu0 %v399, 40
        %v3256 = vpop.permute.xlu0 %3255
        %3257 = vrot.lane.b32.xlu0 %v400, 40
        %v3258 = vpop.permute.xlu0 %3257
        %3259 = vrot.lane.b32.xlu0 %v401, 40
        %v3260 = vpop.permute.xlu0 %3259
        %3261 = vrot.lane.b32.xlu0 %v402, 40
        %v3262 = vpop.permute.xlu0 %3261
        %3263 = vrot.lane.b32.xlu0 %v403, 40
        %v3264 = vpop.permute.xlu0 %3263
        %3265 = vrot.lane.b32.xlu0 %v404, 40
        %v3266 = vpop.permute.xlu0 %3265
        %3267 = vrot.lane.b32.xlu0 %v776, 40
        %v3268 = vpop.permute.xlu0 %3267
        %3269 = vrot.lane.b32.xlu0 %v406, 40
        %v3270 = vpop.permute.xlu0 %3269
        %3271 = vrot.lane.b32.xlu0 %v407, 40
        %v3272 = vpop.permute.xlu0 %3271
        %3273 = vrot.lane.b32.xlu0 %v408, 40
        %v3274 = vpop.permute.xlu0 %3273
        %3275 = vrot.lane.b32.xlu0 %v409, 40
        %v3276 = vpop.permute.xlu0 %3275
        %3277 = vrot.lane.b32.xlu0 %v410, 40
        %v3278 = vpop.permute.xlu0 %3277
        %3279 = vrot.lane.b32.xlu0 %v411, 40
        %v3280 = vpop.permute.xlu0 %3279
        %3281 = vrot.lane.b32.xlu0 %v412, 40
        %v3282 = vpop.permute.xlu0 %3281
        %3283 = vrot.lane.b32.xlu0 %v777, 40
        %v3284 = vpop.permute.xlu0 %3283
        %3285 = vrot.lane.b32.xlu0 %v414, 40
        %v3286 = vpop.permute.xlu0 %3285
        %3287 = vrot.lane.b32.xlu0 %v415, 40
        %v3288 = vpop.permute.xlu0 %3287
        %3289 = vrot.lane.b32.xlu0 %v416, 40
        %v3290 = vpop.permute.xlu0 %3289
        %3291 = vrot.lane.b32.xlu0 %v417, 40
        %v3292 = vpop.permute.xlu0 %3291
        %3293 = vrot.lane.b32.xlu0 %v418, 40
        %v3294 = vpop.permute.xlu0 %3293
        %3295 = vrot.lane.b32.xlu0 %v419, 40
        %v3296 = vpop.permute.xlu0 %3295
        %3297 = vrot.lane.b32.xlu0 %v420, 40
        %v3298 = vpop.permute.xlu0 %3297
        %3299 = vrot.lane.b32.xlu0 %v778, 40
        %v3300 = vpop.permute.xlu0 %3299
        %3301 = vrot.lane.b32.xlu0 %v422, 40
        %v3302 = vpop.permute.xlu0 %3301
        %3303 = vrot.lane.b32.xlu0 %v423, 40
        %v3304 = vpop.permute.xlu0 %3303
        %3305 = vrot.lane.b32.xlu0 %v424, 40
        %v3306 = vpop.permute.xlu0 %3305
        %3307 = vrot.lane.b32.xlu0 %v425, 40
        %v3308 = vpop.permute.xlu0 %3307
        %3309 = vrot.lane.b32.xlu0 %v426, 40
        %v3310 = vpop.permute.xlu0 %3309
        %3311 = vrot.lane.b32.xlu0 %v427, 40
        %v3312 = vpop.permute.xlu0 %3311
        %3313 = vrot.lane.b32.xlu0 %v428, 40
        %v3314 = vpop.permute.xlu0 %3313
        %3315 = vrot.lane.b32.xlu0 %v779, 40
        %v3316 = vpop.permute.xlu0 %3315
        %3317 = vrot.lane.b32.xlu0 %v430, 40
        %v3318 = vpop.permute.xlu0 %3317
        %3319 = vrot.lane.b32.xlu0 %v431, 40
        %v3320 = vpop.permute.xlu0 %3319
        %3321 = vrot.lane.b32.xlu0 %v432, 40
        %v3322 = vpop.permute.xlu0 %3321
        %3323 = vrot.lane.b32.xlu0 %v433, 40
        %v3324 = vpop.permute.xlu0 %3323
        %3325 = vrot.lane.b32.xlu0 %v434, 40
        %v3326 = vpop.permute.xlu0 %3325
        %3327 = vrot.lane.b32.xlu0 %v435, 40
        %v3328 = vpop.permute.xlu0 %3327
        %3329 = vrot.lane.b32.xlu0 %v436, 40
        %v3330 = vpop.permute.xlu0 %3329
        %3331 = vrot.lane.b32.xlu0 %v780, 40
        %v3332 = vpop.permute.xlu0 %3331
        %3405 = vrot.lane.b32.xlu0 %v438, 44
        %v3406 = vpop.permute.xlu0 %3405
        %3407 = vrot.lane.b32.xlu0 %v439, 44
        %v3408 = vpop.permute.xlu0 %3407
        %3409 = vrot.lane.b32.xlu0 %v440, 44
        %v3410 = vpop.permute.xlu0 %3409
        %3411 = vrot.lane.b32.xlu0 %v441, 44
        %v3412 = vpop.permute.xlu0 %3411
        %3413 = vrot.lane.b32.xlu0 %v442, 44
        %v3414 = vpop.permute.xlu0 %3413
        %3415 = vrot.lane.b32.xlu0 %v443, 44
        %v3416 = vpop.permute.xlu0 %3415
        %3417 = vrot.lane.b32.xlu0 %v444, 44
        %v3418 = vpop.permute.xlu0 %3417
        %3419 = vrot.lane.b32.xlu0 %v781, 44
        %v3420 = vpop.permute.xlu0 %3419
        %3421 = vrot.lane.b32.xlu0 %v446, 44
        %v3422 = vpop.permute.xlu0 %3421
        %3423 = vrot.lane.b32.xlu0 %v447, 44
        %v3424 = vpop.permute.xlu0 %3423
        %3425 = vrot.lane.b32.xlu0 %v448, 44
        %v3426 = vpop.permute.xlu0 %3425
        %3427 = vrot.lane.b32.xlu0 %v449, 44
        %v3428 = vpop.permute.xlu0 %3427
        %3429 = vrot.lane.b32.xlu0 %v450, 44
        %v3430 = vpop.permute.xlu0 %3429
        %3431 = vrot.lane.b32.xlu0 %v451, 44
        %v3432 = vpop.permute.xlu0 %3431
        %3433 = vrot.lane.b32.xlu0 %v452, 44
        %v3434 = vpop.permute.xlu0 %3433
        %3435 = vrot.lane.b32.xlu0 %v782, 44
        %v3436 = vpop.permute.xlu0 %3435
        %3437 = vrot.lane.b32.xlu0 %v454, 44
        %v3438 = vpop.permute.xlu0 %3437
        %3439 = vrot.lane.b32.xlu0 %v455, 44
        %v3440 = vpop.permute.xlu0 %3439
        %3441 = vrot.lane.b32.xlu0 %v456, 44
        %v3442 = vpop.permute.xlu0 %3441
        %3443 = vrot.lane.b32.xlu0 %v457, 44
        %v3444 = vpop.permute.xlu0 %3443
        %3445 = vrot.lane.b32.xlu0 %v458, 44
        %v3446 = vpop.permute.xlu0 %3445
        %3447 = vrot.lane.b32.xlu0 %v459, 44
        %v3448 = vpop.permute.xlu0 %3447
        %3449 = vrot.lane.b32.xlu0 %v460, 44
        %v3450 = vpop.permute.xlu0 %3449
        %3451 = vrot.lane.b32.xlu0 %v783, 44
        %v3452 = vpop.permute.xlu0 %3451
        %3453 = vrot.lane.b32.xlu0 %v462, 44
        %v3454 = vpop.permute.xlu0 %3453
        %3455 = vrot.lane.b32.xlu0 %v463, 44
        %v3456 = vpop.permute.xlu0 %3455
        %3457 = vrot.lane.b32.xlu0 %v464, 44
        %v3458 = vpop.permute.xlu0 %3457
        %3459 = vrot.lane.b32.xlu0 %v465, 44
        %v3460 = vpop.permute.xlu0 %3459
        %3461 = vrot.lane.b32.xlu0 %v466, 44
        %v3462 = vpop.permute.xlu0 %3461
        %3463 = vrot.lane.b32.xlu0 %v467, 44
        %v3464 = vpop.permute.xlu0 %3463
        %3465 = vrot.lane.b32.xlu0 %v468, 44
        %v3466 = vpop.permute.xlu0 %3465
        %3467 = vrot.lane.b32.xlu0 %v784, 44
        %v3468 = vpop.permute.xlu0 %3467
        %3469 = vrot.lane.b32.xlu0 %v470, 44
        %v3470 = vpop.permute.xlu0 %3469
        %3471 = vrot.lane.b32.xlu0 %v471, 44
        %v3472 = vpop.permute.xlu0 %3471
        %3473 = vrot.lane.b32.xlu0 %v472, 44
        %v3474 = vpop.permute.xlu0 %3473
        %3475 = vrot.lane.b32.xlu0 %v473, 44
        %v3476 = vpop.permute.xlu0 %3475
        %3477 = vrot.lane.b32.xlu0 %v474, 44
        %v3478 = vpop.permute.xlu0 %3477
        %3479 = vrot.lane.b32.xlu0 %v475, 44
        %v3480 = vpop.permute.xlu0 %3479
        %3481 = vrot.lane.b32.xlu0 %v476, 44
        %v3482 = vpop.permute.xlu0 %3481
        %3483 = vrot.lane.b32.xlu0 %v785, 44
        %v3484 = vpop.permute.xlu0 %3483
        %3485 = vrot.lane.b32.xlu0 %v478, 44
        %v3486 = vpop.permute.xlu0 %3485
        %3487 = vrot.lane.b32.xlu0 %v479, 44
        %v3488 = vpop.permute.xlu0 %3487
        %3489 = vrot.lane.b32.xlu0 %v480, 44
        %v3490 = vpop.permute.xlu0 %3489
        %3491 = vrot.lane.b32.xlu0 %v481, 44
        %v3492 = vpop.permute.xlu0 %3491
        %3493 = vrot.lane.b32.xlu0 %v482, 44
        %v3494 = vpop.permute.xlu0 %3493
        %3495 = vrot.lane.b32.xlu0 %v483, 44
        %v3496 = vpop.permute.xlu0 %3495
        %3497 = vrot.lane.b32.xlu0 %v484, 44
        %v3498 = vpop.permute.xlu0 %3497
        %3499 = vrot.lane.b32.xlu0 %v786, 44
        %v3500 = vpop.permute.xlu0 %3499
        %3501 = vrot.lane.b32.xlu0 %v486, 44
        %v3502 = vpop.permute.xlu0 %3501
        %3503 = vrot.lane.b32.xlu0 %v487, 44
        %v3504 = vpop.permute.xlu0 %3503
        %3505 = vrot.lane.b32.xlu0 %v488, 44
        %v3506 = vpop.permute.xlu0 %3505
        %3507 = vrot.lane.b32.xlu0 %v489, 44
        %v3508 = vpop.permute.xlu0 %3507
        %3509 = vrot.lane.b32.xlu0 %v490, 44
        %v3510 = vpop.permute.xlu0 %3509
        %3511 = vrot.lane.b32.xlu0 %v491, 44
        %v3512 = vpop.permute.xlu0 %3511
        %3513 = vrot.lane.b32.xlu0 %v492, 44
        %v3514 = vpop.permute.xlu0 %3513
        %3515 = vrot.lane.b32.xlu0 %v787, 44
        %v3516 = vpop.permute.xlu0 %3515
        %3517 = vrot.lane.b32.xlu0 %v494, 44
        %v3518 = vpop.permute.xlu0 %3517
        %3519 = vrot.lane.b32.xlu0 %v495, 44
        %v3520 = vpop.permute.xlu0 %3519
        %3521 = vrot.lane.b32.xlu0 %v496, 44
        %v3522 = vpop.permute.xlu0 %3521
        %3523 = vrot.lane.b32.xlu0 %v497, 44
        %v3524 = vpop.permute.xlu0 %3523
        %3525 = vrot.lane.b32.xlu0 %v498, 44
        %v3526 = vpop.permute.xlu0 %3525
        %3527 = vrot.lane.b32.xlu0 %v499, 44
        %v3528 = vpop.permute.xlu0 %3527
        %3529 = vrot.lane.b32.xlu0 %v500, 44
        %v3530 = vpop.permute.xlu0 %3529
        %3531 = vrot.lane.b32.xlu0 %v788, 44
        %v3532 = vpop.permute.xlu0 %3531
        %3605 = vrot.lane.b32.xlu0 %v502, 48
        %v3606 = vpop.permute.xlu0 %3605
        %3607 = vrot.lane.b32.xlu0 %v503, 48
        %v3608 = vpop.permute.xlu0 %3607
        %3609 = vrot.lane.b32.xlu0 %v504, 48
        %v3610 = vpop.permute.xlu0 %3609
        %3611 = vrot.lane.b32.xlu0 %v505, 48
        %v3612 = vpop.permute.xlu0 %3611
        %3613 = vrot.lane.b32.xlu0 %v506, 48
        %v3614 = vpop.permute.xlu0 %3613
        %3615 = vrot.lane.b32.xlu0 %v507, 48
        %v3616 = vpop.permute.xlu0 %3615
        %3617 = vrot.lane.b32.xlu0 %v508, 48
        %v3618 = vpop.permute.xlu0 %3617
        %3619 = vrot.lane.b32.xlu0 %v789, 48
        %v3620 = vpop.permute.xlu0 %3619
        %3621 = vrot.lane.b32.xlu0 %v510, 48
        %v3622 = vpop.permute.xlu0 %3621
        %3623 = vrot.lane.b32.xlu0 %v511, 48
        %v3624 = vpop.permute.xlu0 %3623
        %3625 = vrot.lane.b32.xlu0 %v512, 48
        %v3626 = vpop.permute.xlu0 %3625
        %3627 = vrot.lane.b32.xlu0 %v513, 48
        %v3628 = vpop.permute.xlu0 %3627
        %3629 = vrot.lane.b32.xlu0 %v514, 48
        %v3630 = vpop.permute.xlu0 %3629
        %3631 = vrot.lane.b32.xlu0 %v515, 48
        %v3632 = vpop.permute.xlu0 %3631
        %3633 = vrot.lane.b32.xlu0 %v516, 48
        %v3634 = vpop.permute.xlu0 %3633
        %3635 = vrot.lane.b32.xlu0 %v790, 48
        %v3636 = vpop.permute.xlu0 %3635
        %3637 = vrot.lane.b32.xlu0 %v518, 48
        %v3638 = vpop.permute.xlu0 %3637
        %3639 = vrot.lane.b32.xlu0 %v519, 48
        %v3640 = vpop.permute.xlu0 %3639
        %3641 = vrot.lane.b32.xlu0 %v520, 48
        %v3642 = vpop.permute.xlu0 %3641
        %3643 = vrot.lane.b32.xlu0 %v521, 48
        %v3644 = vpop.permute.xlu0 %3643
        %3645 = vrot.lane.b32.xlu0 %v522, 48
        %v3646 = vpop.permute.xlu0 %3645
        %3647 = vrot.lane.b32.xlu0 %v523, 48
        %v3648 = vpop.permute.xlu0 %3647
        %3649 = vrot.lane.b32.xlu0 %v524, 48
        %v3650 = vpop.permute.xlu0 %3649
        %3651 = vrot.lane.b32.xlu0 %v791, 48
        %v3652 = vpop.permute.xlu0 %3651
        %3653 = vrot.lane.b32.xlu0 %v526, 48
        %v3654 = vpop.permute.xlu0 %3653
        %3655 = vrot.lane.b32.xlu0 %v527, 48
        %v3656 = vpop.permute.xlu0 %3655
        %3657 = vrot.lane.b32.xlu0 %v528, 48
        %v3658 = vpop.permute.xlu0 %3657
        %3659 = vrot.lane.b32.xlu0 %v529, 48
        %v3660 = vpop.permute.xlu0 %3659
        %3661 = vrot.lane.b32.xlu0 %v530, 48
        %v3662 = vpop.permute.xlu0 %3661
        %3663 = vrot.lane.b32.xlu0 %v531, 48
        %v3664 = vpop.permute.xlu0 %3663
        %3665 = vrot.lane.b32.xlu0 %v532, 48
        %v3666 = vpop.permute.xlu0 %3665
        %3667 = vrot.lane.b32.xlu0 %v792, 48
        %v3668 = vpop.permute.xlu0 %3667
        %3669 = vrot.lane.b32.xlu0 %v534, 48
        %v3670 = vpop.permute.xlu0 %3669
        %3671 = vrot.lane.b32.xlu0 %v535, 48
        %v3672 = vpop.permute.xlu0 %3671
        %3673 = vrot.lane.b32.xlu0 %v536, 48
        %v3674 = vpop.permute.xlu0 %3673
        %3675 = vrot.lane.b32.xlu0 %v537, 48
        %v3676 = vpop.permute.xlu0 %3675
        %3677 = vrot.lane.b32.xlu0 %v538, 48
        %v3678 = vpop.permute.xlu0 %3677
        %3679 = vrot.lane.b32.xlu0 %v539, 48
        %v3680 = vpop.permute.xlu0 %3679
        %3681 = vrot.lane.b32.xlu0 %v540, 48
        %v3682 = vpop.permute.xlu0 %3681
        %3683 = vrot.lane.b32.xlu0 %v793, 48
        %v3684 = vpop.permute.xlu0 %3683
        %3685 = vrot.lane.b32.xlu0 %v542, 48
        %v3686 = vpop.permute.xlu0 %3685
        %3687 = vrot.lane.b32.xlu0 %v543, 48
        %v3688 = vpop.permute.xlu0 %3687
        %3689 = vrot.lane.b32.xlu0 %v544, 48
        %v3690 = vpop.permute.xlu0 %3689
        %3691 = vrot.lane.b32.xlu0 %v545, 48
        %v3692 = vpop.permute.xlu0 %3691
        %3693 = vrot.lane.b32.xlu0 %v546, 48
        %v3694 = vpop.permute.xlu0 %3693
        %3695 = vrot.lane.b32.xlu0 %v547, 48
        %v3696 = vpop.permute.xlu0 %3695
        %3697 = vrot.lane.b32.xlu0 %v548, 48
        %v3698 = vpop.permute.xlu0 %3697
        %3699 = vrot.lane.b32.xlu0 %v794, 48
        %v3700 = vpop.permute.xlu0 %3699
        %3701 = vrot.lane.b32.xlu0 %v550, 48
        %v3702 = vpop.permute.xlu0 %3701
        %3703 = vrot.lane.b32.xlu0 %v551, 48
        %v3704 = vpop.permute.xlu0 %3703
        %3705 = vrot.lane.b32.xlu0 %v552, 48
        %v3706 = vpop.permute.xlu0 %3705
        %3707 = vrot.lane.b32.xlu0 %v553, 48
        %v3708 = vpop.permute.xlu0 %3707
        %3709 = vrot.lane.b32.xlu0 %v554, 48
        %v3710 = vpop.permute.xlu0 %3709
        %3711 = vrot.lane.b32.xlu0 %v555, 48
        %v3712 = vpop.permute.xlu0 %3711
        %3713 = vrot.lane.b32.xlu0 %v556, 48
        %v3714 = vpop.permute.xlu0 %3713
        %3715 = vrot.lane.b32.xlu0 %v795, 48
        %v3716 = vpop.permute.xlu0 %3715
        %3717 = vrot.lane.b32.xlu0 %v558, 48
        %v3718 = vpop.permute.xlu0 %3717
        %3719 = vrot.lane.b32.xlu0 %v559, 48
        %v3720 = vpop.permute.xlu0 %3719
        %3721 = vrot.lane.b32.xlu0 %v560, 48
        %v3722 = vpop.permute.xlu0 %3721
        %3723 = vrot.lane.b32.xlu0 %v561, 48
        %v3724 = vpop.permute.xlu0 %3723
        %3725 = vrot.lane.b32.xlu0 %v562, 48
        %v3726 = vpop.permute.xlu0 %3725
        %3727 = vrot.lane.b32.xlu0 %v563, 48
        %v3728 = vpop.permute.xlu0 %3727
        %3729 = vrot.lane.b32.xlu0 %v564, 48
        %v3730 = vpop.permute.xlu0 %3729
        %3731 = vrot.lane.b32.xlu0 %v796, 48
        %v3732 = vpop.permute.xlu0 %3731
        %3805 = vrot.lane.b32.xlu0 %v566, 52
        %v3806 = vpop.permute.xlu0 %3805
        %3807 = vrot.lane.b32.xlu0 %v567, 52
        %v3808 = vpop.permute.xlu0 %3807
        %3809 = vrot.lane.b32.xlu0 %v568, 52
        %v3810 = vpop.permute.xlu0 %3809
        %3811 = vrot.lane.b32.xlu0 %v569, 52
        %v3812 = vpop.permute.xlu0 %3811
        %3813 = vrot.lane.b32.xlu0 %v570, 52
        %v3814 = vpop.permute.xlu0 %3813
        %3815 = vrot.lane.b32.xlu0 %v571, 52
        %v3816 = vpop.permute.xlu0 %3815
        %3817 = vrot.lane.b32.xlu0 %v572, 52
        %v3818 = vpop.permute.xlu0 %3817
        %3819 = vrot.lane.b32.xlu0 %v797, 52
        %v3820 = vpop.permute.xlu0 %3819
        %3821 = vrot.lane.b32.xlu0 %v574, 52
        %v3822 = vpop.permute.xlu0 %3821
        %3823 = vrot.lane.b32.xlu0 %v575, 52
        %v3824 = vpop.permute.xlu0 %3823
        %3825 = vrot.lane.b32.xlu0 %v576, 52
        %v3826 = vpop.permute.xlu0 %3825
        %3827 = vrot.lane.b32.xlu0 %v577, 52
        %v3828 = vpop.permute.xlu0 %3827
        %3829 = vrot.lane.b32.xlu0 %v578, 52
        %v3830 = vpop.permute.xlu0 %3829
        %3831 = vrot.lane.b32.xlu0 %v579, 52
        %v3832 = vpop.permute.xlu0 %3831
        %3833 = vrot.lane.b32.xlu0 %v580, 52
        %v3834 = vpop.permute.xlu0 %3833
        %3835 = vrot.lane.b32.xlu0 %v798, 52
        %v3836 = vpop.permute.xlu0 %3835
        %3837 = vrot.lane.b32.xlu0 %v582, 52
        %v3838 = vpop.permute.xlu0 %3837
        %3839 = vrot.lane.b32.xlu0 %v583, 52
        %v3840 = vpop.permute.xlu0 %3839
        %3841 = vrot.lane.b32.xlu0 %v584, 52
        %v3842 = vpop.permute.xlu0 %3841
        %3843 = vrot.lane.b32.xlu0 %v585, 52
        %v3844 = vpop.permute.xlu0 %3843
        %3845 = vrot.lane.b32.xlu0 %v586, 52
        %v3846 = vpop.permute.xlu0 %3845
        %3847 = vrot.lane.b32.xlu0 %v587, 52
        %v3848 = vpop.permute.xlu0 %3847
        %3849 = vrot.lane.b32.xlu0 %v588, 52
        %v3850 = vpop.permute.xlu0 %3849
        %3851 = vrot.lane.b32.xlu0 %v799, 52
        %v3852 = vpop.permute.xlu0 %3851
        %3853 = vrot.lane.b32.xlu0 %v590, 52
        %v3854 = vpop.permute.xlu0 %3853
        %3855 = vrot.lane.b32.xlu0 %v591, 52
        %v3856 = vpop.permute.xlu0 %3855
        %3857 = vrot.lane.b32.xlu0 %v592, 52
        %v3858 = vpop.permute.xlu0 %3857
        %3859 = vrot.lane.b32.xlu0 %v593, 52
        %v3860 = vpop.permute.xlu0 %3859
        %3861 = vrot.lane.b32.xlu0 %v594, 52
        %v3862 = vpop.permute.xlu0 %3861
        %3863 = vrot.lane.b32.xlu0 %v595, 52
        %v3864 = vpop.permute.xlu0 %3863
        %3865 = vrot.lane.b32.xlu0 %v596, 52
        %v3866 = vpop.permute.xlu0 %3865
        %3867 = vrot.lane.b32.xlu0 %v800, 52
        %v3868 = vpop.permute.xlu0 %3867
        %3869 = vrot.lane.b32.xlu0 %v598, 52
        %v3870 = vpop.permute.xlu0 %3869
        %3871 = vrot.lane.b32.xlu0 %v599, 52
        %v3872 = vpop.permute.xlu0 %3871
        %3873 = vrot.lane.b32.xlu0 %v600, 52
        %v3874 = vpop.permute.xlu0 %3873
        %3875 = vrot.lane.b32.xlu0 %v601, 52
        %v3876 = vpop.permute.xlu0 %3875
        %3877 = vrot.lane.b32.xlu0 %v602, 52
        %v3878 = vpop.permute.xlu0 %3877
        %3879 = vrot.lane.b32.xlu0 %v603, 52
        %v3880 = vpop.permute.xlu0 %3879
        %3881 = vrot.lane.b32.xlu0 %v604, 52
        %v3882 = vpop.permute.xlu0 %3881
        %3883 = vrot.lane.b32.xlu0 %v801, 52
        %v3884 = vpop.permute.xlu0 %3883
        %3885 = vrot.lane.b32.xlu0 %v606, 52
        %v3886 = vpop.permute.xlu0 %3885
        %3887 = vrot.lane.b32.xlu0 %v607, 52
        %v3888 = vpop.permute.xlu0 %3887
        %3889 = vrot.lane.b32.xlu0 %v608, 52
        %v3890 = vpop.permute.xlu0 %3889
        %3891 = vrot.lane.b32.xlu0 %v609, 52
        %v3892 = vpop.permute.xlu0 %3891
        %3893 = vrot.lane.b32.xlu0 %v610, 52
        %v3894 = vpop.permute.xlu0 %3893
        %3895 = vrot.lane.b32.xlu0 %v611, 52
        %v3896 = vpop.permute.xlu0 %3895
        %3897 = vrot.lane.b32.xlu0 %v612, 52
        %v3898 = vpop.permute.xlu0 %3897
        %3899 = vrot.lane.b32.xlu0 %v802, 52
        %v3900 = vpop.permute.xlu0 %3899
        %3901 = vrot.lane.b32.xlu0 %v614, 52
        %v3902 = vpop.permute.xlu0 %3901
        %3903 = vrot.lane.b32.xlu0 %v615, 52
        %v3904 = vpop.permute.xlu0 %3903
        %3905 = vrot.lane.b32.xlu0 %v616, 52
        %v3906 = vpop.permute.xlu0 %3905
        %3907 = vrot.lane.b32.xlu0 %v617, 52
        %v3908 = vpop.permute.xlu0 %3907
        %3909 = vrot.lane.b32.xlu0 %v618, 52
        %v3910 = vpop.permute.xlu0 %3909
        %3911 = vrot.lane.b32.xlu0 %v619, 52
        %v3912 = vpop.permute.xlu0 %3911
        %3913 = vrot.lane.b32.xlu0 %v620, 52
        %v3914 = vpop.permute.xlu0 %3913
        %3915 = vrot.lane.b32.xlu0 %v803, 52
        %v3916 = vpop.permute.xlu0 %3915
        %3917 = vrot.lane.b32.xlu0 %v622, 52
        %v3918 = vpop.permute.xlu0 %3917
        %3919 = vrot.lane.b32.xlu0 %v623, 52
        %v3920 = vpop.permute.xlu0 %3919
        %3921 = vrot.lane.b32.xlu0 %v624, 52
        %v3922 = vpop.permute.xlu0 %3921
        %3923 = vrot.lane.b32.xlu0 %v625, 52
        %v3924 = vpop.permute.xlu0 %3923
        %3925 = vrot.lane.b32.xlu0 %v626, 52
        %v3926 = vpop.permute.xlu0 %3925
        %3927 = vrot.lane.b32.xlu0 %v627, 52
        %v3928 = vpop.permute.xlu0 %3927
        %3929 = vrot.lane.b32.xlu0 %v628, 52
        %v3930 = vpop.permute.xlu0 %3929
        %3931 = vrot.lane.b32.xlu0 %v804, 52
        %v3932 = vpop.permute.xlu0 %3931
        %4005 = vrot.lane.b32.xlu0 %v630, 56
        %v4006 = vpop.permute.xlu0 %4005
        %4007 = vrot.lane.b32.xlu0 %v631, 56
        %v4008 = vpop.permute.xlu0 %4007
        %4009 = vrot.lane.b32.xlu0 %v632, 56
        %v4010 = vpop.permute.xlu0 %4009
        %4011 = vrot.lane.b32.xlu0 %v633, 56
        %v4012 = vpop.permute.xlu0 %4011
        %4013 = vrot.lane.b32.xlu0 %v634, 56
        %v4014 = vpop.permute.xlu0 %4013
        %4015 = vrot.lane.b32.xlu0 %v635, 56
        %v4016 = vpop.permute.xlu0 %4015
        %4017 = vrot.lane.b32.xlu0 %v636, 56
        %v4018 = vpop.permute.xlu0 %4017
        %4019 = vrot.lane.b32.xlu0 %v805, 56
        %v4020 = vpop.permute.xlu0 %4019
        %4021 = vrot.lane.b32.xlu0 %v638, 56
        %v4022 = vpop.permute.xlu0 %4021
        %4023 = vrot.lane.b32.xlu0 %v639, 56
        %v4024 = vpop.permute.xlu0 %4023
        %4025 = vrot.lane.b32.xlu0 %v640, 56
        %v4026 = vpop.permute.xlu0 %4025
        %4027 = vrot.lane.b32.xlu0 %v641, 56
        %v4028 = vpop.permute.xlu0 %4027
        %4029 = vrot.lane.b32.xlu0 %v642, 56
        %v4030 = vpop.permute.xlu0 %4029
        %4031 = vrot.lane.b32.xlu0 %v643, 56
        %v4032 = vpop.permute.xlu0 %4031
        %4033 = vrot.lane.b32.xlu0 %v644, 56
        %v4034 = vpop.permute.xlu0 %4033
        %4035 = vrot.lane.b32.xlu0 %v806, 56
        %v4036 = vpop.permute.xlu0 %4035
        %4037 = vrot.lane.b32.xlu0 %v646, 56
        %v4038 = vpop.permute.xlu0 %4037
        %4039 = vrot.lane.b32.xlu0 %v647, 56
        %v4040 = vpop.permute.xlu0 %4039
        %4041 = vrot.lane.b32.xlu0 %v648, 56
        %v4042 = vpop.permute.xlu0 %4041
        %4043 = vrot.lane.b32.xlu0 %v649, 56
        %v4044 = vpop.permute.xlu0 %4043
        %4045 = vrot.lane.b32.xlu0 %v650, 56
        %v4046 = vpop.permute.xlu0 %4045
        %4047 = vrot.lane.b32.xlu0 %v651, 56
        %v4048 = vpop.permute.xlu0 %4047
        %4049 = vrot.lane.b32.xlu0 %v652, 56
        %v4050 = vpop.permute.xlu0 %4049
        %4051 = vrot.lane.b32.xlu0 %v807, 56
        %v4052 = vpop.permute.xlu0 %4051
        %4053 = vrot.lane.b32.xlu0 %v654, 56
        %v4054 = vpop.permute.xlu0 %4053
        %4055 = vrot.lane.b32.xlu0 %v655, 56
        %v4056 = vpop.permute.xlu0 %4055
        %4057 = vrot.lane.b32.xlu0 %v656, 56
        %v4058 = vpop.permute.xlu0 %4057
        %4059 = vrot.lane.b32.xlu0 %v657, 56
        %v4060 = vpop.permute.xlu0 %4059
        %4061 = vrot.lane.b32.xlu0 %v658, 56
        %v4062 = vpop.permute.xlu0 %4061
        %4063 = vrot.lane.b32.xlu0 %v659, 56
        %v4064 = vpop.permute.xlu0 %4063
        %4065 = vrot.lane.b32.xlu0 %v660, 56
        %v4066 = vpop.permute.xlu0 %4065
        %4067 = vrot.lane.b32.xlu0 %v808, 56
        %v4068 = vpop.permute.xlu0 %4067
        %4069 = vrot.lane.b32.xlu0 %v662, 56
        %v4070 = vpop.permute.xlu0 %4069
        %4071 = vrot.lane.b32.xlu0 %v663, 56
        %v4072 = vpop.permute.xlu0 %4071
        %4073 = vrot.lane.b32.xlu0 %v664, 56
        %v4074 = vpop.permute.xlu0 %4073
        %4075 = vrot.lane.b32.xlu0 %v665, 56
        %v4076 = vpop.permute.xlu0 %4075
        %4077 = vrot.lane.b32.xlu0 %v666, 56
        %v4078 = vpop.permute.xlu0 %4077
        %4079 = vrot.lane.b32.xlu0 %v667, 56
        %v4080 = vpop.permute.xlu0 %4079
        %4081 = vrot.lane.b32.xlu0 %v668, 56
        %v4082 = vpop.permute.xlu0 %4081
        %4083 = vrot.lane.b32.xlu0 %v809, 56
        %v4084 = vpop.permute.xlu0 %4083
        %4085 = vrot.lane.b32.xlu0 %v670, 56
        %v4086 = vpop.permute.xlu0 %4085
        %4087 = vrot.lane.b32.xlu0 %v671, 56
        %v4088 = vpop.permute.xlu0 %4087
        %4089 = vrot.lane.b32.xlu0 %v672, 56
        %v4090 = vpop.permute.xlu0 %4089
        %4091 = vrot.lane.b32.xlu0 %v673, 56
        %v4092 = vpop.permute.xlu0 %4091
        %4093 = vrot.lane.b32.xlu0 %v674, 56
        %v4094 = vpop.permute.xlu0 %4093
        %4095 = vrot.lane.b32.xlu0 %v675, 56
        %v4096 = vpop.permute.xlu0 %4095
        %4097 = vrot.lane.b32.xlu0 %v676, 56
        %v4098 = vpop.permute.xlu0 %4097
        %4099 = vrot.lane.b32.xlu0 %v810, 56
        %v4100 = vpop.permute.xlu0 %4099
        %4101 = vrot.lane.b32.xlu0 %v678, 56
        %v4102 = vpop.permute.xlu0 %4101
        %4103 = vrot.lane.b32.xlu0 %v679, 56
        %v4104 = vpop.permute.xlu0 %4103
        %4105 = vrot.lane.b32.xlu0 %v680, 56
        %v4106 = vpop.permute.xlu0 %4105
        %4107 = vrot.lane.b32.xlu0 %v681, 56
        %v4108 = vpop.permute.xlu0 %4107
        %4109 = vrot.lane.b32.xlu0 %v682, 56
        %v4110 = vpop.permute.xlu0 %4109
        %4111 = vrot.lane.b32.xlu0 %v683, 56
        %v4112 = vpop.permute.xlu0 %4111
        %4113 = vrot.lane.b32.xlu0 %v684, 56
        %v4114 = vpop.permute.xlu0 %4113
        %4115 = vrot.lane.b32.xlu0 %v811, 56
        %v4116 = vpop.permute.xlu0 %4115
        %4117 = vrot.lane.b32.xlu0 %v686, 56
        %v4118 = vpop.permute.xlu0 %4117
        %4119 = vrot.lane.b32.xlu0 %v687, 56
        %v4120 = vpop.permute.xlu0 %4119
        %4121 = vrot.lane.b32.xlu0 %v688, 56
        %v4122 = vpop.permute.xlu0 %4121
        %4123 = vrot.lane.b32.xlu0 %v689, 56
        %v4124 = vpop.permute.xlu0 %4123
        %4125 = vrot.lane.b32.xlu0 %v690, 56
        %v4126 = vpop.permute.xlu0 %4125
        %4127 = vrot.lane.b32.xlu0 %v691, 56
        %v4128 = vpop.permute.xlu0 %4127
        %4129 = vrot.lane.b32.xlu0 %v692, 56
        %v4130 = vpop.permute.xlu0 %4129
        %4131 = vrot.lane.b32.xlu0 %v812, 56
        %v4132 = vpop.permute.xlu0 %4131
        %4205 = vrot.lane.b32.xlu0 %v694, 60
        %v4206 = vpop.permute.xlu0 %4205
        %4207 = vrot.lane.b32.xlu0 %v695, 60
        %v4208 = vpop.permute.xlu0 %4207
        %4209 = vrot.lane.b32.xlu0 %v696, 60
        %v4210 = vpop.permute.xlu0 %4209
        %4211 = vrot.lane.b32.xlu0 %v697, 60
        %v4212 = vpop.permute.xlu0 %4211
        %4213 = vrot.lane.b32.xlu0 %v698, 60
        %v4214 = vpop.permute.xlu0 %4213
        %4215 = vrot.lane.b32.xlu0 %v699, 60
        %v4216 = vpop.permute.xlu0 %4215
        %4217 = vrot.lane.b32.xlu0 %v700, 60
        %v4218 = vpop.permute.xlu0 %4217
        %4219 = vrot.lane.b32.xlu0 %v813, 60
        %v4220 = vpop.permute.xlu0 %4219
        %4221 = vrot.lane.b32.xlu0 %v702, 60
        %v4222 = vpop.permute.xlu0 %4221
        %4223 = vrot.lane.b32.xlu0 %v703, 60
        %v4224 = vpop.permute.xlu0 %4223
        %4225 = vrot.lane.b32.xlu0 %v704, 60
        %v4226 = vpop.permute.xlu0 %4225
        %4227 = vrot.lane.b32.xlu0 %v705, 60
        %v4228 = vpop.permute.xlu0 %4227
        %4229 = vrot.lane.b32.xlu0 %v706, 60
        %v4230 = vpop.permute.xlu0 %4229
        %4231 = vrot.lane.b32.xlu0 %v707, 60
        %v4232 = vpop.permute.xlu0 %4231
        %4233 = vrot.lane.b32.xlu0 %v708, 60
        %v4234 = vpop.permute.xlu0 %4233
        %4235 = vrot.lane.b32.xlu0 %v814, 60
        %v4236 = vpop.permute.xlu0 %4235
        %4237 = vrot.lane.b32.xlu0 %v710, 60
        %v4238 = vpop.permute.xlu0 %4237
        %4239 = vrot.lane.b32.xlu0 %v711, 60
        %v4240 = vpop.permute.xlu0 %4239
        %4241 = vrot.lane.b32.xlu0 %v712, 60
        %v4242 = vpop.permute.xlu0 %4241
        %4243 = vrot.lane.b32.xlu0 %v713, 60
        %v4244 = vpop.permute.xlu0 %4243
        %4245 = vrot.lane.b32.xlu0 %v714, 60
        %v4246 = vpop.permute.xlu0 %4245
        %4247 = vrot.lane.b32.xlu0 %v715, 60
        %v4248 = vpop.permute.xlu0 %4247
        %4249 = vrot.lane.b32.xlu0 %v716, 60
        %v4250 = vpop.permute.xlu0 %4249
        %4251 = vrot.lane.b32.xlu0 %v815, 60
        %v4252 = vpop.permute.xlu0 %4251
        %4253 = vrot.lane.b32.xlu0 %v718, 60
        %v4254 = vpop.permute.xlu0 %4253
        %4255 = vrot.lane.b32.xlu0 %v719, 60
        %v4256 = vpop.permute.xlu0 %4255
        %4257 = vrot.lane.b32.xlu0 %v720, 60
        %v4258 = vpop.permute.xlu0 %4257
        %4259 = vrot.lane.b32.xlu0 %v721, 60
        %v4260 = vpop.permute.xlu0 %4259
        %4261 = vrot.lane.b32.xlu0 %v722, 60
        %v4262 = vpop.permute.xlu0 %4261
        %4263 = vrot.lane.b32.xlu0 %v723, 60
        %v4264 = vpop.permute.xlu0 %4263
        %4265 = vrot.lane.b32.xlu0 %v724, 60
        %v4266 = vpop.permute.xlu0 %4265
        %4267 = vrot.lane.b32.xlu0 %v816, 60
        %v4268 = vpop.permute.xlu0 %4267
        %4269 = vrot.lane.b32.xlu0 %v726, 60
        %v4270 = vpop.permute.xlu0 %4269
        %4271 = vrot.lane.b32.xlu0 %v727, 60
        %v4272 = vpop.permute.xlu0 %4271
        %4273 = vrot.lane.b32.xlu0 %v728, 60
        %v4274 = vpop.permute.xlu0 %4273
        %4275 = vrot.lane.b32.xlu0 %v729, 60
        %v4276 = vpop.permute.xlu0 %4275
        %4277 = vrot.lane.b32.xlu0 %v730, 60
        %v4278 = vpop.permute.xlu0 %4277
        %4279 = vrot.lane.b32.xlu0 %v731, 60
        %v4280 = vpop.permute.xlu0 %4279
        %4281 = vrot.lane.b32.xlu0 %v732, 60
        %v4282 = vpop.permute.xlu0 %4281
        %4283 = vrot.lane.b32.xlu0 %v817, 60
        %v4284 = vpop.permute.xlu0 %4283
        %4285 = vrot.lane.b32.xlu0 %v734, 60
        %v4286 = vpop.permute.xlu0 %4285
        %4287 = vrot.lane.b32.xlu0 %v735, 60
        %v4288 = vpop.permute.xlu0 %4287
        %4289 = vrot.lane.b32.xlu0 %v736, 60
        %v4290 = vpop.permute.xlu0 %4289
        %4291 = vrot.lane.b32.xlu0 %v737, 60
        %v4292 = vpop.permute.xlu0 %4291
        %4293 = vrot.lane.b32.xlu0 %v738, 60
        %v4294 = vpop.permute.xlu0 %4293
        %4295 = vrot.lane.b32.xlu0 %v739, 60
        %v4296 = vpop.permute.xlu0 %4295
        %4297 = vrot.lane.b32.xlu0 %v740, 60
        %v4298 = vpop.permute.xlu0 %4297
        %4299 = vrot.lane.b32.xlu0 %v818, 60
        %v4300 = vpop.permute.xlu0 %4299
        %4301 = vrot.lane.b32.xlu0 %v742, 60
        %v4302 = vpop.permute.xlu0 %4301
        %4303 = vrot.lane.b32.xlu0 %v743, 60
        %v4304 = vpop.permute.xlu0 %4303
        %4305 = vrot.lane.b32.xlu0 %v744, 60
        %v4306 = vpop.permute.xlu0 %4305
        %4307 = vrot.lane.b32.xlu0 %v745, 60
        %v4308 = vpop.permute.xlu0 %4307
        %4309 = vrot.lane.b32.xlu0 %v746, 60
        %v4310 = vpop.permute.xlu0 %4309
        %4311 = vrot.lane.b32.xlu0 %v747, 60
        %v4312 = vpop.permute.xlu0 %4311
        %4313 = vrot.lane.b32.xlu0 %v748, 60
        %v4314 = vpop.permute.xlu0 %4313
        %4315 = vrot.lane.b32.xlu0 %v819, 60
        %v4316 = vpop.permute.xlu0 %4315
        %4317 = vrot.lane.b32.xlu0 %v750, 60
        %v4318 = vpop.permute.xlu0 %4317
        %4319 = vrot.lane.b32.xlu0 %v751, 60
        %v4320 = vpop.permute.xlu0 %4319
        %4321 = vrot.lane.b32.xlu0 %v752, 60
        %v4322 = vpop.permute.xlu0 %4321
        %4323 = vrot.lane.b32.xlu0 %v753, 60
        %v4324 = vpop.permute.xlu0 %4323
        %4325 = vrot.lane.b32.xlu0 %v754, 60
        %v4326 = vpop.permute.xlu0 %4325
        %4327 = vrot.lane.b32.xlu0 %v755, 60
        %v4328 = vpop.permute.xlu0 %4327
        %4329 = vrot.lane.b32.xlu0 %v756, 60
        %v4330 = vpop.permute.xlu0 %4329
        %4331 = vrot.lane.b32.xlu0 %v820, 60
        %v4332 = vpop.permute.xlu0 %4331
        %vm4397 = vcmask 31744
        %v4398 = vsel %vm4397, %v245, %v1014
        %v4399 = vsel %vm4397, %v246, %v1016
        %v4400 = vsel %vm4397, %v247, %v1018
        %v4401 = vsel %vm4397, %v248, %v1020
        %v4402 = vsel %vm4397, %v249, %v1022
        %v4403 = vsel %vm4397, %v250, %v1024
        %v4404 = vsel %vm4397, %v251, %v1026
        %v4405 = vsel %vm4397, %v252, %v1028
        %v4406 = vsel %vm4397, %v253, %v1030
        %v4407 = vsel %vm4397, %v254, %v1032
        %v4408 = vsel %vm4397, %v255, %v1034
        %v4409 = vsel %vm4397, %v256, %v1036
        %v4410 = vsel %vm4397, %v257, %v1038
        %v4411 = vsel %vm4397, %v258, %v1040
        %v4412 = vsel %vm4397, %v259, %v1042
        %v4413 = vsel %vm4397, %v260, %v1044
        %v4414 = vsel %vm4397, %v261, %v1046
        %v4415 = vsel %vm4397, %v262, %v1048
        %v4416 = vsel %vm4397, %v263, %v1050
        %v4417 = vsel %vm4397, %v264, %v1052
        %v4418 = vsel %vm4397, %v265, %v1054
        %v4419 = vsel %vm4397, %v266, %v1056
        %v4420 = vsel %vm4397, %v267, %v1058
        %v4421 = vsel %vm4397, %v268, %v1060
        %v4422 = vsel %vm4397, %v269, %v1062
        %v4423 = vsel %vm4397, %v270, %v1064
        %v4424 = vsel %vm4397, %v271, %v1066
        %v4425 = vsel %vm4397, %v272, %v1068
        %v4426 = vsel %vm4397, %v273, %v1070
        %v4427 = vsel %vm4397, %v274, %v1072
        %v4428 = vsel %vm4397, %v275, %v1074
        %v4429 = vsel %vm4397, %v276, %v1076
        %v4430 = vsel %vm4397, %v277, %v1078
        %v4431 = vsel %vm4397, %v278, %v1080
        %v4432 = vsel %vm4397, %v279, %v1082
        %v4433 = vsel %vm4397, %v280, %v1084
        %v4434 = vsel %vm4397, %v281, %v1086
        %v4435 = vsel %vm4397, %v282, %v1088
        %v4436 = vsel %vm4397, %v283, %v1090
        %v4437 = vsel %vm4397, %v284, %v1092
        %v4438 = vsel %vm4397, %v285, %v1094
        %v4439 = vsel %vm4397, %v286, %v1096
        %v4440 = vsel %vm4397, %v287, %v1098
        %v4441 = vsel %vm4397, %v288, %v1100
        %v4442 = vsel %vm4397, %v289, %v1102
        %v4443 = vsel %vm4397, %v290, %v1104
        %v4444 = vsel %vm4397, %v291, %v1106
        %v4445 = vsel %vm4397, %v292, %v1108
        %v4446 = vsel %vm4397, %v293, %v1110
        %v4447 = vsel %vm4397, %v294, %v1112
        %v4448 = vsel %vm4397, %v295, %v1114
        %v4449 = vsel %vm4397, %v296, %v1116
        %v4450 = vsel %vm4397, %v297, %v1118
        %v4451 = vsel %vm4397, %v298, %v1120
        %v4452 = vsel %vm4397, %v299, %v1122
        %v4453 = vsel %vm4397, %v300, %v1124
        %v4454 = vsel %vm4397, %v301, %v1126
        %v4455 = vsel %vm4397, %v302, %v1128
        %v4456 = vsel %vm4397, %v303, %v1130
        %v4457 = vsel %vm4397, %v304, %v1132
        %v4458 = vsel %vm4397, %v305, %v1134
        %v4459 = vsel %vm4397, %v306, %v1136
        %v4460 = vsel %vm4397, %v307, %v1138
        %v4461 = vsel %vm4397, %v308, %v1140
        %vm4462 = vcmask 64512
        %v4463 = vsel %vm4462, %v4398, %v1270
        %v4464 = vsel %vm4462, %v4399, %v1272
        %v4465 = vsel %vm4462, %v4400, %v1274
        %v4466 = vsel %vm4462, %v4401, %v1276
        %v4467 = vsel %vm4462, %v4402, %v1278
        %v4468 = vsel %vm4462, %v4403, %v1280
        %v4469 = vsel %vm4462, %v4404, %v1282
        %v4470 = vsel %vm4462, %v4405, %v1284
        %v4471 = vsel %vm4462, %v4406, %v1286
        %v4472 = vsel %vm4462, %v4407, %v1288
        %v4473 = vsel %vm4462, %v4408, %v1290
        %v4474 = vsel %vm4462, %v4409, %v1292
        %v4475 = vsel %vm4462, %v4410, %v1294
        %v4476 = vsel %vm4462, %v4411, %v1296
        %v4477 = vsel %vm4462, %v4412, %v1298
        %v4478 = vsel %vm4462, %v4413, %v1300
        %v4479 = vsel %vm4462, %v4414, %v1302
        %v4480 = vsel %vm4462, %v4415, %v1304
        %v4481 = vsel %vm4462, %v4416, %v1306
        %v4482 = vsel %vm4462, %v4417, %v1308
        %v4483 = vsel %vm4462, %v4418, %v1310
        %v4484 = vsel %vm4462, %v4419, %v1312
        %v4485 = vsel %vm4462, %v4420, %v1314
        %v4486 = vsel %vm4462, %v4421, %v1316
        %v4487 = vsel %vm4462, %v4422, %v1318
        %v4488 = vsel %vm4462, %v4423, %v1320
        %v4489 = vsel %vm4462, %v4424, %v1322
        %v4490 = vsel %vm4462, %v4425, %v1324
        %v4491 = vsel %vm4462, %v4426, %v1326
        %v4492 = vsel %vm4462, %v4427, %v1328
        %v4493 = vsel %vm4462, %v4428, %v1330
        %v4494 = vsel %vm4462, %v4429, %v1332
        %v4495 = vsel %vm4462, %v4430, %v1334
        %v4496 = vsel %vm4462, %v4431, %v1336
        %v4497 = vsel %vm4462, %v4432, %v1338
        %v4498 = vsel %vm4462, %v4433, %v1340
        %v4499 = vsel %vm4462, %v4434, %v1342
        %v4500 = vsel %vm4462, %v4435, %v1344
        %v4501 = vsel %vm4462, %v4436, %v1346
        %v4502 = vsel %vm4462, %v4437, %v1348
        %v4503 = vsel %vm4462, %v4438, %v1350
        %v4504 = vsel %vm4462, %v4439, %v1352
        %v4505 = vsel %vm4462, %v4440, %v1354
        %v4506 = vsel %vm4462, %v4441, %v1356
        %v4507 = vsel %vm4462, %v4442, %v1358
        %v4508 = vsel %vm4462, %v4443, %v1360
        %v4509 = vsel %vm4462, %v4444, %v1362
        %v4510 = vsel %vm4462, %v4445, %v1364
        %v4511 = vsel %vm4462, %v4446, %v1366
        %v4512 = vsel %vm4462, %v4447, %v1368
        %v4513 = vsel %vm4462, %v4448, %v1370
        %v4514 = vsel %vm4462, %v4449, %v1372
        %v4515 = vsel %vm4462, %v4450, %v1374
        %v4516 = vsel %vm4462, %v4451, %v1376
        %v4517 = vsel %vm4462, %v4452, %v1378
        %v4518 = vsel %vm4462, %v4453, %v1380
        %v4519 = vsel %vm4462, %v4454, %v1382
        %v4520 = vsel %vm4462, %v4455, %v1384
        %v4521 = vsel %vm4462, %v4456, %v1386
        %v4522 = vsel %vm4462, %v4457, %v1388
        %v4523 = vsel %vm4462, %v4458, %v1390
        %v4524 = vsel %vm4462, %v4459, %v1392
        %v4525 = vsel %vm4462, %v4460, %v1394
        %v4526 = vsel %vm4462, %v4461, %v1396
        %vm4527 = vcmask 97280
        %v4528 = vsel %vm4527, %v4463, %v1526
        %v4529 = vsel %vm4527, %v4464, %v1528
        %v4530 = vsel %vm4527, %v4465, %v1530
        %v4531 = vsel %vm4527, %v4466, %v1532
        %v4532 = vsel %vm4527, %v4467, %v1534
        %v4533 = vsel %vm4527, %v4468, %v1536
        %v4534 = vsel %vm4527, %v4469, %v1538
        %v4535 = vsel %vm4527, %v4470, %v1540
        %v4536 = vsel %vm4527, %v4471, %v1542
        %v4537 = vsel %vm4527, %v4472, %v1544
        %v4538 = vsel %vm4527, %v4473, %v1546
        %v4539 = vsel %vm4527, %v4474, %v1548
        %v4540 = vsel %vm4527, %v4475, %v1550
        %v4541 = vsel %vm4527, %v4476, %v1552
        %v4542 = vsel %vm4527, %v4477, %v1554
        %v4543 = vsel %vm4527, %v4478, %v1556
        %v4544 = vsel %vm4527, %v4479, %v1558
        %v4545 = vsel %vm4527, %v4480, %v1560
        %v4546 = vsel %vm4527, %v4481, %v1562
        %v4547 = vsel %vm4527, %v4482, %v1564
        %v4548 = vsel %vm4527, %v4483, %v1566
        %v4549 = vsel %vm4527, %v4484, %v1568
        %v4550 = vsel %vm4527, %v4485, %v1570
        %v4551 = vsel %vm4527, %v4486, %v1572
        %v4552 = vsel %vm4527, %v4487, %v1574
        %v4553 = vsel %vm4527, %v4488, %v1576
        %v4554 = vsel %vm4527, %v4489, %v1578
        %v4555 = vsel %vm4527, %v4490, %v1580
        %v4556 = vsel %vm4527, %v4491, %v1582
        %v4557 = vsel %vm4527, %v4492, %v1584
        %v4558 = vsel %vm4527, %v4493, %v1586
        %v4559 = vsel %vm4527, %v4494, %v1588
        %v4560 = vsel %vm4527, %v4495, %v1590
        %v4561 = vsel %vm4527, %v4496, %v1592
        %v4562 = vsel %vm4527, %v4497, %v1594
        %v4563 = vsel %vm4527, %v4498, %v1596
        %v4564 = vsel %vm4527, %v4499, %v1598
        %v4565 = vsel %vm4527, %v4500, %v1600
        %v4566 = vsel %vm4527, %v4501, %v1602
        %v4567 = vsel %vm4527, %v4502, %v1604
        %v4568 = vsel %vm4527, %v4503, %v1606
        %v4569 = vsel %vm4527, %v4504, %v1608
        %v4570 = vsel %vm4527, %v4505, %v1610
        %v4571 = vsel %vm4527, %v4506, %v1612
        %v4572 = vsel %vm4527, %v4507, %v1614
        %v4573 = vsel %vm4527, %v4508, %v1616
        %v4574 = vsel %vm4527, %v4509, %v1618
        %v4575 = vsel %vm4527, %v4510, %v1620
        %v4576 = vsel %vm4527, %v4511, %v1622
        %v4577 = vsel %vm4527, %v4512, %v1624
        %v4578 = vsel %vm4527, %v4513, %v1626
        %v4579 = vsel %vm4527, %v4514, %v1628
        %v4580 = vsel %vm4527, %v4515, %v1630
        %v4581 = vsel %vm4527, %v4516, %v1632
        %v4582 = vsel %vm4527, %v4517, %v1634
        %v4583 = vsel %vm4527, %v4518, %v1636
        %v4584 = vsel %vm4527, %v4519, %v1638
        %v4585 = vsel %vm4527, %v4520, %v1640
        %v4586 = vsel %vm4527, %v4521, %v1642
        %v4587 = vsel %vm4527, %v4522, %v1644
        %v4588 = vsel %vm4527, %v4523, %v1646
        %v4589 = vsel %vm4527, %v4524, %v1648
        %v4590 = vsel %vm4527, %v4525, %v1650
        %v4591 = vsel %vm4527, %v4526, %v1652
        %vm4592 = vcmask 130048
        %v4593 = vsel %vm4592, %v4528, %v1782
        %v4594 = vsel %vm4592, %v4529, %v1784
        %v4595 = vsel %vm4592, %v4530, %v1786
        %v4596 = vsel %vm4592, %v4531, %v1788
        %v4597 = vsel %vm4592, %v4532, %v1790
        %v4598 = vsel %vm4592, %v4533, %v1792
        %v4599 = vsel %vm4592, %v4534, %v1794
        %v4600 = vsel %vm4592, %v4535, %v1796
        %v4601 = vsel %vm4592, %v4536, %v1798
        %v4602 = vsel %vm4592, %v4537, %v1800
        %v4603 = vsel %vm4592, %v4538, %v1802
        %v4604 = vsel %vm4592, %v4539, %v1804
        %v4605 = vsel %vm4592, %v4540, %v1806
        %v4606 = vsel %vm4592, %v4541, %v1808
        %v4607 = vsel %vm4592, %v4542, %v1810
        %v4608 = vsel %vm4592, %v4543, %v1812
        %v4609 = vsel %vm4592, %v4544, %v1814
        %v4610 = vsel %vm4592, %v4545, %v1816
        %v4611 = vsel %vm4592, %v4546, %v1818
        %v4612 = vsel %vm4592, %v4547, %v1820
        %v4613 = vsel %vm4592, %v4548, %v1822
        %v4614 = vsel %vm4592, %v4549, %v1824
        %v4615 = vsel %vm4592, %v4550, %v1826
        %v4616 = vsel %vm4592, %v4551, %v1828
        %v4617 = vsel %vm4592, %v4552, %v1830
        %v4618 = vsel %vm4592, %v4553, %v1832
        %v4619 = vsel %vm4592, %v4554, %v1834
        %v4620 = vsel %vm4592, %v4555, %v1836
        %v4621 = vsel %vm4592, %v4556, %v1838
        %v4622 = vsel %vm4592, %v4557, %v1840
        %v4623 = vsel %vm4592, %v4558, %v1842
        %v4624 = vsel %vm4592, %v4559, %v1844
        %v4625 = vsel %vm4592, %v4560, %v1846
        %v4626 = vsel %vm4592, %v4561, %v1848
        %v4627 = vsel %vm4592, %v4562, %v1850
        %v4628 = vsel %vm4592, %v4563, %v1852
        %v4629 = vsel %vm4592, %v4564, %v1854
        %v4630 = vsel %vm4592, %v4565, %v1856
        %v4631 = vsel %vm4592, %v4566, %v1858
        %v4632 = vsel %vm4592, %v4567, %v1860
        %v4633 = vsel %vm4592, %v4568, %v1862
        %v4634 = vsel %vm4592, %v4569, %v1864
        %v4635 = vsel %vm4592, %v4570, %v1866
        %v4636 = vsel %vm4592, %v4571, %v1868
        %v4637 = vsel %vm4592, %v4572, %v1870
        %v4638 = vsel %vm4592, %v4573, %v1872
        %v4639 = vsel %vm4592, %v4574, %v1874
        %v4640 = vsel %vm4592, %v4575, %v1876
        %v4641 = vsel %vm4592, %v4576, %v1878
        %v4642 = vsel %vm4592, %v4577, %v1880
        %v4643 = vsel %vm4592, %v4578, %v1882
        %v4644 = vsel %vm4592, %v4579, %v1884
        %v4645 = vsel %vm4592, %v4580, %v1886
        %v4646 = vsel %vm4592, %v4581, %v1888
        %v4647 = vsel %vm4592, %v4582, %v1890
        %v4648 = vsel %vm4592, %v4583, %v1892
        %v4649 = vsel %vm4592, %v4584, %v1894
        %v4650 = vsel %vm4592, %v4585, %v1896
        %v4651 = vsel %vm4592, %v4586, %v1898
        %v4652 = vsel %vm4592, %v4587, %v1900
        %v4653 = vsel %vm4592, %v4588, %v1902
        %v4654 = vsel %vm4592, %v4589, %v1904
        %v4655 = vsel %vm4592, %v4590, %v1906
        %v4656 = vsel %vm4592, %v4591, %v1908
        %vm4657 = vcmask 162816
        %v4658 = vsel %vm4657, %v4593, %v2038
        %v4659 = vsel %vm4657, %v4594, %v2040
        %v4660 = vsel %vm4657, %v4595, %v2042
        %v4661 = vsel %vm4657, %v4596, %v2044
        %v4662 = vsel %vm4657, %v4597, %v2046
        %v4663 = vsel %vm4657, %v4598, %v2048
        %v4664 = vsel %vm4657, %v4599, %v2050
        %v4665 = vsel %vm4657, %v4600, %v2052
        %v4666 = vsel %vm4657, %v4601, %v2054
        %v4667 = vsel %vm4657, %v4602, %v2056
        %v4668 = vsel %vm4657, %v4603, %v2058
        %v4669 = vsel %vm4657, %v4604, %v2060
        %v4670 = vsel %vm4657, %v4605, %v2062
        %v4671 = vsel %vm4657, %v4606, %v2064
        %v4672 = vsel %vm4657, %v4607, %v2066
        %v4673 = vsel %vm4657, %v4608, %v2068
        %v4674 = vsel %vm4657, %v4609, %v2070
        %v4675 = vsel %vm4657, %v4610, %v2072
        %v4676 = vsel %vm4657, %v4611, %v2074
        %v4677 = vsel %vm4657, %v4612, %v2076
        %v4678 = vsel %vm4657, %v4613, %v2078
        %v4679 = vsel %vm4657, %v4614, %v2080
        %v4680 = vsel %vm4657, %v4615, %v2082
        %v4681 = vsel %vm4657, %v4616, %v2084
        %v4682 = vsel %vm4657, %v4617, %v2086
        %v4683 = vsel %vm4657, %v4618, %v2088
        %v4684 = vsel %vm4657, %v4619, %v2090
        %v4685 = vsel %vm4657, %v4620, %v2092
        %v4686 = vsel %vm4657, %v4621, %v2094
        %v4687 = vsel %vm4657, %v4622, %v2096
        %v4688 = vsel %vm4657, %v4623, %v2098
        %v4689 = vsel %vm4657, %v4624, %v2100
        %v4690 = vsel %vm4657, %v4625, %v2102
        %v4691 = vsel %vm4657, %v4626, %v2104
        %v4692 = vsel %vm4657, %v4627, %v2106
        %v4693 = vsel %vm4657, %v4628, %v2108
        %v4694 = vsel %vm4657, %v4629, %v2110
        %v4695 = vsel %vm4657, %v4630, %v2112
        %v4696 = vsel %vm4657, %v4631, %v2114
        %v4697 = vsel %vm4657, %v4632, %v2116
        %v4698 = vsel %vm4657, %v4633, %v2118
        %v4699 = vsel %vm4657, %v4634, %v2120
        %v4700 = vsel %vm4657, %v4635, %v2122
        %v4701 = vsel %vm4657, %v4636, %v2124
        %v4702 = vsel %vm4657, %v4637, %v2126
        %v4703 = vsel %vm4657, %v4638, %v2128
        %v4704 = vsel %vm4657, %v4639, %v2130
        %v4705 = vsel %vm4657, %v4640, %v2132
        %v4706 = vsel %vm4657, %v4641, %v2134
        %v4707 = vsel %vm4657, %v4642, %v2136
        %v4708 = vsel %vm4657, %v4643, %v2138
        %v4709 = vsel %vm4657, %v4644, %v2140
        %v4710 = vsel %vm4657, %v4645, %v2142
        %v4711 = vsel %vm4657, %v4646, %v2144
        %v4712 = vsel %vm4657, %v4647, %v2146
        %v4713 = vsel %vm4657, %v4648, %v2148
        %v4714 = vsel %vm4657, %v4649, %v2150
        %v4715 = vsel %vm4657, %v4650, %v2152
        %v4716 = vsel %vm4657, %v4651, %v2154
        %v4717 = vsel %vm4657, %v4652, %v2156
        %v4718 = vsel %vm4657, %v4653, %v2158
        %v4719 = vsel %vm4657, %v4654, %v2160
        %v4720 = vsel %vm4657, %v4655, %v2162
        %v4721 = vsel %vm4657, %v4656, %v2164
        %vm4722 = vcmask 195584
        %v4723 = vsel %vm4722, %v4658, %v2294
        %v4724 = vsel %vm4722, %v4659, %v2296
        %v4725 = vsel %vm4722, %v4660, %v2298
        %v4726 = vsel %vm4722, %v4661, %v2300
        %v4727 = vsel %vm4722, %v4662, %v2302
        %v4728 = vsel %vm4722, %v4663, %v2304
        %v4729 = vsel %vm4722, %v4664, %v2306
        %v4730 = vsel %vm4722, %v4665, %v2308
        %v4731 = vsel %vm4722, %v4666, %v2310
        %v4732 = vsel %vm4722, %v4667, %v2312
        %v4733 = vsel %vm4722, %v4668, %v2314
        %v4734 = vsel %vm4722, %v4669, %v2316
        %v4735 = vsel %vm4722, %v4670, %v2318
        %v4736 = vsel %vm4722, %v4671, %v2320
        %v4737 = vsel %vm4722, %v4672, %v2322
        %v4738 = vsel %vm4722, %v4673, %v2324
        %v4739 = vsel %vm4722, %v4674, %v2326
        %v4740 = vsel %vm4722, %v4675, %v2328
        %v4741 = vsel %vm4722, %v4676, %v2330
        %v4742 = vsel %vm4722, %v4677, %v2332
        %v4743 = vsel %vm4722, %v4678, %v2334
        %v4744 = vsel %vm4722, %v4679, %v2336
        %v4745 = vsel %vm4722, %v4680, %v2338
        %v4746 = vsel %vm4722, %v4681, %v2340
        %v4747 = vsel %vm4722, %v4682, %v2342
        %v4748 = vsel %vm4722, %v4683, %v2344
        %v4749 = vsel %vm4722, %v4684, %v2346
        %v4750 = vsel %vm4722, %v4685, %v2348
        %v4751 = vsel %vm4722, %v4686, %v2350
        %v4752 = vsel %vm4722, %v4687, %v2352
        %v4753 = vsel %vm4722, %v4688, %v2354
        %v4754 = vsel %vm4722, %v4689, %v2356
        %v4755 = vsel %vm4722, %v4690, %v2358
        %v4756 = vsel %vm4722, %v4691, %v2360
        %v4757 = vsel %vm4722, %v4692, %v2362
        %v4758 = vsel %vm4722, %v4693, %v2364
        %v4759 = vsel %vm4722, %v4694, %v2366
        %v4760 = vsel %vm4722, %v4695, %v2368
        %v4761 = vsel %vm4722, %v4696, %v2370
        %v4762 = vsel %vm4722, %v4697, %v2372
        %v4763 = vsel %vm4722, %v4698, %v2374
        %v4764 = vsel %vm4722, %v4699, %v2376
        %v4765 = vsel %vm4722, %v4700, %v2378
        %v4766 = vsel %vm4722, %v4701, %v2380
        %v4767 = vsel %vm4722, %v4702, %v2382
        %v4768 = vsel %vm4722, %v4703, %v2384
        %v4769 = vsel %vm4722, %v4704, %v2386
        %v4770 = vsel %vm4722, %v4705, %v2388
        %v4771 = vsel %vm4722, %v4706, %v2390
        %v4772 = vsel %vm4722, %v4707, %v2392
        %v4773 = vsel %vm4722, %v4708, %v2394
        %v4774 = vsel %vm4722, %v4709, %v2396
        %v4775 = vsel %vm4722, %v4710, %v2398
        %v4776 = vsel %vm4722, %v4711, %v2400
        %v4777 = vsel %vm4722, %v4712, %v2402
        %v4778 = vsel %vm4722, %v4713, %v2404
        %v4779 = vsel %vm4722, %v4714, %v2406
        %v4780 = vsel %vm4722, %v4715, %v2408
        %v4781 = vsel %vm4722, %v4716, %v2410
        %v4782 = vsel %vm4722, %v4717, %v2412
        %v4783 = vsel %vm4722, %v4718, %v2414
        %v4784 = vsel %vm4722, %v4719, %v2416
        %v4785 = vsel %vm4722, %v4720, %v2418
        %v4786 = vsel %vm4722, %v4721, %v2420
        %vm4787 = vcmask 228352
        %v4788 = vsel %vm4787, %v4723, %v2550
        %v4789 = vsel %vm4787, %v4724, %v2552
        %v4790 = vsel %vm4787, %v4725, %v2554
        %v4791 = vsel %vm4787, %v4726, %v2556
        %v4792 = vsel %vm4787, %v4727, %v2558
        %v4793 = vsel %vm4787, %v4728, %v2560
        %v4794 = vsel %vm4787, %v4729, %v2562
        %v4795 = vsel %vm4787, %v4730, %v2564
        %v4796 = vsel %vm4787, %v4731, %v2566
        %v4797 = vsel %vm4787, %v4732, %v2568
        %v4798 = vsel %vm4787, %v4733, %v2570
        %v4799 = vsel %vm4787, %v4734, %v2572
        %v4800 = vsel %vm4787, %v4735, %v2574
        %v4801 = vsel %vm4787, %v4736, %v2576
        %v4802 = vsel %vm4787, %v4737, %v2578
        %v4803 = vsel %vm4787, %v4738, %v2580
        %v4804 = vsel %vm4787, %v4739, %v2582
        %v4805 = vsel %vm4787, %v4740, %v2584
        %v4806 = vsel %vm4787, %v4741, %v2586
        %v4807 = vsel %vm4787, %v4742, %v2588
        %v4808 = vsel %vm4787, %v4743, %v2590
        %v4809 = vsel %vm4787, %v4744, %v2592
        %v4810 = vsel %vm4787, %v4745, %v2594
        %v4811 = vsel %vm4787, %v4746, %v2596
        %v4812 = vsel %vm4787, %v4747, %v2598
        %v4813 = vsel %vm4787, %v4748, %v2600
        %v4814 = vsel %vm4787, %v4749, %v2602
        %v4815 = vsel %vm4787, %v4750, %v2604
        %v4816 = vsel %vm4787, %v4751, %v2606
        %v4817 = vsel %vm4787, %v4752, %v2608
        %v4818 = vsel %vm4787, %v4753, %v2610
        %v4819 = vsel %vm4787, %v4754, %v2612
        %v4820 = vsel %vm4787, %v4755, %v2614
        %v4821 = vsel %vm4787, %v4756, %v2616
        %v4822 = vsel %vm4787, %v4757, %v2618
        %v4823 = vsel %vm4787, %v4758, %v2620
        %v4824 = vsel %vm4787, %v4759, %v2622
        %v4825 = vsel %vm4787, %v4760, %v2624
        %v4826 = vsel %vm4787, %v4761, %v2626
        %v4827 = vsel %vm4787, %v4762, %v2628
        %v4828 = vsel %vm4787, %v4763, %v2630
        %v4829 = vsel %vm4787, %v4764, %v2632
        %v4830 = vsel %vm4787, %v4765, %v2634
        %v4831 = vsel %vm4787, %v4766, %v2636
        %v4832 = vsel %vm4787, %v4767, %v2638
        %v4833 = vsel %vm4787, %v4768, %v2640
        %v4834 = vsel %vm4787, %v4769, %v2642
        %v4835 = vsel %vm4787, %v4770, %v2644
        %v4836 = vsel %vm4787, %v4771, %v2646
        %v4837 = vsel %vm4787, %v4772, %v2648
        %v4838 = vsel %vm4787, %v4773, %v2650
        %v4839 = vsel %vm4787, %v4774, %v2652
        %v4840 = vsel %vm4787, %v4775, %v2654
        %v4841 = vsel %vm4787, %v4776, %v2656
        %v4842 = vsel %vm4787, %v4777, %v2658
        %v4843 = vsel %vm4787, %v4778, %v2660
        %v4844 = vsel %vm4787, %v4779, %v2662
        %v4845 = vsel %vm4787, %v4780, %v2664
        %v4846 = vsel %vm4787, %v4781, %v2666
        %v4847 = vsel %vm4787, %v4782, %v2668
        %v4848 = vsel %vm4787, %v4783, %v2670
        %v4849 = vsel %vm4787, %v4784, %v2672
        %v4850 = vsel %vm4787, %v4785, %v2674
        %v4851 = vsel %vm4787, %v4786, %v2676
        %vm4852 = vcmask 261120
        %v4853 = vsel %vm4852, %v4788, %v2806
        %v4854 = vsel %vm4852, %v4789, %v2808
        %v4855 = vsel %vm4852, %v4790, %v2810
        %v4856 = vsel %vm4852, %v4791, %v2812
        %v4857 = vsel %vm4852, %v4792, %v2814
        %v4858 = vsel %vm4852, %v4793, %v2816
        %v4859 = vsel %vm4852, %v4794, %v2818
        %v4860 = vsel %vm4852, %v4795, %v2820
        %v4861 = vsel %vm4852, %v4796, %v2822
        %v4862 = vsel %vm4852, %v4797, %v2824
        %v4863 = vsel %vm4852, %v4798, %v2826
        %v4864 = vsel %vm4852, %v4799, %v2828
        %v4865 = vsel %vm4852, %v4800, %v2830
        %v4866 = vsel %vm4852, %v4801, %v2832
        %v4867 = vsel %vm4852, %v4802, %v2834
        %v4868 = vsel %vm4852, %v4803, %v2836
        %v4869 = vsel %vm4852, %v4804, %v2838
        %v4870 = vsel %vm4852, %v4805, %v2840
        %v4871 = vsel %vm4852, %v4806, %v2842
        %v4872 = vsel %vm4852, %v4807, %v2844
        %v4873 = vsel %vm4852, %v4808, %v2846
        %v4874 = vsel %vm4852, %v4809, %v2848
        %v4875 = vsel %vm4852, %v4810, %v2850
        %v4876 = vsel %vm4852, %v4811, %v2852
        %v4877 = vsel %vm4852, %v4812, %v2854
        %v4878 = vsel %vm4852, %v4813, %v2856
        %v4879 = vsel %vm4852, %v4814, %v2858
        %v4880 = vsel %vm4852, %v4815, %v2860
        %v4881 = vsel %vm4852, %v4816, %v2862
        %v4882 = vsel %vm4852, %v4817, %v2864
        %v4883 = vsel %vm4852, %v4818, %v2866
        %v4884 = vsel %vm4852, %v4819, %v2868
        %v4885 = vsel %vm4852, %v4820, %v2870
        %v4886 = vsel %vm4852, %v4821, %v2872
        %v4887 = vsel %vm4852, %v4822, %v2874
        %v4888 = vsel %vm4852, %v4823, %v2876
        %v4889 = vsel %vm4852, %v4824, %v2878
        %v4890 = vsel %vm4852, %v4825, %v2880
        %v4891 = vsel %vm4852, %v4826, %v2882
        %v4892 = vsel %vm4852, %v4827, %v2884
        %v4893 = vsel %vm4852, %v4828, %v2886
        %v4894 = vsel %vm4852, %v4829, %v2888
        %v4895 = vsel %vm4852, %v4830, %v2890
        %v4896 = vsel %vm4852, %v4831, %v2892
        %v4897 = vsel %vm4852, %v4832, %v2894
        %v4898 = vsel %vm4852, %v4833, %v2896
        %v4899 = vsel %vm4852, %v4834, %v2898
        %v4900 = vsel %vm4852, %v4835, %v2900
        %v4901 = vsel %vm4852, %v4836, %v2902
        %v4902 = vsel %vm4852, %v4837, %v2904
        %v4903 = vsel %vm4852, %v4838, %v2906
        %v4904 = vsel %vm4852, %v4839, %v2908
        %v4905 = vsel %vm4852, %v4840, %v2910
        %v4906 = vsel %vm4852, %v4841, %v2912
        %v4907 = vsel %vm4852, %v4842, %v2914
        %v4908 = vsel %vm4852, %v4843, %v2916
        %v4909 = vsel %vm4852, %v4844, %v2918
        %v4910 = vsel %vm4852, %v4845, %v2920
        %v4911 = vsel %vm4852, %v4846, %v2922
        %v4912 = vsel %vm4852, %v4847, %v2924
        %v4913 = vsel %vm4852, %v4848, %v2926
        %v4914 = vsel %vm4852, %v4849, %v2928
        %v4915 = vsel %vm4852, %v4850, %v2930
        %v4916 = vsel %vm4852, %v4851, %v2932
        %vm4917 = vcmask 293888
        %v4918 = vsel %vm4917, %v4853, %v3006
        %v4919 = vsel %vm4917, %v4854, %v3008
        %v4920 = vsel %vm4917, %v4855, %v3010
        %v4921 = vsel %vm4917, %v4856, %v3012
        %v4922 = vsel %vm4917, %v4857, %v3014
        %v4923 = vsel %vm4917, %v4858, %v3016
        %v4924 = vsel %vm4917, %v4859, %v3018
        %v4925 = vsel %vm4917, %v4860, %v3020
        %v4926 = vsel %vm4917, %v4861, %v3022
        %v4927 = vsel %vm4917, %v4862, %v3024
        %v4928 = vsel %vm4917, %v4863, %v3026
        %v4929 = vsel %vm4917, %v4864, %v3028
        %v4930 = vsel %vm4917, %v4865, %v3030
        %v4931 = vsel %vm4917, %v4866, %v3032
        %v4932 = vsel %vm4917, %v4867, %v3034
        %v4933 = vsel %vm4917, %v4868, %v3036
        %v4934 = vsel %vm4917, %v4869, %v3038
        %v4935 = vsel %vm4917, %v4870, %v3040
        %v4936 = vsel %vm4917, %v4871, %v3042
        %v4937 = vsel %vm4917, %v4872, %v3044
        %v4938 = vsel %vm4917, %v4873, %v3046
        %v4939 = vsel %vm4917, %v4874, %v3048
        %v4940 = vsel %vm4917, %v4875, %v3050
        %v4941 = vsel %vm4917, %v4876, %v3052
        %v4942 = vsel %vm4917, %v4877, %v3054
        %v4943 = vsel %vm4917, %v4878, %v3056
        %v4944 = vsel %vm4917, %v4879, %v3058
        %v4945 = vsel %vm4917, %v4880, %v3060
        %v4946 = vsel %vm4917, %v4881, %v3062
        %v4947 = vsel %vm4917, %v4882, %v3064
        %v4948 = vsel %vm4917, %v4883, %v3066
        %v4949 = vsel %vm4917, %v4884, %v3068
        %v4950 = vsel %vm4917, %v4885, %v3070
        %v4951 = vsel %vm4917, %v4886, %v3072
        %v4952 = vsel %vm4917, %v4887, %v3074
        %v4953 = vsel %vm4917, %v4888, %v3076
        %v4954 = vsel %vm4917, %v4889, %v3078
        %v4955 = vsel %vm4917, %v4890, %v3080
        %v4956 = vsel %vm4917, %v4891, %v3082
        %v4957 = vsel %vm4917, %v4892, %v3084
        %v4958 = vsel %vm4917, %v4893, %v3086
        %v4959 = vsel %vm4917, %v4894, %v3088
        %v4960 = vsel %vm4917, %v4895, %v3090
        %v4961 = vsel %vm4917, %v4896, %v3092
        %v4962 = vsel %vm4917, %v4897, %v3094
        %v4963 = vsel %vm4917, %v4898, %v3096
        %v4964 = vsel %vm4917, %v4899, %v3098
        %v4965 = vsel %vm4917, %v4900, %v3100
        %v4966 = vsel %vm4917, %v4901, %v3102
        %v4967 = vsel %vm4917, %v4902, %v3104
        %v4968 = vsel %vm4917, %v4903, %v3106
        %v4969 = vsel %vm4917, %v4904, %v3108
        %v4970 = vsel %vm4917, %v4905, %v3110
        %v4971 = vsel %vm4917, %v4906, %v3112
        %v4972 = vsel %vm4917, %v4907, %v3114
        %v4973 = vsel %vm4917, %v4908, %v3116
        %v4974 = vsel %vm4917, %v4909, %v3118
        %v4975 = vsel %vm4917, %v4910, %v3120
        %v4976 = vsel %vm4917, %v4911, %v3122
        %v4977 = vsel %vm4917, %v4912, %v3124
        %v4978 = vsel %vm4917, %v4913, %v3126
        %v4979 = vsel %vm4917, %v4914, %v3128
        %v4980 = vsel %vm4917, %v4915, %v3130
        %v4981 = vsel %vm4917, %v4916, %v3132
        %vm4982 = vcmask 326656
        %v4983 = vsel %vm4982, %v4918, %v3206
        %v4984 = vsel %vm4982, %v4919, %v3208
        %v4985 = vsel %vm4982, %v4920, %v3210
        %v4986 = vsel %vm4982, %v4921, %v3212
        %v4987 = vsel %vm4982, %v4922, %v3214
        %v4988 = vsel %vm4982, %v4923, %v3216
        %v4989 = vsel %vm4982, %v4924, %v3218
        %v4990 = vsel %vm4982, %v4925, %v3220
        %v4991 = vsel %vm4982, %v4926, %v3222
        %v4992 = vsel %vm4982, %v4927, %v3224
        %v4993 = vsel %vm4982, %v4928, %v3226
        %v4994 = vsel %vm4982, %v4929, %v3228
        %v4995 = vsel %vm4982, %v4930, %v3230
        %v4996 = vsel %vm4982, %v4931, %v3232
        %v4997 = vsel %vm4982, %v4932, %v3234
        %v4998 = vsel %vm4982, %v4933, %v3236
        %v4999 = vsel %vm4982, %v4934, %v3238
        %v5000 = vsel %vm4982, %v4935, %v3240
        %v5001 = vsel %vm4982, %v4936, %v3242
        %v5002 = vsel %vm4982, %v4937, %v3244
        %v5003 = vsel %vm4982, %v4938, %v3246
        %v5004 = vsel %vm4982, %v4939, %v3248
        %v5005 = vsel %vm4982, %v4940, %v3250
        %v5006 = vsel %vm4982, %v4941, %v3252
        %v5007 = vsel %vm4982, %v4942, %v3254
        %v5008 = vsel %vm4982, %v4943, %v3256
        %v5009 = vsel %vm4982, %v4944, %v3258
        %v5010 = vsel %vm4982, %v4945, %v3260
        %v5011 = vsel %vm4982, %v4946, %v3262
        %v5012 = vsel %vm4982, %v4947, %v3264
        %v5013 = vsel %vm4982, %v4948, %v3266
        %v5014 = vsel %vm4982, %v4949, %v3268
        %v5015 = vsel %vm4982, %v4950, %v3270
        %v5016 = vsel %vm4982, %v4951, %v3272
        %v5017 = vsel %vm4982, %v4952, %v3274
        %v5018 = vsel %vm4982, %v4953, %v3276
        %v5019 = vsel %vm4982, %v4954, %v3278
        %v5020 = vsel %vm4982, %v4955, %v3280
        %v5021 = vsel %vm4982, %v4956, %v3282
        %v5022 = vsel %vm4982, %v4957, %v3284
        %v5023 = vsel %vm4982, %v4958, %v3286
        %v5024 = vsel %vm4982, %v4959, %v3288
        %v5025 = vsel %vm4982, %v4960, %v3290
        %v5026 = vsel %vm4982, %v4961, %v3292
        %v5027 = vsel %vm4982, %v4962, %v3294
        %v5028 = vsel %vm4982, %v4963, %v3296
        %v5029 = vsel %vm4982, %v4964, %v3298
        %v5030 = vsel %vm4982, %v4965, %v3300
        %v5031 = vsel %vm4982, %v4966, %v3302
        %v5032 = vsel %vm4982, %v4967, %v3304
        %v5033 = vsel %vm4982, %v4968, %v3306
        %v5034 = vsel %vm4982, %v4969, %v3308
        %v5035 = vsel %vm4982, %v4970, %v3310
        %v5036 = vsel %vm4982, %v4971, %v3312
        %v5037 = vsel %vm4982, %v4972, %v3314
        %v5038 = vsel %vm4982, %v4973, %v3316
        %v5039 = vsel %vm4982, %v4974, %v3318
        %v5040 = vsel %vm4982, %v4975, %v3320
        %v5041 = vsel %vm4982, %v4976, %v3322
        %v5042 = vsel %vm4982, %v4977, %v3324
        %v5043 = vsel %vm4982, %v4978, %v3326
        %v5044 = vsel %vm4982, %v4979, %v3328
        %v5045 = vsel %vm4982, %v4980, %v3330
        %v5046 = vsel %vm4982, %v4981, %v3332
        %vm5047 = vcmask 359424
        %v5048 = vsel %vm5047, %v4983, %v3406
        %v5049 = vsel %vm5047, %v4984, %v3408
        %v5050 = vsel %vm5047, %v4985, %v3410
        %v5051 = vsel %vm5047, %v4986, %v3412
        %v5052 = vsel %vm5047, %v4987, %v3414
        %v5053 = vsel %vm5047, %v4988, %v3416
        %v5054 = vsel %vm5047, %v4989, %v3418
        %v5055 = vsel %vm5047, %v4990, %v3420
        %v5056 = vsel %vm5047, %v4991, %v3422
        %v5057 = vsel %vm5047, %v4992, %v3424
        %v5058 = vsel %vm5047, %v4993, %v3426
        %v5059 = vsel %vm5047, %v4994, %v3428
        %v5060 = vsel %vm5047, %v4995, %v3430
        %v5061 = vsel %vm5047, %v4996, %v3432
        %v5062 = vsel %vm5047, %v4997, %v3434
        %v5063 = vsel %vm5047, %v4998, %v3436
        %v5064 = vsel %vm5047, %v4999, %v3438
        %v5065 = vsel %vm5047, %v5000, %v3440
        %v5066 = vsel %vm5047, %v5001, %v3442
        %v5067 = vsel %vm5047, %v5002, %v3444
        %v5068 = vsel %vm5047, %v5003, %v3446
        %v5069 = vsel %vm5047, %v5004, %v3448
        %v5070 = vsel %vm5047, %v5005, %v3450
        %v5071 = vsel %vm5047, %v5006, %v3452
        %v5072 = vsel %vm5047, %v5007, %v3454
        %v5073 = vsel %vm5047, %v5008, %v3456
        %v5074 = vsel %vm5047, %v5009, %v3458
        %v5075 = vsel %vm5047, %v5010, %v3460
        %v5076 = vsel %vm5047, %v5011, %v3462
        %v5077 = vsel %vm5047, %v5012, %v3464
        %v5078 = vsel %vm5047, %v5013, %v3466
        %v5079 = vsel %vm5047, %v5014, %v3468
        %v5080 = vsel %vm5047, %v5015, %v3470
        %v5081 = vsel %vm5047, %v5016, %v3472
        %v5082 = vsel %vm5047, %v5017, %v3474
        %v5083 = vsel %vm5047, %v5018, %v3476
        %v5084 = vsel %vm5047, %v5019, %v3478
        %v5085 = vsel %vm5047, %v5020, %v3480
        %v5086 = vsel %vm5047, %v5021, %v3482
        %v5087 = vsel %vm5047, %v5022, %v3484
        %v5088 = vsel %vm5047, %v5023, %v3486
        %v5089 = vsel %vm5047, %v5024, %v3488
        %v5090 = vsel %vm5047, %v5025, %v3490
        %v5091 = vsel %vm5047, %v5026, %v3492
        %v5092 = vsel %vm5047, %v5027, %v3494
        %v5093 = vsel %vm5047, %v5028, %v3496
        %v5094 = vsel %vm5047, %v5029, %v3498
        %v5095 = vsel %vm5047, %v5030, %v3500
        %v5096 = vsel %vm5047, %v5031, %v3502
        %v5097 = vsel %vm5047, %v5032, %v3504
        %v5098 = vsel %vm5047, %v5033, %v3506
        %v5099 = vsel %vm5047, %v5034, %v3508
        %v5100 = vsel %vm5047, %v5035, %v3510
        %v5101 = vsel %vm5047, %v5036, %v3512
        %v5102 = vsel %vm5047, %v5037, %v3514
        %v5103 = vsel %vm5047, %v5038, %v3516
        %v5104 = vsel %vm5047, %v5039, %v3518
        %v5105 = vsel %vm5047, %v5040, %v3520
        %v5106 = vsel %vm5047, %v5041, %v3522
        %v5107 = vsel %vm5047, %v5042, %v3524
        %v5108 = vsel %vm5047, %v5043, %v3526
        %v5109 = vsel %vm5047, %v5044, %v3528
        %v5110 = vsel %vm5047, %v5045, %v3530
        %v5111 = vsel %vm5047, %v5046, %v3532
        %vm5112 = vcmask 392192
        %v5113 = vsel %vm5112, %v5048, %v3606
        %v5114 = vsel %vm5112, %v5049, %v3608
        %v5115 = vsel %vm5112, %v5050, %v3610
        %v5116 = vsel %vm5112, %v5051, %v3612
        %v5117 = vsel %vm5112, %v5052, %v3614
        %v5118 = vsel %vm5112, %v5053, %v3616
        %v5119 = vsel %vm5112, %v5054, %v3618
        %v5120 = vsel %vm5112, %v5055, %v3620
        %v5121 = vsel %vm5112, %v5056, %v3622
        %v5122 = vsel %vm5112, %v5057, %v3624
        %v5123 = vsel %vm5112, %v5058, %v3626
        %v5124 = vsel %vm5112, %v5059, %v3628
        %v5125 = vsel %vm5112, %v5060, %v3630
        %v5126 = vsel %vm5112, %v5061, %v3632
        %v5127 = vsel %vm5112, %v5062, %v3634
        %v5128 = vsel %vm5112, %v5063, %v3636
        %v5129 = vsel %vm5112, %v5064, %v3638
        %v5130 = vsel %vm5112, %v5065, %v3640
        %v5131 = vsel %vm5112, %v5066, %v3642
        %v5132 = vsel %vm5112, %v5067, %v3644
        %v5133 = vsel %vm5112, %v5068, %v3646
        %v5134 = vsel %vm5112, %v5069, %v3648
        %v5135 = vsel %vm5112, %v5070, %v3650
        %v5136 = vsel %vm5112, %v5071, %v3652
        %v5137 = vsel %vm5112, %v5072, %v3654
        %v5138 = vsel %vm5112, %v5073, %v3656
        %v5139 = vsel %vm5112, %v5074, %v3658
        %v5140 = vsel %vm5112, %v5075, %v3660
        %v5141 = vsel %vm5112, %v5076, %v3662
        %v5142 = vsel %vm5112, %v5077, %v3664
        %v5143 = vsel %vm5112, %v5078, %v3666
        %v5144 = vsel %vm5112, %v5079, %v3668
        %v5145 = vsel %vm5112, %v5080, %v3670
        %v5146 = vsel %vm5112, %v5081, %v3672
        %v5147 = vsel %vm5112, %v5082, %v3674
        %v5148 = vsel %vm5112, %v5083, %v3676
        %v5149 = vsel %vm5112, %v5084, %v3678
        %v5150 = vsel %vm5112, %v5085, %v3680
        %v5151 = vsel %vm5112, %v5086, %v3682
        %v5152 = vsel %vm5112, %v5087, %v3684
        %v5153 = vsel %vm5112, %v5088, %v3686
        %v5154 = vsel %vm5112, %v5089, %v3688
        %v5155 = vsel %vm5112, %v5090, %v3690
        %v5156 = vsel %vm5112, %v5091, %v3692
        %v5157 = vsel %vm5112, %v5092, %v3694
        %v5158 = vsel %vm5112, %v5093, %v3696
        %v5159 = vsel %vm5112, %v5094, %v3698
        %v5160 = vsel %vm5112, %v5095, %v3700
        %v5161 = vsel %vm5112, %v5096, %v3702
        %v5162 = vsel %vm5112, %v5097, %v3704
        %v5163 = vsel %vm5112, %v5098, %v3706
        %v5164 = vsel %vm5112, %v5099, %v3708
        %v5165 = vsel %vm5112, %v5100, %v3710
        %v5166 = vsel %vm5112, %v5101, %v3712
        %v5167 = vsel %vm5112, %v5102, %v3714
        %v5168 = vsel %vm5112, %v5103, %v3716
        %v5169 = vsel %vm5112, %v5104, %v3718
        %v5170 = vsel %vm5112, %v5105, %v3720
        %v5171 = vsel %vm5112, %v5106, %v3722
        %v5172 = vsel %vm5112, %v5107, %v3724
        %v5173 = vsel %vm5112, %v5108, %v3726
        %v5174 = vsel %vm5112, %v5109, %v3728
        %v5175 = vsel %vm5112, %v5110, %v3730
        %v5176 = vsel %vm5112, %v5111, %v3732
        %vm5177 = vcmask 424960
        %v5178 = vsel %vm5177, %v5113, %v3806
        %v5179 = vsel %vm5177, %v5114, %v3808
        %v5180 = vsel %vm5177, %v5115, %v3810
        %v5181 = vsel %vm5177, %v5116, %v3812
        %v5182 = vsel %vm5177, %v5117, %v3814
        %v5183 = vsel %vm5177, %v5118, %v3816
        %v5184 = vsel %vm5177, %v5119, %v3818
        %v5185 = vsel %vm5177, %v5120, %v3820
        %v5186 = vsel %vm5177, %v5121, %v3822
        %v5187 = vsel %vm5177, %v5122, %v3824
        %v5188 = vsel %vm5177, %v5123, %v3826
        %v5189 = vsel %vm5177, %v5124, %v3828
        %v5190 = vsel %vm5177, %v5125, %v3830
        %v5191 = vsel %vm5177, %v5126, %v3832
        %v5192 = vsel %vm5177, %v5127, %v3834
        %v5193 = vsel %vm5177, %v5128, %v3836
        %v5194 = vsel %vm5177, %v5129, %v3838
        %v5195 = vsel %vm5177, %v5130, %v3840
        %v5196 = vsel %vm5177, %v5131, %v3842
        %v5197 = vsel %vm5177, %v5132, %v3844
        %v5198 = vsel %vm5177, %v5133, %v3846
        %v5199 = vsel %vm5177, %v5134, %v3848
        %v5200 = vsel %vm5177, %v5135, %v3850
        %v5201 = vsel %vm5177, %v5136, %v3852
        %v5202 = vsel %vm5177, %v5137, %v3854
        %v5203 = vsel %vm5177, %v5138, %v3856
        %v5204 = vsel %vm5177, %v5139, %v3858
        %v5205 = vsel %vm5177, %v5140, %v3860
        %v5206 = vsel %vm5177, %v5141, %v3862
        %v5207 = vsel %vm5177, %v5142, %v3864
        %v5208 = vsel %vm5177, %v5143, %v3866
        %v5209 = vsel %vm5177, %v5144, %v3868
        %v5210 = vsel %vm5177, %v5145, %v3870
        %v5211 = vsel %vm5177, %v5146, %v3872
        %v5212 = vsel %vm5177, %v5147, %v3874
        %v5213 = vsel %vm5177, %v5148, %v3876
        %v5214 = vsel %vm5177, %v5149, %v3878
        %v5215 = vsel %vm5177, %v5150, %v3880
        %v5216 = vsel %vm5177, %v5151, %v3882
        %v5217 = vsel %vm5177, %v5152, %v3884
        %v5218 = vsel %vm5177, %v5153, %v3886
        %v5219 = vsel %vm5177, %v5154, %v3888
        %v5220 = vsel %vm5177, %v5155, %v3890
        %v5221 = vsel %vm5177, %v5156, %v3892
        %v5222 = vsel %vm5177, %v5157, %v3894
        %v5223 = vsel %vm5177, %v5158, %v3896
        %v5224 = vsel %vm5177, %v5159, %v3898
        %v5225 = vsel %vm5177, %v5160, %v3900
        %v5226 = vsel %vm5177, %v5161, %v3902
        %v5227 = vsel %vm5177, %v5162, %v3904
        %v5228 = vsel %vm5177, %v5163, %v3906
        %v5229 = vsel %vm5177, %v5164, %v3908
        %v5230 = vsel %vm5177, %v5165, %v3910
        %v5231 = vsel %vm5177, %v5166, %v3912
        %v5232 = vsel %vm5177, %v5167, %v3914
        %v5233 = vsel %vm5177, %v5168, %v3916
        %v5234 = vsel %vm5177, %v5169, %v3918
        %v5235 = vsel %vm5177, %v5170, %v3920
        %v5236 = vsel %vm5177, %v5171, %v3922
        %v5237 = vsel %vm5177, %v5172, %v3924
        %v5238 = vsel %vm5177, %v5173, %v3926
        %v5239 = vsel %vm5177, %v5174, %v3928
        %v5240 = vsel %vm5177, %v5175, %v3930
        %v5241 = vsel %vm5177, %v5176, %v3932
        %vm5242 = vcmask 457728
        %v5243 = vsel %vm5242, %v5178, %v4006
        %v5244 = vsel %vm5242, %v5179, %v4008
        %v5245 = vsel %vm5242, %v5180, %v4010
        %v5246 = vsel %vm5242, %v5181, %v4012
        %v5247 = vsel %vm5242, %v5182, %v4014
        %v5248 = vsel %vm5242, %v5183, %v4016
        %v5249 = vsel %vm5242, %v5184, %v4018
        %v5250 = vsel %vm5242, %v5185, %v4020
        %v5251 = vsel %vm5242, %v5186, %v4022
        %v5252 = vsel %vm5242, %v5187, %v4024
        %v5253 = vsel %vm5242, %v5188, %v4026
        %v5254 = vsel %vm5242, %v5189, %v4028
        %v5255 = vsel %vm5242, %v5190, %v4030
        %v5256 = vsel %vm5242, %v5191, %v4032
        %v5257 = vsel %vm5242, %v5192, %v4034
        %v5258 = vsel %vm5242, %v5193, %v4036
        %v5259 = vsel %vm5242, %v5194, %v4038
        %v5260 = vsel %vm5242, %v5195, %v4040
        %v5261 = vsel %vm5242, %v5196, %v4042
        %v5262 = vsel %vm5242, %v5197, %v4044
        %v5263 = vsel %vm5242, %v5198, %v4046
        %v5264 = vsel %vm5242, %v5199, %v4048
        %v5265 = vsel %vm5242, %v5200, %v4050
        %v5266 = vsel %vm5242, %v5201, %v4052
        %v5267 = vsel %vm5242, %v5202, %v4054
        %v5268 = vsel %vm5242, %v5203, %v4056
        %v5269 = vsel %vm5242, %v5204, %v4058
        %v5270 = vsel %vm5242, %v5205, %v4060
        %v5271 = vsel %vm5242, %v5206, %v4062
        %v5272 = vsel %vm5242, %v5207, %v4064
        %v5273 = vsel %vm5242, %v5208, %v4066
        %v5274 = vsel %vm5242, %v5209, %v4068
        %v5275 = vsel %vm5242, %v5210, %v4070
        %v5276 = vsel %vm5242, %v5211, %v4072
        %v5277 = vsel %vm5242, %v5212, %v4074
        %v5278 = vsel %vm5242, %v5213, %v4076
        %v5279 = vsel %vm5242, %v5214, %v4078
        %v5280 = vsel %vm5242, %v5215, %v4080
        %v5281 = vsel %vm5242, %v5216, %v4082
        %v5282 = vsel %vm5242, %v5217, %v4084
        %v5283 = vsel %vm5242, %v5218, %v4086
        %v5284 = vsel %vm5242, %v5219, %v4088
        %v5285 = vsel %vm5242, %v5220, %v4090
        %v5286 = vsel %vm5242, %v5221, %v4092
        %v5287 = vsel %vm5242, %v5222, %v4094
        %v5288 = vsel %vm5242, %v5223, %v4096
        %v5289 = vsel %vm5242, %v5224, %v4098
        %v5290 = vsel %vm5242, %v5225, %v4100
        %v5291 = vsel %vm5242, %v5226, %v4102
        %v5292 = vsel %vm5242, %v5227, %v4104
        %v5293 = vsel %vm5242, %v5228, %v4106
        %v5294 = vsel %vm5242, %v5229, %v4108
        %v5295 = vsel %vm5242, %v5230, %v4110
        %v5296 = vsel %vm5242, %v5231, %v4112
        %v5297 = vsel %vm5242, %v5232, %v4114
        %v5298 = vsel %vm5242, %v5233, %v4116
        %v5299 = vsel %vm5242, %v5234, %v4118
        %v5300 = vsel %vm5242, %v5235, %v4120
        %v5301 = vsel %vm5242, %v5236, %v4122
        %v5302 = vsel %vm5242, %v5237, %v4124
        %v5303 = vsel %vm5242, %v5238, %v4126
        %v5304 = vsel %vm5242, %v5239, %v4128
        %v5305 = vsel %vm5242, %v5240, %v4130
        %v5306 = vsel %vm5242, %v5241, %v4132
        %vm5307 = vcmask 490496
        %v5308 = vsel %vm5307, %v5243, %v4206
        %v5309 = vsel %vm5307, %v5244, %v4208
        %v5310 = vsel %vm5307, %v5245, %v4210
        %v5311 = vsel %vm5307, %v5246, %v4212
        %v5312 = vsel %vm5307, %v5247, %v4214
        %v5313 = vsel %vm5307, %v5248, %v4216
        %v5314 = vsel %vm5307, %v5249, %v4218
        %v5315 = vsel %vm5307, %v5250, %v4220
        %v5316 = vsel %vm5307, %v5251, %v4222
        %v5317 = vsel %vm5307, %v5252, %v4224
        %v5318 = vsel %vm5307, %v5253, %v4226
        %v5319 = vsel %vm5307, %v5254, %v4228
        %v5320 = vsel %vm5307, %v5255, %v4230
        %v5321 = vsel %vm5307, %v5256, %v4232
        %v5322 = vsel %vm5307, %v5257, %v4234
        %v5323 = vsel %vm5307, %v5258, %v4236
        %v5324 = vsel %vm5307, %v5259, %v4238
        %v5325 = vsel %vm5307, %v5260, %v4240
        %v5326 = vsel %vm5307, %v5261, %v4242
        %v5327 = vsel %vm5307, %v5262, %v4244
        %v5328 = vsel %vm5307, %v5263, %v4246
        %v5329 = vsel %vm5307, %v5264, %v4248
        %v5330 = vsel %vm5307, %v5265, %v4250
        %v5331 = vsel %vm5307, %v5266, %v4252
        %v5332 = vsel %vm5307, %v5267, %v4254
        %v5333 = vsel %vm5307, %v5268, %v4256
        %v5334 = vsel %vm5307, %v5269, %v4258
        %v5335 = vsel %vm5307, %v5270, %v4260
        %v5336 = vsel %vm5307, %v5271, %v4262
        %v5337 = vsel %vm5307, %v5272, %v4264
        %v5338 = vsel %vm5307, %v5273, %v4266
        %v5339 = vsel %vm5307, %v5274, %v4268
        %v5340 = vsel %vm5307, %v5275, %v4270
        %v5341 = vsel %vm5307, %v5276, %v4272
        %v5342 = vsel %vm5307, %v5277, %v4274
        %v5343 = vsel %vm5307, %v5278, %v4276
        %v5344 = vsel %vm5307, %v5279, %v4278
        %v5345 = vsel %vm5307, %v5280, %v4280
        %v5346 = vsel %vm5307, %v5281, %v4282
        %v5347 = vsel %vm5307, %v5282, %v4284
        %v5348 = vsel %vm5307, %v5283, %v4286
        %v5349 = vsel %vm5307, %v5284, %v4288
        %v5350 = vsel %vm5307, %v5285, %v4290
        %v5351 = vsel %vm5307, %v5286, %v4292
        %v5352 = vsel %vm5307, %v5287, %v4294
        %v5353 = vsel %vm5307, %v5288, %v4296
        %v5354 = vsel %vm5307, %v5289, %v4298
        %v5355 = vsel %vm5307, %v5290, %v4300
        %v5356 = vsel %vm5307, %v5291, %v4302
        %v5357 = vsel %vm5307, %v5292, %v4304
        %v5358 = vsel %vm5307, %v5293, %v4306
        %v5359 = vsel %vm5307, %v5294, %v4308
        %v5360 = vsel %vm5307, %v5295, %v4310
        %v5361 = vsel %vm5307, %v5296, %v4312
        %v5362 = vsel %vm5307, %v5297, %v4314
        %v5363 = vsel %vm5307, %v5298, %v4316
        %v5364 = vsel %vm5307, %v5299, %v4318
        %v5365 = vsel %vm5307, %v5300, %v4320
        %v5366 = vsel %vm5307, %v5301, %v4322
        %v5367 = vsel %vm5307, %v5302, %v4324
        %v5368 = vsel %vm5307, %v5303, %v4326
        %v5369 = vsel %vm5307, %v5304, %v4328
        %v5370 = vsel %vm5307, %v5305, %v4330
        %v5371 = vsel %vm5307, %v5306, %v4332
        %5380 = vrot.lane.b32.xlu0 %v765, 4
        %v5381 = vpop.permute.xlu0 %5380
        %5382 = vrot.lane.b32.xlu0 %v829, 4
        %v5383 = vpop.permute.xlu0 %5382
        %5384 = vrot.lane.b32.xlu0 %v766, 4
        %v5385 = vpop.permute.xlu0 %5384
        %5386 = vrot.lane.b32.xlu0 %v830, 4
        %v5387 = vpop.permute.xlu0 %5386
        %5388 = vrot.lane.b32.xlu0 %v767, 4
        %v5389 = vpop.permute.xlu0 %5388
        %5390 = vrot.lane.b32.xlu0 %v831, 4
        %v5391 = vpop.permute.xlu0 %5390
        %5392 = vrot.lane.b32.xlu0 %v768, 4
        %v5393 = vpop.permute.xlu0 %5392
        %5394 = vrot.lane.b32.xlu0 %v832, 4
        %v5395 = vpop.permute.xlu0 %5394
        %5396 = vrot.lane.b32.xlu0 %v769, 4
        %v5397 = vpop.permute.xlu0 %5396
        %5398 = vrot.lane.b32.xlu0 %v833, 4
        %v5399 = vpop.permute.xlu0 %5398
        %5400 = vrot.lane.b32.xlu0 %v770, 4
        %v5401 = vpop.permute.xlu0 %5400
        %5402 = vrot.lane.b32.xlu0 %v834, 4
        %v5403 = vpop.permute.xlu0 %5402
        %5404 = vrot.lane.b32.xlu0 %v771, 4
        %v5405 = vpop.permute.xlu0 %5404
        %5406 = vrot.lane.b32.xlu0 %v835, 4
        %v5407 = vpop.permute.xlu0 %5406
        %5408 = vrot.lane.b32.xlu0 %v772, 4
        %v5409 = vpop.permute.xlu0 %5408
        %5410 = vrot.lane.b32.xlu0 %v836, 4
        %v5411 = vpop.permute.xlu0 %5410
        %5436 = vrot.lane.b32.xlu0 %v773, 8
        %v5437 = vpop.permute.xlu0 %5436
        %5438 = vrot.lane.b32.xlu0 %v837, 8
        %v5439 = vpop.permute.xlu0 %5438
        %5440 = vrot.lane.b32.xlu0 %v774, 8
        %v5441 = vpop.permute.xlu0 %5440
        %5442 = vrot.lane.b32.xlu0 %v838, 8
        %v5443 = vpop.permute.xlu0 %5442
        %5444 = vrot.lane.b32.xlu0 %v775, 8
        %v5445 = vpop.permute.xlu0 %5444
        %5446 = vrot.lane.b32.xlu0 %v839, 8
        %v5447 = vpop.permute.xlu0 %5446
        %5448 = vrot.lane.b32.xlu0 %v776, 8
        %v5449 = vpop.permute.xlu0 %5448
        %5450 = vrot.lane.b32.xlu0 %v840, 8
        %v5451 = vpop.permute.xlu0 %5450
        %5452 = vrot.lane.b32.xlu0 %v777, 8
        %v5453 = vpop.permute.xlu0 %5452
        %5454 = vrot.lane.b32.xlu0 %v841, 8
        %v5455 = vpop.permute.xlu0 %5454
        %5456 = vrot.lane.b32.xlu0 %v778, 8
        %v5457 = vpop.permute.xlu0 %5456
        %5458 = vrot.lane.b32.xlu0 %v842, 8
        %v5459 = vpop.permute.xlu0 %5458
        %5460 = vrot.lane.b32.xlu0 %v779, 8
        %v5461 = vpop.permute.xlu0 %5460
        %5462 = vrot.lane.b32.xlu0 %v843, 8
        %v5463 = vpop.permute.xlu0 %5462
        %5464 = vrot.lane.b32.xlu0 %v780, 8
        %v5465 = vpop.permute.xlu0 %5464
        %5466 = vrot.lane.b32.xlu0 %v844, 8
        %v5467 = vpop.permute.xlu0 %5466
        %5492 = vrot.lane.b32.xlu0 %v781, 12
        %v5493 = vpop.permute.xlu0 %5492
        %5494 = vrot.lane.b32.xlu0 %v845, 12
        %v5495 = vpop.permute.xlu0 %5494
        %5496 = vrot.lane.b32.xlu0 %v782, 12
        %v5497 = vpop.permute.xlu0 %5496
        %5498 = vrot.lane.b32.xlu0 %v846, 12
        %v5499 = vpop.permute.xlu0 %5498
        %5500 = vrot.lane.b32.xlu0 %v783, 12
        %v5501 = vpop.permute.xlu0 %5500
        %5502 = vrot.lane.b32.xlu0 %v847, 12
        %v5503 = vpop.permute.xlu0 %5502
        %5504 = vrot.lane.b32.xlu0 %v784, 12
        %v5505 = vpop.permute.xlu0 %5504
        %5506 = vrot.lane.b32.xlu0 %v848, 12
        %v5507 = vpop.permute.xlu0 %5506
        %5508 = vrot.lane.b32.xlu0 %v785, 12
        %v5509 = vpop.permute.xlu0 %5508
        %5510 = vrot.lane.b32.xlu0 %v849, 12
        %v5511 = vpop.permute.xlu0 %5510
        %5512 = vrot.lane.b32.xlu0 %v786, 12
        %v5513 = vpop.permute.xlu0 %5512
        %5514 = vrot.lane.b32.xlu0 %v850, 12
        %v5515 = vpop.permute.xlu0 %5514
        %5516 = vrot.lane.b32.xlu0 %v787, 12
        %v5517 = vpop.permute.xlu0 %5516
        %5518 = vrot.lane.b32.xlu0 %v851, 12
        %v5519 = vpop.permute.xlu0 %5518
        %5520 = vrot.lane.b32.xlu0 %v788, 12
        %v5521 = vpop.permute.xlu0 %5520
        %5522 = vrot.lane.b32.xlu0 %v852, 12
        %v5523 = vpop.permute.xlu0 %5522
        %5548 = vrot.lane.b32.xlu0 %v789, 16
        %v5549 = vpop.permute.xlu0 %5548
        %5550 = vrot.lane.b32.xlu0 %v853, 16
        %v5551 = vpop.permute.xlu0 %5550
        %5552 = vrot.lane.b32.xlu0 %v790, 16
        %v5553 = vpop.permute.xlu0 %5552
        %5554 = vrot.lane.b32.xlu0 %v854, 16
        %v5555 = vpop.permute.xlu0 %5554
        %5556 = vrot.lane.b32.xlu0 %v791, 16
        %v5557 = vpop.permute.xlu0 %5556
        %5558 = vrot.lane.b32.xlu0 %v855, 16
        %v5559 = vpop.permute.xlu0 %5558
        %5560 = vrot.lane.b32.xlu0 %v792, 16
        %v5561 = vpop.permute.xlu0 %5560
        %5562 = vrot.lane.b32.xlu0 %v856, 16
        %v5563 = vpop.permute.xlu0 %5562
        %5564 = vrot.lane.b32.xlu0 %v793, 16
        %v5565 = vpop.permute.xlu0 %5564
        %5566 = vrot.lane.b32.xlu0 %v857, 16
        %v5567 = vpop.permute.xlu0 %5566
        %5568 = vrot.lane.b32.xlu0 %v794, 16
        %v5569 = vpop.permute.xlu0 %5568
        %5570 = vrot.lane.b32.xlu0 %v858, 16
        %v5571 = vpop.permute.xlu0 %5570
        %5572 = vrot.lane.b32.xlu0 %v795, 16
        %v5573 = vpop.permute.xlu0 %5572
        %5574 = vrot.lane.b32.xlu0 %v859, 16
        %v5575 = vpop.permute.xlu0 %5574
        %5576 = vrot.lane.b32.xlu0 %v796, 16
        %v5577 = vpop.permute.xlu0 %5576
        %5578 = vrot.lane.b32.xlu0 %v860, 16
        %v5579 = vpop.permute.xlu0 %5578
        %5604 = vrot.lane.b32.xlu0 %v797, 20
        %v5605 = vpop.permute.xlu0 %5604
        %5606 = vrot.lane.b32.xlu0 %v861, 20
        %v5607 = vpop.permute.xlu0 %5606
        %5608 = vrot.lane.b32.xlu0 %v798, 20
        %v5609 = vpop.permute.xlu0 %5608
        %5610 = vrot.lane.b32.xlu0 %v862, 20
        %v5611 = vpop.permute.xlu0 %5610
        %5612 = vrot.lane.b32.xlu0 %v799, 20
        %v5613 = vpop.permute.xlu0 %5612
        %5614 = vrot.lane.b32.xlu0 %v863, 20
        %v5615 = vpop.permute.xlu0 %5614
        %5616 = vrot.lane.b32.xlu0 %v800, 20
        %v5617 = vpop.permute.xlu0 %5616
        %5618 = vrot.lane.b32.xlu0 %v864, 20
        %v5619 = vpop.permute.xlu0 %5618
        %5620 = vrot.lane.b32.xlu0 %v801, 20
        %v5621 = vpop.permute.xlu0 %5620
        %5622 = vrot.lane.b32.xlu0 %v865, 20
        %v5623 = vpop.permute.xlu0 %5622
        %5624 = vrot.lane.b32.xlu0 %v802, 20
        %v5625 = vpop.permute.xlu0 %5624
        %5626 = vrot.lane.b32.xlu0 %v866, 20
        %v5627 = vpop.permute.xlu0 %5626
        %5628 = vrot.lane.b32.xlu0 %v803, 20
        %v5629 = vpop.permute.xlu0 %5628
        %5630 = vrot.lane.b32.xlu0 %v867, 20
        %v5631 = vpop.permute.xlu0 %5630
        %5632 = vrot.lane.b32.xlu0 %v804, 20
        %v5633 = vpop.permute.xlu0 %5632
        %5634 = vrot.lane.b32.xlu0 %v868, 20
        %v5635 = vpop.permute.xlu0 %5634
        %5660 = vrot.lane.b32.xlu0 %v805, 24
        %v5661 = vpop.permute.xlu0 %5660
        %5662 = vrot.lane.b32.xlu0 %v869, 24
        %v5663 = vpop.permute.xlu0 %5662
        %5664 = vrot.lane.b32.xlu0 %v806, 24
        %v5665 = vpop.permute.xlu0 %5664
        %5666 = vrot.lane.b32.xlu0 %v870, 24
        %v5667 = vpop.permute.xlu0 %5666
        %5668 = vrot.lane.b32.xlu0 %v807, 24
        %v5669 = vpop.permute.xlu0 %5668
        %5670 = vrot.lane.b32.xlu0 %v871, 24
        %v5671 = vpop.permute.xlu0 %5670
        %5672 = vrot.lane.b32.xlu0 %v808, 24
        %v5673 = vpop.permute.xlu0 %5672
        %5674 = vrot.lane.b32.xlu0 %v872, 24
        %v5675 = vpop.permute.xlu0 %5674
        %5676 = vrot.lane.b32.xlu0 %v809, 24
        %v5677 = vpop.permute.xlu0 %5676
        %5678 = vrot.lane.b32.xlu0 %v873, 24
        %v5679 = vpop.permute.xlu0 %5678
        %5680 = vrot.lane.b32.xlu0 %v810, 24
        %v5681 = vpop.permute.xlu0 %5680
        %5682 = vrot.lane.b32.xlu0 %v874, 24
        %v5683 = vpop.permute.xlu0 %5682
        %5684 = vrot.lane.b32.xlu0 %v811, 24
        %v5685 = vpop.permute.xlu0 %5684
        %5686 = vrot.lane.b32.xlu0 %v875, 24
        %v5687 = vpop.permute.xlu0 %5686
        %5688 = vrot.lane.b32.xlu0 %v812, 24
        %v5689 = vpop.permute.xlu0 %5688
        %5690 = vrot.lane.b32.xlu0 %v876, 24
        %v5691 = vpop.permute.xlu0 %5690
        %5716 = vrot.lane.b32.xlu0 %v813, 28
        %v5717 = vpop.permute.xlu0 %5716
        %5718 = vrot.lane.b32.xlu0 %v877, 28
        %v5719 = vpop.permute.xlu0 %5718
        %5720 = vrot.lane.b32.xlu0 %v814, 28
        %v5721 = vpop.permute.xlu0 %5720
        %5722 = vrot.lane.b32.xlu0 %v878, 28
        %v5723 = vpop.permute.xlu0 %5722
        %5724 = vrot.lane.b32.xlu0 %v815, 28
        %v5725 = vpop.permute.xlu0 %5724
        %5726 = vrot.lane.b32.xlu0 %v879, 28
        %v5727 = vpop.permute.xlu0 %5726
        %5728 = vrot.lane.b32.xlu0 %v816, 28
        %v5729 = vpop.permute.xlu0 %5728
        %5730 = vrot.lane.b32.xlu0 %v880, 28
        %v5731 = vpop.permute.xlu0 %5730
        %5732 = vrot.lane.b32.xlu0 %v817, 28
        %v5733 = vpop.permute.xlu0 %5732
        %5734 = vrot.lane.b32.xlu0 %v881, 28
        %v5735 = vpop.permute.xlu0 %5734
        %5736 = vrot.lane.b32.xlu0 %v818, 28
        %v5737 = vpop.permute.xlu0 %5736
        %5738 = vrot.lane.b32.xlu0 %v882, 28
        %v5739 = vpop.permute.xlu0 %5738
        %5740 = vrot.lane.b32.xlu0 %v819, 28
        %v5741 = vpop.permute.xlu0 %5740
        %5742 = vrot.lane.b32.xlu0 %v883, 28
        %v5743 = vpop.permute.xlu0 %5742
        %5744 = vrot.lane.b32.xlu0 %v820, 28
        %v5745 = vpop.permute.xlu0 %5744
        %5746 = vrot.lane.b32.xlu0 %v884, 28
        %v5747 = vpop.permute.xlu0 %5746
        %5780 = vrot.lane.b32.xlu0 %v821, 32
        %v5781 = vpop.permute.xlu0 %5780
        %5782 = vrot.lane.b32.xlu0 %v885, 32
        %v5783 = vpop.permute.xlu0 %5782
        %5784 = vrot.lane.b32.xlu0 %v822, 32
        %v5785 = vpop.permute.xlu0 %5784
        %5786 = vrot.lane.b32.xlu0 %v886, 32
        %v5787 = vpop.permute.xlu0 %5786
        %5788 = vrot.lane.b32.xlu0 %v823, 32
        %v5789 = vpop.permute.xlu0 %5788
        %5790 = vrot.lane.b32.xlu0 %v887, 32
        %v5791 = vpop.permute.xlu0 %5790
        %5792 = vrot.lane.b32.xlu0 %v824, 32
        %v5793 = vpop.permute.xlu0 %5792
        %5794 = vrot.lane.b32.xlu0 %v888, 32
        %v5795 = vpop.permute.xlu0 %5794
        %5796 = vrot.lane.b32.xlu0 %v825, 32
        %v5797 = vpop.permute.xlu0 %5796
        %5798 = vrot.lane.b32.xlu0 %v889, 32
        %v5799 = vpop.permute.xlu0 %5798
        %5800 = vrot.lane.b32.xlu0 %v826, 32
        %v5801 = vpop.permute.xlu0 %5800
        %5802 = vrot.lane.b32.xlu0 %v890, 32
        %v5803 = vpop.permute.xlu0 %5802
        %5804 = vrot.lane.b32.xlu0 %v827, 32
        %v5805 = vpop.permute.xlu0 %5804
        %5806 = vrot.lane.b32.xlu0 %v891, 32
        %v5807 = vpop.permute.xlu0 %5806
        %5808 = vrot.lane.b32.xlu0 %v828, 32
        %v5809 = vpop.permute.xlu0 %5808
        %5810 = vrot.lane.b32.xlu0 %v892, 32
        %v5811 = vpop.permute.xlu0 %5810
        %5836 = vrot.lane.b32.xlu0 %v829, 36
        %v5837 = vpop.permute.xlu0 %5836
        %5838 = vrot.lane.b32.xlu0 %v893, 36
        %v5839 = vpop.permute.xlu0 %5838
        %5840 = vrot.lane.b32.xlu0 %v830, 36
        %v5841 = vpop.permute.xlu0 %5840
        %5842 = vrot.lane.b32.xlu0 %v894, 36
        %v5843 = vpop.permute.xlu0 %5842
        %5844 = vrot.lane.b32.xlu0 %v831, 36
        %v5845 = vpop.permute.xlu0 %5844
        %5846 = vrot.lane.b32.xlu0 %v895, 36
        %v5847 = vpop.permute.xlu0 %5846
        %5848 = vrot.lane.b32.xlu0 %v832, 36
        %v5849 = vpop.permute.xlu0 %5848
        %5850 = vrot.lane.b32.xlu0 %v896, 36
        %v5851 = vpop.permute.xlu0 %5850
        %5852 = vrot.lane.b32.xlu0 %v833, 36
        %v5853 = vpop.permute.xlu0 %5852
        %5854 = vrot.lane.b32.xlu0 %v897, 36
        %v5855 = vpop.permute.xlu0 %5854
        %5856 = vrot.lane.b32.xlu0 %v834, 36
        %v5857 = vpop.permute.xlu0 %5856
        %5858 = vrot.lane.b32.xlu0 %v898, 36
        %v5859 = vpop.permute.xlu0 %5858
        %5860 = vrot.lane.b32.xlu0 %v835, 36
        %v5861 = vpop.permute.xlu0 %5860
        %5862 = vrot.lane.b32.xlu0 %v899, 36
        %v5863 = vpop.permute.xlu0 %5862
        %5864 = vrot.lane.b32.xlu0 %v836, 36
        %v5865 = vpop.permute.xlu0 %5864
        %5866 = vrot.lane.b32.xlu0 %v900, 36
        %v5867 = vpop.permute.xlu0 %5866
        %5892 = vrot.lane.b32.xlu0 %v837, 40
        %v5893 = vpop.permute.xlu0 %5892
        %5894 = vrot.lane.b32.xlu0 %v901, 40
        %v5895 = vpop.permute.xlu0 %5894
        %5896 = vrot.lane.b32.xlu0 %v838, 40
        %v5897 = vpop.permute.xlu0 %5896
        %5898 = vrot.lane.b32.xlu0 %v902, 40
        %v5899 = vpop.permute.xlu0 %5898
        %5900 = vrot.lane.b32.xlu0 %v839, 40
        %v5901 = vpop.permute.xlu0 %5900
        %5902 = vrot.lane.b32.xlu0 %v903, 40
        %v5903 = vpop.permute.xlu0 %5902
        %5904 = vrot.lane.b32.xlu0 %v840, 40
        %v5905 = vpop.permute.xlu0 %5904
        %5906 = vrot.lane.b32.xlu0 %v904, 40
        %v5907 = vpop.permute.xlu0 %5906
        %5908 = vrot.lane.b32.xlu0 %v841, 40
        %v5909 = vpop.permute.xlu0 %5908
        %5910 = vrot.lane.b32.xlu0 %v905, 40
        %v5911 = vpop.permute.xlu0 %5910
        %5912 = vrot.lane.b32.xlu0 %v842, 40
        %v5913 = vpop.permute.xlu0 %5912
        %5914 = vrot.lane.b32.xlu0 %v906, 40
        %v5915 = vpop.permute.xlu0 %5914
        %5916 = vrot.lane.b32.xlu0 %v843, 40
        %v5917 = vpop.permute.xlu0 %5916
        %5918 = vrot.lane.b32.xlu0 %v907, 40
        %v5919 = vpop.permute.xlu0 %5918
        %5920 = vrot.lane.b32.xlu0 %v844, 40
        %v5921 = vpop.permute.xlu0 %5920
        %5922 = vrot.lane.b32.xlu0 %v908, 40
        %v5923 = vpop.permute.xlu0 %5922
        %5948 = vrot.lane.b32.xlu0 %v845, 44
        %v5949 = vpop.permute.xlu0 %5948
        %5950 = vrot.lane.b32.xlu0 %v909, 44
        %v5951 = vpop.permute.xlu0 %5950
        %5952 = vrot.lane.b32.xlu0 %v846, 44
        %v5953 = vpop.permute.xlu0 %5952
        %5954 = vrot.lane.b32.xlu0 %v910, 44
        %v5955 = vpop.permute.xlu0 %5954
        %5956 = vrot.lane.b32.xlu0 %v847, 44
        %v5957 = vpop.permute.xlu0 %5956
        %5958 = vrot.lane.b32.xlu0 %v911, 44
        %v5959 = vpop.permute.xlu0 %5958
        %5960 = vrot.lane.b32.xlu0 %v848, 44
        %v5961 = vpop.permute.xlu0 %5960
        %5962 = vrot.lane.b32.xlu0 %v912, 44
        %v5963 = vpop.permute.xlu0 %5962
        %5964 = vrot.lane.b32.xlu0 %v849, 44
        %v5965 = vpop.permute.xlu0 %5964
        %5966 = vrot.lane.b32.xlu0 %v913, 44
        %v5967 = vpop.permute.xlu0 %5966
        %5968 = vrot.lane.b32.xlu0 %v850, 44
        %v5969 = vpop.permute.xlu0 %5968
        %5970 = vrot.lane.b32.xlu0 %v914, 44
        %v5971 = vpop.permute.xlu0 %5970
        %5972 = vrot.lane.b32.xlu0 %v851, 44
        %v5973 = vpop.permute.xlu0 %5972
        %5974 = vrot.lane.b32.xlu0 %v915, 44
        %v5975 = vpop.permute.xlu0 %5974
        %5976 = vrot.lane.b32.xlu0 %v852, 44
        %v5977 = vpop.permute.xlu0 %5976
        %5978 = vrot.lane.b32.xlu0 %v916, 44
        %v5979 = vpop.permute.xlu0 %5978
        %6004 = vrot.lane.b32.xlu0 %v853, 48
        %v6005 = vpop.permute.xlu0 %6004
        %6006 = vrot.lane.b32.xlu0 %v917, 48
        %v6007 = vpop.permute.xlu0 %6006
        %6008 = vrot.lane.b32.xlu0 %v854, 48
        %v6009 = vpop.permute.xlu0 %6008
        %6010 = vrot.lane.b32.xlu0 %v918, 48
        %v6011 = vpop.permute.xlu0 %6010
        %6012 = vrot.lane.b32.xlu0 %v855, 48
        %v6013 = vpop.permute.xlu0 %6012
        %6014 = vrot.lane.b32.xlu0 %v919, 48
        %v6015 = vpop.permute.xlu0 %6014
        %6016 = vrot.lane.b32.xlu0 %v856, 48
        %v6017 = vpop.permute.xlu0 %6016
        %6018 = vrot.lane.b32.xlu0 %v920, 48
        %v6019 = vpop.permute.xlu0 %6018
        %6020 = vrot.lane.b32.xlu0 %v857, 48
        %v6021 = vpop.permute.xlu0 %6020
        %6022 = vrot.lane.b32.xlu0 %v921, 48
        %v6023 = vpop.permute.xlu0 %6022
        %6024 = vrot.lane.b32.xlu0 %v858, 48
        %v6025 = vpop.permute.xlu0 %6024
        %6026 = vrot.lane.b32.xlu0 %v922, 48
        %v6027 = vpop.permute.xlu0 %6026
        %6028 = vrot.lane.b32.xlu0 %v859, 48
        %v6029 = vpop.permute.xlu0 %6028
        %6030 = vrot.lane.b32.xlu0 %v923, 48
        %v6031 = vpop.permute.xlu0 %6030
        %6032 = vrot.lane.b32.xlu0 %v860, 48
        %v6033 = vpop.permute.xlu0 %6032
        %6034 = vrot.lane.b32.xlu0 %v924, 48
        %v6035 = vpop.permute.xlu0 %6034
        %6060 = vrot.lane.b32.xlu0 %v861, 52
        %v6061 = vpop.permute.xlu0 %6060
        %6062 = vrot.lane.b32.xlu0 %v925, 52
        %v6063 = vpop.permute.xlu0 %6062
        %6064 = vrot.lane.b32.xlu0 %v862, 52
        %v6065 = vpop.permute.xlu0 %6064
        %6066 = vrot.lane.b32.xlu0 %v926, 52
        %v6067 = vpop.permute.xlu0 %6066
        %6068 = vrot.lane.b32.xlu0 %v863, 52
        %v6069 = vpop.permute.xlu0 %6068
        %6070 = vrot.lane.b32.xlu0 %v927, 52
        %v6071 = vpop.permute.xlu0 %6070
        %6072 = vrot.lane.b32.xlu0 %v864, 52
        %v6073 = vpop.permute.xlu0 %6072
        %6074 = vrot.lane.b32.xlu0 %v928, 52
        %v6075 = vpop.permute.xlu0 %6074
        %6076 = vrot.lane.b32.xlu0 %v865, 52
        %v6077 = vpop.permute.xlu0 %6076
        %6078 = vrot.lane.b32.xlu0 %v929, 52
        %v6079 = vpop.permute.xlu0 %6078
        %6080 = vrot.lane.b32.xlu0 %v866, 52
        %v6081 = vpop.permute.xlu0 %6080
        %6082 = vrot.lane.b32.xlu0 %v930, 52
        %v6083 = vpop.permute.xlu0 %6082
        %6084 = vrot.lane.b32.xlu0 %v867, 52
        %v6085 = vpop.permute.xlu0 %6084
        %6086 = vrot.lane.b32.xlu0 %v931, 52
        %v6087 = vpop.permute.xlu0 %6086
        %6088 = vrot.lane.b32.xlu0 %v868, 52
        %v6089 = vpop.permute.xlu0 %6088
        %6090 = vrot.lane.b32.xlu0 %v932, 52
        %v6091 = vpop.permute.xlu0 %6090
        %6116 = vrot.lane.b32.xlu0 %v869, 56
        %v6117 = vpop.permute.xlu0 %6116
        %6118 = vrot.lane.b32.xlu0 %v933, 56
        %v6119 = vpop.permute.xlu0 %6118
        %6120 = vrot.lane.b32.xlu0 %v870, 56
        %v6121 = vpop.permute.xlu0 %6120
        %6122 = vrot.lane.b32.xlu0 %v934, 56
        %v6123 = vpop.permute.xlu0 %6122
        %6124 = vrot.lane.b32.xlu0 %v871, 56
        %v6125 = vpop.permute.xlu0 %6124
        %6126 = vrot.lane.b32.xlu0 %v935, 56
        %v6127 = vpop.permute.xlu0 %6126
        %6128 = vrot.lane.b32.xlu0 %v872, 56
        %v6129 = vpop.permute.xlu0 %6128
        %6130 = vrot.lane.b32.xlu0 %v936, 56
        %v6131 = vpop.permute.xlu0 %6130
        %6132 = vrot.lane.b32.xlu0 %v873, 56
        %v6133 = vpop.permute.xlu0 %6132
        %6134 = vrot.lane.b32.xlu0 %v937, 56
        %v6135 = vpop.permute.xlu0 %6134
        %6136 = vrot.lane.b32.xlu0 %v874, 56
        %v6137 = vpop.permute.xlu0 %6136
        %6138 = vrot.lane.b32.xlu0 %v938, 56
        %v6139 = vpop.permute.xlu0 %6138
        %6140 = vrot.lane.b32.xlu0 %v875, 56
        %v6141 = vpop.permute.xlu0 %6140
        %6142 = vrot.lane.b32.xlu0 %v939, 56
        %v6143 = vpop.permute.xlu0 %6142
        %6144 = vrot.lane.b32.xlu0 %v876, 56
        %v6145 = vpop.permute.xlu0 %6144
        %6146 = vrot.lane.b32.xlu0 %v940, 56
        %v6147 = vpop.permute.xlu0 %6146
        %6172 = vrot.lane.b32.xlu0 %v877, 60
        %v6173 = vpop.permute.xlu0 %6172
        %6174 = vrot.lane.b32.xlu0 %v941, 60
        %v6175 = vpop.permute.xlu0 %6174
        %6176 = vrot.lane.b32.xlu0 %v878, 60
        %v6177 = vpop.permute.xlu0 %6176
        %6178 = vrot.lane.b32.xlu0 %v942, 60
        %v6179 = vpop.permute.xlu0 %6178
        %6180 = vrot.lane.b32.xlu0 %v879, 60
        %v6181 = vpop.permute.xlu0 %6180
        %6182 = vrot.lane.b32.xlu0 %v943, 60
        %v6183 = vpop.permute.xlu0 %6182
        %6184 = vrot.lane.b32.xlu0 %v880, 60
        %v6185 = vpop.permute.xlu0 %6184
        %6186 = vrot.lane.b32.xlu0 %v944, 60
        %v6187 = vpop.permute.xlu0 %6186
        %6188 = vrot.lane.b32.xlu0 %v881, 60
        %v6189 = vpop.permute.xlu0 %6188
        %6190 = vrot.lane.b32.xlu0 %v945, 60
        %v6191 = vpop.permute.xlu0 %6190
        %6192 = vrot.lane.b32.xlu0 %v882, 60
        %v6193 = vpop.permute.xlu0 %6192
        %6194 = vrot.lane.b32.xlu0 %v946, 60
        %v6195 = vpop.permute.xlu0 %6194
        %6196 = vrot.lane.b32.xlu0 %v883, 60
        %v6197 = vpop.permute.xlu0 %6196
        %6198 = vrot.lane.b32.xlu0 %v947, 60
        %v6199 = vpop.permute.xlu0 %6198
        %6200 = vrot.lane.b32.xlu0 %v884, 60
        %v6201 = vpop.permute.xlu0 %6200
        %6202 = vrot.lane.b32.xlu0 %v948, 60
        %v6203 = vpop.permute.xlu0 %6202
        %v6220 = vsel %vm4397, %v757, %v5381
        %v6221 = vsel %vm4397, %v821, %v5383
        %v6222 = vsel %vm4397, %v758, %v5385
        %v6223 = vsel %vm4397, %v822, %v5387
        %v6224 = vsel %vm4397, %v759, %v5389
        %v6225 = vsel %vm4397, %v823, %v5391
        %v6226 = vsel %vm4397, %v760, %v5393
        %v6227 = vsel %vm4397, %v824, %v5395
        %v6228 = vsel %vm4397, %v761, %v5397
        %v6229 = vsel %vm4397, %v825, %v5399
        %v6230 = vsel %vm4397, %v762, %v5401
        %v6231 = vsel %vm4397, %v826, %v5403
        %v6232 = vsel %vm4397, %v763, %v5405
        %v6233 = vsel %vm4397, %v827, %v5407
        %v6234 = vsel %vm4397, %v764, %v5409
        %v6235 = vsel %vm4397, %v828, %v5411
        %v6236 = vsel %vm4462, %v6220, %v5437
        %v6237 = vsel %vm4462, %v6221, %v5439
        %v6238 = vsel %vm4462, %v6222, %v5441
        %v6239 = vsel %vm4462, %v6223, %v5443
        %v6240 = vsel %vm4462, %v6224, %v5445
        %v6241 = vsel %vm4462, %v6225, %v5447
        %v6242 = vsel %vm4462, %v6226, %v5449
        %v6243 = vsel %vm4462, %v6227, %v5451
        %v6244 = vsel %vm4462, %v6228, %v5453
        %v6245 = vsel %vm4462, %v6229, %v5455
        %v6246 = vsel %vm4462, %v6230, %v5457
        %v6247 = vsel %vm4462, %v6231, %v5459
        %v6248 = vsel %vm4462, %v6232, %v5461
        %v6249 = vsel %vm4462, %v6233, %v5463
        %v6250 = vsel %vm4462, %v6234, %v5465
        %v6251 = vsel %vm4462, %v6235, %v5467
        %v6252 = vsel %vm4527, %v6236, %v5493
        %v6253 = vsel %vm4527, %v6237, %v5495
        %v6254 = vsel %vm4527, %v6238, %v5497
        %v6255 = vsel %vm4527, %v6239, %v5499
        %v6256 = vsel %vm4527, %v6240, %v5501
        %v6257 = vsel %vm4527, %v6241, %v5503
        %v6258 = vsel %vm4527, %v6242, %v5505
        %v6259 = vsel %vm4527, %v6243, %v5507
        %v6260 = vsel %vm4527, %v6244, %v5509
        %v6261 = vsel %vm4527, %v6245, %v5511
        %v6262 = vsel %vm4527, %v6246, %v5513
        %v6263 = vsel %vm4527, %v6247, %v5515
        %v6264 = vsel %vm4527, %v6248, %v5517
        %v6265 = vsel %vm4527, %v6249, %v5519
        %v6266 = vsel %vm4527, %v6250, %v5521
        %v6267 = vsel %vm4527, %v6251, %v5523
        %v6268 = vsel %vm4592, %v6252, %v5549
        %v6269 = vsel %vm4592, %v6253, %v5551
        %v6270 = vsel %vm4592, %v6254, %v5553
        %v6271 = vsel %vm4592, %v6255, %v5555
        %v6272 = vsel %vm4592, %v6256, %v5557
        %v6273 = vsel %vm4592, %v6257, %v5559
        %v6274 = vsel %vm4592, %v6258, %v5561
        %v6275 = vsel %vm4592, %v6259, %v5563
        %v6276 = vsel %vm4592, %v6260, %v5565
        %v6277 = vsel %vm4592, %v6261, %v5567
        %v6278 = vsel %vm4592, %v6262, %v5569
        %v6279 = vsel %vm4592, %v6263, %v5571
        %v6280 = vsel %vm4592, %v6264, %v5573
        %v6281 = vsel %vm4592, %v6265, %v5575
        %v6282 = vsel %vm4592, %v6266, %v5577
        %v6283 = vsel %vm4592, %v6267, %v5579
        %v6284 = vsel %vm4657, %v6268, %v5605
        %v6285 = vsel %vm4657, %v6269, %v5607
        %v6286 = vsel %vm4657, %v6270, %v5609
        %v6287 = vsel %vm4657, %v6271, %v5611
        %v6288 = vsel %vm4657, %v6272, %v5613
        %v6289 = vsel %vm4657, %v6273, %v5615
        %v6290 = vsel %vm4657, %v6274, %v5617
        %v6291 = vsel %vm4657, %v6275, %v5619
        %v6292 = vsel %vm4657, %v6276, %v5621
        %v6293 = vsel %vm4657, %v6277, %v5623
        %v6294 = vsel %vm4657, %v6278, %v5625
        %v6295 = vsel %vm4657, %v6279, %v5627
        %v6296 = vsel %vm4657, %v6280, %v5629
        %v6297 = vsel %vm4657, %v6281, %v5631
        %v6298 = vsel %vm4657, %v6282, %v5633
        %v6299 = vsel %vm4657, %v6283, %v5635
        %v6300 = vsel %vm4722, %v6284, %v5661
        %v6301 = vsel %vm4722, %v6285, %v5663
        %v6302 = vsel %vm4722, %v6286, %v5665
        %v6303 = vsel %vm4722, %v6287, %v5667
        %v6304 = vsel %vm4722, %v6288, %v5669
        %v6305 = vsel %vm4722, %v6289, %v5671
        %v6306 = vsel %vm4722, %v6290, %v5673
        %v6307 = vsel %vm4722, %v6291, %v5675
        %v6308 = vsel %vm4722, %v6292, %v5677
        %v6309 = vsel %vm4722, %v6293, %v5679
        %v6310 = vsel %vm4722, %v6294, %v5681
        %v6311 = vsel %vm4722, %v6295, %v5683
        %v6312 = vsel %vm4722, %v6296, %v5685
        %v6313 = vsel %vm4722, %v6297, %v5687
        %v6314 = vsel %vm4722, %v6298, %v5689
        %v6315 = vsel %vm4722, %v6299, %v5691
        %v6316 = vsel %vm4787, %v6300, %v5717
        %v6317 = vsel %vm4787, %v6301, %v5719
        %v6318 = vsel %vm4787, %v6302, %v5721
        %v6319 = vsel %vm4787, %v6303, %v5723
        %v6320 = vsel %vm4787, %v6304, %v5725
        %v6321 = vsel %vm4787, %v6305, %v5727
        %v6322 = vsel %vm4787, %v6306, %v5729
        %v6323 = vsel %vm4787, %v6307, %v5731
        %v6324 = vsel %vm4787, %v6308, %v5733
        %v6325 = vsel %vm4787, %v6309, %v5735
        %v6326 = vsel %vm4787, %v6310, %v5737
        %v6327 = vsel %vm4787, %v6311, %v5739
        %v6328 = vsel %vm4787, %v6312, %v5741
        %v6329 = vsel %vm4787, %v6313, %v5743
        %v6330 = vsel %vm4787, %v6314, %v5745
        %v6331 = vsel %vm4787, %v6315, %v5747
        %v6332 = vsel %vm4852, %v6316, %v5781
        %v6333 = vsel %vm4852, %v6317, %v5783
        %v6334 = vsel %vm4852, %v6318, %v5785
        %v6335 = vsel %vm4852, %v6319, %v5787
        %v6336 = vsel %vm4852, %v6320, %v5789
        %v6337 = vsel %vm4852, %v6321, %v5791
        %v6338 = vsel %vm4852, %v6322, %v5793
        %v6339 = vsel %vm4852, %v6323, %v5795
        %v6340 = vsel %vm4852, %v6324, %v5797
        %v6341 = vsel %vm4852, %v6325, %v5799
        %v6342 = vsel %vm4852, %v6326, %v5801
        %v6343 = vsel %vm4852, %v6327, %v5803
        %v6344 = vsel %vm4852, %v6328, %v5805
        %v6345 = vsel %vm4852, %v6329, %v5807
        %v6346 = vsel %vm4852, %v6330, %v5809
        %v6347 = vsel %vm4852, %v6331, %v5811
        %v6348 = vsel %vm4917, %v6332, %v5837
        %v6349 = vsel %vm4917, %v6333, %v5839
        %v6350 = vsel %vm4917, %v6334, %v5841
        %v6351 = vsel %vm4917, %v6335, %v5843
        %v6352 = vsel %vm4917, %v6336, %v5845
        %v6353 = vsel %vm4917, %v6337, %v5847
        %v6354 = vsel %vm4917, %v6338, %v5849
        %v6355 = vsel %vm4917, %v6339, %v5851
        %v6356 = vsel %vm4917, %v6340, %v5853
        %v6357 = vsel %vm4917, %v6341, %v5855
        %v6358 = vsel %vm4917, %v6342, %v5857
        %v6359 = vsel %vm4917, %v6343, %v5859
        %v6360 = vsel %vm4917, %v6344, %v5861
        %v6361 = vsel %vm4917, %v6345, %v5863
        %v6362 = vsel %vm4917, %v6346, %v5865
        %v6363 = vsel %vm4917, %v6347, %v5867
        %v6364 = vsel %vm4982, %v6348, %v5893
        %v6365 = vsel %vm4982, %v6349, %v5895
        %v6366 = vsel %vm4982, %v6350, %v5897
        %v6367 = vsel %vm4982, %v6351, %v5899
        %v6368 = vsel %vm4982, %v6352, %v5901
        %v6369 = vsel %vm4982, %v6353, %v5903
        %v6370 = vsel %vm4982, %v6354, %v5905
        %v6371 = vsel %vm4982, %v6355, %v5907
        %v6372 = vsel %vm4982, %v6356, %v5909
        %v6373 = vsel %vm4982, %v6357, %v5911
        %v6374 = vsel %vm4982, %v6358, %v5913
        %v6375 = vsel %vm4982, %v6359, %v5915
        %v6376 = vsel %vm4982, %v6360, %v5917
        %v6377 = vsel %vm4982, %v6361, %v5919
        %v6378 = vsel %vm4982, %v6362, %v5921
        %v6379 = vsel %vm4982, %v6363, %v5923
        %v6380 = vsel %vm5047, %v6364, %v5949
        %v6381 = vsel %vm5047, %v6365, %v5951
        %v6382 = vsel %vm5047, %v6366, %v5953
        %v6383 = vsel %vm5047, %v6367, %v5955
        %v6384 = vsel %vm5047, %v6368, %v5957
        %v6385 = vsel %vm5047, %v6369, %v5959
        %v6386 = vsel %vm5047, %v6370, %v5961
        %v6387 = vsel %vm5047, %v6371, %v5963
        %v6388 = vsel %vm5047, %v6372, %v5965
        %v6389 = vsel %vm5047, %v6373, %v5967
        %v6390 = vsel %vm5047, %v6374, %v5969
        %v6391 = vsel %vm5047, %v6375, %v5971
        %v6392 = vsel %vm5047, %v6376, %v5973
        %v6393 = vsel %vm5047, %v6377, %v5975
        %v6394 = vsel %vm5047, %v6378, %v5977
        %v6395 = vsel %vm5047, %v6379, %v5979
        %v6396 = vsel %vm5112, %v6380, %v6005
        %v6397 = vsel %vm5112, %v6381, %v6007
        %v6398 = vsel %vm5112, %v6382, %v6009
        %v6399 = vsel %vm5112, %v6383, %v6011
        %v6400 = vsel %vm5112, %v6384, %v6013
        %v6401 = vsel %vm5112, %v6385, %v6015
        %v6402 = vsel %vm5112, %v6386, %v6017
        %v6403 = vsel %vm5112, %v6387, %v6019
        %v6404 = vsel %vm5112, %v6388, %v6021
        %v6405 = vsel %vm5112, %v6389, %v6023
        %v6406 = vsel %vm5112, %v6390, %v6025
        %v6407 = vsel %vm5112, %v6391, %v6027
        %v6408 = vsel %vm5112, %v6392, %v6029
        %v6409 = vsel %vm5112, %v6393, %v6031
        %v6410 = vsel %vm5112, %v6394, %v6033
        %v6411 = vsel %vm5112, %v6395, %v6035
        %v6412 = vsel %vm5177, %v6396, %v6061
        %v6413 = vsel %vm5177, %v6397, %v6063
        %v6414 = vsel %vm5177, %v6398, %v6065
        %v6415 = vsel %vm5177, %v6399, %v6067
        %v6416 = vsel %vm5177, %v6400, %v6069
        %v6417 = vsel %vm5177, %v6401, %v6071
        %v6418 = vsel %vm5177, %v6402, %v6073
        %v6419 = vsel %vm5177, %v6403, %v6075
        %v6420 = vsel %vm5177, %v6404, %v6077
        %v6421 = vsel %vm5177, %v6405, %v6079
        %v6422 = vsel %vm5177, %v6406, %v6081
        %v6423 = vsel %vm5177, %v6407, %v6083
        %v6424 = vsel %vm5177, %v6408, %v6085
        %v6425 = vsel %vm5177, %v6409, %v6087
        %v6426 = vsel %vm5177, %v6410, %v6089
        %v6427 = vsel %vm5177, %v6411, %v6091
        %v6428 = vsel %vm5242, %v6412, %v6117
        %v6429 = vsel %vm5242, %v6413, %v6119
        %v6430 = vsel %vm5242, %v6414, %v6121
        %v6431 = vsel %vm5242, %v6415, %v6123
        %v6432 = vsel %vm5242, %v6416, %v6125
        %v6433 = vsel %vm5242, %v6417, %v6127
        %v6434 = vsel %vm5242, %v6418, %v6129
        %v6435 = vsel %vm5242, %v6419, %v6131
        %v6436 = vsel %vm5242, %v6420, %v6133
        %v6437 = vsel %vm5242, %v6421, %v6135
        %v6438 = vsel %vm5242, %v6422, %v6137
        %v6439 = vsel %vm5242, %v6423, %v6139
        %v6440 = vsel %vm5242, %v6424, %v6141
        %v6441 = vsel %vm5242, %v6425, %v6143
        %v6442 = vsel %vm5242, %v6426, %v6145
        %v6443 = vsel %vm5242, %v6427, %v6147
        %v6444 = vsel %vm5307, %v6428, %v6173
        %v6445 = vsel %vm5307, %v6429, %v6175
        %v6446 = vsel %vm5307, %v6430, %v6177
        %v6447 = vsel %vm5307, %v6431, %v6179
        %v6448 = vsel %vm5307, %v6432, %v6181
        %v6449 = vsel %vm5307, %v6433, %v6183
        %v6450 = vsel %vm5307, %v6434, %v6185
        %v6451 = vsel %vm5307, %v6435, %v6187
        %v6452 = vsel %vm5307, %v6436, %v6189
        %v6453 = vsel %vm5307, %v6437, %v6191
        %v6454 = vsel %vm5307, %v6438, %v6193
        %v6455 = vsel %vm5307, %v6439, %v6195
        %v6456 = vsel %vm5307, %v6440, %v6197
        %v6457 = vsel %vm5307, %v6441, %v6199
        %v6458 = vsel %vm5307, %v6442, %v6201
        %v6459 = vsel %vm5307, %v6443, %v6203
        %6524 = vrot.lane.b32.xlu0 %v5310, 64
        %v6525 = vpop.permute.xlu0 %6524
        %6526 = vrot.lane.b32.xlu0 %v5311, 64
        %v6527 = vpop.permute.xlu0 %6526
        %6528 = vrot.lane.b32.xlu0 %v5312, 64
        %v6529 = vpop.permute.xlu0 %6528
        %6530 = vrot.lane.b32.xlu0 %v5313, 64
        %v6531 = vpop.permute.xlu0 %6530
        %6532 = vrot.lane.b32.xlu0 %v5314, 64
        %v6533 = vpop.permute.xlu0 %6532
        %6534 = vrot.lane.b32.xlu0 %v5315, 64
        %v6535 = vpop.permute.xlu0 %6534
        %6536 = vrot.lane.b32.xlu0 %v6444, 64
        %v6537 = vpop.permute.xlu0 %6536
        %6538 = vrot.lane.b32.xlu0 %v6445, 64
        %v6539 = vpop.permute.xlu0 %6538
        %6540 = vrot.lane.b32.xlu0 %v5318, 64
        %v6541 = vpop.permute.xlu0 %6540
        %6542 = vrot.lane.b32.xlu0 %v5319, 64
        %v6543 = vpop.permute.xlu0 %6542
        %6544 = vrot.lane.b32.xlu0 %v5320, 64
        %v6545 = vpop.permute.xlu0 %6544
        %6546 = vrot.lane.b32.xlu0 %v5321, 64
        %v6547 = vpop.permute.xlu0 %6546
        %6548 = vrot.lane.b32.xlu0 %v5322, 64
        %v6549 = vpop.permute.xlu0 %6548
        %6550 = vrot.lane.b32.xlu0 %v5323, 64
        %v6551 = vpop.permute.xlu0 %6550
        %6552 = vrot.lane.b32.xlu0 %v6446, 64
        %v6553 = vpop.permute.xlu0 %6552
        %6554 = vrot.lane.b32.xlu0 %v6447, 64
        %v6555 = vpop.permute.xlu0 %6554
        %6556 = vrot.lane.b32.xlu0 %v5326, 64
        %v6557 = vpop.permute.xlu0 %6556
        %6558 = vrot.lane.b32.xlu0 %v5327, 64
        %v6559 = vpop.permute.xlu0 %6558
        %6560 = vrot.lane.b32.xlu0 %v5328, 64
        %v6561 = vpop.permute.xlu0 %6560
        %6562 = vrot.lane.b32.xlu0 %v5329, 64
        %v6563 = vpop.permute.xlu0 %6562
        %6564 = vrot.lane.b32.xlu0 %v5330, 64
        %v6565 = vpop.permute.xlu0 %6564
        %6566 = vrot.lane.b32.xlu0 %v5331, 64
        %v6567 = vpop.permute.xlu0 %6566
        %6568 = vrot.lane.b32.xlu0 %v6448, 64
        %v6569 = vpop.permute.xlu0 %6568
        %6570 = vrot.lane.b32.xlu0 %v6449, 64
        %v6571 = vpop.permute.xlu0 %6570
        %6572 = vrot.lane.b32.xlu0 %v5334, 64
        %v6573 = vpop.permute.xlu0 %6572
        %6574 = vrot.lane.b32.xlu0 %v5335, 64
        %v6575 = vpop.permute.xlu0 %6574
        %6576 = vrot.lane.b32.xlu0 %v5336, 64
        %v6577 = vpop.permute.xlu0 %6576
        %6578 = vrot.lane.b32.xlu0 %v5337, 64
        %v6579 = vpop.permute.xlu0 %6578
        %6580 = vrot.lane.b32.xlu0 %v5338, 64
        %v6581 = vpop.permute.xlu0 %6580
        %6582 = vrot.lane.b32.xlu0 %v5339, 64
        %v6583 = vpop.permute.xlu0 %6582
        %6584 = vrot.lane.b32.xlu0 %v6450, 64
        %v6585 = vpop.permute.xlu0 %6584
        %6586 = vrot.lane.b32.xlu0 %v6451, 64
        %v6587 = vpop.permute.xlu0 %6586
        %6588 = vrot.lane.b32.xlu0 %v5342, 64
        %v6589 = vpop.permute.xlu0 %6588
        %6590 = vrot.lane.b32.xlu0 %v5343, 64
        %v6591 = vpop.permute.xlu0 %6590
        %6592 = vrot.lane.b32.xlu0 %v5344, 64
        %v6593 = vpop.permute.xlu0 %6592
        %6594 = vrot.lane.b32.xlu0 %v5345, 64
        %v6595 = vpop.permute.xlu0 %6594
        %6596 = vrot.lane.b32.xlu0 %v5346, 64
        %v6597 = vpop.permute.xlu0 %6596
        %6598 = vrot.lane.b32.xlu0 %v5347, 64
        %v6599 = vpop.permute.xlu0 %6598
        %6600 = vrot.lane.b32.xlu0 %v6452, 64
        %v6601 = vpop.permute.xlu0 %6600
        %6602 = vrot.lane.b32.xlu0 %v6453, 64
        %v6603 = vpop.permute.xlu0 %6602
        %6604 = vrot.lane.b32.xlu0 %v5350, 64
        %v6605 = vpop.permute.xlu0 %6604
        %6606 = vrot.lane.b32.xlu0 %v5351, 64
        %v6607 = vpop.permute.xlu0 %6606
        %6608 = vrot.lane.b32.xlu0 %v5352, 64
        %v6609 = vpop.permute.xlu0 %6608
        %6610 = vrot.lane.b32.xlu0 %v5353, 64
        %v6611 = vpop.permute.xlu0 %6610
        %6612 = vrot.lane.b32.xlu0 %v5354, 64
        %v6613 = vpop.permute.xlu0 %6612
        %6614 = vrot.lane.b32.xlu0 %v5355, 64
        %v6615 = vpop.permute.xlu0 %6614
        %6616 = vrot.lane.b32.xlu0 %v6454, 64
        %v6617 = vpop.permute.xlu0 %6616
        %6618 = vrot.lane.b32.xlu0 %v6455, 64
        %v6619 = vpop.permute.xlu0 %6618
        %6620 = vrot.lane.b32.xlu0 %v5358, 64
        %v6621 = vpop.permute.xlu0 %6620
        %6622 = vrot.lane.b32.xlu0 %v5359, 64
        %v6623 = vpop.permute.xlu0 %6622
        %6624 = vrot.lane.b32.xlu0 %v5360, 64
        %v6625 = vpop.permute.xlu0 %6624
        %6626 = vrot.lane.b32.xlu0 %v5361, 64
        %v6627 = vpop.permute.xlu0 %6626
        %6628 = vrot.lane.b32.xlu0 %v5362, 64
        %v6629 = vpop.permute.xlu0 %6628
        %6630 = vrot.lane.b32.xlu0 %v5363, 64
        %v6631 = vpop.permute.xlu0 %6630
        %6632 = vrot.lane.b32.xlu0 %v6456, 64
        %v6633 = vpop.permute.xlu0 %6632
        %6634 = vrot.lane.b32.xlu0 %v6457, 64
        %v6635 = vpop.permute.xlu0 %6634
        %6636 = vrot.lane.b32.xlu0 %v5366, 64
        %v6637 = vpop.permute.xlu0 %6636
        %6638 = vrot.lane.b32.xlu0 %v5367, 64
        %v6639 = vpop.permute.xlu0 %6638
        %6640 = vrot.lane.b32.xlu0 %v5368, 64
        %v6641 = vpop.permute.xlu0 %6640
        %6642 = vrot.lane.b32.xlu0 %v5369, 64
        %v6643 = vpop.permute.xlu0 %6642
        %6644 = vrot.lane.b32.xlu0 %v5370, 64
        %v6645 = vpop.permute.xlu0 %6644
        %6646 = vrot.lane.b32.xlu0 %v5371, 64
        %v6647 = vpop.permute.xlu0 %6646
        %6648 = vrot.lane.b32.xlu0 %v6458, 64
        %v6649 = vpop.permute.xlu0 %6648
        %6650 = vrot.lane.b32.xlu0 %v6459, 64
        %v6651 = vpop.permute.xlu0 %6650
        %vm6716 = vcmask 523264
        %v6717 = vsel %vm6716, %v5308, %v6525
        %v6718 = vsel %vm6716, %v5309, %v6527
        %v6719 = vsel %vm6716, %v5310, %v6529
        %v6720 = vsel %vm6716, %v5311, %v6531
        %v6721 = vsel %vm6716, %v5312, %v6533
        %v6722 = vsel %vm6716, %v5313, %v6535
        %v6723 = vsel %vm6716, %v5314, %v6537
        %v6724 = vsel %vm6716, %v5315, %v6539
        %v6725 = vsel %vm6716, %v5316, %v6541
        %v6726 = vsel %vm6716, %v5317, %v6543
        %v6727 = vsel %vm6716, %v5318, %v6545
        %v6728 = vsel %vm6716, %v5319, %v6547
        %v6729 = vsel %vm6716, %v5320, %v6549
        %v6730 = vsel %vm6716, %v5321, %v6551
        %v6731 = vsel %vm6716, %v5322, %v6553
        %v6732 = vsel %vm6716, %v5323, %v6555
        %v6733 = vsel %vm6716, %v5324, %v6557
        %v6734 = vsel %vm6716, %v5325, %v6559
        %v6735 = vsel %vm6716, %v5326, %v6561
        %v6736 = vsel %vm6716, %v5327, %v6563
        %v6737 = vsel %vm6716, %v5328, %v6565
        %v6738 = vsel %vm6716, %v5329, %v6567
        %v6739 = vsel %vm6716, %v5330, %v6569
        %v6740 = vsel %vm6716, %v5331, %v6571
        %v6741 = vsel %vm6716, %v5332, %v6573
        %v6742 = vsel %vm6716, %v5333, %v6575
        %v6743 = vsel %vm6716, %v5334, %v6577
        %v6744 = vsel %vm6716, %v5335, %v6579
        %v6745 = vsel %vm6716, %v5336, %v6581
        %v6746 = vsel %vm6716, %v5337, %v6583
        %v6747 = vsel %vm6716, %v5338, %v6585
        %v6748 = vsel %vm6716, %v5339, %v6587
        %v6749 = vsel %vm6716, %v5340, %v6589
        %v6750 = vsel %vm6716, %v5341, %v6591
        %v6751 = vsel %vm6716, %v5342, %v6593
        %v6752 = vsel %vm6716, %v5343, %v6595
        %v6753 = vsel %vm6716, %v5344, %v6597
        %v6754 = vsel %vm6716, %v5345, %v6599
        %v6755 = vsel %vm6716, %v5346, %v6601
        %v6756 = vsel %vm6716, %v5347, %v6603
        %v6757 = vsel %vm6716, %v5348, %v6605
        %v6758 = vsel %vm6716, %v5349, %v6607
        %v6759 = vsel %vm6716, %v5350, %v6609
        %v6760 = vsel %vm6716, %v5351, %v6611
        %v6761 = vsel %vm6716, %v5352, %v6613
        %v6762 = vsel %vm6716, %v5353, %v6615
        %v6763 = vsel %vm6716, %v5354, %v6617
        %v6764 = vsel %vm6716, %v5355, %v6619
        %v6765 = vsel %vm6716, %v5356, %v6621
        %v6766 = vsel %vm6716, %v5357, %v6623
        %v6767 = vsel %vm6716, %v5358, %v6625
        %v6768 = vsel %vm6716, %v5359, %v6627
        %v6769 = vsel %vm6716, %v5360, %v6629
        %v6770 = vsel %vm6716, %v5361, %v6631
        %v6771 = vsel %vm6716, %v5362, %v6633
        %v6772 = vsel %vm6716, %v5363, %v6635
        %v6773 = vsel %vm6716, %v5364, %v6637
        %v6774 = vsel %vm6716, %v5365, %v6639
        %v6775 = vsel %vm6716, %v5366, %v6641
        %v6776 = vsel %vm6716, %v5367, %v6643
        %v6777 = vsel %vm6716, %v5368, %v6645
        %v6778 = vsel %vm6716, %v5369, %v6647
        %v6779 = vsel %vm6716, %v5370, %v6649
        %v6780 = vsel %vm6716, %v5371, %v6651
        %v6781 = vld [vmem:[%s2] sm:$0xff]
        %v6782 = vld [vmem:[%s2 + $0x8] sm:$0xff]
        %v6783 = vld [vmem:[%s2 + $0x10] sm:$0xff]
        %v6784 = vld [vmem:[%s2 + $0x18] sm:$0xff]
        %v6785 = vld [vmem:[%s2 + $0x20] sm:$0xff]
        %v6786 = vld [vmem:[%s2 + $0x28] sm:$0xff]
        %v6787 = vld [vmem:[%s2 + $0x30] sm:$0xff]
        %v6788 = vld [vmem:[%s2 + $0x38] sm:$0xff]
        %v6789 = vld [vmem:[%s2 + $0x40] sm:$0xff]
        %v6790 = vld [vmem:[%s2 + $0x48] sm:$0xff]
        %v6791 = vld [vmem:[%s2 + $0x50] sm:$0xff]
        %v6792 = vld [vmem:[%s2 + $0x58] sm:$0xff]
        %v6793 = vld [vmem:[%s2 + $0x60] sm:$0xff]
        %v6794 = vld [vmem:[%s2 + $0x68] sm:$0xff]
        %v6795 = vld [vmem:[%s2 + $0x70] sm:$0xff]
        %v6796 = vld [vmem:[%s2 + $0x78] sm:$0xff]
        %6797 = vmatprep.subr.mxu0 0.0
        %6798 = vmatpush1.msra.mxu0 %v6781
        %6799 = vmatprep.subr.mxu0 0.0
        %6800 = vmatpush1.msra.mxu0 %v6782
        %6801 = vmatprep.subr.mxu0 0.0
        %6802 = vmatpush1.msra.mxu0 %v6783
        %6803 = vmatprep.subr.mxu0 0.0
        %6804 = vmatpush1.msra.mxu0 %v6784
        %6805 = vmatprep.subr.mxu0 0.0
        %6806 = vmatpush1.msra.mxu0 %v6785
        %6807 = vmatprep.subr.mxu0 0.0
        %6808 = vmatpush1.msra.mxu0 %v6786
        %6809 = vmatprep.subr.mxu0 0.0
        %6810 = vmatpush1.msra.mxu0 %v6787
        %6811 = vmatprep.subr.mxu0 0.0
        %6812 = vmatpush1.msra.mxu0 %v6788
        %6813 = vmatprep.subr.mxu0 0.0
        %6814 = vmatpush1.msra.mxu0 %v6789
        %6815 = vmatprep.subr.mxu0 0.0
        %6816 = vmatpush1.msra.mxu0 %v6790
        %6817 = vmatprep.subr.mxu0 0.0
        %6818 = vmatpush1.msra.mxu0 %v6791
        %6819 = vmatprep.subr.mxu0 0.0
        %6820 = vmatpush1.msra.mxu0 %v6792
        %6821 = vmatprep.subr.mxu0 0.0
        %6822 = vmatpush1.msra.mxu0 %v6793
        %6823 = vmatprep.subr.mxu0 0.0
        %6824 = vmatpush1.msra.mxu0 %v6794
        %6825 = vmatprep.subr.mxu0 0.0
        %6826 = vmatpush1.msra.mxu0 %v6795
        %6827 = vmatprep.subr.mxu0 0.0
        %6828 = vmatpush1.msra.mxu0 %v6796
        %6829 = vmatprep.subr.mxu0 0.0
        %6830 = vmatpush1.msra.mxu0 0.0
        %6831 = vmatprep.subr.mxu0 0.0
        %6832 = vmatpush1.msra.mxu0 0.0
        %6833 = vmatprep.subr.mxu0 0.0
        %6834 = vmatpush1.msra.mxu0 0.0
        %6835 = vmatprep.subr.mxu0 0.0
        %6836 = vmatpush1.msra.mxu0 0.0
        %6837 = vmatprep.subr.mxu0 0.0
        %6838 = vmatpush1.msra.mxu0 0.0
        %6839 = vmatprep.subr.mxu0 0.0
        %6840 = vmatpush1.msra.mxu0 0.0
        %6841 = vmatprep.subr.mxu0 0.0
        %6842 = vmatpush1.msra.mxu0 0.0
        %6843 = vmatprep.subr.mxu0 0.0
        %6844 = vmatpush1.msra.mxu0 0.0
        %6845 = vmatprep.subr.mxu0 0.0
        %6846 = vmatpush1.msra.mxu0 0.0
        %6847 = vmatprep.subr.mxu0 0.0
        %6848 = vmatpush1.msra.mxu0 0.0
        %6849 = vmatprep.subr.mxu0 0.0
        %6850 = vmatpush1.msra.mxu0 0.0
        %6851 = vmatprep.subr.mxu0 0.0
        %6852 = vmatpush1.msra.mxu0 0.0
        %6853 = vmatprep.subr.mxu0 0.0
        %6854 = vmatpush1.msra.mxu0 0.0
        %6855 = vmatprep.subr.mxu0 0.0
        %6856 = vmatpush1.msra.mxu0 0.0
        %6857 = vmatprep.subr.mxu0 0.0
        %6858 = vmatpush1.msra.mxu0 0.0
        %6859 = vmatprep.subr.mxu0 0.0
        %6860 = vmatpush1.msra.mxu0 0.0
        %6861 = vmatprep.mubr.f32.mxu0 0.0
        %6862 = vmatmul.mubr.f32.gmra.mrb[0].mxu0 %v6717
        %v6863 = vpop.f32.mrb[0].mxu0
        %v6864 = vadd.f32 0.0, %v6863
        %v6865 = vpop.f32.mrb[0].mxu0
        %6866 = vmatprep.mubr.f32.mxu0 0.0
        %6867 = vmatmul.mubr.f32.gmra.mrb[0].mxu0 %v6718
        %v6868 = vpop.f32.mrb[0].mxu0
        %v6869 = vadd.f32 0.0, %v6868
        %v6870 = vpop.f32.mrb[0].mxu0
        %6871 = vmatprep.mubr.f32.mxu0 0.0
        %6872 = vmatmul.mubr.f32.gmra.mrb[0].mxu0 %v6719
        %v6873 = vpop.f32.mrb[0].mxu0
        %v6874 = vadd.f32 0.0, %v6873
        %v6875 = vpop.f32.mrb[0].mxu0
        %6876 = vmatprep.mubr.f32.mxu0 0.0
        %6877 = vmatmul.mubr.f32.gmra.mrb[0].mxu0 %v6720
        %v6878 = vpop.f32.mrb[0].mxu0
        %v6879 = vadd.f32 0.0, %v6878
        %v6880 = vpop.f32.mrb[0].mxu0
        %6881 = vmatprep.mubr.f32.mxu0 0.0
        %6882 = vmatmul.mubr.f32.gmra.mrb[0].mxu0 %v6721
        %v6883 = vpop.f32.mrb[0].mxu0
        %v6884 = vadd.f32 0.0, %v6883
        %v6885 = vpop.f32.mrb[0].mxu0
        %6886 = vmatprep.mubr.f32.mxu0 0.0
        %6887 = vmatmul.mubr.f32.gmra.mrb[0].mxu0 %v6722
        %v6888 = vpop.f32.mrb[0].mxu0
        %v6889 = vadd.f32 0.0, %v6888
        %v6890 = vpop.f32.mrb[0].mxu0
        %6891 = vmatprep.mubr.f32.mxu0 0.0
        %6892 = vmatmul.mubr.f32.gmra.mrb[0].mxu0 %v6723
        %v6893 = vpop.f32.mrb[0].mxu0
        %v6894 = vadd.f32 0.0, %v6893
        %v6895 = vpop.f32.mrb[0].mxu0
        %6896 = vmatprep.mubr.f32.mxu0 0.0
        %6897 = vmatmul.mubr.f32.gmra.mrb[0].mxu0 %v6724
        %v6898 = vpop.f32.mrb[0].mxu0
        %v6899 = vadd.f32 0.0, %v6898
        %v6900 = vpop.f32.mrb[0].mxu0
        %6901 = vmatprep.mubr.f32.mxu0 0.0
        %6902 = vmatmul.mubr.f32.gmra.mrb[0].mxu0 %v6725
        %v6903 = vpop.f32.mrb[0].mxu0
        %v6904 = vadd.f32 0.0, %v6903
        %v6905 = vpop.f32.mrb[0].mxu0
        %6906 = vmatprep.mubr.f32.mxu0 0.0
        %6907 = vmatmul.mubr.f32.gmra.mrb[0].mxu0 %v6726
        %v6908 = vpop.f32.mrb[0].mxu0
        %v6909 = vadd.f32 0.0, %v6908
        %v6910 = vpop.f32.mrb[0].mxu0
        %6911 = vmatprep.mubr.f32.mxu0 0.0
        %6912 = vmatmul.mubr.f32.gmra.mrb[0].mxu0 %v6727
        %v6913 = vpop.f32.mrb[0].mxu0
        %v6914 = vadd.f32 0.0, %v6913
        %v6915 = vpop.f32.mrb[0].mxu0
        %6916 = vmatprep.mubr.f32.mxu0 0.0
        %6917 = vmatmul.mubr.f32.gmra.mrb[0].mxu0 %v6728
        %v6918 = vpop.f32.mrb[0].mxu0
        %v6919 = vadd.f32 0.0, %v6918
        %v6920 = vpop.f32.mrb[0].mxu0
        %6921 = vmatprep.mubr.f32.mxu0 0.0
        %6922 = vmatmul.mubr.f32.gmra.mrb[0].mxu0 %v6729
        %v6923 = vpop.f32.mrb[0].mxu0
        %v6924 = vadd.f32 0.0, %v6923
        %v6925 = vpop.f32.mrb[0].mxu0
        %6926 = vmatprep.mubr.f32.mxu0 0.0
        %6927 = vmatmul.mubr.f32.gmra.mrb[0].mxu0 %v6730
        %v6928 = vpop.f32.mrb[0].mxu0
        %v6929 = vadd.f32 0.0, %v6928
        %v6930 = vpop.f32.mrb[0].mxu0
        %6931 = vmatprep.mubr.f32.mxu0 0.0
        %6932 = vmatmul.mubr.f32.gmra.mrb[0].mxu0 %v6731
        %v6933 = vpop.f32.mrb[0].mxu0
        %v6934 = vadd.f32 0.0, %v6933
        %v6935 = vpop.f32.mrb[0].mxu0
        %6936 = vmatprep.mubr.f32.mxu0 0.0
        %6937 = vmatmul.mubr.f32.gmra.mrb[0].mxu0 %v6732
        %v6938 = vpop.f32.mrb[0].mxu0
        %v6939 = vadd.f32 0.0, %v6938
        %v6940 = vpop.f32.mrb[0].mxu0
        %6941 = vmatprep.mubr.f32.mxu0 0.0
        %6942 = vmatmul.mubr.f32.gmra.mrb[0].mxu0 %v6733
        %v6943 = vpop.f32.mrb[0].mxu0
        %v6944 = vadd.f32 0.0, %v6943
        %v6945 = vpop.f32.mrb[0].mxu0
        %6946 = vmatprep.mubr.f32.mxu0 0.0
        %6947 = vmatmul.mubr.f32.gmra.mrb[0].mxu0 %v6734
        %v6948 = vpop.f32.mrb[0].mxu0
        %v6949 = vadd.f32 0.0, %v6948
        %v6950 = vpop.f32.mrb[0].mxu0
        %6951 = vmatprep.mubr.f32.mxu0 0.0
        %6952 = vmatmul.mubr.f32.gmra.mrb[0].mxu0 %v6735
        %v6953 = vpop.f32.mrb[0].mxu0
        %v6954 = vadd.f32 0.0, %v6953
        %v6955 = vpop.f32.mrb[0].mxu0
        %6956 = vmatprep.mubr.f32.mxu0 0.0
        %6957 = vmatmul.mubr.f32.gmra.mrb[0].mxu0 %v6736
        %v6958 = vpop.f32.mrb[0].mxu0
        %v6959 = vadd.f32 0.0, %v6958
        %v6960 = vpop.f32.mrb[0].mxu0
        %6961 = vmatprep.mubr.f32.mxu0 0.0
        %6962 = vmatmul.mubr.f32.gmra.mrb[0].mxu0 %v6737
        %v6963 = vpop.f32.mrb[0].mxu0
        %v6964 = vadd.f32 0.0, %v6963
        %v6965 = vpop.f32.mrb[0].mxu0
        %6966 = vmatprep.mubr.f32.mxu0 0.0
        %6967 = vmatmul.mubr.f32.gmra.mrb[0].mxu0 %v6738
        %v6968 = vpop.f32.mrb[0].mxu0
        %v6969 = vadd.f32 0.0, %v6968
        %v6970 = vpop.f32.mrb[0].mxu0
        %6971 = vmatprep.mubr.f32.mxu0 0.0
        %6972 = vmatmul.mubr.f32.gmra.mrb[0].mxu0 %v6739
        %v6973 = vpop.f32.mrb[0].mxu0
        %v6974 = vadd.f32 0.0, %v6973
        %v6975 = vpop.f32.mrb[0].mxu0
        %6976 = vmatprep.mubr.f32.mxu0 0.0
        %6977 = vmatmul.mubr.f32.gmra.mrb[0].mxu0 %v6740
        %v6978 = vpop.f32.mrb[0].mxu0
        %v6979 = vadd.f32 0.0, %v6978
        %v6980 = vpop.f32.mrb[0].mxu0
        %6981 = vmatprep.mubr.f32.mxu0 0.0
        %6982 = vmatmul.mubr.f32.gmra.mrb[0].mxu0 %v6741
        %v6983 = vpop.f32.mrb[0].mxu0
        %v6984 = vadd.f32 0.0, %v6983
        %v6985 = vpop.f32.mrb[0].mxu0
        %6986 = vmatprep.mubr.f32.mxu0 0.0
        %6987 = vmatmul.mubr.f32.gmra.mrb[0].mxu0 %v6742
        %v6988 = vpop.f32.mrb[0].mxu0
        %v6989 = vadd.f32 0.0, %v6988
        %v6990 = vpop.f32.mrb[0].mxu0
        %6991 = vmatprep.mubr.f32.mxu0 0.0
        %6992 = vmatmul.mubr.f32.gmra.mrb[0].mxu0 %v6743
        %v6993 = vpop.f32.mrb[0].mxu0
        %v6994 = vadd.f32 0.0, %v6993
        %v6995 = vpop.f32.mrb[0].mxu0
        %6996 = vmatprep.mubr.f32.mxu0 0.0
        %6997 = vmatmul.mubr.f32.gmra.mrb[0].mxu0 %v6744
        %v6998 = vpop.f32.mrb[0].mxu0
        %v6999 = vadd.f32 0.0, %v6998
        %v7000 = vpop.f32.mrb[0].mxu0
        %7001 = vmatprep.mubr.f32.mxu0 0.0
        %7002 = vmatmul.mubr.f32.gmra.mrb[0].mxu0 %v6745
        %v7003 = vpop.f32.mrb[0].mxu0
        %v7004 = vadd.f32 0.0, %v7003
        %v7005 = vpop.f32.mrb[0].mxu0
        %7006 = vmatprep.mubr.f32.mxu0 0.0
        %7007 = vmatmul.mubr.f32.gmra.mrb[0].mxu0 %v6746
        %v7008 = vpop.f32.mrb[0].mxu0
        %v7009 = vadd.f32 0.0, %v7008
        %v7010 = vpop.f32.mrb[0].mxu0
        %7011 = vmatprep.mubr.f32.mxu0 0.0
        %7012 = vmatmul.mubr.f32.gmra.mrb[0].mxu0 %v6747
        %v7013 = vpop.f32.mrb[0].mxu0
        %v7014 = vadd.f32 0.0, %v7013
        %v7015 = vpop.f32.mrb[0].mxu0
        %7016 = vmatprep.mubr.f32.mxu0 0.0
        %7017 = vmatmul.mubr.f32.gmra.mrb[0].mxu0 %v6748
        %v7018 = vpop.f32.mrb[0].mxu0
        %v7019 = vadd.f32 0.0, %v7018
        %v7020 = vpop.f32.mrb[0].mxu0
        %7021 = vmatprep.mubr.f32.mxu0 0.0
        %7022 = vmatmul.mubr.f32.gmra.mrb[0].mxu0 %v6749
        %v7023 = vpop.f32.mrb[0].mxu0
        %v7024 = vadd.f32 0.0, %v7023
        %v7025 = vpop.f32.mrb[0].mxu0
        %7026 = vmatprep.mubr.f32.mxu0 0.0
        %7027 = vmatmul.mubr.f32.gmra.mrb[0].mxu0 %v6750
        %v7028 = vpop.f32.mrb[0].mxu0
        %v7029 = vadd.f32 0.0, %v7028
        %v7030 = vpop.f32.mrb[0].mxu0
        %7031 = vmatprep.mubr.f32.mxu0 0.0
        %7032 = vmatmul.mubr.f32.gmra.mrb[0].mxu0 %v6751
        %v7033 = vpop.f32.mrb[0].mxu0
        %v7034 = vadd.f32 0.0, %v7033
        %v7035 = vpop.f32.mrb[0].mxu0
        %7036 = vmatprep.mubr.f32.mxu0 0.0
        %7037 = vmatmul.mubr.f32.gmra.mrb[0].mxu0 %v6752
        %v7038 = vpop.f32.mrb[0].mxu0
        %v7039 = vadd.f32 0.0, %v7038
        %v7040 = vpop.f32.mrb[0].mxu0
        %7041 = vmatprep.mubr.f32.mxu0 0.0
        %7042 = vmatmul.mubr.f32.gmra.mrb[0].mxu0 %v6753
        %v7043 = vpop.f32.mrb[0].mxu0
        %v7044 = vadd.f32 0.0, %v7043
        %v7045 = vpop.f32.mrb[0].mxu0
        %7046 = vmatprep.mubr.f32.mxu0 0.0
        %7047 = vmatmul.mubr.f32.gmra.mrb[0].mxu0 %v6754
        %v7048 = vpop.f32.mrb[0].mxu0
        %v7049 = vadd.f32 0.0, %v7048
        %v7050 = vpop.f32.mrb[0].mxu0
        %7051 = vmatprep.mubr.f32.mxu0 0.0
        %7052 = vmatmul.mubr.f32.gmra.mrb[0].mxu0 %v6755
        %v7053 = vpop.f32.mrb[0].mxu0
        %v7054 = vadd.f32 0.0, %v7053
        %v7055 = vpop.f32.mrb[0].mxu0
        %7056 = vmatprep.mubr.f32.mxu0 0.0
        %7057 = vmatmul.mubr.f32.gmra.mrb[0].mxu0 %v6756
        %v7058 = vpop.f32.mrb[0].mxu0
        %v7059 = vadd.f32 0.0, %v7058
        %v7060 = vpop.f32.mrb[0].mxu0
        %7061 = vmatprep.mubr.f32.mxu0 0.0
        %7062 = vmatmul.mubr.f32.gmra.mrb[0].mxu0 %v6757
        %v7063 = vpop.f32.mrb[0].mxu0
        %v7064 = vadd.f32 0.0, %v7063
        %v7065 = vpop.f32.mrb[0].mxu0
        %7066 = vmatprep.mubr.f32.mxu0 0.0
        %7067 = vmatmul.mubr.f32.gmra.mrb[0].mxu0 %v6758
        %v7068 = vpop.f32.mrb[0].mxu0
        %v7069 = vadd.f32 0.0, %v7068
        %v7070 = vpop.f32.mrb[0].mxu0
        %7071 = vmatprep.mubr.f32.mxu0 0.0
        %7072 = vmatmul.mubr.f32.gmra.mrb[0].mxu0 %v6759
        %v7073 = vpop.f32.mrb[0].mxu0
        %v7074 = vadd.f32 0.0, %v7073
        %v7075 = vpop.f32.mrb[0].mxu0
        %7076 = vmatprep.mubr.f32.mxu0 0.0
        %7077 = vmatmul.mubr.f32.gmra.mrb[0].mxu0 %v6760
        %v7078 = vpop.f32.mrb[0].mxu0
        %v7079 = vadd.f32 0.0, %v7078
        %v7080 = vpop.f32.mrb[0].mxu0
        %7081 = vmatprep.mubr.f32.mxu0 0.0
        %7082 = vmatmul.mubr.f32.gmra.mrb[0].mxu0 %v6761
        %v7083 = vpop.f32.mrb[0].mxu0
        %v7084 = vadd.f32 0.0, %v7083
        %v7085 = vpop.f32.mrb[0].mxu0
        %7086 = vmatprep.mubr.f32.mxu0 0.0
        %7087 = vmatmul.mubr.f32.gmra.mrb[0].mxu0 %v6762
        %v7088 = vpop.f32.mrb[0].mxu0
        %v7089 = vadd.f32 0.0, %v7088
        %v7090 = vpop.f32.mrb[0].mxu0
        %7091 = vmatprep.mubr.f32.mxu0 0.0
        %7092 = vmatmul.mubr.f32.gmra.mrb[0].mxu0 %v6763
        %v7093 = vpop.f32.mrb[0].mxu0
        %v7094 = vadd.f32 0.0, %v7093
        %v7095 = vpop.f32.mrb[0].mxu0
        %7096 = vmatprep.mubr.f32.mxu0 0.0
        %7097 = vmatmul.mubr.f32.gmra.mrb[0].mxu0 %v6764
        %v7098 = vpop.f32.mrb[0].mxu0
        %v7099 = vadd.f32 0.0, %v7098
        %v7100 = vpop.f32.mrb[0].mxu0
        %7101 = vmatprep.mubr.f32.mxu0 0.0
        %7102 = vmatmul.mubr.f32.gmra.mrb[0].mxu0 %v6765
        %v7103 = vpop.f32.mrb[0].mxu0
        %v7104 = vadd.f32 0.0, %v7103
        %v7105 = vpop.f32.mrb[0].mxu0
        %7106 = vmatprep.mubr.f32.mxu0 0.0
        %7107 = vmatmul.mubr.f32.gmra.mrb[0].mxu0 %v6766
        %v7108 = vpop.f32.mrb[0].mxu0
        %v7109 = vadd.f32 0.0, %v7108
        %v7110 = vpop.f32.mrb[0].mxu0
        %7111 = vmatprep.mubr.f32.mxu0 0.0
        %7112 = vmatmul.mubr.f32.gmra.mrb[0].mxu0 %v6767
        %v7113 = vpop.f32.mrb[0].mxu0
        %v7114 = vadd.f32 0.0, %v7113
        %v7115 = vpop.f32.mrb[0].mxu0
        %7116 = vmatprep.mubr.f32.mxu0 0.0
        %7117 = vmatmul.mubr.f32.gmra.mrb[0].mxu0 %v6768
        %v7118 = vpop.f32.mrb[0].mxu0
        %v7119 = vadd.f32 0.0, %v7118
        %v7120 = vpop.f32.mrb[0].mxu0
        %7121 = vmatprep.mubr.f32.mxu0 0.0
        %7122 = vmatmul.mubr.f32.gmra.mrb[0].mxu0 %v6769
        %v7123 = vpop.f32.mrb[0].mxu0
        %v7124 = vadd.f32 0.0, %v7123
        %v7125 = vpop.f32.mrb[0].mxu0
        %7126 = vmatprep.mubr.f32.mxu0 0.0
        %7127 = vmatmul.mubr.f32.gmra.mrb[0].mxu0 %v6770
        %v7128 = vpop.f32.mrb[0].mxu0
        %v7129 = vadd.f32 0.0, %v7128
        %v7130 = vpop.f32.mrb[0].mxu0
        %7131 = vmatprep.mubr.f32.mxu0 0.0
        %7132 = vmatmul.mubr.f32.gmra.mrb[0].mxu0 %v6771
        %v7133 = vpop.f32.mrb[0].mxu0
        %v7134 = vadd.f32 0.0, %v7133
        %v7135 = vpop.f32.mrb[0].mxu0
        %7136 = vmatprep.mubr.f32.mxu0 0.0
        %7137 = vmatmul.mubr.f32.gmra.mrb[0].mxu0 %v6772
        %v7138 = vpop.f32.mrb[0].mxu0
        %v7139 = vadd.f32 0.0, %v7138
        %v7140 = vpop.f32.mrb[0].mxu0
        %7141 = vmatprep.mubr.f32.mxu0 0.0
        %7142 = vmatmul.mubr.f32.gmra.mrb[0].mxu0 %v6773
        %v7143 = vpop.f32.mrb[0].mxu0
        %v7144 = vadd.f32 0.0, %v7143
        %v7145 = vpop.f32.mrb[0].mxu0
        %7146 = vmatprep.mubr.f32.mxu0 0.0
        %7147 = vmatmul.mubr.f32.gmra.mrb[0].mxu0 %v6774
        %v7148 = vpop.f32.mrb[0].mxu0
        %v7149 = vadd.f32 0.0, %v7148
        %v7150 = vpop.f32.mrb[0].mxu0
        %7151 = vmatprep.mubr.f32.mxu0 0.0
        %7152 = vmatmul.mubr.f32.gmra.mrb[0].mxu0 %v6775
        %v7153 = vpop.f32.mrb[0].mxu0
        %v7154 = vadd.f32 0.0, %v7153
        %v7155 = vpop.f32.mrb[0].mxu0
        %7156 = vmatprep.mubr.f32.mxu0 0.0
        %7157 = vmatmul.mubr.f32.gmra.mrb[0].mxu0 %v6776
        %v7158 = vpop.f32.mrb[0].mxu0
        %v7159 = vadd.f32 0.0, %v7158
        %v7160 = vpop.f32.mrb[0].mxu0
        %7161 = vmatprep.mubr.f32.mxu0 0.0
        %7162 = vmatmul.mubr.f32.gmra.mrb[0].mxu0 %v6777
        %v7163 = vpop.f32.mrb[0].mxu0
        %v7164 = vadd.f32 0.0, %v7163
        %v7165 = vpop.f32.mrb[0].mxu0
        %7166 = vmatprep.mubr.f32.mxu0 0.0
        %7167 = vmatmul.mubr.f32.gmra.mrb[0].mxu0 %v6778
        %v7168 = vpop.f32.mrb[0].mxu0
        %v7169 = vadd.f32 0.0, %v7168
        %v7170 = vpop.f32.mrb[0].mxu0
        %7171 = vmatprep.mubr.f32.mxu0 0.0
        %7172 = vmatmul.mubr.f32.gmra.mrb[0].mxu0 %v6779
        %v7173 = vpop.f32.mrb[0].mxu0
        %v7174 = vadd.f32 0.0, %v7173
        %v7175 = vpop.f32.mrb[0].mxu0
        %7176 = vmatprep.mubr.f32.mxu0 0.0
        %7177 = vmatmul.mubr.f32.gmra.mrb[0].mxu0 %v6780
        %v7178 = vpop.f32.mrb[0].mxu0
        %v7179 = vadd.f32 0.0, %v7178
        %v7180 = vpop.f32.mrb[0].mxu0
        %7181 = vdwg.mxu0
        %v7182 = vsel %vm4462, %v6864, -inf
        %v7183 = vsel %vm4462, %v6869, -inf
        %v7184 = vmax.f32 %v7182, %v7183
        %v7185 = vsel %vm4462, %v6874, -inf
        %v7186 = vmax.f32 %v7184, %v7185
        %v7187 = vsel %vm4462, %v6879, -inf
        %v7188 = vmax.f32 %v7186, %v7187
        %v7189 = vsel %vm4462, %v6884, -inf
        %v7190 = vmax.f32 %v7188, %v7189
        %v7191 = vsel %vm4462, %v6889, -inf
        %v7192 = vmax.f32 %v7190, %v7191
        %v7193 = vsel %vm4462, %v6894, -inf
        %v7194 = vmax.f32 %v7192, %v7193
        %vm7195 = vcmask 57344
        %v7196 = vsel %vm7195, %v6899, -inf
        %v7197 = vmax.f32 %v7194, %v7196
        %v7198 = vrot.slane %v7197, 4
        %v7199 = vmax.f32 %v7197, %v7198
        %v7200 = vrot.slane %v7199, 2
        %v7201 = vmax.f32 %v7199, %v7200
        %v7202 = vrot.slane %v7201, 1
        %v7203 = vmax.f32 %v7201, %v7202
        %v7204 = vsel %vm4462, %v6904, -inf
        %v7205 = vsel %vm4462, %v6909, -inf
        %v7206 = vmax.f32 %v7204, %v7205
        %v7207 = vsel %vm4462, %v6914, -inf
        %v7208 = vmax.f32 %v7206, %v7207
        %v7209 = vsel %vm4462, %v6919, -inf
        %v7210 = vmax.f32 %v7208, %v7209
        %v7211 = vsel %vm4462, %v6924, -inf
        %v7212 = vmax.f32 %v7210, %v7211
        %v7213 = vsel %vm4462, %v6929, -inf
        %v7214 = vmax.f32 %v7212, %v7213
        %v7215 = vsel %vm4462, %v6934, -inf
        %v7216 = vmax.f32 %v7214, %v7215
        %v7217 = vsel %vm7195, %v6939, -inf
        %v7218 = vmax.f32 %v7216, %v7217
        %v7219 = vrot.slane %v7218, 4
        %v7220 = vmax.f32 %v7218, %v7219
        %v7221 = vrot.slane %v7220, 2
        %v7222 = vmax.f32 %v7220, %v7221
        %v7223 = vrot.slane %v7222, 1
        %v7224 = vmax.f32 %v7222, %v7223
        %v7225 = vsel %vm4462, %v6944, -inf
        %v7226 = vsel %vm4462, %v6949, -inf
        %v7227 = vmax.f32 %v7225, %v7226
        %v7228 = vsel %vm4462, %v6954, -inf
        %v7229 = vmax.f32 %v7227, %v7228
        %v7230 = vsel %vm4462, %v6959, -inf
        %v7231 = vmax.f32 %v7229, %v7230
        %v7232 = vsel %vm4462, %v6964, -inf
        %v7233 = vmax.f32 %v7231, %v7232
        %v7234 = vsel %vm4462, %v6969, -inf
        %v7235 = vmax.f32 %v7233, %v7234
        %v7236 = vsel %vm4462, %v6974, -inf
        %v7237 = vmax.f32 %v7235, %v7236
        %v7238 = vsel %vm7195, %v6979, -inf
        %v7239 = vmax.f32 %v7237, %v7238
        %v7240 = vrot.slane %v7239, 4
        %v7241 = vmax.f32 %v7239, %v7240
        %v7242 = vrot.slane %v7241, 2
        %v7243 = vmax.f32 %v7241, %v7242
        %v7244 = vrot.slane %v7243, 1
        %v7245 = vmax.f32 %v7243, %v7244
        %v7246 = vsel %vm4462, %v6984, -inf
        %v7247 = vsel %vm4462, %v6989, -inf
        %v7248 = vmax.f32 %v7246, %v7247
        %v7249 = vsel %vm4462, %v6994, -inf
        %v7250 = vmax.f32 %v7248, %v7249
        %v7251 = vsel %vm4462, %v6999, -inf
        %v7252 = vmax.f32 %v7250, %v7251
        %v7253 = vsel %vm4462, %v7004, -inf
        %v7254 = vmax.f32 %v7252, %v7253
        %v7255 = vsel %vm4462, %v7009, -inf
        %v7256 = vmax.f32 %v7254, %v7255
        %v7257 = vsel %vm4462, %v7014, -inf
        %v7258 = vmax.f32 %v7256, %v7257
        %v7259 = vsel %vm7195, %v7019, -inf
        %v7260 = vmax.f32 %v7258, %v7259
        %v7261 = vrot.slane %v7260, 4
        %v7262 = vmax.f32 %v7260, %v7261
        %v7263 = vrot.slane %v7262, 2
        %v7264 = vmax.f32 %v7262, %v7263
        %v7265 = vrot.slane %v7264, 1
        %v7266 = vmax.f32 %v7264, %v7265
        %v7267 = vsel %vm4462, %v7024, -inf
        %v7268 = vsel %vm4462, %v7029, -inf
        %v7269 = vmax.f32 %v7267, %v7268
        %v7270 = vsel %vm4462, %v7034, -inf
        %v7271 = vmax.f32 %v7269, %v7270
        %v7272 = vsel %vm4462, %v7039, -inf
        %v7273 = vmax.f32 %v7271, %v7272
        %v7274 = vsel %vm4462, %v7044, -inf
        %v7275 = vmax.f32 %v7273, %v7274
        %v7276 = vsel %vm4462, %v7049, -inf
        %v7277 = vmax.f32 %v7275, %v7276
        %v7278 = vsel %vm4462, %v7054, -inf
        %v7279 = vmax.f32 %v7277, %v7278
        %v7280 = vsel %vm7195, %v7059, -inf
        %v7281 = vmax.f32 %v7279, %v7280
        %v7282 = vrot.slane %v7281, 4
        %v7283 = vmax.f32 %v7281, %v7282
        %v7284 = vrot.slane %v7283, 2
        %v7285 = vmax.f32 %v7283, %v7284
        %v7286 = vrot.slane %v7285, 1
        %v7287 = vmax.f32 %v7285, %v7286
        %v7288 = vsel %vm4462, %v7064, -inf
        %v7289 = vsel %vm4462, %v7069, -inf
        %v7290 = vmax.f32 %v7288, %v7289
        %v7291 = vsel %vm4462, %v7074, -inf
        %v7292 = vmax.f32 %v7290, %v7291
        %v7293 = vsel %vm4462, %v7079, -inf
        %v7294 = vmax.f32 %v7292, %v7293
        %v7295 = vsel %vm4462, %v7084, -inf
        %v7296 = vmax.f32 %v7294, %v7295
        %v7297 = vsel %vm4462, %v7089, -inf
        %v7298 = vmax.f32 %v7296, %v7297
        %v7299 = vsel %vm4462, %v7094, -inf
        %v7300 = vmax.f32 %v7298, %v7299
        %v7301 = vsel %vm7195, %v7099, -inf
        %v7302 = vmax.f32 %v7300, %v7301
        %v7303 = vrot.slane %v7302, 4
        %v7304 = vmax.f32 %v7302, %v7303
        %v7305 = vrot.slane %v7304, 2
        %v7306 = vmax.f32 %v7304, %v7305
        %v7307 = vrot.slane %v7306, 1
        %v7308 = vmax.f32 %v7306, %v7307
        %v7309 = vsel %vm4462, %v7104, -inf
        %v7310 = vsel %vm4462, %v7109, -inf
        %v7311 = vmax.f32 %v7309, %v7310
        %v7312 = vsel %vm4462, %v7114, -inf
        %v7313 = vmax.f32 %v7311, %v7312
        %v7314 = vsel %vm4462, %v7119, -inf
        %v7315 = vmax.f32 %v7313, %v7314
        %v7316 = vsel %vm4462, %v7124, -inf
        %v7317 = vmax.f32 %v7315, %v7316
        %v7318 = vsel %vm4462, %v7129, -inf
        %v7319 = vmax.f32 %v7317, %v7318
        %v7320 = vsel %vm4462, %v7134, -inf
        %v7321 = vmax.f32 %v7319, %v7320
        %v7322 = vsel %vm7195, %v7139, -inf
        %v7323 = vmax.f32 %v7321, %v7322
        %v7324 = vrot.slane %v7323, 4
        %v7325 = vmax.f32 %v7323, %v7324
        %v7326 = vrot.slane %v7325, 2
        %v7327 = vmax.f32 %v7325, %v7326
        %v7328 = vrot.slane %v7327, 1
        %v7329 = vmax.f32 %v7327, %v7328
        %v7330 = vsel %vm4462, %v7144, -inf
        %v7331 = vsel %vm4462, %v7149, -inf
        %v7332 = vmax.f32 %v7330, %v7331
        %v7333 = vsel %vm4462, %v7154, -inf
        %v7334 = vmax.f32 %v7332, %v7333
        %v7335 = vsel %vm4462, %v7159, -inf
        %v7336 = vmax.f32 %v7334, %v7335
        %v7337 = vsel %vm4462, %v7164, -inf
        %v7338 = vmax.f32 %v7336, %v7337
        %v7339 = vsel %vm4462, %v7169, -inf
        %v7340 = vmax.f32 %v7338, %v7339
        %v7341 = vsel %vm4462, %v7174, -inf
        %v7342 = vmax.f32 %v7340, %v7341
        %v7343 = vsel %vm7195, %v7179, -inf
        %v7344 = vmax.f32 %v7342, %v7343
        %v7345 = vrot.slane %v7344, 4
        %v7346 = vmax.f32 %v7344, %v7345
        %v7347 = vrot.slane %v7346, 2
        %v7348 = vmax.f32 %v7346, %v7347
        %v7349 = vrot.slane %v7348, 1
        %v7350 = vmax.f32 %v7348, %v7349
        %vm7351 = vcmask 130112
        %v7352 = vsel %vm7351, %v6864, -inf
        %v7353 = vsel %vm7351, %v6869, -inf
        %v7354 = vmax.f32 %v7352, %v7353
        %v7355 = vsel %vm7351, %v6874, -inf
        %v7356 = vmax.f32 %v7354, %v7355
        %v7357 = vsel %vm7351, %v6879, -inf
        %v7358 = vmax.f32 %v7356, %v7357
        %v7359 = vsel %vm7351, %v6884, -inf
        %v7360 = vmax.f32 %v7358, %v7359
        %v7361 = vsel %vm7351, %v6889, -inf
        %v7362 = vmax.f32 %v7360, %v7361
        %vm7363 = vcmask 122944
        %v7364 = vsel %vm7363, %v6894, -inf
        %v7365 = vmax.f32 %v7362, %v7364
        %v7366 = vrot.slane %v7365, 4
        %v7367 = vmax.f32 %v7365, %v7366
        %v7368 = vrot.slane %v7367, 2
        %v7369 = vmax.f32 %v7367, %v7368
        %v7370 = vrot.slane %v7369, 1
        %v7371 = vmax.f32 %v7369, %v7370
        %v7372 = vsel %vm7351, %v6904, -inf
        %v7373 = vsel %vm7351, %v6909, -inf
        %v7374 = vmax.f32 %v7372, %v7373
        %v7375 = vsel %vm7351, %v6914, -inf
        %v7376 = vmax.f32 %v7374, %v7375
        %v7377 = vsel %vm7351, %v6919, -inf
        %v7378 = vmax.f32 %v7376, %v7377
        %v7379 = vsel %vm7351, %v6924, -inf
        %v7380 = vmax.f32 %v7378, %v7379
        %v7381 = vsel %vm7351, %v6929, -inf
        %v7382 = vmax.f32 %v7380, %v7381
        %v7383 = vsel %vm7363, %v6934, -inf
        %v7384 = vmax.f32 %v7382, %v7383
        %v7385 = vrot.slane %v7384, 4
        %v7386 = vmax.f32 %v7384, %v7385
        %v7387 = vrot.slane %v7386, 2
        %v7388 = vmax.f32 %v7386, %v7387
        %v7389 = vrot.slane %v7388, 1
        %v7390 = vmax.f32 %v7388, %v7389
        %v7391 = vsel %vm7351, %v6944, -inf
        %v7392 = vsel %vm7351, %v6949, -inf
        %v7393 = vmax.f32 %v7391, %v7392
        %v7394 = vsel %vm7351, %v6954, -inf
        %v7395 = vmax.f32 %v7393, %v7394
        %v7396 = vsel %vm7351, %v6959, -inf
        %v7397 = vmax.f32 %v7395, %v7396
        %v7398 = vsel %vm7351, %v6964, -inf
        %v7399 = vmax.f32 %v7397, %v7398
        %v7400 = vsel %vm7351, %v6969, -inf
        %v7401 = vmax.f32 %v7399, %v7400
        %v7402 = vsel %vm7363, %v6974, -inf
        %v7403 = vmax.f32 %v7401, %v7402
        %v7404 = vrot.slane %v7403, 4
        %v7405 = vmax.f32 %v7403, %v7404
        %v7406 = vrot.slane %v7405, 2
        %v7407 = vmax.f32 %v7405, %v7406
        %v7408 = vrot.slane %v7407, 1
        %v7409 = vmax.f32 %v7407, %v7408
        %v7410 = vsel %vm7351, %v6984, -inf
        %v7411 = vsel %vm7351, %v6989, -inf
        %v7412 = vmax.f32 %v7410, %v7411
        %v7413 = vsel %vm7351, %v6994, -inf
        %v7414 = vmax.f32 %v7412, %v7413
        %v7415 = vsel %vm7351, %v6999, -inf
        %v7416 = vmax.f32 %v7414, %v7415
        %v7417 = vsel %vm7351, %v7004, -inf
        %v7418 = vmax.f32 %v7416, %v7417
        %v7419 = vsel %vm7351, %v7009, -inf
        %v7420 = vmax.f32 %v7418, %v7419
        %v7421 = vsel %vm7363, %v7014, -inf
        %v7422 = vmax.f32 %v7420, %v7421
        %v7423 = vrot.slane %v7422, 4
        %v7424 = vmax.f32 %v7422, %v7423
        %v7425 = vrot.slane %v7424, 2
        %v7426 = vmax.f32 %v7424, %v7425
        %v7427 = vrot.slane %v7426, 1
        %v7428 = vmax.f32 %v7426, %v7427
        %v7429 = vsel %vm7351, %v7024, -inf
        %v7430 = vsel %vm7351, %v7029, -inf
        %v7431 = vmax.f32 %v7429, %v7430
        %v7432 = vsel %vm7351, %v7034, -inf
        %v7433 = vmax.f32 %v7431, %v7432
        %v7434 = vsel %vm7351, %v7039, -inf
        %v7435 = vmax.f32 %v7433, %v7434
        %v7436 = vsel %vm7351, %v7044, -inf
        %v7437 = vmax.f32 %v7435, %v7436
        %v7438 = vsel %vm7351, %v7049, -inf
        %v7439 = vmax.f32 %v7437, %v7438
        %v7440 = vsel %vm7363, %v7054, -inf
        %v7441 = vmax.f32 %v7439, %v7440
        %v7442 = vrot.slane %v7441, 4
        %v7443 = vmax.f32 %v7441, %v7442
        %v7444 = vrot.slane %v7443, 2
        %v7445 = vmax.f32 %v7443, %v7444
        %v7446 = vrot.slane %v7445, 1
        %v7447 = vmax.f32 %v7445, %v7446
        %v7448 = vsel %vm7351, %v7064, -inf
        %v7449 = vsel %vm7351, %v7069, -inf
        %v7450 = vmax.f32 %v7448, %v7449
        %v7451 = vsel %vm7351, %v7074, -inf
        %v7452 = vmax.f32 %v7450, %v7451
        %v7453 = vsel %vm7351, %v7079, -inf
        %v7454 = vmax.f32 %v7452, %v7453
        %v7455 = vsel %vm7351, %v7084, -inf
        %v7456 = vmax.f32 %v7454, %v7455
        %v7457 = vsel %vm7351, %v7089, -inf
        %v7458 = vmax.f32 %v7456, %v7457
        %v7459 = vsel %vm7363, %v7094, -inf
        %v7460 = vmax.f32 %v7458, %v7459
        %v7461 = vrot.slane %v7460, 4
        %v7462 = vmax.f32 %v7460, %v7461
        %v7463 = vrot.slane %v7462, 2
        %v7464 = vmax.f32 %v7462, %v7463
        %v7465 = vrot.slane %v7464, 1
        %v7466 = vmax.f32 %v7464, %v7465
        %v7467 = vsel %vm7351, %v7104, -inf
        %v7468 = vsel %vm7351, %v7109, -inf
        %v7469 = vmax.f32 %v7467, %v7468
        %v7470 = vsel %vm7351, %v7114, -inf
        %v7471 = vmax.f32 %v7469, %v7470
        %v7472 = vsel %vm7351, %v7119, -inf
        %v7473 = vmax.f32 %v7471, %v7472
        %v7474 = vsel %vm7351, %v7124, -inf
        %v7475 = vmax.f32 %v7473, %v7474
        %v7476 = vsel %vm7351, %v7129, -inf
        %v7477 = vmax.f32 %v7475, %v7476
        %v7478 = vsel %vm7363, %v7134, -inf
        %v7479 = vmax.f32 %v7477, %v7478
        %v7480 = vrot.slane %v7479, 4
        %v7481 = vmax.f32 %v7479, %v7480
        %v7482 = vrot.slane %v7481, 2
        %v7483 = vmax.f32 %v7481, %v7482
        %v7484 = vrot.slane %v7483, 1
        %v7485 = vmax.f32 %v7483, %v7484
        %v7486 = vsel %vm7351, %v7144, -inf
        %v7487 = vsel %vm7351, %v7149, -inf
        %v7488 = vmax.f32 %v7486, %v7487
        %v7489 = vsel %vm7351, %v7154, -inf
        %v7490 = vmax.f32 %v7488, %v7489
        %v7491 = vsel %vm7351, %v7159, -inf
        %v7492 = vmax.f32 %v7490, %v7491
        %v7493 = vsel %vm7351, %v7164, -inf
        %v7494 = vmax.f32 %v7492, %v7493
        %v7495 = vsel %vm7351, %v7169, -inf
        %v7496 = vmax.f32 %v7494, %v7495
        %v7497 = vsel %vm7363, %v7174, -inf
        %v7498 = vmax.f32 %v7496, %v7497
        %v7499 = vrot.slane %v7498, 4
        %v7500 = vmax.f32 %v7498, %v7499
        %v7501 = vrot.slane %v7500, 2
        %v7502 = vmax.f32 %v7500, %v7501
        %v7503 = vrot.slane %v7502, 1
        %v7504 = vmax.f32 %v7502, %v7503
        %vm7505 = vcmask 195712
        %v7506 = vsel %vm7505, %v6864, -inf
        %v7507 = vsel %vm7505, %v6869, -inf
        %v7508 = vmax.f32 %v7506, %v7507
        %v7509 = vsel %vm7505, %v6874, -inf
        %v7510 = vmax.f32 %v7508, %v7509
        %v7511 = vsel %vm7505, %v6879, -inf
        %v7512 = vmax.f32 %v7510, %v7511
        %v7513 = vsel %vm7505, %v6884, -inf
        %v7514 = vmax.f32 %v7512, %v7513
        %vm7515 = vcmask 188544
        %v7516 = vsel %vm7515, %v6889, -inf
        %v7517 = vmax.f32 %v7514, %v7516
        %v7518 = vrot.slane %v7517, 4
        %v7519 = vmax.f32 %v7517, %v7518
        %v7520 = vrot.slane %v7519, 2
        %v7521 = vmax.f32 %v7519, %v7520
        %v7522 = vrot.slane %v7521, 1
        %v7523 = vmax.f32 %v7521, %v7522
        %v7524 = vsel %vm7505, %v6904, -inf
        %v7525 = vsel %vm7505, %v6909, -inf
        %v7526 = vmax.f32 %v7524, %v7525
        %v7527 = vsel %vm7505, %v6914, -inf
        %v7528 = vmax.f32 %v7526, %v7527
        %v7529 = vsel %vm7505, %v6919, -inf
        %v7530 = vmax.f32 %v7528, %v7529
        %v7531 = vsel %vm7505, %v6924, -inf
        %v7532 = vmax.f32 %v7530, %v7531
        %v7533 = vsel %vm7515, %v6929, -inf
        %v7534 = vmax.f32 %v7532, %v7533
        %v7535 = vrot.slane %v7534, 4
        %v7536 = vmax.f32 %v7534, %v7535
        %v7537 = vrot.slane %v7536, 2
        %v7538 = vmax.f32 %v7536, %v7537
        %v7539 = vrot.slane %v7538, 1
        %v7540 = vmax.f32 %v7538, %v7539
        %v7541 = vsel %vm7505, %v6944, -inf
        %v7542 = vsel %vm7505, %v6949, -inf
        %v7543 = vmax.f32 %v7541, %v7542
        %v7544 = vsel %vm7505, %v6954, -inf
        %v7545 = vmax.f32 %v7543, %v7544
        %v7546 = vsel %vm7505, %v6959, -inf
        %v7547 = vmax.f32 %v7545, %v7546
        %v7548 = vsel %vm7505, %v6964, -inf
        %v7549 = vmax.f32 %v7547, %v7548
        %v7550 = vsel %vm7515, %v6969, -inf
        %v7551 = vmax.f32 %v7549, %v7550
        %v7552 = vrot.slane %v7551, 4
        %v7553 = vmax.f32 %v7551, %v7552
        %v7554 = vrot.slane %v7553, 2
        %v7555 = vmax.f32 %v7553, %v7554
        %v7556 = vrot.slane %v7555, 1
        %v7557 = vmax.f32 %v7555, %v7556
        %v7558 = vsel %vm7505, %v6984, -inf
        %v7559 = vsel %vm7505, %v6989, -inf
        %v7560 = vmax.f32 %v7558, %v7559
        %v7561 = vsel %vm7505, %v6994, -inf
        %v7562 = vmax.f32 %v7560, %v7561
        %v7563 = vsel %vm7505, %v6999, -inf
        %v7564 = vmax.f32 %v7562, %v7563
        %v7565 = vsel %vm7505, %v7004, -inf
        %v7566 = vmax.f32 %v7564, %v7565
        %v7567 = vsel %vm7515, %v7009, -inf
        %v7568 = vmax.f32 %v7566, %v7567
        %v7569 = vrot.slane %v7568, 4
        %v7570 = vmax.f32 %v7568, %v7569
        %v7571 = vrot.slane %v7570, 2
        %v7572 = vmax.f32 %v7570, %v7571
        %v7573 = vrot.slane %v7572, 1
        %v7574 = vmax.f32 %v7572, %v7573
        %v7575 = vsel %vm7505, %v7024, -inf
        %v7576 = vsel %vm7505, %v7029, -inf
        %v7577 = vmax.f32 %v7575, %v7576
        %v7578 = vsel %vm7505, %v7034, -inf
        %v7579 = vmax.f32 %v7577, %v7578
        %v7580 = vsel %vm7505, %v7039, -inf
        %v7581 = vmax.f32 %v7579, %v7580
        %v7582 = vsel %vm7505, %v7044, -inf
        %v7583 = vmax.f32 %v7581, %v7582
        %v7584 = vsel %vm7515, %v7049, -inf
        %v7585 = vmax.f32 %v7583, %v7584
        %v7586 = vrot.slane %v7585, 4
        %v7587 = vmax.f32 %v7585, %v7586
        %v7588 = vrot.slane %v7587, 2
        %v7589 = vmax.f32 %v7587, %v7588
        %v7590 = vrot.slane %v7589, 1
        %v7591 = vmax.f32 %v7589, %v7590
        %v7592 = vsel %vm7505, %v7064, -inf
        %v7593 = vsel %vm7505, %v7069, -inf
        %v7594 = vmax.f32 %v7592, %v7593
        %v7595 = vsel %vm7505, %v7074, -inf
        %v7596 = vmax.f32 %v7594, %v7595
        %v7597 = vsel %vm7505, %v7079, -inf
        %v7598 = vmax.f32 %v7596, %v7597
        %v7599 = vsel %vm7505, %v7084, -inf
        %v7600 = vmax.f32 %v7598, %v7599
        %v7601 = vsel %vm7515, %v7089, -inf
        %v7602 = vmax.f32 %v7600, %v7601
        %v7603 = vrot.slane %v7602, 4
        %v7604 = vmax.f32 %v7602, %v7603
        %v7605 = vrot.slane %v7604, 2
        %v7606 = vmax.f32 %v7604, %v7605
        %v7607 = vrot.slane %v7606, 1
        %v7608 = vmax.f32 %v7606, %v7607
        %v7609 = vsel %vm7505, %v7104, -inf
        %v7610 = vsel %vm7505, %v7109, -inf
        %v7611 = vmax.f32 %v7609, %v7610
        %v7612 = vsel %vm7505, %v7114, -inf
        %v7613 = vmax.f32 %v7611, %v7612
        %v7614 = vsel %vm7505, %v7119, -inf
        %v7615 = vmax.f32 %v7613, %v7614
        %v7616 = vsel %vm7505, %v7124, -inf
        %v7617 = vmax.f32 %v7615, %v7616
        %v7618 = vsel %vm7515, %v7129, -inf
        %v7619 = vmax.f32 %v7617, %v7618
        %v7620 = vrot.slane %v7619, 4
        %v7621 = vmax.f32 %v7619, %v7620
        %v7622 = vrot.slane %v7621, 2
        %v7623 = vmax.f32 %v7621, %v7622
        %v7624 = vrot.slane %v7623, 1
        %v7625 = vmax.f32 %v7623, %v7624
        %v7626 = vsel %vm7505, %v7144, -inf
        %v7627 = vsel %vm7505, %v7149, -inf
        %v7628 = vmax.f32 %v7626, %v7627
        %v7629 = vsel %vm7505, %v7154, -inf
        %v7630 = vmax.f32 %v7628, %v7629
        %v7631 = vsel %vm7505, %v7159, -inf
        %v7632 = vmax.f32 %v7630, %v7631
        %v7633 = vsel %vm7505, %v7164, -inf
        %v7634 = vmax.f32 %v7632, %v7633
        %v7635 = vsel %vm7515, %v7169, -inf
        %v7636 = vmax.f32 %v7634, %v7635
        %v7637 = vrot.slane %v7636, 4
        %v7638 = vmax.f32 %v7636, %v7637
        %v7639 = vrot.slane %v7638, 2
        %v7640 = vmax.f32 %v7638, %v7639
        %v7641 = vrot.slane %v7640, 1
        %v7642 = vmax.f32 %v7640, %v7641
        %vm7643 = vcmask 261312
        %v7644 = vsel %vm7643, %v6864, -inf
        %v7645 = vsel %vm7643, %v6869, -inf
        %v7646 = vmax.f32 %v7644, %v7645
        %v7647 = vsel %vm7643, %v6874, -inf
        %v7648 = vmax.f32 %v7646, %v7647
        %v7649 = vsel %vm7643, %v6879, -inf
        %v7650 = vmax.f32 %v7648, %v7649
        %vm7651 = vcmask 254144
        %v7652 = vsel %vm7651, %v6884, -inf
        %v7653 = vmax.f32 %v7650, %v7652
        %v7654 = vrot.slane %v7653, 4
        %v7655 = vmax.f32 %v7653, %v7654
        %v7656 = vrot.slane %v7655, 2
        %v7657 = vmax.f32 %v7655, %v7656
        %v7658 = vrot.slane %v7657, 1
        %v7659 = vmax.f32 %v7657, %v7658
        %v7660 = vsel %vm7643, %v6904, -inf
        %v7661 = vsel %vm7643, %v6909, -inf
        %v7662 = vmax.f32 %v7660, %v7661
        %v7663 = vsel %vm7643, %v6914, -inf
        %v7664 = vmax.f32 %v7662, %v7663
        %v7665 = vsel %vm7643, %v6919, -inf
        %v7666 = vmax.f32 %v7664, %v7665
        %v7667 = vsel %vm7651, %v6924, -inf
        %v7668 = vmax.f32 %v7666, %v7667
        %v7669 = vrot.slane %v7668, 4
        %v7670 = vmax.f32 %v7668, %v7669
        %v7671 = vrot.slane %v7670, 2
        %v7672 = vmax.f32 %v7670, %v7671
        %v7673 = vrot.slane %v7672, 1
        %v7674 = vmax.f32 %v7672, %v7673
        %v7675 = vsel %vm7643, %v6944, -inf
        %v7676 = vsel %vm7643, %v6949, -inf
        %v7677 = vmax.f32 %v7675, %v7676
        %v7678 = vsel %vm7643, %v6954, -inf
        %v7679 = vmax.f32 %v7677, %v7678
        %v7680 = vsel %vm7643, %v6959, -inf
        %v7681 = vmax.f32 %v7679, %v7680
        %v7682 = vsel %vm7651, %v6964, -inf
        %v7683 = vmax.f32 %v7681, %v7682
        %v7684 = vrot.slane %v7683, 4
        %v7685 = vmax.f32 %v7683, %v7684
        %v7686 = vrot.slane %v7685, 2
        %v7687 = vmax.f32 %v7685, %v7686
        %v7688 = vrot.slane %v7687, 1
        %v7689 = vmax.f32 %v7687, %v7688
        %v7690 = vsel %vm7643, %v6984, -inf
        %v7691 = vsel %vm7643, %v6989, -inf
        %v7692 = vmax.f32 %v7690, %v7691
        %v7693 = vsel %vm7643, %v6994, -inf
        %v7694 = vmax.f32 %v7692, %v7693
        %v7695 = vsel %vm7643, %v6999, -inf
        %v7696 = vmax.f32 %v7694, %v7695
        %v7697 = vsel %vm7651, %v7004, -inf
        %v7698 = vmax.f32 %v7696, %v7697
        %v7699 = vrot.slane %v7698, 4
        %v7700 = vmax.f32 %v7698, %v7699
        %v7701 = vrot.slane %v7700, 2
        %v7702 = vmax.f32 %v7700, %v7701
        %v7703 = vrot.slane %v7702, 1
        %v7704 = vmax.f32 %v7702, %v7703
        %v7705 = vsel %vm7643, %v7024, -inf
        %v7706 = vsel %vm7643, %v7029, -inf
        %v7707 = vmax.f32 %v7705, %v7706
        %v7708 = vsel %vm7643, %v7034, -inf
        %v7709 = vmax.f32 %v7707, %v7708
        %v7710 = vsel %vm7643, %v7039, -inf
        %v7711 = vmax.f32 %v7709, %v7710
        %v7712 = vsel %vm7651, %v7044, -inf
        %v7713 = vmax.f32 %v7711, %v7712
        %v7714 = vrot.slane %v7713, 4
        %v7715 = vmax.f32 %v7713, %v7714
        %v7716 = vrot.slane %v7715, 2
        %v7717 = vmax.f32 %v7715, %v7716
        %v7718 = vrot.slane %v7717, 1
        %v7719 = vmax.f32 %v7717, %v7718
        %v7720 = vsel %vm7643, %v7064, -inf
        %v7721 = vsel %vm7643, %v7069, -inf
        %v7722 = vmax.f32 %v7720, %v7721
        %v7723 = vsel %vm7643, %v7074, -inf
        %v7724 = vmax.f32 %v7722, %v7723
        %v7725 = vsel %vm7643, %v7079, -inf
        %v7726 = vmax.f32 %v7724, %v7725
        %v7727 = vsel %vm7651, %v7084, -inf
        %v7728 = vmax.f32 %v7726, %v7727
        %v7729 = vrot.slane %v7728, 4
        %v7730 = vmax.f32 %v7728, %v7729
        %v7731 = vrot.slane %v7730, 2
        %v7732 = vmax.f32 %v7730, %v7731
        %v7733 = vrot.slane %v7732, 1
        %v7734 = vmax.f32 %v7732, %v7733
        %v7735 = vsel %vm7643, %v7104, -inf
        %v7736 = vsel %vm7643, %v7109, -inf
        %v7737 = vmax.f32 %v7735, %v7736
        %v7738 = vsel %vm7643, %v7114, -inf
        %v7739 = vmax.f32 %v7737, %v7738
        %v7740 = vsel %vm7643, %v7119, -inf
        %v7741 = vmax.f32 %v7739, %v7740
        %v7742 = vsel %vm7651, %v7124, -inf
        %v7743 = vmax.f32 %v7741, %v7742
        %v7744 = vrot.slane %v7743, 4
        %v7745 = vmax.f32 %v7743, %v7744
        %v7746 = vrot.slane %v7745, 2
        %v7747 = vmax.f32 %v7745, %v7746
        %v7748 = vrot.slane %v7747, 1
        %v7749 = vmax.f32 %v7747, %v7748
        %v7750 = vsel %vm7643, %v7144, -inf
        %v7751 = vsel %vm7643, %v7149, -inf
        %v7752 = vmax.f32 %v7750, %v7751
        %v7753 = vsel %vm7643, %v7154, -inf
        %v7754 = vmax.f32 %v7752, %v7753
        %v7755 = vsel %vm7643, %v7159, -inf
        %v7756 = vmax.f32 %v7754, %v7755
        %v7757 = vsel %vm7651, %v7164, -inf
        %v7758 = vmax.f32 %v7756, %v7757
        %v7759 = vrot.slane %v7758, 4
        %v7760 = vmax.f32 %v7758, %v7759
        %v7761 = vrot.slane %v7760, 2
        %v7762 = vmax.f32 %v7760, %v7761
        %v7763 = vrot.slane %v7762, 1
        %v7764 = vmax.f32 %v7762, %v7763
        %vm7773 = vcmask 1041409
        %v7774 = vsel %vm7773, %v7224, %v7203
        %vm7775 = vcmask 1042434
        %v7776 = vsel %vm7775, %v7245, %v7774
        %vm7777 = vcmask 1043459
        %v7778 = vsel %vm7777, %v7266, %v7776
        %vm7779 = vcmask 1044484
        %v7780 = vsel %vm7779, %v7287, %v7778
        %vm7781 = vcmask 1045509
        %v7782 = vsel %vm7781, %v7308, %v7780
        %vm7783 = vcmask 1046534
        %v7784 = vsel %vm7783, %v7329, %v7782
        %vm7785 = vcmask 1047559
        %v7786 = vsel %vm7785, %v7350, %v7784
        %v7796 = vsel %vm7773, %v7390, %v7371
        %v7797 = vsel %vm7775, %v7409, %v7796
        %v7798 = vsel %vm7777, %v7428, %v7797
        %v7799 = vsel %vm7779, %v7447, %v7798
        %v7800 = vsel %vm7781, %v7466, %v7799
        %v7801 = vsel %vm7783, %v7485, %v7800
        %v7802 = vsel %vm7785, %v7504, %v7801
        %v7812 = vsel %vm7773, %v7540, %v7523
        %v7813 = vsel %vm7775, %v7557, %v7812
        %v7814 = vsel %vm7777, %v7574, %v7813
        %v7815 = vsel %vm7779, %v7591, %v7814
        %v7816 = vsel %vm7781, %v7608, %v7815
        %v7817 = vsel %vm7783, %v7625, %v7816
        %v7818 = vsel %vm7785, %v7642, %v7817
        %v7828 = vsel %vm7773, %v7674, %v7659
        %v7829 = vsel %vm7775, %v7689, %v7828
        %v7830 = vsel %vm7777, %v7704, %v7829
        %v7831 = vsel %vm7779, %v7719, %v7830
        %v7832 = vsel %vm7781, %v7734, %v7831
        %v7833 = vsel %vm7783, %v7749, %v7832
        %v7834 = vsel %vm7785, %v7764, %v7833
        %v7836 = vsel %vm4462, %v7786, %v7802
        %v7837 = vsel %vm4592, %v7836, %v7818
        %v7838 = vsel %vm4722, %v7837, %v7834
        %v7839 = vld [vmem:[%s2 + $0x80] sm:$0x1]
        %v7840 = vlaneseq
        %v7841 = vshrl.u32 %v7840, 7
        %v7842 = vsub.s32 0, %v7841
        %v7843 = vrot.slane %v7839, %v7842
        %v7844 = vadd.f32 %v7838, %v7843
        %v7845 = vld [vmem:[%s3] sm:$0xff]
        %v7846 = vld [vmem:[%s3 + $0x8] sm:$0xff]
        %v7847 = vld [vmem:[%s3 + $0x10] sm:$0xff]
        %v7848 = vld [vmem:[%s3 + $0x18] sm:$0xff]
        %v7849 = vld [vmem:[%s3 + $0x5c] sm:$0x1]
        %v7850 = vlaneseq
        %v7851 = vshrl.u32 %v7850, 7
        %v7852 = vsub.s32 0, %v7851
        %v7853 = vrot.slane %v7849, %v7852
        %v7855 = vsel %vm4852, %v7844, 0
        %7857 = vmatprep.subr.mxu0 0.0
        %7858 = vmatpush1.msra.mxu0 %v7845
        %7859 = vmatprep.subr.mxu0 0.0
        %7860 = vmatpush1.msra.mxu0 %v7846
        %7861 = vmatprep.subr.mxu0 0.0
        %7862 = vmatpush1.msra.mxu0 %v7847
        %7863 = vmatprep.subr.mxu0 0.0
        %7864 = vmatpush1.msra.mxu0 %v7848
        %7865 = vmatprep.subr.mxu0 0.0
        %7866 = vmatpush1.msra.mxu0 0.0
        %7867 = vmatprep.subr.mxu0 0.0
        %7868 = vmatpush1.msra.mxu0 0.0
        %7869 = vmatprep.subr.mxu0 0.0
        %7870 = vmatpush1.msra.mxu0 0.0
        %7871 = vmatprep.subr.mxu0 0.0
        %7872 = vmatpush1.msra.mxu0 0.0
        %7873 = vmatprep.subr.mxu0 0.0
        %7874 = vmatpush1.msra.mxu0 0.0
        %7875 = vmatprep.subr.mxu0 0.0
        %7876 = vmatpush1.msra.mxu0 0.0
        %7877 = vmatprep.subr.mxu0 0.0
        %7878 = vmatpush1.msra.mxu0 0.0
        %7879 = vmatprep.subr.mxu0 0.0
        %7880 = vmatpush1.msra.mxu0 0.0
        %7881 = vmatprep.subr.mxu0 0.0
        %7882 = vmatpush1.msra.mxu0 0.0
        %7883 = vmatprep.subr.mxu0 0.0
        %7884 = vmatpush1.msra.mxu0 0.0
        %7885 = vmatprep.subr.mxu0 0.0
        %7886 = vmatpush1.msra.mxu0 0.0
        %7887 = vmatprep.subr.mxu0 0.0
        %7888 = vmatpush1.msra.mxu0 0.0
        %7889 = vmatprep.subr.mxu0 0.0
        %7890 = vmatpush1.msra.mxu0 0.0
        %7891 = vmatprep.subr.mxu0 0.0
        %7892 = vmatpush1.msra.mxu0 0.0
        %7893 = vmatprep.subr.mxu0 0.0
        %7894 = vmatpush1.msra.mxu0 0.0
        %7895 = vmatprep.subr.mxu0 0.0
        %7896 = vmatpush1.msra.mxu0 0.0
        %7897 = vmatprep.subr.mxu0 0.0
        %7898 = vmatpush1.msra.mxu0 0.0
        %7899 = vmatprep.subr.mxu0 0.0
        %7900 = vmatpush1.msra.mxu0 0.0
        %7901 = vmatprep.subr.mxu0 0.0
        %7902 = vmatpush1.msra.mxu0 0.0
        %7903 = vmatprep.subr.mxu0 0.0
        %7904 = vmatpush1.msra.mxu0 0.0
        %7905 = vmatprep.subr.mxu0 0.0
        %7906 = vmatpush1.msra.mxu0 0.0
        %7907 = vmatprep.subr.mxu0 0.0
        %7908 = vmatpush1.msra.mxu0 0.0
        %7909 = vmatprep.subr.mxu0 0.0
        %7910 = vmatpush1.msra.mxu0 0.0
        %7911 = vmatprep.subr.mxu0 0.0
        %7912 = vmatpush1.msra.mxu0 0.0
        %7913 = vmatprep.subr.mxu0 0.0
        %7914 = vmatpush1.msra.mxu0 0.0
        %7915 = vmatprep.subr.mxu0 0.0
        %7916 = vmatpush1.msra.mxu0 0.0
        %7917 = vmatprep.subr.mxu0 0.0
        %7918 = vmatpush1.msra.mxu0 0.0
        %7919 = vmatprep.subr.mxu0 0.0
        %7920 = vmatpush1.msra.mxu0 0.0
        %7921 = vmatprep.mubr.f32.mxu0 0.0
        %7922 = vmatmul.mubr.f32.gmra.mrb[0].mxu0 %v7855
        %v7923 = vpop.f32.mrb[0].mxu0
        %v7924 = vadd.f32 %v7853, %v7923
        %v7925 = vpop.f32.mrb[0].mxu0
        %7926 = vdwg.mxu0
        %vm7927 = vcmp.gt.f32.partialorder %v7924, 0.0
        %v7928 = vmul.f32 %v7924, 0.01
        %v7929 = vsel %vm7927, %v7924, %v7928
        %v7930 = vld [vmem:[%s244] sm:$0xff]
        %v7931 = vld [vmem:[%s3 + $0x20] sm:$0xff]
        %v7932 = vld [vmem:[%s3 + $0x28] sm:$0xff]
        %v7933 = vld [vmem:[%s3 + $0x30] sm:$0xff]
        %v7934 = vld [vmem:[%s3 + $0x5d] sm:$0x1]
        %v7935 = vlaneseq
        %v7936 = vshrl.u32 %v7935, 7
        %v7937 = vsub.s32 0, %v7936
        %v7938 = vrot.slane %v7934, %v7937
        %v7940 = vsel %vm4722, %v7930, 0
        %7942 = vmatprep.subr.mxu0 0.0
        %7943 = vmatpush1.msra.mxu0 %v7931
        %7944 = vmatprep.subr.mxu0 0.0
        %7945 = vmatpush1.msra.mxu0 %v7932
        %7946 = vmatprep.subr.mxu0 0.0
        %7947 = vmatpush1.msra.mxu0 %v7933
        %7948 = vmatprep.subr.mxu0 0.0
        %7949 = vmatpush1.msra.mxu0 0.0
        %7950 = vmatprep.subr.mxu0 0.0
        %7951 = vmatpush1.msra.mxu0 0.0
        %7952 = vmatprep.subr.mxu0 0.0
        %7953 = vmatpush1.msra.mxu0 0.0
        %7954 = vmatprep.subr.mxu0 0.0
        %7955 = vmatpush1.msra.mxu0 0.0
        %7956 = vmatprep.subr.mxu0 0.0
        %7957 = vmatpush1.msra.mxu0 0.0
        %7958 = vmatprep.subr.mxu0 0.0
        %7959 = vmatpush1.msra.mxu0 0.0
        %7960 = vmatprep.subr.mxu0 0.0
        %7961 = vmatpush1.msra.mxu0 0.0
        %7962 = vmatprep.subr.mxu0 0.0
        %7963 = vmatpush1.msra.mxu0 0.0
        %7964 = vmatprep.subr.mxu0 0.0
        %7965 = vmatpush1.msra.mxu0 0.0
        %7966 = vmatprep.subr.mxu0 0.0
        %7967 = vmatpush1.msra.mxu0 0.0
        %7968 = vmatprep.subr.mxu0 0.0
        %7969 = vmatpush1.msra.mxu0 0.0
        %7970 = vmatprep.subr.mxu0 0.0
        %7971 = vmatpush1.msra.mxu0 0.0
        %7972 = vmatprep.subr.mxu0 0.0
        %7973 = vmatpush1.msra.mxu0 0.0
        %7974 = vmatprep.subr.mxu0 0.0
        %7975 = vmatpush1.msra.mxu0 0.0
        %7976 = vmatprep.subr.mxu0 0.0
        %7977 = vmatpush1.msra.mxu0 0.0
        %7978 = vmatprep.subr.mxu0 0.0
        %7979 = vmatpush1.msra.mxu0 0.0
        %7980 = vmatprep.subr.mxu0 0.0
        %7981 = vmatpush1.msra.mxu0 0.0
        %7982 = vmatprep.subr.mxu0 0.0
        %7983 = vmatpush1.msra.mxu0 0.0
        %7984 = vmatprep.subr.mxu0 0.0
        %7985 = vmatpush1.msra.mxu0 0.0
        %7986 = vmatprep.subr.mxu0 0.0
        %7987 = vmatpush1.msra.mxu0 0.0
        %7988 = vmatprep.subr.mxu0 0.0
        %7989 = vmatpush1.msra.mxu0 0.0
        %7990 = vmatprep.subr.mxu0 0.0
        %7991 = vmatpush1.msra.mxu0 0.0
        %7992 = vmatprep.subr.mxu0 0.0
        %7993 = vmatpush1.msra.mxu0 0.0
        %7994 = vmatprep.subr.mxu0 0.0
        %7995 = vmatpush1.msra.mxu0 0.0
        %7996 = vmatprep.subr.mxu0 0.0
        %7997 = vmatpush1.msra.mxu0 0.0
        %7998 = vmatprep.subr.mxu0 0.0
        %7999 = vmatpush1.msra.mxu0 0.0
        %8000 = vmatprep.subr.mxu0 0.0
        %8001 = vmatpush1.msra.mxu0 0.0
        %8002 = vmatprep.subr.mxu0 0.0
        %8003 = vmatpush1.msra.mxu0 0.0
        %8004 = vmatprep.subr.mxu0 0.0
        %8005 = vmatpush1.msra.mxu0 0.0
        %8006 = vmatprep.mubr.f32.mxu0 0.0
        %8007 = vmatmul.mubr.f32.gmra.mrb[0].mxu0 %v7940
        %v8008 = vpop.f32.mrb[0].mxu0
        %v8009 = vadd.f32 %v7938, %v8008
        %v8010 = vpop.f32.mrb[0].mxu0
        %8011 = vdwg.mxu0
        %vm8012 = vcmp.gt.f32.partialorder %v8009, 0.0
        %v8013 = vmul.f32 %v8009, 0.01
        %v8014 = vsel %vm8012, %v8009, %v8013
        %v8015 = vld [vmem:[%s3 + $0x38] sm:$0xff]
        %v8016 = vld [vmem:[%s3 + $0x40] sm:$0xff]
        %v8017 = vld [vmem:[%s3 + $0x5e] sm:$0x1]
        %v8018 = vlaneseq
        %v8019 = vshrl.u32 %v8018, 7
        %v8020 = vsub.s32 0, %v8019
        %v8021 = vrot.slane %v8017, %v8020
        %8022 = vrot.lane.b32.xlu0 %v7930, 104
        %v8023 = vpop.permute.xlu0 %8022
        %v8024 = vsel %vm4592, %v8023, 0
        %8026 = vmatprep.subr.mxu0 0.0
        %8027 = vmatpush1.msra.mxu0 %v8015
        %8028 = vmatprep.subr.mxu0 0.0
        %8029 = vmatpush1.msra.mxu0 %v8016
        %8030 = vmatprep.subr.mxu0 0.0
        %8031 = vmatpush1.msra.mxu0 0.0
        %8032 = vmatprep.subr.mxu0 0.0
        %8033 = vmatpush1.msra.mxu0 0.0
        %8034 = vmatprep.subr.mxu0 0.0
        %8035 = vmatpush1.msra.mxu0 0.0
        %8036 = vmatprep.subr.mxu0 0.0
        %8037 = vmatpush1.msra.mxu0 0.0
        %8038 = vmatprep.subr.mxu0 0.0
        %8039 = vmatpush1.msra.mxu0 0.0
        %8040 = vmatprep.subr.mxu0 0.0
        %8041 = vmatpush1.msra.mxu0 0.0
        %8042 = vmatprep.subr.mxu0 0.0
        %8043 = vmatpush1.msra.mxu0 0.0
        %8044 = vmatprep.subr.mxu0 0.0
        %8045 = vmatpush1.msra.mxu0 0.0
        %8046 = vmatprep.subr.mxu0 0.0
        %8047 = vmatpush1.msra.mxu0 0.0
        %8048 = vmatprep.subr.mxu0 0.0
        %8049 = vmatpush1.msra.mxu0 0.0
        %8050 = vmatprep.subr.mxu0 0.0
        %8051 = vmatpush1.msra.mxu0 0.0
        %8052 = vmatprep.subr.mxu0 0.0
        %8053 = vmatpush1.msra.mxu0 0.0
        %8054 = vmatprep.subr.mxu0 0.0
        %8055 = vmatpush1.msra.mxu0 0.0
        %8056 = vmatprep.subr.mxu0 0.0
        %8057 = vmatpush1.msra.mxu0 0.0
        %8058 = vmatprep.subr.mxu0 0.0
        %8059 = vmatpush1.msra.mxu0 0.0
        %8060 = vmatprep.subr.mxu0 0.0
        %8061 = vmatpush1.msra.mxu0 0.0
        %8062 = vmatprep.subr.mxu0 0.0
        %8063 = vmatpush1.msra.mxu0 0.0
        %8064 = vmatprep.subr.mxu0 0.0
        %8065 = vmatpush1.msra.mxu0 0.0
        %8066 = vmatprep.subr.mxu0 0.0
        %8067 = vmatpush1.msra.mxu0 0.0
        %8068 = vmatprep.subr.mxu0 0.0
        %8069 = vmatpush1.msra.mxu0 0.0
        %8070 = vmatprep.subr.mxu0 0.0
        %8071 = vmatpush1.msra.mxu0 0.0
        %8072 = vmatprep.subr.mxu0 0.0
        %8073 = vmatpush1.msra.mxu0 0.0
        %8074 = vmatprep.subr.mxu0 0.0
        %8075 = vmatpush1.msra.mxu0 0.0
        %8076 = vmatprep.subr.mxu0 0.0
        %8077 = vmatpush1.msra.mxu0 0.0
        %8078 = vmatprep.subr.mxu0 0.0
        %8079 = vmatpush1.msra.mxu0 0.0
        %8080 = vmatprep.subr.mxu0 0.0
        %8081 = vmatpush1.msra.mxu0 0.0
        %8082 = vmatprep.subr.mxu0 0.0
        %8083 = vmatpush1.msra.mxu0 0.0
        %8084 = vmatprep.subr.mxu0 0.0
        %8085 = vmatpush1.msra.mxu0 0.0
        %8086 = vmatprep.subr.mxu0 0.0
        %8087 = vmatpush1.msra.mxu0 0.0
        %8088 = vmatprep.subr.mxu0 0.0
        %8089 = vmatpush1.msra.mxu0 0.0
        %8090 = vmatprep.mubr.f32.mxu0 0.0
        %8091 = vmatmul.mubr.f32.gmra.mrb[0].mxu0 %v8024
        %v8092 = vpop.f32.mrb[0].mxu0
        %v8093 = vadd.f32 %v8021, %v8092
        %v8094 = vpop.f32.mrb[0].mxu0
        %8095 = vdwg.mxu0
        %vm8096 = vcmp.gt.f32.partialorder %v8093, 0.0
        %v8097 = vmul.f32 %v8093, 0.01
        %v8098 = vsel %vm8096, %v8093, %v8097
        %v8099 = vld [vmem:[%s3 + $0x48] sm:$0xff]
        %v8100 = vld [vmem:[%s3 + $0x50] sm:$0xff]
        %v8101 = vld [vmem:[%s3 + $0x58] sm:$0xf]
        %v8102 = vld [vmem:[%s3 + $0x5f] sm:$0x1]
        %v8103 = vlaneseq
        %v8104 = vshrl.u32 %v8103, 7
        %v8105 = vsub.s32 0, %v8104
        %v8106 = vrot.slane %v8102, %v8105
        %8107 = vrot.lane.b32.xlu0 %v7930, 88
        %v8108 = vpop.permute.xlu0 %8107
        %v8109 = vsel %vm4657, %v8108, 0
        %vm8111 = vcmask 1043456
        %v8113 = vsel %vm8111, %v8101, 0
        %8115 = vmatprep.subr.mxu0 0.0
        %8116 = vmatpush1.msra.mxu0 %v8099
        %8117 = vmatprep.subr.mxu0 0.0
        %8118 = vmatpush1.msra.mxu0 %v8100
        %8119 = vmatprep.subr.mxu0 0.0
        %8120 = vmatpush1.msra.mxu0 %v8113
        %8121 = vmatprep.subr.mxu0 0.0
        %8122 = vmatpush1.msra.mxu0 0.0
        %8123 = vmatprep.subr.mxu0 0.0
        %8124 = vmatpush1.msra.mxu0 0.0
        %8125 = vmatprep.subr.mxu0 0.0
        %8126 = vmatpush1.msra.mxu0 0.0
        %8127 = vmatprep.subr.mxu0 0.0
        %8128 = vmatpush1.msra.mxu0 0.0
        %8129 = vmatprep.subr.mxu0 0.0
        %8130 = vmatpush1.msra.mxu0 0.0
        %8131 = vmatprep.subr.mxu0 0.0
        %8132 = vmatpush1.msra.mxu0 0.0
        %8133 = vmatprep.subr.mxu0 0.0
        %8134 = vmatpush1.msra.mxu0 0.0
        %8135 = vmatprep.subr.mxu0 0.0
        %8136 = vmatpush1.msra.mxu0 0.0
        %8137 = vmatprep.subr.mxu0 0.0
        %8138 = vmatpush1.msra.mxu0 0.0
        %8139 = vmatprep.subr.mxu0 0.0
        %8140 = vmatpush1.msra.mxu0 0.0
        %8141 = vmatprep.subr.mxu0 0.0
        %8142 = vmatpush1.msra.mxu0 0.0
        %8143 = vmatprep.subr.mxu0 0.0
        %8144 = vmatpush1.msra.mxu0 0.0
        %8145 = vmatprep.subr.mxu0 0.0
        %8146 = vmatpush1.msra.mxu0 0.0
        %8147 = vmatprep.subr.mxu0 0.0
        %8148 = vmatpush1.msra.mxu0 0.0
        %8149 = vmatprep.subr.mxu0 0.0
        %8150 = vmatpush1.msra.mxu0 0.0
        %8151 = vmatprep.subr.mxu0 0.0
        %8152 = vmatpush1.msra.mxu0 0.0
        %8153 = vmatprep.subr.mxu0 0.0
        %8154 = vmatpush1.msra.mxu0 0.0
        %8155 = vmatprep.subr.mxu0 0.0
        %8156 = vmatpush1.msra.mxu0 0.0
        %8157 = vmatprep.subr.mxu0 0.0
        %8158 = vmatpush1.msra.mxu0 0.0
        %8159 = vmatprep.subr.mxu0 0.0
        %8160 = vmatpush1.msra.mxu0 0.0
        %8161 = vmatprep.subr.mxu0 0.0
        %8162 = vmatpush1.msra.mxu0 0.0
        %8163 = vmatprep.subr.mxu0 0.0
        %8164 = vmatpush1.msra.mxu0 0.0
        %8165 = vmatprep.subr.mxu0 0.0
        %8166 = vmatpush1.msra.mxu0 0.0
        %8167 = vmatprep.subr.mxu0 0.0
        %8168 = vmatpush1.msra.mxu0 0.0
        %8169 = vmatprep.subr.mxu0 0.0
        %8170 = vmatpush1.msra.mxu0 0.0
        %8171 = vmatprep.subr.mxu0 0.0
        %8172 = vmatpush1.msra.mxu0 0.0
        %8173 = vmatprep.subr.mxu0 0.0
        %8174 = vmatpush1.msra.mxu0 0.0
        %8175 = vmatprep.subr.mxu0 0.0
        %8176 = vmatpush1.msra.mxu0 0.0
        %8177 = vmatprep.subr.mxu0 0.0
        %8178 = vmatpush1.msra.mxu0 0.0
        %8179 = vmatprep.mubr.f32.mxu0 0.0
        %8180 = vmatmul.mubr.f32.gmra.mrb[0].mxu0 %v8109
        %v8181 = vpop.f32.mrb[0].mxu0
        %v8182 = vadd.f32 %v8106, %v8181
        %v8183 = vpop.f32.mrb[0].mxu0
        %8184 = vdwg.mxu0
        %v8185 = vmax.f32 %v8182, 0.0
        %v8186 = vld [vmem:[%s4 + $0x80] sm:$0x1]
        %v8187 = vlaneseq
        %v8188 = vshrl.u32 %v8187, 7
        %v8189 = vsub.s32 0, %v8188
        %v8190 = vrot.slane %v8186, %v8189
        %v8191 = vld [vmem:[%s4] sm:$0xff]
        %v8192 = vld [vmem:[%s4 + $0x8] sm:$0xff]
        %v8193 = vld [vmem:[%s4 + $0x10] sm:$0xff]
        %v8194 = vld [vmem:[%s4 + $0x18] sm:$0xff]
        %v8196 = vsel %vm4852, %v7929, 0
        %8198 = vmatprep.subr.mxu0 0.0
        %8199 = vmatpush1.msra.mxu0 %v8191
        %8200 = vmatprep.subr.mxu0 0.0
        %8201 = vmatpush1.msra.mxu0 %v8192
        %8202 = vmatprep.subr.mxu0 0.0
        %8203 = vmatpush1.msra.mxu0 %v8193
        %8204 = vmatprep.subr.mxu0 0.0
        %8205 = vmatpush1.msra.mxu0 %v8194
        %8206 = vmatprep.subr.mxu0 0.0
        %8207 = vmatpush1.msra.mxu0 0.0
        %8208 = vmatprep.subr.mxu0 0.0
        %8209 = vmatpush1.msra.mxu0 0.0
        %8210 = vmatprep.subr.mxu0 0.0
        %8211 = vmatpush1.msra.mxu0 0.0
        %8212 = vmatprep.subr.mxu0 0.0
        %8213 = vmatpush1.msra.mxu0 0.0
        %8214 = vmatprep.subr.mxu0 0.0
        %8215 = vmatpush1.msra.mxu0 0.0
        %8216 = vmatprep.subr.mxu0 0.0
        %8217 = vmatpush1.msra.mxu0 0.0
        %8218 = vmatprep.subr.mxu0 0.0
        %8219 = vmatpush1.msra.mxu0 0.0
        %8220 = vmatprep.subr.mxu0 0.0
        %8221 = vmatpush1.msra.mxu0 0.0
        %8222 = vmatprep.subr.mxu0 0.0
        %8223 = vmatpush1.msra.mxu0 0.0
        %8224 = vmatprep.subr.mxu0 0.0
        %8225 = vmatpush1.msra.mxu0 0.0
        %8226 = vmatprep.subr.mxu0 0.0
        %8227 = vmatpush1.msra.mxu0 0.0
        %8228 = vmatprep.subr.mxu0 0.0
        %8229 = vmatpush1.msra.mxu0 0.0
        %8230 = vmatprep.subr.mxu0 0.0
        %8231 = vmatpush1.msra.mxu0 0.0
        %8232 = vmatprep.subr.mxu0 0.0
        %8233 = vmatpush1.msra.mxu0 0.0
        %8234 = vmatprep.subr.mxu0 0.0
        %8235 = vmatpush1.msra.mxu0 0.0
        %8236 = vmatprep.subr.mxu0 0.0
        %8237 = vmatpush1.msra.mxu0 0.0
        %8238 = vmatprep.subr.mxu0 0.0
        %8239 = vmatpush1.msra.mxu0 0.0
        %8240 = vmatprep.subr.mxu0 0.0
        %8241 = vmatpush1.msra.mxu0 0.0
        %8242 = vmatprep.subr.mxu0 0.0
        %8243 = vmatpush1.msra.mxu0 0.0
        %8244 = vmatprep.subr.mxu0 0.0
        %8245 = vmatpush1.msra.mxu0 0.0
        %8246 = vmatprep.subr.mxu0 0.0
        %8247 = vmatpush1.msra.mxu0 0.0
        %8248 = vmatprep.subr.mxu0 0.0
        %8249 = vmatpush1.msra.mxu0 0.0
        %8250 = vmatprep.subr.mxu0 0.0
        %8251 = vmatpush1.msra.mxu0 0.0
        %8252 = vmatprep.subr.mxu0 0.0
        %8253 = vmatpush1.msra.mxu0 0.0
        %8254 = vmatprep.subr.mxu0 0.0
        %8255 = vmatpush1.msra.mxu0 0.0
        %8256 = vmatprep.subr.mxu0 0.0
        %8257 = vmatpush1.msra.mxu0 0.0
        %8258 = vmatprep.subr.mxu0 0.0
        %8259 = vmatpush1.msra.mxu0 0.0
        %8260 = vmatprep.subr.mxu0 0.0
        %8261 = vmatpush1.msra.mxu0 0.0
        %8262 = vmatprep.mubr.f32.mxu0 0.0
        %8263 = vmatmul.mubr.f32.gmra.mrb[0].mxu0 %v8196
        %v8264 = vpop.f32.mrb[0].mxu0
        %v8265 = vadd.f32 0.0, %v8264
        %v8266 = vpop.f32.mrb[0].mxu0
        %8267 = vdwg.mxu0
        %v8268 = vadd.f32 %v8190, %v8265
        %v8269 = vld [vmem:[%s4 + $0x20] sm:$0xff]
        %v8270 = vld [vmem:[%s4 + $0x28] sm:$0xff]
        %v8271 = vld [vmem:[%s4 + $0x30] sm:$0xff]
        %v8272 = vld [vmem:[%s4 + $0x38] sm:$0xff]
        %v8274 = vsel %vm4852, %v8098, 0
        %8276 = vmatprep.subr.mxu0 0.0
        %8277 = vmatpush1.msra.mxu0 %v8269
        %8278 = vmatprep.subr.mxu0 0.0
        %8279 = vmatpush1.msra.mxu0 %v8270
        %8280 = vmatprep.subr.mxu0 0.0
        %8281 = vmatpush1.msra.mxu0 %v8271
        %8282 = vmatprep.subr.mxu0 0.0
        %8283 = vmatpush1.msra.mxu0 %v8272
        %8284 = vmatprep.subr.mxu0 0.0
        %8285 = vmatpush1.msra.mxu0 0.0
        %8286 = vmatprep.subr.mxu0 0.0
        %8287 = vmatpush1.msra.mxu0 0.0
        %8288 = vmatprep.subr.mxu0 0.0
        %8289 = vmatpush1.msra.mxu0 0.0
        %8290 = vmatprep.subr.mxu0 0.0
        %8291 = vmatpush1.msra.mxu0 0.0
        %8292 = vmatprep.subr.mxu0 0.0
        %8293 = vmatpush1.msra.mxu0 0.0
        %8294 = vmatprep.subr.mxu0 0.0
        %8295 = vmatpush1.msra.mxu0 0.0
        %8296 = vmatprep.subr.mxu0 0.0
        %8297 = vmatpush1.msra.mxu0 0.0
        %8298 = vmatprep.subr.mxu0 0.0
        %8299 = vmatpush1.msra.mxu0 0.0
        %8300 = vmatprep.subr.mxu0 0.0
        %8301 = vmatpush1.msra.mxu0 0.0
        %8302 = vmatprep.subr.mxu0 0.0
        %8303 = vmatpush1.msra.mxu0 0.0
        %8304 = vmatprep.subr.mxu0 0.0
        %8305 = vmatpush1.msra.mxu0 0.0
        %8306 = vmatprep.subr.mxu0 0.0
        %8307 = vmatpush1.msra.mxu0 0.0
        %8308 = vmatprep.subr.mxu0 0.0
        %8309 = vmatpush1.msra.mxu0 0.0
        %8310 = vmatprep.subr.mxu0 0.0
        %8311 = vmatpush1.msra.mxu0 0.0
        %8312 = vmatprep.subr.mxu0 0.0
        %8313 = vmatpush1.msra.mxu0 0.0
        %8314 = vmatprep.subr.mxu0 0.0
        %8315 = vmatpush1.msra.mxu0 0.0
        %8316 = vmatprep.subr.mxu0 0.0
        %8317 = vmatpush1.msra.mxu0 0.0
        %8318 = vmatprep.subr.mxu0 0.0
        %8319 = vmatpush1.msra.mxu0 0.0
        %8320 = vmatprep.subr.mxu0 0.0
        %8321 = vmatpush1.msra.mxu0 0.0
        %8322 = vmatprep.subr.mxu0 0.0
        %8323 = vmatpush1.msra.mxu0 0.0
        %8324 = vmatprep.subr.mxu0 0.0
        %8325 = vmatpush1.msra.mxu0 0.0
        %8326 = vmatprep.subr.mxu0 0.0
        %8327 = vmatpush1.msra.mxu0 0.0
        %8328 = vmatprep.subr.mxu0 0.0
        %8329 = vmatpush1.msra.mxu0 0.0
        %8330 = vmatprep.subr.mxu0 0.0
        %8331 = vmatpush1.msra.mxu0 0.0
        %8332 = vmatprep.subr.mxu0 0.0
        %8333 = vmatpush1.msra.mxu0 0.0
        %8334 = vmatprep.subr.mxu0 0.0
        %8335 = vmatpush1.msra.mxu0 0.0
        %8336 = vmatprep.subr.mxu0 0.0
        %8337 = vmatpush1.msra.mxu0 0.0
        %8338 = vmatprep.subr.mxu0 0.0
        %8339 = vmatpush1.msra.mxu0 0.0
        %8340 = vmatprep.mubr.f32.mxu0 0.0
        %8341 = vmatmul.mubr.f32.gmra.mrb[0].mxu0 %v8274
        %v8342 = vpop.f32.mrb[0].mxu0
        %v8343 = vadd.f32 0.0, %v8342
        %v8344 = vpop.f32.mrb[0].mxu0
        %8345 = vdwg.mxu0
        %v8346 = vadd.f32 %v8268, %v8343
        %v8347 = vld [vmem:[%s4 + $0x40] sm:$0xff]
        %v8348 = vld [vmem:[%s4 + $0x48] sm:$0xff]
        %v8349 = vld [vmem:[%s4 + $0x50] sm:$0xff]
        %v8350 = vld [vmem:[%s4 + $0x58] sm:$0xff]
        %v8352 = vsel %vm4852, %v8014, 0
        %8354 = vmatprep.subr.mxu0 0.0
        %8355 = vmatpush1.msra.mxu0 %v8347
        %8356 = vmatprep.subr.mxu0 0.0
        %8357 = vmatpush1.msra.mxu0 %v8348
        %8358 = vmatprep.subr.mxu0 0.0
        %8359 = vmatpush1.msra.mxu0 %v8349
        %8360 = vmatprep.subr.mxu0 0.0
        %8361 = vmatpush1.msra.mxu0 %v8350
        %8362 = vmatprep.subr.mxu0 0.0
        %8363 = vmatpush1.msra.mxu0 0.0
        %8364 = vmatprep.subr.mxu0 0.0
        %8365 = vmatpush1.msra.mxu0 0.0
        %8366 = vmatprep.subr.mxu0 0.0
        %8367 = vmatpush1.msra.mxu0 0.0
        %8368 = vmatprep.subr.mxu0 0.0
        %8369 = vmatpush1.msra.mxu0 0.0
        %8370 = vmatprep.subr.mxu0 0.0
        %8371 = vmatpush1.msra.mxu0 0.0
        %8372 = vmatprep.subr.mxu0 0.0
        %8373 = vmatpush1.msra.mxu0 0.0
        %8374 = vmatprep.subr.mxu0 0.0
        %8375 = vmatpush1.msra.mxu0 0.0
        %8376 = vmatprep.subr.mxu0 0.0
        %8377 = vmatpush1.msra.mxu0 0.0
        %8378 = vmatprep.subr.mxu0 0.0
        %8379 = vmatpush1.msra.mxu0 0.0
        %8380 = vmatprep.subr.mxu0 0.0
        %8381 = vmatpush1.msra.mxu0 0.0
        %8382 = vmatprep.subr.mxu0 0.0
        %8383 = vmatpush1.msra.mxu0 0.0
        %8384 = vmatprep.subr.mxu0 0.0
        %8385 = vmatpush1.msra.mxu0 0.0
        %8386 = vmatprep.subr.mxu0 0.0
        %8387 = vmatpush1.msra.mxu0 0.0
        %8388 = vmatprep.subr.mxu0 0.0
        %8389 = vmatpush1.msra.mxu0 0.0
        %8390 = vmatprep.subr.mxu0 0.0
        %8391 = vmatpush1.msra.mxu0 0.0
        %8392 = vmatprep.subr.mxu0 0.0
        %8393 = vmatpush1.msra.mxu0 0.0
        %8394 = vmatprep.subr.mxu0 0.0
        %8395 = vmatpush1.msra.mxu0 0.0
        %8396 = vmatprep.subr.mxu0 0.0
        %8397 = vmatpush1.msra.mxu0 0.0
        %8398 = vmatprep.subr.mxu0 0.0
        %8399 = vmatpush1.msra.mxu0 0.0
        %8400 = vmatprep.subr.mxu0 0.0
        %8401 = vmatpush1.msra.mxu0 0.0
        %8402 = vmatprep.subr.mxu0 0.0
        %8403 = vmatpush1.msra.mxu0 0.0
        %8404 = vmatprep.subr.mxu0 0.0
        %8405 = vmatpush1.msra.mxu0 0.0
        %8406 = vmatprep.subr.mxu0 0.0
        %8407 = vmatpush1.msra.mxu0 0.0
        %8408 = vmatprep.subr.mxu0 0.0
        %8409 = vmatpush1.msra.mxu0 0.0
        %8410 = vmatprep.subr.mxu0 0.0
        %8411 = vmatpush1.msra.mxu0 0.0
        %8412 = vmatprep.subr.mxu0 0.0
        %8413 = vmatpush1.msra.mxu0 0.0
        %8414 = vmatprep.subr.mxu0 0.0
        %8415 = vmatpush1.msra.mxu0 0.0
        %8416 = vmatprep.subr.mxu0 0.0
        %8417 = vmatpush1.msra.mxu0 0.0
        %8418 = vmatprep.mubr.f32.mxu0 0.0
        %8419 = vmatmul.mubr.f32.gmra.mrb[0].mxu0 %v8352
        %v8420 = vpop.f32.mrb[0].mxu0
        %v8421 = vadd.f32 0.0, %v8420
        %v8422 = vpop.f32.mrb[0].mxu0
        %8423 = vdwg.mxu0
        %v8424 = vadd.f32 %v8346, %v8421
        %v8425 = vld [vmem:[%s4 + $0x60] sm:$0xff]
        %v8426 = vld [vmem:[%s4 + $0x68] sm:$0xff]
        %v8427 = vld [vmem:[%s4 + $0x70] sm:$0xff]
        %v8428 = vld [vmem:[%s4 + $0x78] sm:$0xff]
        %v8430 = vsel %vm4852, %v8185, 0
        %8432 = vmatprep.subr.mxu0 0.0
        %8433 = vmatpush1.msra.mxu0 %v8425
        %8434 = vmatprep.subr.mxu0 0.0
        %8435 = vmatpush1.msra.mxu0 %v8426
        %8436 = vmatprep.subr.mxu0 0.0
        %8437 = vmatpush1.msra.mxu0 %v8427
        %8438 = vmatprep.subr.mxu0 0.0
        %8439 = vmatpush1.msra.mxu0 %v8428
        %8440 = vmatprep.subr.mxu0 0.0
        %8441 = vmatpush1.msra.mxu0 0.0
        %8442 = vmatprep.subr.mxu0 0.0
        %8443 = vmatpush1.msra.mxu0 0.0
        %8444 = vmatprep.subr.mxu0 0.0
        %8445 = vmatpush1.msra.mxu0 0.0
        %8446 = vmatprep.subr.mxu0 0.0
        %8447 = vmatpush1.msra.mxu0 0.0
        %8448 = vmatprep.subr.mxu0 0.0
        %8449 = vmatpush1.msra.mxu0 0.0
        %8450 = vmatprep.subr.mxu0 0.0
        %8451 = vmatpush1.msra.mxu0 0.0
        %8452 = vmatprep.subr.mxu0 0.0
        %8453 = vmatpush1.msra.mxu0 0.0
        %8454 = vmatprep.subr.mxu0 0.0
        %8455 = vmatpush1.msra.mxu0 0.0
        %8456 = vmatprep.subr.mxu0 0.0
        %8457 = vmatpush1.msra.mxu0 0.0
        %8458 = vmatprep.subr.mxu0 0.0
        %8459 = vmatpush1.msra.mxu0 0.0
        %8460 = vmatprep.subr.mxu0 0.0
        %8461 = vmatpush1.msra.mxu0 0.0
        %8462 = vmatprep.subr.mxu0 0.0
        %8463 = vmatpush1.msra.mxu0 0.0
        %8464 = vmatprep.subr.mxu0 0.0
        %8465 = vmatpush1.msra.mxu0 0.0
        %8466 = vmatprep.subr.mxu0 0.0
        %8467 = vmatpush1.msra.mxu0 0.0
        %8468 = vmatprep.subr.mxu0 0.0
        %8469 = vmatpush1.msra.mxu0 0.0
        %8470 = vmatprep.subr.mxu0 0.0
        %8471 = vmatpush1.msra.mxu0 0.0
        %8472 = vmatprep.subr.mxu0 0.0
        %8473 = vmatpush1.msra.mxu0 0.0
        %8474 = vmatprep.subr.mxu0 0.0
        %8475 = vmatpush1.msra.mxu0 0.0
        %8476 = vmatprep.subr.mxu0 0.0
        %8477 = vmatpush1.msra.mxu0 0.0
        %8478 = vmatprep.subr.mxu0 0.0
        %8479 = vmatpush1.msra.mxu0 0.0
        %8480 = vmatprep.subr.mxu0 0.0
        %8481 = vmatpush1.msra.mxu0 0.0
        %8482 = vmatprep.subr.mxu0 0.0
        %8483 = vmatpush1.msra.mxu0 0.0
        %8484 = vmatprep.subr.mxu0 0.0
        %8485 = vmatpush1.msra.mxu0 0.0
        %8486 = vmatprep.subr.mxu0 0.0
        %8487 = vmatpush1.msra.mxu0 0.0
        %8488 = vmatprep.subr.mxu0 0.0
        %8489 = vmatpush1.msra.mxu0 0.0
        %8490 = vmatprep.subr.mxu0 0.0
        %8491 = vmatpush1.msra.mxu0 0.0
        %8492 = vmatprep.subr.mxu0 0.0
        %8493 = vmatpush1.msra.mxu0 0.0
        %8494 = vmatprep.subr.mxu0 0.0
        %8495 = vmatpush1.msra.mxu0 0.0
        %8496 = vmatprep.mubr.f32.mxu0 0.0
        %8497 = vmatmul.mubr.f32.gmra.mrb[0].mxu0 %v8430
        %v8498 = vpop.f32.mrb[0].mxu0
        %v8499 = vadd.f32 0.0, %v8498
        %v8500 = vpop.f32.mrb[0].mxu0
        %8501 = vdwg.mxu0
        %v8502 = vadd.f32 %v8424, %v8499
        %8503 = vst.msk [vmem:[%s233] sm:$0xff] %vm4592, %v8502
        %s8504 = sand.u32 %s142, 1
        %s8505 = scalar_lea.sflag [#allocation3], %s8504
        %s8506 = sand.u32 %s142, 1
        %s8507 = smul.addr %s8506, 8
        %s8508 = scalar_lea.vmem [#allocation2], %s8507
        // Predicated region
        $region41: #{tpu_custom_call.1} parent=39 // pred_check
          %p8509 = pneg %p152
        $region42: #{tpu_custom_call.1} parent=39 // pred_check_branch
          %8511 = sbr.rel (%p8509) target = $region44
        $region43: #{tpu_custom_call.1} parent=39 // pred_region
          %s8513 = ssub.s32 128, 128
          %8514 = vsyncadd %s8505, %s8513
          %s8515 = smul.addr %s19, 128
          %s8516 = scalar_lea.hbm %s5, %s8515
          %s8518 = sshll.u32 %s8508, 4
          %s8519 = int_to_ptr.vmem [resolvable:$true] %s8518
          %8521 = dma.vmem_to_hbm [thread:$0]  %s8519, 128, %s8516, %s8505
        $region44: #{tpu_custom_call.1} parent=39 // pred_fallthru
          _
      $region40: #{tpu_custom_call.1} parent=5 // pred_fallthru
        _
      %p8522 = scmp.le.s32.totalorder 2, %s14
      // Predicated region
      $region45: #{tpu_custom_call.1} parent=5 // pred_check
        %p8523 = pneg %p8522
      $region46: #{tpu_custom_call.1} parent=5 // pred_check_branch
        %8525 = sbr.rel (%p8523) target = $region48
      $region47: #{tpu_custom_call.1} parent=5 // pred_region
        %s8526 = ssub.s32 %s14, 2
        // Predicated region
        $region49: #{tpu_custom_call.1} parent=47 // pred_check
          %p8527 = pneg %p158
        $region50: #{tpu_custom_call.1} parent=47 // pred_check_branch
          %8529 = sbr.rel (%p8527) target = $region52
        $region51: #{tpu_custom_call.1} parent=47 // pred_region
          %s8530 = sand.u32 %s143, 1
          %s8531 = scalar_lea.sflag [#allocation3], %s8530
          %s8532 = sand.u32 %s143, 1
          %s8533 = smul.addr %s8532, 8
          %s8534 = scalar_lea.vmem [#allocation2], %s8533
          %8535 = dma.done %s8531, 128
        $region52: #{tpu_custom_call.1} parent=47 // pred_fallthru
          _
      $region48: #{tpu_custom_call.1} parent=5 // pred_fallthru
        _
    $region6: #{tpu_custom_call.1} parent=1 // loop_footer
      %s18 = sadd.s32 1, %s14
    $region7: #{tpu_custom_call.1} parent=1 // loop_footer_branch
      %13 = sbr.rel target = $region3
    $region8: #{tpu_custom_call.1} parent=1 // loop_exit
      _
    %8536 = vsyncpa [#allocation3], 1
    %s8537 = scalar_lea.sflag [#allocation3], 1
    %8538 = vsyncpa %s8537, 1

</llo_original>
